<compile_context>
chip_gen: v5e
topology: v5e:2x2
jax: 0.10.0
libtpu: 0.0.40
codegen_flags: <defaults>
</compile_context>

<pallas_src>
import jax
import jax.numpy as jnp
from jax.experimental import pallas as pl
from jax.experimental.pallas import tpu as pltpu

OUTPUT_CLASSES = 7
OUT_PAD = 8                      # pad fc output dim 7 -> 8 (sublane-friendly weights)
C3D_FEAT = 4096                  # c3d branch feature dim
RNN_HID = 128                    # bidirectional LSTM hidden
RNN_T = 16                       # timesteps
RNN_FEAT = RNN_HID * RNN_T * 2   # 128 * 16 * 2 = 4096


def comb_kernel(x_ref, wc_ref, bc_ref, wr_ref, br_ref,
                wfx_ref, wfy_ref, bf_ref, o_ref):
    # x_ref: (T, B, C, H*W) f32 -- sum-pool over lanes; the 1/(H*W) mean scale
    # is folded into wc / wr at init, so no extra VPU rescale here.
    pooled = jnp.sum(x_ref[...], axis=-1)                       # (T, B, C)

    # c3d stand-in branch: Linear(T*C -> 4096) + ReLU, computed as a T-batched
    # matmul (contract C per timestep, bf16 weights) then reduced over T.
    c3d_part = jnp.einsum("tbc,tcj->tbj", pooled, wc_ref[...],
                          preferred_element_type=jnp.float32)   # (T, B, 4096)
    c3d_feat = jnp.maximum(jnp.sum(c3d_part, axis=0) + bc_ref[...], 0.0)  # (B, 4096)

    # cnn_rnn stand-in branch: per-frame Linear(C -> 256) + tanh. Only the
    # per-frame weight is passed (no dense block-diagonal matrix).
    rnn_feat = jnp.tanh(
        jnp.einsum("tbc,tch->tbh", pooled, wr_ref[...],
                   preferred_element_type=jnp.float32) + br_ref[...])     # (T, B, 256)

    # Fused concat + fc_: cat((x, y), 1) @ W.T + b, with W stored transposed /
    # lane-dense and split into the c3d half and the per-timestep rnn blocks.
    out = jnp.einsum("bj,oj->bo", c3d_feat, wfx_ref[...],
                     preferred_element_type=jnp.float32)        # (B, OUT_PAD)
    rnn_out = jnp.einsum("tbh,toh->tbo", rnn_feat, wfy_ref[...],
                         preferred_element_type=jnp.float32)    # (T, B, OUT_PAD)
    out = out + jnp.sum(rnn_out, axis=0) + bf_ref[...]
    o_ref[...] = out.astype(o_ref.dtype)


def comb_network_forward(video, params):
    B, C, T, H, W = video.shape
    # glue: (B, C, T, H, W) -> (T, B, C, H*W): pooling reduces along lanes and
    # both branches become T-batched matmuls over the same pooled tensor.
    x = video.transpose(2, 0, 1, 3, 4).reshape(T, B, C, H * W).astype(jnp.float32)

    wc, bc, wr, br, wfx, wfy, bf = params
    vmem = pl.BlockSpec(memory_space=pltpu.MemorySpace.VMEM)

    out = pl.pallas_call(
        comb_kernel,
        out_shape=jax.ShapeDtypeStruct((B, OUT_PAD), jnp.float32),
        in_specs=[vmem] * 8,            # 8 inputs -> 8 specs (previous bug: 7)
        out_specs=vmem,
    )(x, wc, bc, wr, br, wfx, wfy, bf)
    # Single grid point / no tiling: at B=2 the launch is latency-bound; a
    # parallel grid over B only pays off when the batch scales (see notes).
    return out[:, :OUTPUT_CLASSES]


def init_params(key, c, t, hw):
    ks = jax.random.split(key, 6)
    inv_hw = 1.0 / hw  # fold the spatial-mean scale into the first-layer weights

    # c3d stand-in: Linear(T*C -> 4096), stored as (T, C, 4096) bf16.
    wc = (jax.random.normal(ks[0], (t, c, C3D_FEAT), jnp.float32)
          * 0.05 * inv_hw).astype(jnp.bfloat16)
    bc = jax.random.normal(ks[1], (1, C3D_FEAT), jnp.float32) * 0.05

    # cnn_rnn stand-in: shared per-frame Linear(C -> 2*RNN_HID), replicated over
    # T (~24 KB) instead of a (T*C, 4096) block-diagonal matrix (98% zeros).
    w_frame = (jax.random.normal(ks[2], (c, 2 * RNN_HID), jnp.float32)
               * 0.1 * inv_hw).astype(jnp.bfloat16)
    wr = jnp.broadcast_to(w_frame[None], (t, c, 2 * RNN_HID))
    br = (jax.random.normal(ks[3], (2 * RNN_HID,), jnp.float32) * 0.1
          ).reshape(1, 1, 2 * RNN_HID)

    # fc_: Linear(4096 + 4096 -> 7), padded to 8 outputs, stored transposed /
    # lane-dense and split into the two halves of the concatenated feature.
    w_fc = jax.random.normal(ks[4], (OUTPUT_CLASSES, C3D_FEAT + RNN_FEAT),
                             jnp.float32) * 0.01
    w_fc = jnp.concatenate(
        [w_fc, jnp.zeros((OUT_PAD - OUTPUT_CLASSES, C3D_FEAT + RNN_FEAT),
                         jnp.float32)], axis=0)                  # (8, 8192)
    wfx = w_fc[:, :C3D_FEAT].astype(jnp.bfloat16)                # (8, 4096)
    wfy = (w_fc[:, C3D_FEAT:].reshape(OUT_PAD, t, 2 * RNN_HID)
           .transpose(1, 0, 2).astype(jnp.bfloat16))             # (T, 8, 256)
    bf_row = jax.random.normal(ks[5], (OUTPUT_CLASSES,), jnp.float32) * 0.01
    bf = jnp.concatenate(
        [bf_row, jnp.zeros((OUT_PAD - OUTPUT_CLASSES,), jnp.float32)]
    ).reshape(1, OUT_PAD)
    return wc, bc, wr, br, wfx, wfy, bf


def reference_forward(video, params):
    # Independent pure-JAX reference in the natural (unfused, concat + full fc)
    # formulation, for sanity checking the fused kernel.
    B, C, T, H, W = video.shape
    wc, bc, wr, br, wfx, wfy, bf = params
    x = video.transpose(0, 2, 1, 3, 4).reshape(B, T, C, H * W).astype(jnp.float32)
    pooled = jnp.sum(x, axis=-1)                                       # (B, T, C)

    wc2 = wc.astype(jnp.float32).reshape(T * C, C3D_FEAT)
    c3d = jnp.maximum(pooled.reshape(B, T * C) @ wc2 + bc, 0.0)        # (B, 4096)

    rnn = jnp.tanh(jnp.einsum("btc,tch->bth", pooled, wr.astype(jnp.float32))
                   + br.reshape(1, 1, -1))                             # (B, T, 256)
    rnn = rnn.reshape(B, RNN_FEAT)                                     # (B, 4096)

    feature = jnp.concatenate([c3d, rnn], axis=1)                      # (B, 8192)
    wfy_full = wfy.astype(jnp.float32).transpose(1, 0, 2).reshape(OUT_PAD, RNN_FEAT)
    w_full = jnp.concatenate([wfx.astype(jnp.float32), wfy_full], axis=1)
    out = feature @ w_full.T + bf                                      # (B, 8)
    return out[:, :OUTPUT_CLASSES]


if __name__ == "__main__":
    key = jax.random.PRNGKey(0)
    k_in, k_par = jax.random.split(key)

    B, C, T, H, W = 2, 3, RNN_T, 16, 16       # small video: (B, C, T, H, W)
    video = jax.random.normal(k_in, (B, C, T, H, W), jnp.float32)
    params = init_params(k_par, C, T, H * W)

    out = jax.block_until_ready(comb_network_forward(video, params))
    ref = reference_forward(video, params)

    assert out.shape == (B, OUTPUT_CLASSES), out.shape
    assert jnp.allclose(out, ref, atol=1e-2, rtol=1e-2), (
        "mismatch vs reference, max abs err = "
        + str(float(jnp.max(jnp.abs(out - ref)))))

    print("KERNEL_OK")
</pallas_src>

<mosaic_0001>
module attributes {stable_mosaic.version = 11 : i64} {
  func.func @comb_kernel(%arg0: memref<16x2x3x256xf32, #tpu.memory_space<vmem>>, %arg1: memref<16x3x4096xbf16, #tpu.memory_space<vmem>>, %arg2: memref<1x4096xf32, #tpu.memory_space<vmem>>, %arg3: memref<16x3x256xbf16, #tpu.memory_space<vmem>>, %arg4: memref<1x1x256xf32, #tpu.memory_space<vmem>>, %arg5: memref<8x4096xbf16, #tpu.memory_space<vmem>>, %arg6: memref<16x8x256xbf16, #tpu.memory_space<vmem>>, %arg7: memref<1x8xf32, #tpu.memory_space<vmem>>, %arg8: memref<2x8xf32, #tpu.memory_space<vmem>>) attributes {dimension_semantics = [], scalar_prefetch = 0 : i64, scratch_operands = 0 : i64, tpu.core_type = #tpu.core_type<tc>} {
    %c0 = arith.constant 0 : index
    %c0_0 = arith.constant 0 : index
    %c0_1 = arith.constant 0 : index
    %c0_2 = arith.constant 0 : index
    %0 = vector.load %arg0[%c0, %c0_0, %c0_1, %c0_2] : memref<16x2x3x256xf32, #tpu.memory_space<vmem>>, vector<16x2x3x256xf32>
    %cst = arith.constant dense<0.000000e+00> : vector<16x2x3xf32>
    %1 = vector.multi_reduction <add>, %0, %cst [3] : vector<16x2x3x256xf32> to vector<16x2x3xf32>
    %c0_3 = arith.constant 0 : index
    %c0_4 = arith.constant 0 : index
    %c0_5 = arith.constant 0 : index
    %2 = vector.load %arg1[%c0_3, %c0_4, %c0_5] : memref<16x3x4096xbf16, #tpu.memory_space<vmem>>, vector<16x3x4096xbf16>
    "tpu.trace_start"() <{level = 10 : i32, message = "tbc,tcj->tbj"}> : () -> ()
    %cst_6 = arith.constant dense<0.000000e+00> : vector<16x2x4096xf32>
    %3 = tpu.matmul %1, %2, %cst_6 {dimension_numbers = #tpu.dot_dimension_numbers<[2], [1], [1], [2], [0, 0, 0, 1, 1, 2], [0], [0]>} : vector<16x2x3xf32>, vector<16x3x4096xbf16>, vector<16x2x4096xf32> -> vector<16x2x4096xf32>
    "tpu.trace_stop"() : () -> ()
    %cst_7 = arith.constant dense<0.000000e+00> : vector<2x4096xf32>
    %4 = vector.multi_reduction <add>, %3, %cst_7 [0] : vector<16x2x4096xf32> to vector<2x4096xf32>
    %c0_8 = arith.constant 0 : index
    %c0_9 = arith.constant 0 : index
    %5 = vector.load %arg2[%c0_8, %c0_9] : memref<1x4096xf32, #tpu.memory_space<vmem>>, vector<1x4096xf32>
    %6 = vector.broadcast %5 : vector<1x4096xf32> to vector<2x4096xf32>
    %7 = arith.addf %4, %6 : vector<2x4096xf32>
    %cst_10 = arith.constant 0.000000e+00 : f32
    %8 = vector.broadcast %cst_10 : f32 to vector<2x4096xf32>
    %9 = arith.maximumf %7, %8 : vector<2x4096xf32>
    %c0_11 = arith.constant 0 : index
    %c0_12 = arith.constant 0 : index
    %c0_13 = arith.constant 0 : index
    %10 = vector.load %arg3[%c0_11, %c0_12, %c0_13] : memref<16x3x256xbf16, #tpu.memory_space<vmem>>, vector<16x3x256xbf16>
    "tpu.trace_start"() <{level = 10 : i32, message = "tbc,tch->tbh"}> : () -> ()
    %cst_14 = arith.constant dense<0.000000e+00> : vector<16x2x256xf32>
    %11 = tpu.matmul %1, %10, %cst_14 {dimension_numbers = #tpu.dot_dimension_numbers<[2], [1], [1], [2], [0, 0, 0, 1, 1, 2], [0], [0]>} : vector<16x2x3xf32>, vector<16x3x256xbf16>, vector<16x2x256xf32> -> vector<16x2x256xf32>
    "tpu.trace_stop"() : () -> ()
    %c0_15 = arith.constant 0 : index
    %c0_16 = arith.constant 0 : index
    %c0_17 = arith.constant 0 : index
    %12 = vector.load %arg4[%c0_15, %c0_16, %c0_17] : memref<1x1x256xf32, #tpu.memory_space<vmem>>, vector<1x1x256xf32>
    %13 = vector.broadcast %12 : vector<1x1x256xf32> to vector<16x2x256xf32>
    %14 = arith.addf %11, %13 : vector<16x2x256xf32>
    %15 = math.tanh %14 : vector<16x2x256xf32>
    %c0_18 = arith.constant 0 : index
    %c0_19 = arith.constant 0 : index
    %16 = vector.load %arg5[%c0_18, %c0_19] : memref<8x4096xbf16, #tpu.memory_space<vmem>>, vector<8x4096xbf16>
    "tpu.trace_start"() <{level = 10 : i32, message = "bj,oj->bo"}> : () -> ()
    %cst_20 = arith.constant dense<0.000000e+00> : vector<2x8xf32>
    %17 = tpu.matmul %9, %16, %cst_20 {dimension_numbers = #tpu.dot_dimension_numbers<[1], [1], [0], [0], [0, 0, 1, 0], [], []>} : vector<2x4096xf32>, vector<8x4096xbf16>, vector<2x8xf32> -> vector<2x8xf32>
    "tpu.trace_stop"() : () -> ()
    %c0_21 = arith.constant 0 : index
    %c0_22 = arith.constant 0 : index
    %c0_23 = arith.constant 0 : index
    %18 = vector.load %arg6[%c0_21, %c0_22, %c0_23] : memref<16x8x256xbf16, #tpu.memory_space<vmem>>, vector<16x8x256xbf16>
    "tpu.trace_start"() <{level = 10 : i32, message = "tbh,toh->tbo"}> : () -> ()
    %cst_24 = arith.constant dense<0.000000e+00> : vector<16x2x8xf32>
    %19 = tpu.matmul %15, %18, %cst_24 {dimension_numbers = #tpu.dot_dimension_numbers<[2], [2], [1], [1], [0, 0, 0, 1, 1, 1], [0], [0]>} : vector<16x2x256xf32>, vector<16x8x256xbf16>, vector<16x2x8xf32> -> vector<16x2x8xf32>
    "tpu.trace_stop"() : () -> ()
    %cst_25 = arith.constant dense<0.000000e+00> : vector<2x8xf32>
    %20 = vector.multi_reduction <add>, %19, %cst_25 [0] : vector<16x2x8xf32> to vector<2x8xf32>
    %21 = arith.addf %17, %20 : vector<2x8xf32>
    %c0_26 = arith.constant 0 : index
    %c0_27 = arith.constant 0 : index
    %22 = vector.load %arg7[%c0_26, %c0_27] : memref<1x8xf32, #tpu.memory_space<vmem>>, vector<1x8xf32>
    %23 = vector.broadcast %22 : vector<1x8xf32> to vector<2x8xf32>
    %24 = arith.addf %21, %23 : vector<2x8xf32>
    %c0_28 = arith.constant 0 : index
    %c0_29 = arith.constant 0 : index
    %25 = vector.load %arg8[%c0_28, %c0_29] : memref<2x8xf32, #tpu.memory_space<vmem>>, vector<2x8xf32>
    tpu.vector_store %arg8[%c0_28, %c0_29], %24 {strides = array<i32>} : memref<2x8xf32, #tpu.memory_space<vmem>>, vector<2x8xf32>,
    return
  }
}

</mosaic_0001>

<llo_original>
// kernel: tpu_custom_call.1
$region0: #{tpu_custom_call.1}
  #allocation0 [shape = 'u32[]', space=smem, size = 0x4, offset = 0x4, fixed_abs, tag = 'smem constant byte address 0x4 - core index']
  #allocation1 [shape = 'u32[72,128]{1,0:T(1,128)}', space=vmem, size = 0x9000, scoped, tag = 'internal scratch']
  %s0 = inlined_call_operand.vmem [shape: f32[16,2,3,256], index: 0, kind: input, shape index: {}]
  %s1 = inlined_call_operand.vmem [shape: bf16[16,3,4096], index: 1, kind: input, shape index: {}]
  %s2 = inlined_call_operand.vmem [shape: f32[1,4096], index: 2, kind: input, shape index: {}]
  %s3 = inlined_call_operand.vmem [shape: bf16[16,3,256], index: 3, kind: input, shape index: {}]
  %s4 = inlined_call_operand.vmem [shape: f32[1,1,256], index: 4, kind: input, shape index: {}]
  %s5 = inlined_call_operand.vmem [shape: bf16[8,4096], index: 5, kind: input, shape index: {}]
  %s6 = inlined_call_operand.vmem [shape: bf16[16,8,256], index: 6, kind: input, shape index: {}]
  %s7 = inlined_call_operand.vmem [shape: f32[1,8], index: 7, kind: input, shape index: {}]
  %s8 = inlined_call_operand.hbm [shape: f32[2,8], index: 8, kind: output, shape index: {}]
  %s9 = sld [smem:[#allocation0]]
  $region42: #{tpu_custom_call.1} parent=0
    _
  %s11 = ssub.s32 1, %s9
  %s12 = scalar_select 0, %s11, %s9
  $region1: #{tpu_custom_call.1} parent=0
    #allocation2 [shape = 'u8[1024]{0}', space=vmem, size = 0x400, scoped, tag = 'output window, operand 0, single buffered']
    #allocation3 [shape = 's32[1]{0}', space=sflag, size = 0x4, scoped, tag = 'scoped memory for tpu_custom_call.1']
    %13 = vsyncpa [#allocation3], 0
    // Predicated region
    $region2: #{tpu_custom_call.1} parent=1 // pred_check
      _
    $region3: #{tpu_custom_call.1} parent=1 // pred_check_branch
      %15 = sbr.rel (0) target = $region5
    $region4: #{tpu_custom_call.1} parent=1 // pred_region
      _
    $region5: #{tpu_custom_call.1} parent=1 // pred_fallthru
      _
    // Predicated region
    $region6: #{tpu_custom_call.1} parent=1 // pred_check
      _
    $region7: #{tpu_custom_call.1} parent=1 // pred_check_branch
      %17 = sbr.rel (0) target = $region9
    $region8: #{tpu_custom_call.1} parent=1 // pred_region
      _
    $region9: #{tpu_custom_call.1} parent=1 // pred_fallthru
      _
    // Predicated region
    $region10: #{tpu_custom_call.1} parent=1 // pred_check
      _
    $region11: #{tpu_custom_call.1} parent=1 // pred_check_branch
      %19 = sbr.rel (0) target = $region13
    $region12: #{tpu_custom_call.1} parent=1 // pred_region
      _
    $region13: #{tpu_custom_call.1} parent=1 // pred_fallthru
      _
    // Predicated region
    $region14: #{tpu_custom_call.1} parent=1 // pred_check
      _
    $region15: #{tpu_custom_call.1} parent=1 // pred_check_branch
      %21 = sbr.rel (0) target = $region17
    $region16: #{tpu_custom_call.1} parent=1 // pred_region
      _
    $region17: #{tpu_custom_call.1} parent=1 // pred_fallthru
      _
    // Predicated region
    $region18: #{tpu_custom_call.1} parent=1 // pred_check
      _
    $region19: #{tpu_custom_call.1} parent=1 // pred_check_branch
      %23 = sbr.rel (0) target = $region21
    $region20: #{tpu_custom_call.1} parent=1 // pred_region
      _
    $region21: #{tpu_custom_call.1} parent=1 // pred_fallthru
      _
    // Predicated region
    $region22: #{tpu_custom_call.1} parent=1 // pred_check
      _
    $region23: #{tpu_custom_call.1} parent=1 // pred_check_branch
      %25 = sbr.rel (0) target = $region25
    $region24: #{tpu_custom_call.1} parent=1 // pred_region
      _
    $region25: #{tpu_custom_call.1} parent=1 // pred_fallthru
      _
    // Predicated region
    $region26: #{tpu_custom_call.1} parent=1 // pred_check
      _
    $region27: #{tpu_custom_call.1} parent=1 // pred_check_branch
      %27 = sbr.rel (0) target = $region29
    $region28: #{tpu_custom_call.1} parent=1 // pred_region
      _
    $region29: #{tpu_custom_call.1} parent=1 // pred_fallthru
      _
    // Predicated region
    $region30: #{tpu_custom_call.1} parent=1 // pred_check
      _
    $region31: #{tpu_custom_call.1} parent=1 // pred_check_branch
      %29 = sbr.rel (0) target = $region33
    $region32: #{tpu_custom_call.1} parent=1 // pred_region
      _
    $region33: #{tpu_custom_call.1} parent=1 // pred_fallthru
      _
    %v31 = vld [vmem:[%s0] sm:$0x77]
    %v32 = vld [vmem:[%s0 + $0x8] sm:$0x77]
    %v33 = vld [vmem:[%s0 + $0x10] sm:$0x77]
    %v34 = vld [vmem:[%s0 + $0x18] sm:$0x77]
    %v35 = vld [vmem:[%s0 + $0x20] sm:$0x77]
    %v36 = vld [vmem:[%s0 + $0x28] sm:$0x77]
    %v37 = vld [vmem:[%s0 + $0x30] sm:$0x77]
    %v38 = vld [vmem:[%s0 + $0x38] sm:$0x77]
    %v39 = vld [vmem:[%s0 + $0x40] sm:$0x77]
    %v40 = vld [vmem:[%s0 + $0x48] sm:$0x77]
    %v41 = vld [vmem:[%s0 + $0x50] sm:$0x77]
    %v42 = vld [vmem:[%s0 + $0x58] sm:$0x77]
    %v43 = vld [vmem:[%s0 + $0x60] sm:$0x77]
    %v44 = vld [vmem:[%s0 + $0x68] sm:$0x77]
    %v45 = vld [vmem:[%s0 + $0x70] sm:$0x77]
    %v46 = vld [vmem:[%s0 + $0x78] sm:$0x77]
    %v47 = vld [vmem:[%s0 + $0x80] sm:$0x77]
    %v48 = vld [vmem:[%s0 + $0x88] sm:$0x77]
    %v49 = vld [vmem:[%s0 + $0x90] sm:$0x77]
    %v50 = vld [vmem:[%s0 + $0x98] sm:$0x77]
    %v51 = vld [vmem:[%s0 + $0xa0] sm:$0x77]
    %v52 = vld [vmem:[%s0 + $0xa8] sm:$0x77]
    %v53 = vld [vmem:[%s0 + $0xb0] sm:$0x77]
    %v54 = vld [vmem:[%s0 + $0xb8] sm:$0x77]
    %v55 = vld [vmem:[%s0 + $0xc0] sm:$0x77]
    %v56 = vld [vmem:[%s0 + $0xc8] sm:$0x77]
    %v57 = vld [vmem:[%s0 + $0xd0] sm:$0x77]
    %v58 = vld [vmem:[%s0 + $0xd8] sm:$0x77]
    %v59 = vld [vmem:[%s0 + $0xe0] sm:$0x77]
    %v60 = vld [vmem:[%s0 + $0xe8] sm:$0x77]
    %v61 = vld [vmem:[%s0 + $0xf0] sm:$0x77]
    %v62 = vld [vmem:[%s0 + $0xf8] sm:$0x77]
    %95 = vst [vmem:[#allocation1] ss:$2 sm:$0xff] %v31
    %v96 = vld.sshfl [vmem:[#allocation1] sm:$0xff pattern:$0x75316420]
    %v97 = vld.sshfl [vmem:[#allocation1 + $0x8] sm:$0xff pattern:$0x75316420]
    %s98 = scalar_lea.vmem [#allocation1], 16
    %99 = vst [vmem:[%s98] ss:$2 sm:$0xff] %v32
    %v100 = vld.sshfl [vmem:[#allocation1 + $0x10] sm:$0xff pattern:$0x75316420]
    %v101 = vld.sshfl [vmem:[#allocation1 + $0x18] sm:$0xff pattern:$0x75316420]
    %s102 = scalar_lea.vmem [#allocation1], 32
    %103 = vst [vmem:[%s102] ss:$2 sm:$0xff] %v33
    %v104 = vld.sshfl [vmem:[#allocation1 + $0x20] sm:$0xff pattern:$0x75316420]
    %v105 = vld.sshfl [vmem:[#allocation1 + $0x28] sm:$0xff pattern:$0x75316420]
    %s106 = scalar_lea.vmem [#allocation1], 48
    %107 = vst [vmem:[%s106] ss:$2 sm:$0xff] %v34
    %v108 = vld.sshfl [vmem:[#allocation1 + $0x30] sm:$0xff pattern:$0x75316420]
    %v109 = vld.sshfl [vmem:[#allocation1 + $0x38] sm:$0xff pattern:$0x75316420]
    %110 = vst [vmem:[#allocation1] ss:$2 sm:$0xff] %v35
    %v111 = vld.sshfl [vmem:[#allocation1] sm:$0xff pattern:$0x75316420]
    %v112 = vld.sshfl [vmem:[#allocation1 + $0x8] sm:$0xff pattern:$0x75316420]
    %113 = vst [vmem:[%s98] ss:$2 sm:$0xff] %v36
    %v114 = vld.sshfl [vmem:[#allocation1 + $0x10] sm:$0xff pattern:$0x75316420]
    %v115 = vld.sshfl [vmem:[#allocation1 + $0x18] sm:$0xff pattern:$0x75316420]
    %116 = vst [vmem:[%s102] ss:$2 sm:$0xff] %v37
    %v117 = vld.sshfl [vmem:[#allocation1 + $0x20] sm:$0xff pattern:$0x75316420]
    %v118 = vld.sshfl [vmem:[#allocation1 + $0x28] sm:$0xff pattern:$0x75316420]
    %119 = vst [vmem:[%s106] ss:$2 sm:$0xff] %v38
    %v120 = vld.sshfl [vmem:[#allocation1 + $0x30] sm:$0xff pattern:$0x75316420]
    %v121 = vld.sshfl [vmem:[#allocation1 + $0x38] sm:$0xff pattern:$0x75316420]
    %122 = vst [vmem:[#allocation1] ss:$2 sm:$0xff] %v39
    %v123 = vld.sshfl [vmem:[#allocation1] sm:$0xff pattern:$0x75316420]
    %v124 = vld.sshfl [vmem:[#allocation1 + $0x8] sm:$0xff pattern:$0x75316420]
    %125 = vst [vmem:[%s98] ss:$2 sm:$0xff] %v40
    %v126 = vld.sshfl [vmem:[#allocation1 + $0x10] sm:$0xff pattern:$0x75316420]
    %v127 = vld.sshfl [vmem:[#allocation1 + $0x18] sm:$0xff pattern:$0x75316420]
    %128 = vst [vmem:[%s102] ss:$2 sm:$0xff] %v41
    %v129 = vld.sshfl [vmem:[#allocation1 + $0x20] sm:$0xff pattern:$0x75316420]
    %v130 = vld.sshfl [vmem:[#allocation1 + $0x28] sm:$0xff pattern:$0x75316420]
    %131 = vst [vmem:[%s106] ss:$2 sm:$0xff] %v42
    %v132 = vld.sshfl [vmem:[#allocation1 + $0x30] sm:$0xff pattern:$0x75316420]
    %v133 = vld.sshfl [vmem:[#allocation1 + $0x38] sm:$0xff pattern:$0x75316420]
    %134 = vst [vmem:[#allocation1] ss:$2 sm:$0xff] %v43
    %v135 = vld.sshfl [vmem:[#allocation1] sm:$0xff pattern:$0x75316420]
    %v136 = vld.sshfl [vmem:[#allocation1 + $0x8] sm:$0xff pattern:$0x75316420]
    %137 = vst [vmem:[%s98] ss:$2 sm:$0xff] %v44
    %v138 = vld.sshfl [vmem:[#allocation1 + $0x10] sm:$0xff pattern:$0x75316420]
    %v139 = vld.sshfl [vmem:[#allocation1 + $0x18] sm:$0xff pattern:$0x75316420]
    %140 = vst [vmem:[%s102] ss:$2 sm:$0xff] %v45
    %v141 = vld.sshfl [vmem:[#allocation1 + $0x20] sm:$0xff pattern:$0x75316420]
    %v142 = vld.sshfl [vmem:[#allocation1 + $0x28] sm:$0xff pattern:$0x75316420]
    %143 = vst [vmem:[%s106] ss:$2 sm:$0xff] %v46
    %v144 = vld.sshfl [vmem:[#allocation1 + $0x30] sm:$0xff pattern:$0x75316420]
    %v145 = vld.sshfl [vmem:[#allocation1 + $0x38] sm:$0xff pattern:$0x75316420]
    %146 = vst [vmem:[#allocation1] ss:$2 sm:$0xff] %v47
    %v147 = vld.sshfl [vmem:[#allocation1] sm:$0xff pattern:$0x75316420]
    %v148 = vld.sshfl [vmem:[#allocation1 + $0x8] sm:$0xff pattern:$0x75316420]
    %149 = vst [vmem:[%s98] ss:$2 sm:$0xff] %v48
    %v150 = vld.sshfl [vmem:[#allocation1 + $0x10] sm:$0xff pattern:$0x75316420]
    %v151 = vld.sshfl [vmem:[#allocation1 + $0x18] sm:$0xff pattern:$0x75316420]
    %152 = vst [vmem:[%s102] ss:$2 sm:$0xff] %v49
    %v153 = vld.sshfl [vmem:[#allocation1 + $0x20] sm:$0xff pattern:$0x75316420]
    %v154 = vld.sshfl [vmem:[#allocation1 + $0x28] sm:$0xff pattern:$0x75316420]
    %155 = vst [vmem:[%s106] ss:$2 sm:$0xff] %v50
    %v156 = vld.sshfl [vmem:[#allocation1 + $0x30] sm:$0xff pattern:$0x75316420]
    %v157 = vld.sshfl [vmem:[#allocation1 + $0x38] sm:$0xff pattern:$0x75316420]
    %158 = vst [vmem:[#allocation1] ss:$2 sm:$0xff] %v51
    %v159 = vld.sshfl [vmem:[#allocation1] sm:$0xff pattern:$0x75316420]
    %v160 = vld.sshfl [vmem:[#allocation1 + $0x8] sm:$0xff pattern:$0x75316420]
    %161 = vst [vmem:[%s98] ss:$2 sm:$0xff] %v52
    %v162 = vld.sshfl [vmem:[#allocation1 + $0x10] sm:$0xff pattern:$0x75316420]
    %v163 = vld.sshfl [vmem:[#allocation1 + $0x18] sm:$0xff pattern:$0x75316420]
    %164 = vst [vmem:[%s102] ss:$2 sm:$0xff] %v53
    %v165 = vld.sshfl [vmem:[#allocation1 + $0x20] sm:$0xff pattern:$0x75316420]
    %v166 = vld.sshfl [vmem:[#allocation1 + $0x28] sm:$0xff pattern:$0x75316420]
    %167 = vst [vmem:[%s106] ss:$2 sm:$0xff] %v54
    %v168 = vld.sshfl [vmem:[#allocation1 + $0x30] sm:$0xff pattern:$0x75316420]
    %v169 = vld.sshfl [vmem:[#allocation1 + $0x38] sm:$0xff pattern:$0x75316420]
    %170 = vst [vmem:[#allocation1] ss:$2 sm:$0xff] %v55
    %v171 = vld.sshfl [vmem:[#allocation1] sm:$0xff pattern:$0x75316420]
    %v172 = vld.sshfl [vmem:[#allocation1 + $0x8] sm:$0xff pattern:$0x75316420]
    %173 = vst [vmem:[%s98] ss:$2 sm:$0xff] %v56
    %v174 = vld.sshfl [vmem:[#allocation1 + $0x10] sm:$0xff pattern:$0x75316420]
    %v175 = vld.sshfl [vmem:[#allocation1 + $0x18] sm:$0xff pattern:$0x75316420]
    %176 = vst [vmem:[%s102] ss:$2 sm:$0xff] %v57
    %v177 = vld.sshfl [vmem:[#allocation1 + $0x20] sm:$0xff pattern:$0x75316420]
    %v178 = vld.sshfl [vmem:[#allocation1 + $0x28] sm:$0xff pattern:$0x75316420]
    %179 = vst [vmem:[%s106] ss:$2 sm:$0xff] %v58
    %v180 = vld.sshfl [vmem:[#allocation1 + $0x30] sm:$0xff pattern:$0x75316420]
    %v181 = vld.sshfl [vmem:[#allocation1 + $0x38] sm:$0xff pattern:$0x75316420]
    %182 = vst [vmem:[#allocation1] ss:$2 sm:$0xff] %v59
    %v183 = vld.sshfl [vmem:[#allocation1] sm:$0xff pattern:$0x75316420]
    %v184 = vld.sshfl [vmem:[#allocation1 + $0x8] sm:$0xff pattern:$0x75316420]
    %185 = vst [vmem:[%s98] ss:$2 sm:$0xff] %v60
    %v186 = vld.sshfl [vmem:[#allocation1 + $0x10] sm:$0xff pattern:$0x75316420]
    %v187 = vld.sshfl [vmem:[#allocation1 + $0x18] sm:$0xff pattern:$0x75316420]
    %188 = vst [vmem:[%s102] ss:$2 sm:$0xff] %v61
    %v189 = vld.sshfl [vmem:[#allocation1 + $0x20] sm:$0xff pattern:$0x75316420]
    %v190 = vld.sshfl [vmem:[#allocation1 + $0x28] sm:$0xff pattern:$0x75316420]
    %191 = vst [vmem:[%s106] ss:$2 sm:$0xff] %v62
    %v192 = vld.sshfl [vmem:[#allocation1 + $0x30] sm:$0xff pattern:$0x75316420]
    %v193 = vld.sshfl [vmem:[#allocation1 + $0x38] sm:$0xff pattern:$0x75316420]
    %vm258 = vcmask 1042432
    %v259 = vsel %vm258, %v96, 0.0
    %v260 = vsel %vm258, %v97, 0.0
    %v261 = vadd.f32 %v259, %v260
    %262 = vadd.xlane.f32.xlu0 %v261
    %v263 = vpop.xlane.xlu0 %262
    %v264 = vsel %vm258, %v100, 0.0
    %v265 = vsel %vm258, %v101, 0.0
    %v266 = vadd.f32 %v264, %v265
    %267 = vadd.xlane.f32.xlu0 %v266
    %v268 = vpop.xlane.xlu0 %267
    %v269 = vsel %vm258, %v104, 0.0
    %v270 = vsel %vm258, %v105, 0.0
    %v271 = vadd.f32 %v269, %v270
    %272 = vadd.xlane.f32.xlu0 %v271
    %v273 = vpop.xlane.xlu0 %272
    %v274 = vsel %vm258, %v108, 0.0
    %v275 = vsel %vm258, %v109, 0.0
    %v276 = vadd.f32 %v274, %v275
    %277 = vadd.xlane.f32.xlu0 %v276
    %v278 = vpop.xlane.xlu0 %277
    %v279 = vsel %vm258, %v111, 0.0
    %v280 = vsel %vm258, %v112, 0.0
    %v281 = vadd.f32 %v279, %v280
    %282 = vadd.xlane.f32.xlu0 %v281
    %v283 = vpop.xlane.xlu0 %282
    %v284 = vsel %vm258, %v114, 0.0
    %v285 = vsel %vm258, %v115, 0.0
    %v286 = vadd.f32 %v284, %v285
    %287 = vadd.xlane.f32.xlu0 %v286
    %v288 = vpop.xlane.xlu0 %287
    %v289 = vsel %vm258, %v117, 0.0
    %v290 = vsel %vm258, %v118, 0.0
    %v291 = vadd.f32 %v289, %v290
    %292 = vadd.xlane.f32.xlu0 %v291
    %v293 = vpop.xlane.xlu0 %292
    %v294 = vsel %vm258, %v120, 0.0
    %v295 = vsel %vm258, %v121, 0.0
    %v296 = vadd.f32 %v294, %v295
    %297 = vadd.xlane.f32.xlu0 %v296
    %v298 = vpop.xlane.xlu0 %297
    %v299 = vsel %vm258, %v123, 0.0
    %v300 = vsel %vm258, %v124, 0.0
    %v301 = vadd.f32 %v299, %v300
    %302 = vadd.xlane.f32.xlu0 %v301
    %v303 = vpop.xlane.xlu0 %302
    %v304 = vsel %vm258, %v126, 0.0
    %v305 = vsel %vm258, %v127, 0.0
    %v306 = vadd.f32 %v304, %v305
    %307 = vadd.xlane.f32.xlu0 %v306
    %v308 = vpop.xlane.xlu0 %307
    %v309 = vsel %vm258, %v129, 0.0
    %v310 = vsel %vm258, %v130, 0.0
    %v311 = vadd.f32 %v309, %v310
    %312 = vadd.xlane.f32.xlu0 %v311
    %v313 = vpop.xlane.xlu0 %312
    %v314 = vsel %vm258, %v132, 0.0
    %v315 = vsel %vm258, %v133, 0.0
    %v316 = vadd.f32 %v314, %v315
    %317 = vadd.xlane.f32.xlu0 %v316
    %v318 = vpop.xlane.xlu0 %317
    %v319 = vsel %vm258, %v135, 0.0
    %v320 = vsel %vm258, %v136, 0.0
    %v321 = vadd.f32 %v319, %v320
    %322 = vadd.xlane.f32.xlu0 %v321
    %v323 = vpop.xlane.xlu0 %322
    %v324 = vsel %vm258, %v138, 0.0
    %v325 = vsel %vm258, %v139, 0.0
    %v326 = vadd.f32 %v324, %v325
    %327 = vadd.xlane.f32.xlu0 %v326
    %v328 = vpop.xlane.xlu0 %327
    %v329 = vsel %vm258, %v141, 0.0
    %v330 = vsel %vm258, %v142, 0.0
    %v331 = vadd.f32 %v329, %v330
    %332 = vadd.xlane.f32.xlu0 %v331
    %v333 = vpop.xlane.xlu0 %332
    %v334 = vsel %vm258, %v144, 0.0
    %v335 = vsel %vm258, %v145, 0.0
    %v336 = vadd.f32 %v334, %v335
    %337 = vadd.xlane.f32.xlu0 %v336
    %v338 = vpop.xlane.xlu0 %337
    %v339 = vsel %vm258, %v147, 0.0
    %v340 = vsel %vm258, %v148, 0.0
    %v341 = vadd.f32 %v339, %v340
    %342 = vadd.xlane.f32.xlu0 %v341
    %v343 = vpop.xlane.xlu0 %342
    %v344 = vsel %vm258, %v150, 0.0
    %v345 = vsel %vm258, %v151, 0.0
    %v346 = vadd.f32 %v344, %v345
    %347 = vadd.xlane.f32.xlu0 %v346
    %v348 = vpop.xlane.xlu0 %347
    %v349 = vsel %vm258, %v153, 0.0
    %v350 = vsel %vm258, %v154, 0.0
    %v351 = vadd.f32 %v349, %v350
    %352 = vadd.xlane.f32.xlu0 %v351
    %v353 = vpop.xlane.xlu0 %352
    %v354 = vsel %vm258, %v156, 0.0
    %v355 = vsel %vm258, %v157, 0.0
    %v356 = vadd.f32 %v354, %v355
    %357 = vadd.xlane.f32.xlu0 %v356
    %v358 = vpop.xlane.xlu0 %357
    %v359 = vsel %vm258, %v159, 0.0
    %v360 = vsel %vm258, %v160, 0.0
    %v361 = vadd.f32 %v359, %v360
    %362 = vadd.xlane.f32.xlu0 %v361
    %v363 = vpop.xlane.xlu0 %362
    %v364 = vsel %vm258, %v162, 0.0
    %v365 = vsel %vm258, %v163, 0.0
    %v366 = vadd.f32 %v364, %v365
    %367 = vadd.xlane.f32.xlu0 %v366
    %v368 = vpop.xlane.xlu0 %367
    %v369 = vsel %vm258, %v165, 0.0
    %v370 = vsel %vm258, %v166, 0.0
    %v371 = vadd.f32 %v369, %v370
    %372 = vadd.xlane.f32.xlu0 %v371
    %v373 = vpop.xlane.xlu0 %372
    %v374 = vsel %vm258, %v168, 0.0
    %v375 = vsel %vm258, %v169, 0.0
    %v376 = vadd.f32 %v374, %v375
    %377 = vadd.xlane.f32.xlu0 %v376
    %v378 = vpop.xlane.xlu0 %377
    %v379 = vsel %vm258, %v171, 0.0
    %v380 = vsel %vm258, %v172, 0.0
    %v381 = vadd.f32 %v379, %v380
    %382 = vadd.xlane.f32.xlu0 %v381
    %v383 = vpop.xlane.xlu0 %382
    %v384 = vsel %vm258, %v174, 0.0
    %v385 = vsel %vm258, %v175, 0.0
    %v386 = vadd.f32 %v384, %v385
    %387 = vadd.xlane.f32.xlu0 %v386
    %v388 = vpop.xlane.xlu0 %387
    %v389 = vsel %vm258, %v177, 0.0
    %v390 = vsel %vm258, %v178, 0.0
    %v391 = vadd.f32 %v389, %v390
    %392 = vadd.xlane.f32.xlu0 %v391
    %v393 = vpop.xlane.xlu0 %392
    %v394 = vsel %vm258, %v180, 0.0
    %v395 = vsel %vm258, %v181, 0.0
    %v396 = vadd.f32 %v394, %v395
    %397 = vadd.xlane.f32.xlu0 %v396
    %v398 = vpop.xlane.xlu0 %397
    %v399 = vsel %vm258, %v183, 0.0
    %v400 = vsel %vm258, %v184, 0.0
    %v401 = vadd.f32 %v399, %v400
    %402 = vadd.xlane.f32.xlu0 %v401
    %v403 = vpop.xlane.xlu0 %402
    %v404 = vsel %vm258, %v186, 0.0
    %v405 = vsel %vm258, %v187, 0.0
    %v406 = vadd.f32 %v404, %v405
    %407 = vadd.xlane.f32.xlu0 %v406
    %v408 = vpop.xlane.xlu0 %407
    %v409 = vsel %vm258, %v189, 0.0
    %v410 = vsel %vm258, %v190, 0.0
    %v411 = vadd.f32 %v409, %v410
    %412 = vadd.xlane.f32.xlu0 %v411
    %v413 = vpop.xlane.xlu0 %412
    %v414 = vsel %vm258, %v192, 0.0
    %v415 = vsel %vm258, %v193, 0.0
    %v416 = vadd.f32 %v414, %v415
    %417 = vadd.xlane.f32.xlu0 %v416
    %v418 = vpop.xlane.xlu0 %417
    %v419 = vld [vmem:[%s1] sm:$0xff]
    %v420 = vld [vmem:[%s1 + $0x8] sm:$0xff]
    %v421 = vld [vmem:[%s1 + $0x10] sm:$0xff]
    %v422 = vld [vmem:[%s1 + $0x18] sm:$0xff]
    %v423 = vld [vmem:[%s1 + $0x20] sm:$0xff]
    %v424 = vld [vmem:[%s1 + $0x28] sm:$0xff]
    %v425 = vld [vmem:[%s1 + $0x30] sm:$0xff]
    %v426 = vld [vmem:[%s1 + $0x38] sm:$0xff]
    %v427 = vld [vmem:[%s1 + $0x40] sm:$0xff]
    %v428 = vld [vmem:[%s1 + $0x48] sm:$0xff]
    %v429 = vld [vmem:[%s1 + $0x50] sm:$0xff]
    %v430 = vld [vmem:[%s1 + $0x58] sm:$0xff]
    %v431 = vld [vmem:[%s1 + $0x60] sm:$0xff]
    %v432 = vld [vmem:[%s1 + $0x68] sm:$0xff]
    %v433 = vld [vmem:[%s1 + $0x70] sm:$0xff]
    %v434 = vld [vmem:[%s1 + $0x78] sm:$0xff]
    %v435 = vld [vmem:[%s1 + $0x80] sm:$0xff]
    %v436 = vld [vmem:[%s1 + $0x88] sm:$0xff]
    %v437 = vld [vmem:[%s1 + $0x90] sm:$0xff]
    %v438 = vld [vmem:[%s1 + $0x98] sm:$0xff]
    %v439 = vld [vmem:[%s1 + $0xa0] sm:$0xff]
    %v440 = vld [vmem:[%s1 + $0xa8] sm:$0xff]
    %v441 = vld [vmem:[%s1 + $0xb0] sm:$0xff]
    %v442 = vld [vmem:[%s1 + $0xb8] sm:$0xff]
    %v443 = vld [vmem:[%s1 + $0xc0] sm:$0xff]
    %v444 = vld [vmem:[%s1 + $0xc8] sm:$0xff]
    %v445 = vld [vmem:[%s1 + $0xd0] sm:$0xff]
    %v446 = vld [vmem:[%s1 + $0xd8] sm:$0xff]
    %v447 = vld [vmem:[%s1 + $0xe0] sm:$0xff]
    %v448 = vld [vmem:[%s1 + $0xe8] sm:$0xff]
    %v449 = vld [vmem:[%s1 + $0xf0] sm:$0xff]
    %v450 = vld [vmem:[%s1 + $0xf8] sm:$0xff]
    %v451 = vld [vmem:[%s1 + $0x100] sm:$0xff]
    %v452 = vld [vmem:[%s1 + $0x108] sm:$0xff]
    %v453 = vld [vmem:[%s1 + $0x110] sm:$0xff]
    %v454 = vld [vmem:[%s1 + $0x118] sm:$0xff]
    %v455 = vld [vmem:[%s1 + $0x120] sm:$0xff]
    %v456 = vld [vmem:[%s1 + $0x128] sm:$0xff]
    %v457 = vld [vmem:[%s1 + $0x130] sm:$0xff]
    %v458 = vld [vmem:[%s1 + $0x138] sm:$0xff]
    %v459 = vld [vmem:[%s1 + $0x140] sm:$0xff]
    %v460 = vld [vmem:[%s1 + $0x148] sm:$0xff]
    %v461 = vld [vmem:[%s1 + $0x150] sm:$0xff]
    %v462 = vld [vmem:[%s1 + $0x158] sm:$0xff]
    %v463 = vld [vmem:[%s1 + $0x160] sm:$0xff]
    %v464 = vld [vmem:[%s1 + $0x168] sm:$0xff]
    %v465 = vld [vmem:[%s1 + $0x170] sm:$0xff]
    %v466 = vld [vmem:[%s1 + $0x178] sm:$0xff]
    %v467 = vld [vmem:[%s1 + $0x180] sm:$0xff]
    %v468 = vld [vmem:[%s1 + $0x188] sm:$0xff]
    %v469 = vld [vmem:[%s1 + $0x190] sm:$0xff]
    %v470 = vld [vmem:[%s1 + $0x198] sm:$0xff]
    %v471 = vld [vmem:[%s1 + $0x1a0] sm:$0xff]
    %v472 = vld [vmem:[%s1 + $0x1a8] sm:$0xff]
    %v473 = vld [vmem:[%s1 + $0x1b0] sm:$0xff]
    %v474 = vld [vmem:[%s1 + $0x1b8] sm:$0xff]
    %v475 = vld [vmem:[%s1 + $0x1c0] sm:$0xff]
    %v476 = vld [vmem:[%s1 + $0x1c8] sm:$0xff]
    %v477 = vld [vmem:[%s1 + $0x1d0] sm:$0xff]
    %v478 = vld [vmem:[%s1 + $0x1d8] sm:$0xff]
    %v479 = vld [vmem:[%s1 + $0x1e0] sm:$0xff]
    %v480 = vld [vmem:[%s1 + $0x1e8] sm:$0xff]
    %v481 = vld [vmem:[%s1 + $0x1f0] sm:$0xff]
    %v482 = vld [vmem:[%s1 + $0x1f8] sm:$0xff]
    %v483 = vld [vmem:[%s1 + $0x200] sm:$0xff]
    %v484 = vld [vmem:[%s1 + $0x208] sm:$0xff]
    %v485 = vld [vmem:[%s1 + $0x210] sm:$0xff]
    %v486 = vld [vmem:[%s1 + $0x218] sm:$0xff]
    %v487 = vld [vmem:[%s1 + $0x220] sm:$0xff]
    %v488 = vld [vmem:[%s1 + $0x228] sm:$0xff]
    %v489 = vld [vmem:[%s1 + $0x230] sm:$0xff]
    %v490 = vld [vmem:[%s1 + $0x238] sm:$0xff]
    %v491 = vld [vmem:[%s1 + $0x240] sm:$0xff]
    %v492 = vld [vmem:[%s1 + $0x248] sm:$0xff]
    %v493 = vld [vmem:[%s1 + $0x250] sm:$0xff]
    %v494 = vld [vmem:[%s1 + $0x258] sm:$0xff]
    %v495 = vld [vmem:[%s1 + $0x260] sm:$0xff]
    %v496 = vld [vmem:[%s1 + $0x268] sm:$0xff]
    %v497 = vld [vmem:[%s1 + $0x270] sm:$0xff]
    %v498 = vld [vmem:[%s1 + $0x278] sm:$0xff]
    %v499 = vld [vmem:[%s1 + $0x280] sm:$0xff]
    %v500 = vld [vmem:[%s1 + $0x288] sm:$0xff]
    %v501 = vld [vmem:[%s1 + $0x290] sm:$0xff]
    %v502 = vld [vmem:[%s1 + $0x298] sm:$0xff]
    %v503 = vld [vmem:[%s1 + $0x2a0] sm:$0xff]
    %v504 = vld [vmem:[%s1 + $0x2a8] sm:$0xff]
    %v505 = vld [vmem:[%s1 + $0x2b0] sm:$0xff]
    %v506 = vld [vmem:[%s1 + $0x2b8] sm:$0xff]
    %v507 = vld [vmem:[%s1 + $0x2c0] sm:$0xff]
    %v508 = vld [vmem:[%s1 + $0x2c8] sm:$0xff]
    %v509 = vld [vmem:[%s1 + $0x2d0] sm:$0xff]
    %v510 = vld [vmem:[%s1 + $0x2d8] sm:$0xff]
    %v511 = vld [vmem:[%s1 + $0x2e0] sm:$0xff]
    %v512 = vld [vmem:[%s1 + $0x2e8] sm:$0xff]
    %v513 = vld [vmem:[%s1 + $0x2f0] sm:$0xff]
    %v514 = vld [vmem:[%s1 + $0x2f8] sm:$0xff]
    %v515 = vld [vmem:[%s1 + $0x300] sm:$0xff]
    %v516 = vld [vmem:[%s1 + $0x308] sm:$0xff]
    %v517 = vld [vmem:[%s1 + $0x310] sm:$0xff]
    %v518 = vld [vmem:[%s1 + $0x318] sm:$0xff]
    %v519 = vld [vmem:[%s1 + $0x320] sm:$0xff]
    %v520 = vld [vmem:[%s1 + $0x328] sm:$0xff]
    %v521 = vld [vmem:[%s1 + $0x330] sm:$0xff]
    %v522 = vld [vmem:[%s1 + $0x338] sm:$0xff]
    %v523 = vld [vmem:[%s1 + $0x340] sm:$0xff]
    %v524 = vld [vmem:[%s1 + $0x348] sm:$0xff]
    %v525 = vld [vmem:[%s1 + $0x350] sm:$0xff]
    %v526 = vld [vmem:[%s1 + $0x358] sm:$0xff]
    %v527 = vld [vmem:[%s1 + $0x360] sm:$0xff]
    %v528 = vld [vmem:[%s1 + $0x368] sm:$0xff]
    %v529 = vld [vmem:[%s1 + $0x370] sm:$0xff]
    %v530 = vld [vmem:[%s1 + $0x378] sm:$0xff]
    %v531 = vld [vmem:[%s1 + $0x380] sm:$0xff]
    %v532 = vld [vmem:[%s1 + $0x388] sm:$0xff]
    %v533 = vld [vmem:[%s1 + $0x390] sm:$0xff]
    %v534 = vld [vmem:[%s1 + $0x398] sm:$0xff]
    %v535 = vld [vmem:[%s1 + $0x3a0] sm:$0xff]
    %v536 = vld [vmem:[%s1 + $0x3a8] sm:$0xff]
    %v537 = vld [vmem:[%s1 + $0x3b0] sm:$0xff]
    %v538 = vld [vmem:[%s1 + $0x3b8] sm:$0xff]
    %v539 = vld [vmem:[%s1 + $0x3c0] sm:$0xff]
    %v540 = vld [vmem:[%s1 + $0x3c8] sm:$0xff]
    %v541 = vld [vmem:[%s1 + $0x3d0] sm:$0xff]
    %v542 = vld [vmem:[%s1 + $0x3d8] sm:$0xff]
    %v543 = vld [vmem:[%s1 + $0x3e0] sm:$0xff]
    %v544 = vld [vmem:[%s1 + $0x3e8] sm:$0xff]
    %v545 = vld [vmem:[%s1 + $0x3f0] sm:$0xff]
    %v546 = vld [vmem:[%s1 + $0x3f8] sm:$0xff]
    %v549 = vlaneseq
    %v550 = vand.u32 %v549, 127
    %v551 = vperm.slane %v263, %v550
    %v552 = vperm.slane %v268, %v550
    %vm553 = vcmask 1041409
    %v554 = vsel %vm553, %v552, %v551
    %556 = vst [vmem:[#allocation1] ss:$4 sm:$0xff] %v419
    %s558 = scalar_lea.vmem [#allocation1], 32
    %559 = vst [vmem:[%s558] ss:$4 sm:$0xff] %v420
    %v560 = vld.sshfl [vmem:[#allocation1] sm:$0xff pattern:$0x73625140]
    %v561 = vld.sshfl [vmem:[#allocation1 + $0x8] sm:$0xff pattern:$0x73625140]
    %v562 = vld.sshfl [vmem:[#allocation1 + $0x10] sm:$0xff pattern:$0x73625140]
    %v563 = vld.sshfl [vmem:[#allocation1 + $0x18] sm:$0xff pattern:$0x73625140]
    %v564 = vld.sshfl [vmem:[#allocation1 + $0x20] sm:$0xff pattern:$0x73625140]
    %v565 = vld.sshfl [vmem:[#allocation1 + $0x28] sm:$0xff pattern:$0x73625140]
    %v566 = vld.sshfl [vmem:[#allocation1 + $0x30] sm:$0xff pattern:$0x73625140]
    %v567 = vld.sshfl [vmem:[#allocation1 + $0x38] sm:$0xff pattern:$0x73625140]
    %569 = vst [vmem:[#allocation1] ss:$4 sm:$0xff] %v421
    %571 = vst [vmem:[%s558] ss:$4 sm:$0xff] %v422
    %v572 = vld.sshfl [vmem:[#allocation1] sm:$0xff pattern:$0x73625140]
    %v573 = vld.sshfl [vmem:[#allocation1 + $0x8] sm:$0xff pattern:$0x73625140]
    %v574 = vld.sshfl [vmem:[#allocation1 + $0x10] sm:$0xff pattern:$0x73625140]
    %v575 = vld.sshfl [vmem:[#allocation1 + $0x18] sm:$0xff pattern:$0x73625140]
    %v576 = vld.sshfl [vmem:[#allocation1 + $0x20] sm:$0xff pattern:$0x73625140]
    %v577 = vld.sshfl [vmem:[#allocation1 + $0x28] sm:$0xff pattern:$0x73625140]
    %v578 = vld.sshfl [vmem:[#allocation1 + $0x30] sm:$0xff pattern:$0x73625140]
    %v579 = vld.sshfl [vmem:[#allocation1 + $0x38] sm:$0xff pattern:$0x73625140]
    %581 = vst [vmem:[#allocation1] ss:$4 sm:$0xff] %v423
    %583 = vst [vmem:[%s558] ss:$4 sm:$0xff] %v424
    %v584 = vld.sshfl [vmem:[#allocation1] sm:$0xff pattern:$0x73625140]
    %v585 = vld.sshfl [vmem:[#allocation1 + $0x8] sm:$0xff pattern:$0x73625140]
    %v586 = vld.sshfl [vmem:[#allocation1 + $0x10] sm:$0xff pattern:$0x73625140]
    %v587 = vld.sshfl [vmem:[#allocation1 + $0x18] sm:$0xff pattern:$0x73625140]
    %v588 = vld.sshfl [vmem:[#allocation1 + $0x20] sm:$0xff pattern:$0x73625140]
    %v589 = vld.sshfl [vmem:[#allocation1 + $0x28] sm:$0xff pattern:$0x73625140]
    %v590 = vld.sshfl [vmem:[#allocation1 + $0x30] sm:$0xff pattern:$0x73625140]
    %v591 = vld.sshfl [vmem:[#allocation1 + $0x38] sm:$0xff pattern:$0x73625140]
    %593 = vst [vmem:[#allocation1] ss:$4 sm:$0xff] %v425
    %595 = vst [vmem:[%s558] ss:$4 sm:$0xff] %v426
    %v596 = vld.sshfl [vmem:[#allocation1] sm:$0xff pattern:$0x73625140]
    %v597 = vld.sshfl [vmem:[#allocation1 + $0x8] sm:$0xff pattern:$0x73625140]
    %v598 = vld.sshfl [vmem:[#allocation1 + $0x10] sm:$0xff pattern:$0x73625140]
    %v599 = vld.sshfl [vmem:[#allocation1 + $0x18] sm:$0xff pattern:$0x73625140]
    %v600 = vld.sshfl [vmem:[#allocation1 + $0x20] sm:$0xff pattern:$0x73625140]
    %v601 = vld.sshfl [vmem:[#allocation1 + $0x28] sm:$0xff pattern:$0x73625140]
    %v602 = vld.sshfl [vmem:[#allocation1 + $0x30] sm:$0xff pattern:$0x73625140]
    %v603 = vld.sshfl [vmem:[#allocation1 + $0x38] sm:$0xff pattern:$0x73625140]
    %vm604 = vcmask 23552
    %v605 = vsel %vm604, %v554, 0
    %vm607 = vcmask 1040384
    %vm608 = vcmask 1041408
    %v609 = vsel %vm607, 4294967295, 65535
    %v610 = vsel %vm608, %v609, 0
    %v611 = vand.u32 %v560, %v610
    %v613 = vand.u32 %v561, %v610
    %v615 = vand.u32 %v562, %v610
    %v617 = vand.u32 %v563, %v610
    %v619 = vand.u32 %v564, %v610
    %v621 = vand.u32 %v565, %v610
    %v623 = vand.u32 %v566, %v610
    %v625 = vand.u32 %v567, %v610
    %v627 = vand.u32 %v572, %v610
    %v629 = vand.u32 %v573, %v610
    %v631 = vand.u32 %v574, %v610
    %v633 = vand.u32 %v575, %v610
    %v635 = vand.u32 %v576, %v610
    %v637 = vand.u32 %v577, %v610
    %v639 = vand.u32 %v578, %v610
    %v641 = vand.u32 %v579, %v610
    %v643 = vand.u32 %v584, %v610
    %v645 = vand.u32 %v585, %v610
    %v647 = vand.u32 %v586, %v610
    %v649 = vand.u32 %v587, %v610
    %v651 = vand.u32 %v588, %v610
    %v653 = vand.u32 %v589, %v610
    %v655 = vand.u32 %v590, %v610
    %v657 = vand.u32 %v591, %v610
    %v659 = vand.u32 %v596, %v610
    %v661 = vand.u32 %v597, %v610
    %v663 = vand.u32 %v598, %v610
    %v665 = vand.u32 %v599, %v610
    %v667 = vand.u32 %v600, %v610
    %v669 = vand.u32 %v601, %v610
    %v671 = vand.u32 %v602, %v610
    %v673 = vand.u32 %v603, %v610
    %675 = vmatpush.bf16.msra.mxu0 0
    %676 = vmatpush.bf16.msra.mxu0 0
    %677 = vmatpush.bf16.msra.mxu0 0
    %678 = vmatpush.bf16.msra.mxu0 0
    %679 = vmatpush.bf16.msra.mxu0 0
    %680 = vmatpush.bf16.msra.mxu0 0
    %681 = vmatpush.bf16.msra.mxu0 0
    %682 = vmatpush.bf16.msra.mxu0 %v611
    %683 = vmatmul.f32.gmra.mxu0 %v605
    %v684 = vpop.f32.mrf.mxu0
    %v685 = vadd.f32 0.0, %v684
    %686 = vdwg.mxu0
    %687 = vmatpush.bf16.msra.mxu0 0
    %688 = vmatpush.bf16.msra.mxu0 0
    %689 = vmatpush.bf16.msra.mxu0 0
    %690 = vmatpush.bf16.msra.mxu0 0
    %691 = vmatpush.bf16.msra.mxu0 0
    %692 = vmatpush.bf16.msra.mxu0 0
    %693 = vmatpush.bf16.msra.mxu0 0
    %694 = vmatpush.bf16.msra.mxu0 %v613
    %695 = vmatmul.f32.gmra.mxu0 %v605
    %v696 = vpop.f32.mrf.mxu0
    %v697 = vadd.f32 0.0, %v696
    %698 = vdwg.mxu0
    %699 = vmatpush.bf16.msra.mxu0 0
    %700 = vmatpush.bf16.msra.mxu0 0
    %701 = vmatpush.bf16.msra.mxu0 0
    %702 = vmatpush.bf16.msra.mxu0 0
    %703 = vmatpush.bf16.msra.mxu0 0
    %704 = vmatpush.bf16.msra.mxu0 0
    %705 = vmatpush.bf16.msra.mxu0 0
    %706 = vmatpush.bf16.msra.mxu0 %v615
    %707 = vmatmul.f32.gmra.mxu0 %v605
    %v708 = vpop.f32.mrf.mxu0
    %v709 = vadd.f32 0.0, %v708
    %710 = vdwg.mxu0
    %711 = vmatpush.bf16.msra.mxu0 0
    %712 = vmatpush.bf16.msra.mxu0 0
    %713 = vmatpush.bf16.msra.mxu0 0
    %714 = vmatpush.bf16.msra.mxu0 0
    %715 = vmatpush.bf16.msra.mxu0 0
    %716 = vmatpush.bf16.msra.mxu0 0
    %717 = vmatpush.bf16.msra.mxu0 0
    %718 = vmatpush.bf16.msra.mxu0 %v617
    %719 = vmatmul.f32.gmra.mxu0 %v605
    %v720 = vpop.f32.mrf.mxu0
    %v721 = vadd.f32 0.0, %v720
    %722 = vdwg.mxu0
    %723 = vmatpush.bf16.msra.mxu0 0
    %724 = vmatpush.bf16.msra.mxu0 0
    %725 = vmatpush.bf16.msra.mxu0 0
    %726 = vmatpush.bf16.msra.mxu0 0
    %727 = vmatpush.bf16.msra.mxu0 0
    %728 = vmatpush.bf16.msra.mxu0 0
    %729 = vmatpush.bf16.msra.mxu0 0
    %730 = vmatpush.bf16.msra.mxu0 %v619
    %731 = vmatmul.f32.gmra.mxu0 %v605
    %v732 = vpop.f32.mrf.mxu0
    %v733 = vadd.f32 0.0, %v732
    %734 = vdwg.mxu0
    %735 = vmatpush.bf16.msra.mxu0 0
    %736 = vmatpush.bf16.msra.mxu0 0
    %737 = vmatpush.bf16.msra.mxu0 0
    %738 = vmatpush.bf16.msra.mxu0 0
    %739 = vmatpush.bf16.msra.mxu0 0
    %740 = vmatpush.bf16.msra.mxu0 0
    %741 = vmatpush.bf16.msra.mxu0 0
    %742 = vmatpush.bf16.msra.mxu0 %v621
    %743 = vmatmul.f32.gmra.mxu0 %v605
    %v744 = vpop.f32.mrf.mxu0
    %v745 = vadd.f32 0.0, %v744
    %746 = vdwg.mxu0
    %747 = vmatpush.bf16.msra.mxu0 0
    %748 = vmatpush.bf16.msra.mxu0 0
    %749 = vmatpush.bf16.msra.mxu0 0
    %750 = vmatpush.bf16.msra.mxu0 0
    %751 = vmatpush.bf16.msra.mxu0 0
    %752 = vmatpush.bf16.msra.mxu0 0
    %753 = vmatpush.bf16.msra.mxu0 0
    %754 = vmatpush.bf16.msra.mxu0 %v623
    %755 = vmatmul.f32.gmra.mxu0 %v605
    %v756 = vpop.f32.mrf.mxu0
    %v757 = vadd.f32 0.0, %v756
    %758 = vdwg.mxu0
    %759 = vmatpush.bf16.msra.mxu0 0
    %760 = vmatpush.bf16.msra.mxu0 0
    %761 = vmatpush.bf16.msra.mxu0 0
    %762 = vmatpush.bf16.msra.mxu0 0
    %763 = vmatpush.bf16.msra.mxu0 0
    %764 = vmatpush.bf16.msra.mxu0 0
    %765 = vmatpush.bf16.msra.mxu0 0
    %766 = vmatpush.bf16.msra.mxu0 %v625
    %767 = vmatmul.f32.gmra.mxu0 %v605
    %v768 = vpop.f32.mrf.mxu0
    %v769 = vadd.f32 0.0, %v768
    %770 = vdwg.mxu0
    %771 = vmatpush.bf16.msra.mxu0 0
    %772 = vmatpush.bf16.msra.mxu0 0
    %773 = vmatpush.bf16.msra.mxu0 0
    %774 = vmatpush.bf16.msra.mxu0 0
    %775 = vmatpush.bf16.msra.mxu0 0
    %776 = vmatpush.bf16.msra.mxu0 0
    %777 = vmatpush.bf16.msra.mxu0 0
    %778 = vmatpush.bf16.msra.mxu0 %v627
    %779 = vmatmul.f32.gmra.mxu0 %v605
    %v780 = vpop.f32.mrf.mxu0
    %v781 = vadd.f32 0.0, %v780
    %782 = vdwg.mxu0
    %783 = vmatpush.bf16.msra.mxu0 0
    %784 = vmatpush.bf16.msra.mxu0 0
    %785 = vmatpush.bf16.msra.mxu0 0
    %786 = vmatpush.bf16.msra.mxu0 0
    %787 = vmatpush.bf16.msra.mxu0 0
    %788 = vmatpush.bf16.msra.mxu0 0
    %789 = vmatpush.bf16.msra.mxu0 0
    %790 = vmatpush.bf16.msra.mxu0 %v629
    %791 = vmatmul.f32.gmra.mxu0 %v605
    %v792 = vpop.f32.mrf.mxu0
    %v793 = vadd.f32 0.0, %v792
    %794 = vdwg.mxu0
    %795 = vmatpush.bf16.msra.mxu0 0
    %796 = vmatpush.bf16.msra.mxu0 0
    %797 = vmatpush.bf16.msra.mxu0 0
    %798 = vmatpush.bf16.msra.mxu0 0
    %799 = vmatpush.bf16.msra.mxu0 0
    %800 = vmatpush.bf16.msra.mxu0 0
    %801 = vmatpush.bf16.msra.mxu0 0
    %802 = vmatpush.bf16.msra.mxu0 %v631
    %803 = vmatmul.f32.gmra.mxu0 %v605
    %v804 = vpop.f32.mrf.mxu0
    %v805 = vadd.f32 0.0, %v804
    %806 = vdwg.mxu0
    %807 = vmatpush.bf16.msra.mxu0 0
    %808 = vmatpush.bf16.msra.mxu0 0
    %809 = vmatpush.bf16.msra.mxu0 0
    %810 = vmatpush.bf16.msra.mxu0 0
    %811 = vmatpush.bf16.msra.mxu0 0
    %812 = vmatpush.bf16.msra.mxu0 0
    %813 = vmatpush.bf16.msra.mxu0 0
    %814 = vmatpush.bf16.msra.mxu0 %v633
    %815 = vmatmul.f32.gmra.mxu0 %v605
    %v816 = vpop.f32.mrf.mxu0
    %v817 = vadd.f32 0.0, %v816
    %818 = vdwg.mxu0
    %819 = vmatpush.bf16.msra.mxu0 0
    %820 = vmatpush.bf16.msra.mxu0 0
    %821 = vmatpush.bf16.msra.mxu0 0
    %822 = vmatpush.bf16.msra.mxu0 0
    %823 = vmatpush.bf16.msra.mxu0 0
    %824 = vmatpush.bf16.msra.mxu0 0
    %825 = vmatpush.bf16.msra.mxu0 0
    %826 = vmatpush.bf16.msra.mxu0 %v635
    %827 = vmatmul.f32.gmra.mxu0 %v605
    %v828 = vpop.f32.mrf.mxu0
    %v829 = vadd.f32 0.0, %v828
    %830 = vdwg.mxu0
    %831 = vmatpush.bf16.msra.mxu0 0
    %832 = vmatpush.bf16.msra.mxu0 0
    %833 = vmatpush.bf16.msra.mxu0 0
    %834 = vmatpush.bf16.msra.mxu0 0
    %835 = vmatpush.bf16.msra.mxu0 0
    %836 = vmatpush.bf16.msra.mxu0 0
    %837 = vmatpush.bf16.msra.mxu0 0
    %838 = vmatpush.bf16.msra.mxu0 %v637
    %839 = vmatmul.f32.gmra.mxu0 %v605
    %v840 = vpop.f32.mrf.mxu0
    %v841 = vadd.f32 0.0, %v840
    %842 = vdwg.mxu0
    %843 = vmatpush.bf16.msra.mxu0 0
    %844 = vmatpush.bf16.msra.mxu0 0
    %845 = vmatpush.bf16.msra.mxu0 0
    %846 = vmatpush.bf16.msra.mxu0 0
    %847 = vmatpush.bf16.msra.mxu0 0
    %848 = vmatpush.bf16.msra.mxu0 0
    %849 = vmatpush.bf16.msra.mxu0 0
    %850 = vmatpush.bf16.msra.mxu0 %v639
    %851 = vmatmul.f32.gmra.mxu0 %v605
    %v852 = vpop.f32.mrf.mxu0
    %v853 = vadd.f32 0.0, %v852
    %854 = vdwg.mxu0
    %855 = vmatpush.bf16.msra.mxu0 0
    %856 = vmatpush.bf16.msra.mxu0 0
    %857 = vmatpush.bf16.msra.mxu0 0
    %858 = vmatpush.bf16.msra.mxu0 0
    %859 = vmatpush.bf16.msra.mxu0 0
    %860 = vmatpush.bf16.msra.mxu0 0
    %861 = vmatpush.bf16.msra.mxu0 0
    %862 = vmatpush.bf16.msra.mxu0 %v641
    %863 = vmatmul.f32.gmra.mxu0 %v605
    %v864 = vpop.f32.mrf.mxu0
    %v865 = vadd.f32 0.0, %v864
    %866 = vdwg.mxu0
    %867 = vmatpush.bf16.msra.mxu0 0
    %868 = vmatpush.bf16.msra.mxu0 0
    %869 = vmatpush.bf16.msra.mxu0 0
    %870 = vmatpush.bf16.msra.mxu0 0
    %871 = vmatpush.bf16.msra.mxu0 0
    %872 = vmatpush.bf16.msra.mxu0 0
    %873 = vmatpush.bf16.msra.mxu0 0
    %874 = vmatpush.bf16.msra.mxu0 %v643
    %875 = vmatmul.f32.gmra.mxu0 %v605
    %v876 = vpop.f32.mrf.mxu0
    %v877 = vadd.f32 0.0, %v876
    %878 = vdwg.mxu0
    %879 = vmatpush.bf16.msra.mxu0 0
    %880 = vmatpush.bf16.msra.mxu0 0
    %881 = vmatpush.bf16.msra.mxu0 0
    %882 = vmatpush.bf16.msra.mxu0 0
    %883 = vmatpush.bf16.msra.mxu0 0
    %884 = vmatpush.bf16.msra.mxu0 0
    %885 = vmatpush.bf16.msra.mxu0 0
    %886 = vmatpush.bf16.msra.mxu0 %v645
    %887 = vmatmul.f32.gmra.mxu0 %v605
    %v888 = vpop.f32.mrf.mxu0
    %v889 = vadd.f32 0.0, %v888
    %890 = vdwg.mxu0
    %891 = vmatpush.bf16.msra.mxu0 0
    %892 = vmatpush.bf16.msra.mxu0 0
    %893 = vmatpush.bf16.msra.mxu0 0
    %894 = vmatpush.bf16.msra.mxu0 0
    %895 = vmatpush.bf16.msra.mxu0 0
    %896 = vmatpush.bf16.msra.mxu0 0
    %897 = vmatpush.bf16.msra.mxu0 0
    %898 = vmatpush.bf16.msra.mxu0 %v647
    %899 = vmatmul.f32.gmra.mxu0 %v605
    %v900 = vpop.f32.mrf.mxu0
    %v901 = vadd.f32 0.0, %v900
    %902 = vdwg.mxu0
    %903 = vmatpush.bf16.msra.mxu0 0
    %904 = vmatpush.bf16.msra.mxu0 0
    %905 = vmatpush.bf16.msra.mxu0 0
    %906 = vmatpush.bf16.msra.mxu0 0
    %907 = vmatpush.bf16.msra.mxu0 0
    %908 = vmatpush.bf16.msra.mxu0 0
    %909 = vmatpush.bf16.msra.mxu0 0
    %910 = vmatpush.bf16.msra.mxu0 %v649
    %911 = vmatmul.f32.gmra.mxu0 %v605
    %v912 = vpop.f32.mrf.mxu0
    %v913 = vadd.f32 0.0, %v912
    %914 = vdwg.mxu0
    %915 = vmatpush.bf16.msra.mxu0 0
    %916 = vmatpush.bf16.msra.mxu0 0
    %917 = vmatpush.bf16.msra.mxu0 0
    %918 = vmatpush.bf16.msra.mxu0 0
    %919 = vmatpush.bf16.msra.mxu0 0
    %920 = vmatpush.bf16.msra.mxu0 0
    %921 = vmatpush.bf16.msra.mxu0 0
    %922 = vmatpush.bf16.msra.mxu0 %v651
    %923 = vmatmul.f32.gmra.mxu0 %v605
    %v924 = vpop.f32.mrf.mxu0
    %v925 = vadd.f32 0.0, %v924
    %926 = vdwg.mxu0
    %927 = vmatpush.bf16.msra.mxu0 0
    %928 = vmatpush.bf16.msra.mxu0 0
    %929 = vmatpush.bf16.msra.mxu0 0
    %930 = vmatpush.bf16.msra.mxu0 0
    %931 = vmatpush.bf16.msra.mxu0 0
    %932 = vmatpush.bf16.msra.mxu0 0
    %933 = vmatpush.bf16.msra.mxu0 0
    %934 = vmatpush.bf16.msra.mxu0 %v653
    %935 = vmatmul.f32.gmra.mxu0 %v605
    %v936 = vpop.f32.mrf.mxu0
    %v937 = vadd.f32 0.0, %v936
    %938 = vdwg.mxu0
    %939 = vmatpush.bf16.msra.mxu0 0
    %940 = vmatpush.bf16.msra.mxu0 0
    %941 = vmatpush.bf16.msra.mxu0 0
    %942 = vmatpush.bf16.msra.mxu0 0
    %943 = vmatpush.bf16.msra.mxu0 0
    %944 = vmatpush.bf16.msra.mxu0 0
    %945 = vmatpush.bf16.msra.mxu0 0
    %946 = vmatpush.bf16.msra.mxu0 %v655
    %947 = vmatmul.f32.gmra.mxu0 %v605
    %v948 = vpop.f32.mrf.mxu0
    %v949 = vadd.f32 0.0, %v948
    %950 = vdwg.mxu0
    %951 = vmatpush.bf16.msra.mxu0 0
    %952 = vmatpush.bf16.msra.mxu0 0
    %953 = vmatpush.bf16.msra.mxu0 0
    %954 = vmatpush.bf16.msra.mxu0 0
    %955 = vmatpush.bf16.msra.mxu0 0
    %956 = vmatpush.bf16.msra.mxu0 0
    %957 = vmatpush.bf16.msra.mxu0 0
    %958 = vmatpush.bf16.msra.mxu0 %v657
    %959 = vmatmul.f32.gmra.mxu0 %v605
    %v960 = vpop.f32.mrf.mxu0
    %v961 = vadd.f32 0.0, %v960
    %962 = vdwg.mxu0
    %963 = vmatpush.bf16.msra.mxu0 0
    %964 = vmatpush.bf16.msra.mxu0 0
    %965 = vmatpush.bf16.msra.mxu0 0
    %966 = vmatpush.bf16.msra.mxu0 0
    %967 = vmatpush.bf16.msra.mxu0 0
    %968 = vmatpush.bf16.msra.mxu0 0
    %969 = vmatpush.bf16.msra.mxu0 0
    %970 = vmatpush.bf16.msra.mxu0 %v659
    %971 = vmatmul.f32.gmra.mxu0 %v605
    %v972 = vpop.f32.mrf.mxu0
    %v973 = vadd.f32 0.0, %v972
    %974 = vdwg.mxu0
    %975 = vmatpush.bf16.msra.mxu0 0
    %976 = vmatpush.bf16.msra.mxu0 0
    %977 = vmatpush.bf16.msra.mxu0 0
    %978 = vmatpush.bf16.msra.mxu0 0
    %979 = vmatpush.bf16.msra.mxu0 0
    %980 = vmatpush.bf16.msra.mxu0 0
    %981 = vmatpush.bf16.msra.mxu0 0
    %982 = vmatpush.bf16.msra.mxu0 %v661
    %983 = vmatmul.f32.gmra.mxu0 %v605
    %v984 = vpop.f32.mrf.mxu0
    %v985 = vadd.f32 0.0, %v984
    %986 = vdwg.mxu0
    %987 = vmatpush.bf16.msra.mxu0 0
    %988 = vmatpush.bf16.msra.mxu0 0
    %989 = vmatpush.bf16.msra.mxu0 0
    %990 = vmatpush.bf16.msra.mxu0 0
    %991 = vmatpush.bf16.msra.mxu0 0
    %992 = vmatpush.bf16.msra.mxu0 0
    %993 = vmatpush.bf16.msra.mxu0 0
    %994 = vmatpush.bf16.msra.mxu0 %v663
    %995 = vmatmul.f32.gmra.mxu0 %v605
    %v996 = vpop.f32.mrf.mxu0
    %v997 = vadd.f32 0.0, %v996
    %998 = vdwg.mxu0
    %999 = vmatpush.bf16.msra.mxu0 0
    %1000 = vmatpush.bf16.msra.mxu0 0
    %1001 = vmatpush.bf16.msra.mxu0 0
    %1002 = vmatpush.bf16.msra.mxu0 0
    %1003 = vmatpush.bf16.msra.mxu0 0
    %1004 = vmatpush.bf16.msra.mxu0 0
    %1005 = vmatpush.bf16.msra.mxu0 0
    %1006 = vmatpush.bf16.msra.mxu0 %v665
    %1007 = vmatmul.f32.gmra.mxu0 %v605
    %v1008 = vpop.f32.mrf.mxu0
    %v1009 = vadd.f32 0.0, %v1008
    %1010 = vdwg.mxu0
    %1011 = vmatpush.bf16.msra.mxu0 0
    %1012 = vmatpush.bf16.msra.mxu0 0
    %1013 = vmatpush.bf16.msra.mxu0 0
    %1014 = vmatpush.bf16.msra.mxu0 0
    %1015 = vmatpush.bf16.msra.mxu0 0
    %1016 = vmatpush.bf16.msra.mxu0 0
    %1017 = vmatpush.bf16.msra.mxu0 0
    %1018 = vmatpush.bf16.msra.mxu0 %v667
    %1019 = vmatmul.f32.gmra.mxu0 %v605
    %v1020 = vpop.f32.mrf.mxu0
    %v1021 = vadd.f32 0.0, %v1020
    %1022 = vdwg.mxu0
    %1023 = vmatpush.bf16.msra.mxu0 0
    %1024 = vmatpush.bf16.msra.mxu0 0
    %1025 = vmatpush.bf16.msra.mxu0 0
    %1026 = vmatpush.bf16.msra.mxu0 0
    %1027 = vmatpush.bf16.msra.mxu0 0
    %1028 = vmatpush.bf16.msra.mxu0 0
    %1029 = vmatpush.bf16.msra.mxu0 0
    %1030 = vmatpush.bf16.msra.mxu0 %v669
    %1031 = vmatmul.f32.gmra.mxu0 %v605
    %v1032 = vpop.f32.mrf.mxu0
    %v1033 = vadd.f32 0.0, %v1032
    %1034 = vdwg.mxu0
    %1035 = vmatpush.bf16.msra.mxu0 0
    %1036 = vmatpush.bf16.msra.mxu0 0
    %1037 = vmatpush.bf16.msra.mxu0 0
    %1038 = vmatpush.bf16.msra.mxu0 0
    %1039 = vmatpush.bf16.msra.mxu0 0
    %1040 = vmatpush.bf16.msra.mxu0 0
    %1041 = vmatpush.bf16.msra.mxu0 0
    %1042 = vmatpush.bf16.msra.mxu0 %v671
    %1043 = vmatmul.f32.gmra.mxu0 %v605
    %v1044 = vpop.f32.mrf.mxu0
    %v1045 = vadd.f32 0.0, %v1044
    %1046 = vdwg.mxu0
    %1047 = vmatpush.bf16.msra.mxu0 0
    %1048 = vmatpush.bf16.msra.mxu0 0
    %1049 = vmatpush.bf16.msra.mxu0 0
    %1050 = vmatpush.bf16.msra.mxu0 0
    %1051 = vmatpush.bf16.msra.mxu0 0
    %1052 = vmatpush.bf16.msra.mxu0 0
    %1053 = vmatpush.bf16.msra.mxu0 0
    %1054 = vmatpush.bf16.msra.mxu0 %v673
    %1055 = vmatmul.f32.gmra.mxu0 %v605
    %v1056 = vpop.f32.mrf.mxu0
    %v1057 = vadd.f32 0.0, %v1056
    %1058 = vdwg.mxu0
    %v1061 = vperm.slane %v273, %v550
    %v1062 = vperm.slane %v278, %v550
    %v1063 = vsel %vm553, %v1062, %v1061
    %1065 = vst [vmem:[#allocation1] ss:$4 sm:$0xff] %v427
    %s1067 = scalar_lea.vmem [#allocation1], 32
    %1068 = vst [vmem:[%s1067] ss:$4 sm:$0xff] %v428
    %v1069 = vld.sshfl [vmem:[#allocation1] sm:$0xff pattern:$0x73625140]
    %v1070 = vld.sshfl [vmem:[#allocation1 + $0x8] sm:$0xff pattern:$0x73625140]
    %v1071 = vld.sshfl [vmem:[#allocation1 + $0x10] sm:$0xff pattern:$0x73625140]
    %v1072 = vld.sshfl [vmem:[#allocation1 + $0x18] sm:$0xff pattern:$0x73625140]
    %v1073 = vld.sshfl [vmem:[#allocation1 + $0x20] sm:$0xff pattern:$0x73625140]
    %v1074 = vld.sshfl [vmem:[#allocation1 + $0x28] sm:$0xff pattern:$0x73625140]
    %v1075 = vld.sshfl [vmem:[#allocation1 + $0x30] sm:$0xff pattern:$0x73625140]
    %v1076 = vld.sshfl [vmem:[#allocation1 + $0x38] sm:$0xff pattern:$0x73625140]
    %1078 = vst [vmem:[#allocation1] ss:$4 sm:$0xff] %v429
    %1080 = vst [vmem:[%s1067] ss:$4 sm:$0xff] %v430
    %v1081 = vld.sshfl [vmem:[#allocation1] sm:$0xff pattern:$0x73625140]
    %v1082 = vld.sshfl [vmem:[#allocation1 + $0x8] sm:$0xff pattern:$0x73625140]
    %v1083 = vld.sshfl [vmem:[#allocation1 + $0x10] sm:$0xff pattern:$0x73625140]
    %v1084 = vld.sshfl [vmem:[#allocation1 + $0x18] sm:$0xff pattern:$0x73625140]
    %v1085 = vld.sshfl [vmem:[#allocation1 + $0x20] sm:$0xff pattern:$0x73625140]
    %v1086 = vld.sshfl [vmem:[#allocation1 + $0x28] sm:$0xff pattern:$0x73625140]
    %v1087 = vld.sshfl [vmem:[#allocation1 + $0x30] sm:$0xff pattern:$0x73625140]
    %v1088 = vld.sshfl [vmem:[#allocation1 + $0x38] sm:$0xff pattern:$0x73625140]
    %1090 = vst [vmem:[#allocation1] ss:$4 sm:$0xff] %v431
    %1092 = vst [vmem:[%s1067] ss:$4 sm:$0xff] %v432
    %v1093 = vld.sshfl [vmem:[#allocation1] sm:$0xff pattern:$0x73625140]
    %v1094 = vld.sshfl [vmem:[#allocation1 + $0x8] sm:$0xff pattern:$0x73625140]
    %v1095 = vld.sshfl [vmem:[#allocation1 + $0x10] sm:$0xff pattern:$0x73625140]
    %v1096 = vld.sshfl [vmem:[#allocation1 + $0x18] sm:$0xff pattern:$0x73625140]
    %v1097 = vld.sshfl [vmem:[#allocation1 + $0x20] sm:$0xff pattern:$0x73625140]
    %v1098 = vld.sshfl [vmem:[#allocation1 + $0x28] sm:$0xff pattern:$0x73625140]
    %v1099 = vld.sshfl [vmem:[#allocation1 + $0x30] sm:$0xff pattern:$0x73625140]
    %v1100 = vld.sshfl [vmem:[#allocation1 + $0x38] sm:$0xff pattern:$0x73625140]
    %1102 = vst [vmem:[#allocation1] ss:$4 sm:$0xff] %v433
    %1104 = vst [vmem:[%s1067] ss:$4 sm:$0xff] %v434
    %v1105 = vld.sshfl [vmem:[#allocation1] sm:$0xff pattern:$0x73625140]
    %v1106 = vld.sshfl [vmem:[#allocation1 + $0x8] sm:$0xff pattern:$0x73625140]
    %v1107 = vld.sshfl [vmem:[#allocation1 + $0x10] sm:$0xff pattern:$0x73625140]
    %v1108 = vld.sshfl [vmem:[#allocation1 + $0x18] sm:$0xff pattern:$0x73625140]
    %v1109 = vld.sshfl [vmem:[#allocation1 + $0x20] sm:$0xff pattern:$0x73625140]
    %v1110 = vld.sshfl [vmem:[#allocation1 + $0x28] sm:$0xff pattern:$0x73625140]
    %v1111 = vld.sshfl [vmem:[#allocation1 + $0x30] sm:$0xff pattern:$0x73625140]
    %v1112 = vld.sshfl [vmem:[#allocation1 + $0x38] sm:$0xff pattern:$0x73625140]
    %v1113 = vsel %vm604, %v1063, 0
    %v1115 = vand.u32 %v1069, %v610
    %v1117 = vand.u32 %v1070, %v610
    %v1119 = vand.u32 %v1071, %v610
    %v1121 = vand.u32 %v1072, %v610
    %v1123 = vand.u32 %v1073, %v610
    %v1125 = vand.u32 %v1074, %v610
    %v1127 = vand.u32 %v1075, %v610
    %v1129 = vand.u32 %v1076, %v610
    %v1131 = vand.u32 %v1081, %v610
    %v1133 = vand.u32 %v1082, %v610
    %v1135 = vand.u32 %v1083, %v610
    %v1137 = vand.u32 %v1084, %v610
    %v1139 = vand.u32 %v1085, %v610
    %v1141 = vand.u32 %v1086, %v610
    %v1143 = vand.u32 %v1087, %v610
    %v1145 = vand.u32 %v1088, %v610
    %v1147 = vand.u32 %v1093, %v610
    %v1149 = vand.u32 %v1094, %v610
    %v1151 = vand.u32 %v1095, %v610
    %v1153 = vand.u32 %v1096, %v610
    %v1155 = vand.u32 %v1097, %v610
    %v1157 = vand.u32 %v1098, %v610
    %v1159 = vand.u32 %v1099, %v610
    %v1161 = vand.u32 %v1100, %v610
    %v1163 = vand.u32 %v1105, %v610
    %v1165 = vand.u32 %v1106, %v610
    %v1167 = vand.u32 %v1107, %v610
    %v1169 = vand.u32 %v1108, %v610
    %v1171 = vand.u32 %v1109, %v610
    %v1173 = vand.u32 %v1110, %v610
    %v1175 = vand.u32 %v1111, %v610
    %v1177 = vand.u32 %v1112, %v610
    %1179 = vmatpush.bf16.msra.mxu0 0
    %1180 = vmatpush.bf16.msra.mxu0 0
    %1181 = vmatpush.bf16.msra.mxu0 0
    %1182 = vmatpush.bf16.msra.mxu0 0
    %1183 = vmatpush.bf16.msra.mxu0 0
    %1184 = vmatpush.bf16.msra.mxu0 0
    %1185 = vmatpush.bf16.msra.mxu0 0
    %1186 = vmatpush.bf16.msra.mxu0 %v1115
    %1187 = vmatmul.f32.gmra.mxu0 %v1113
    %v1188 = vpop.f32.mrf.mxu0
    %v1189 = vadd.f32 0.0, %v1188
    %1190 = vdwg.mxu0
    %1191 = vmatpush.bf16.msra.mxu0 0
    %1192 = vmatpush.bf16.msra.mxu0 0
    %1193 = vmatpush.bf16.msra.mxu0 0
    %1194 = vmatpush.bf16.msra.mxu0 0
    %1195 = vmatpush.bf16.msra.mxu0 0
    %1196 = vmatpush.bf16.msra.mxu0 0
    %1197 = vmatpush.bf16.msra.mxu0 0
    %1198 = vmatpush.bf16.msra.mxu0 %v1117
    %1199 = vmatmul.f32.gmra.mxu0 %v1113
    %v1200 = vpop.f32.mrf.mxu0
    %v1201 = vadd.f32 0.0, %v1200
    %1202 = vdwg.mxu0
    %1203 = vmatpush.bf16.msra.mxu0 0
    %1204 = vmatpush.bf16.msra.mxu0 0
    %1205 = vmatpush.bf16.msra.mxu0 0
    %1206 = vmatpush.bf16.msra.mxu0 0
    %1207 = vmatpush.bf16.msra.mxu0 0
    %1208 = vmatpush.bf16.msra.mxu0 0
    %1209 = vmatpush.bf16.msra.mxu0 0
    %1210 = vmatpush.bf16.msra.mxu0 %v1119
    %1211 = vmatmul.f32.gmra.mxu0 %v1113
    %v1212 = vpop.f32.mrf.mxu0
    %v1213 = vadd.f32 0.0, %v1212
    %1214 = vdwg.mxu0
    %1215 = vmatpush.bf16.msra.mxu0 0
    %1216 = vmatpush.bf16.msra.mxu0 0
    %1217 = vmatpush.bf16.msra.mxu0 0
    %1218 = vmatpush.bf16.msra.mxu0 0
    %1219 = vmatpush.bf16.msra.mxu0 0
    %1220 = vmatpush.bf16.msra.mxu0 0
    %1221 = vmatpush.bf16.msra.mxu0 0
    %1222 = vmatpush.bf16.msra.mxu0 %v1121
    %1223 = vmatmul.f32.gmra.mxu0 %v1113
    %v1224 = vpop.f32.mrf.mxu0
    %v1225 = vadd.f32 0.0, %v1224
    %1226 = vdwg.mxu0
    %1227 = vmatpush.bf16.msra.mxu0 0
    %1228 = vmatpush.bf16.msra.mxu0 0
    %1229 = vmatpush.bf16.msra.mxu0 0
    %1230 = vmatpush.bf16.msra.mxu0 0
    %1231 = vmatpush.bf16.msra.mxu0 0
    %1232 = vmatpush.bf16.msra.mxu0 0
    %1233 = vmatpush.bf16.msra.mxu0 0
    %1234 = vmatpush.bf16.msra.mxu0 %v1123
    %1235 = vmatmul.f32.gmra.mxu0 %v1113
    %v1236 = vpop.f32.mrf.mxu0
    %v1237 = vadd.f32 0.0, %v1236
    %1238 = vdwg.mxu0
    %1239 = vmatpush.bf16.msra.mxu0 0
    %1240 = vmatpush.bf16.msra.mxu0 0
    %1241 = vmatpush.bf16.msra.mxu0 0
    %1242 = vmatpush.bf16.msra.mxu0 0
    %1243 = vmatpush.bf16.msra.mxu0 0
    %1244 = vmatpush.bf16.msra.mxu0 0
    %1245 = vmatpush.bf16.msra.mxu0 0
    %1246 = vmatpush.bf16.msra.mxu0 %v1125
    %1247 = vmatmul.f32.gmra.mxu0 %v1113
    %v1248 = vpop.f32.mrf.mxu0
    %v1249 = vadd.f32 0.0, %v1248
    %1250 = vdwg.mxu0
    %1251 = vmatpush.bf16.msra.mxu0 0
    %1252 = vmatpush.bf16.msra.mxu0 0
    %1253 = vmatpush.bf16.msra.mxu0 0
    %1254 = vmatpush.bf16.msra.mxu0 0
    %1255 = vmatpush.bf16.msra.mxu0 0
    %1256 = vmatpush.bf16.msra.mxu0 0
    %1257 = vmatpush.bf16.msra.mxu0 0
    %1258 = vmatpush.bf16.msra.mxu0 %v1127
    %1259 = vmatmul.f32.gmra.mxu0 %v1113
    %v1260 = vpop.f32.mrf.mxu0
    %v1261 = vadd.f32 0.0, %v1260
    %1262 = vdwg.mxu0
    %1263 = vmatpush.bf16.msra.mxu0 0
    %1264 = vmatpush.bf16.msra.mxu0 0
    %1265 = vmatpush.bf16.msra.mxu0 0
    %1266 = vmatpush.bf16.msra.mxu0 0
    %1267 = vmatpush.bf16.msra.mxu0 0
    %1268 = vmatpush.bf16.msra.mxu0 0
    %1269 = vmatpush.bf16.msra.mxu0 0
    %1270 = vmatpush.bf16.msra.mxu0 %v1129
    %1271 = vmatmul.f32.gmra.mxu0 %v1113
    %v1272 = vpop.f32.mrf.mxu0
    %v1273 = vadd.f32 0.0, %v1272
    %1274 = vdwg.mxu0
    %1275 = vmatpush.bf16.msra.mxu0 0
    %1276 = vmatpush.bf16.msra.mxu0 0
    %1277 = vmatpush.bf16.msra.mxu0 0
    %1278 = vmatpush.bf16.msra.mxu0 0
    %1279 = vmatpush.bf16.msra.mxu0 0
    %1280 = vmatpush.bf16.msra.mxu0 0
    %1281 = vmatpush.bf16.msra.mxu0 0
    %1282 = vmatpush.bf16.msra.mxu0 %v1131
    %1283 = vmatmul.f32.gmra.mxu0 %v1113
    %v1284 = vpop.f32.mrf.mxu0
    %v1285 = vadd.f32 0.0, %v1284
    %1286 = vdwg.mxu0
    %1287 = vmatpush.bf16.msra.mxu0 0
    %1288 = vmatpush.bf16.msra.mxu0 0
    %1289 = vmatpush.bf16.msra.mxu0 0
    %1290 = vmatpush.bf16.msra.mxu0 0
    %1291 = vmatpush.bf16.msra.mxu0 0
    %1292 = vmatpush.bf16.msra.mxu0 0
    %1293 = vmatpush.bf16.msra.mxu0 0
    %1294 = vmatpush.bf16.msra.mxu0 %v1133
    %1295 = vmatmul.f32.gmra.mxu0 %v1113
    %v1296 = vpop.f32.mrf.mxu0
    %v1297 = vadd.f32 0.0, %v1296
    %1298 = vdwg.mxu0
    %1299 = vmatpush.bf16.msra.mxu0 0
    %1300 = vmatpush.bf16.msra.mxu0 0
    %1301 = vmatpush.bf16.msra.mxu0 0
    %1302 = vmatpush.bf16.msra.mxu0 0
    %1303 = vmatpush.bf16.msra.mxu0 0
    %1304 = vmatpush.bf16.msra.mxu0 0
    %1305 = vmatpush.bf16.msra.mxu0 0
    %1306 = vmatpush.bf16.msra.mxu0 %v1135
    %1307 = vmatmul.f32.gmra.mxu0 %v1113
    %v1308 = vpop.f32.mrf.mxu0
    %v1309 = vadd.f32 0.0, %v1308
    %1310 = vdwg.mxu0
    %1311 = vmatpush.bf16.msra.mxu0 0
    %1312 = vmatpush.bf16.msra.mxu0 0
    %1313 = vmatpush.bf16.msra.mxu0 0
    %1314 = vmatpush.bf16.msra.mxu0 0
    %1315 = vmatpush.bf16.msra.mxu0 0
    %1316 = vmatpush.bf16.msra.mxu0 0
    %1317 = vmatpush.bf16.msra.mxu0 0
    %1318 = vmatpush.bf16.msra.mxu0 %v1137
    %1319 = vmatmul.f32.gmra.mxu0 %v1113
    %v1320 = vpop.f32.mrf.mxu0
    %v1321 = vadd.f32 0.0, %v1320
    %1322 = vdwg.mxu0
    %1323 = vmatpush.bf16.msra.mxu0 0
    %1324 = vmatpush.bf16.msra.mxu0 0
    %1325 = vmatpush.bf16.msra.mxu0 0
    %1326 = vmatpush.bf16.msra.mxu0 0
    %1327 = vmatpush.bf16.msra.mxu0 0
    %1328 = vmatpush.bf16.msra.mxu0 0
    %1329 = vmatpush.bf16.msra.mxu0 0
    %1330 = vmatpush.bf16.msra.mxu0 %v1139
    %1331 = vmatmul.f32.gmra.mxu0 %v1113
    %v1332 = vpop.f32.mrf.mxu0
    %v1333 = vadd.f32 0.0, %v1332
    %1334 = vdwg.mxu0
    %1335 = vmatpush.bf16.msra.mxu0 0
    %1336 = vmatpush.bf16.msra.mxu0 0
    %1337 = vmatpush.bf16.msra.mxu0 0
    %1338 = vmatpush.bf16.msra.mxu0 0
    %1339 = vmatpush.bf16.msra.mxu0 0
    %1340 = vmatpush.bf16.msra.mxu0 0
    %1341 = vmatpush.bf16.msra.mxu0 0
    %1342 = vmatpush.bf16.msra.mxu0 %v1141
    %1343 = vmatmul.f32.gmra.mxu0 %v1113
    %v1344 = vpop.f32.mrf.mxu0
    %v1345 = vadd.f32 0.0, %v1344
    %1346 = vdwg.mxu0
    %1347 = vmatpush.bf16.msra.mxu0 0
    %1348 = vmatpush.bf16.msra.mxu0 0
    %1349 = vmatpush.bf16.msra.mxu0 0
    %1350 = vmatpush.bf16.msra.mxu0 0
    %1351 = vmatpush.bf16.msra.mxu0 0
    %1352 = vmatpush.bf16.msra.mxu0 0
    %1353 = vmatpush.bf16.msra.mxu0 0
    %1354 = vmatpush.bf16.msra.mxu0 %v1143
    %1355 = vmatmul.f32.gmra.mxu0 %v1113
    %v1356 = vpop.f32.mrf.mxu0
    %v1357 = vadd.f32 0.0, %v1356
    %1358 = vdwg.mxu0
    %1359 = vmatpush.bf16.msra.mxu0 0
    %1360 = vmatpush.bf16.msra.mxu0 0
    %1361 = vmatpush.bf16.msra.mxu0 0
    %1362 = vmatpush.bf16.msra.mxu0 0
    %1363 = vmatpush.bf16.msra.mxu0 0
    %1364 = vmatpush.bf16.msra.mxu0 0
    %1365 = vmatpush.bf16.msra.mxu0 0
    %1366 = vmatpush.bf16.msra.mxu0 %v1145
    %1367 = vmatmul.f32.gmra.mxu0 %v1113
    %v1368 = vpop.f32.mrf.mxu0
    %v1369 = vadd.f32 0.0, %v1368
    %1370 = vdwg.mxu0
    %1371 = vmatpush.bf16.msra.mxu0 0
    %1372 = vmatpush.bf16.msra.mxu0 0
    %1373 = vmatpush.bf16.msra.mxu0 0
    %1374 = vmatpush.bf16.msra.mxu0 0
    %1375 = vmatpush.bf16.msra.mxu0 0
    %1376 = vmatpush.bf16.msra.mxu0 0
    %1377 = vmatpush.bf16.msra.mxu0 0
    %1378 = vmatpush.bf16.msra.mxu0 %v1147
    %1379 = vmatmul.f32.gmra.mxu0 %v1113
    %v1380 = vpop.f32.mrf.mxu0
    %v1381 = vadd.f32 0.0, %v1380
    %1382 = vdwg.mxu0
    %1383 = vmatpush.bf16.msra.mxu0 0
    %1384 = vmatpush.bf16.msra.mxu0 0
    %1385 = vmatpush.bf16.msra.mxu0 0
    %1386 = vmatpush.bf16.msra.mxu0 0
    %1387 = vmatpush.bf16.msra.mxu0 0
    %1388 = vmatpush.bf16.msra.mxu0 0
    %1389 = vmatpush.bf16.msra.mxu0 0
    %1390 = vmatpush.bf16.msra.mxu0 %v1149
    %1391 = vmatmul.f32.gmra.mxu0 %v1113
    %v1392 = vpop.f32.mrf.mxu0
    %v1393 = vadd.f32 0.0, %v1392
    %1394 = vdwg.mxu0
    %1395 = vmatpush.bf16.msra.mxu0 0
    %1396 = vmatpush.bf16.msra.mxu0 0
    %1397 = vmatpush.bf16.msra.mxu0 0
    %1398 = vmatpush.bf16.msra.mxu0 0
    %1399 = vmatpush.bf16.msra.mxu0 0
    %1400 = vmatpush.bf16.msra.mxu0 0
    %1401 = vmatpush.bf16.msra.mxu0 0
    %1402 = vmatpush.bf16.msra.mxu0 %v1151
    %1403 = vmatmul.f32.gmra.mxu0 %v1113
    %v1404 = vpop.f32.mrf.mxu0
    %v1405 = vadd.f32 0.0, %v1404
    %1406 = vdwg.mxu0
    %1407 = vmatpush.bf16.msra.mxu0 0
    %1408 = vmatpush.bf16.msra.mxu0 0
    %1409 = vmatpush.bf16.msra.mxu0 0
    %1410 = vmatpush.bf16.msra.mxu0 0
    %1411 = vmatpush.bf16.msra.mxu0 0
    %1412 = vmatpush.bf16.msra.mxu0 0
    %1413 = vmatpush.bf16.msra.mxu0 0
    %1414 = vmatpush.bf16.msra.mxu0 %v1153
    %1415 = vmatmul.f32.gmra.mxu0 %v1113
    %v1416 = vpop.f32.mrf.mxu0
    %v1417 = vadd.f32 0.0, %v1416
    %1418 = vdwg.mxu0
    %1419 = vmatpush.bf16.msra.mxu0 0
    %1420 = vmatpush.bf16.msra.mxu0 0
    %1421 = vmatpush.bf16.msra.mxu0 0
    %1422 = vmatpush.bf16.msra.mxu0 0
    %1423 = vmatpush.bf16.msra.mxu0 0
    %1424 = vmatpush.bf16.msra.mxu0 0
    %1425 = vmatpush.bf16.msra.mxu0 0
    %1426 = vmatpush.bf16.msra.mxu0 %v1155
    %1427 = vmatmul.f32.gmra.mxu0 %v1113
    %v1428 = vpop.f32.mrf.mxu0
    %v1429 = vadd.f32 0.0, %v1428
    %1430 = vdwg.mxu0
    %1431 = vmatpush.bf16.msra.mxu0 0
    %1432 = vmatpush.bf16.msra.mxu0 0
    %1433 = vmatpush.bf16.msra.mxu0 0
    %1434 = vmatpush.bf16.msra.mxu0 0
    %1435 = vmatpush.bf16.msra.mxu0 0
    %1436 = vmatpush.bf16.msra.mxu0 0
    %1437 = vmatpush.bf16.msra.mxu0 0
    %1438 = vmatpush.bf16.msra.mxu0 %v1157
    %1439 = vmatmul.f32.gmra.mxu0 %v1113
    %v1440 = vpop.f32.mrf.mxu0
    %v1441 = vadd.f32 0.0, %v1440
    %1442 = vdwg.mxu0
    %1443 = vmatpush.bf16.msra.mxu0 0
    %1444 = vmatpush.bf16.msra.mxu0 0
    %1445 = vmatpush.bf16.msra.mxu0 0
    %1446 = vmatpush.bf16.msra.mxu0 0
    %1447 = vmatpush.bf16.msra.mxu0 0
    %1448 = vmatpush.bf16.msra.mxu0 0
    %1449 = vmatpush.bf16.msra.mxu0 0
    %1450 = vmatpush.bf16.msra.mxu0 %v1159
    %1451 = vmatmul.f32.gmra.mxu0 %v1113
    %v1452 = vpop.f32.mrf.mxu0
    %v1453 = vadd.f32 0.0, %v1452
    %1454 = vdwg.mxu0
    %1455 = vmatpush.bf16.msra.mxu0 0
    %1456 = vmatpush.bf16.msra.mxu0 0
    %1457 = vmatpush.bf16.msra.mxu0 0
    %1458 = vmatpush.bf16.msra.mxu0 0
    %1459 = vmatpush.bf16.msra.mxu0 0
    %1460 = vmatpush.bf16.msra.mxu0 0
    %1461 = vmatpush.bf16.msra.mxu0 0
    %1462 = vmatpush.bf16.msra.mxu0 %v1161
    %1463 = vmatmul.f32.gmra.mxu0 %v1113
    %v1464 = vpop.f32.mrf.mxu0
    %v1465 = vadd.f32 0.0, %v1464
    %1466 = vdwg.mxu0
    %1467 = vmatpush.bf16.msra.mxu0 0
    %1468 = vmatpush.bf16.msra.mxu0 0
    %1469 = vmatpush.bf16.msra.mxu0 0
    %1470 = vmatpush.bf16.msra.mxu0 0
    %1471 = vmatpush.bf16.msra.mxu0 0
    %1472 = vmatpush.bf16.msra.mxu0 0
    %1473 = vmatpush.bf16.msra.mxu0 0
    %1474 = vmatpush.bf16.msra.mxu0 %v1163
    %1475 = vmatmul.f32.gmra.mxu0 %v1113
    %v1476 = vpop.f32.mrf.mxu0
    %v1477 = vadd.f32 0.0, %v1476
    %1478 = vdwg.mxu0
    %1479 = vmatpush.bf16.msra.mxu0 0
    %1480 = vmatpush.bf16.msra.mxu0 0
    %1481 = vmatpush.bf16.msra.mxu0 0
    %1482 = vmatpush.bf16.msra.mxu0 0
    %1483 = vmatpush.bf16.msra.mxu0 0
    %1484 = vmatpush.bf16.msra.mxu0 0
    %1485 = vmatpush.bf16.msra.mxu0 0
    %1486 = vmatpush.bf16.msra.mxu0 %v1165
    %1487 = vmatmul.f32.gmra.mxu0 %v1113
    %v1488 = vpop.f32.mrf.mxu0
    %v1489 = vadd.f32 0.0, %v1488
    %1490 = vdwg.mxu0
    %1491 = vmatpush.bf16.msra.mxu0 0
    %1492 = vmatpush.bf16.msra.mxu0 0
    %1493 = vmatpush.bf16.msra.mxu0 0
    %1494 = vmatpush.bf16.msra.mxu0 0
    %1495 = vmatpush.bf16.msra.mxu0 0
    %1496 = vmatpush.bf16.msra.mxu0 0
    %1497 = vmatpush.bf16.msra.mxu0 0
    %1498 = vmatpush.bf16.msra.mxu0 %v1167
    %1499 = vmatmul.f32.gmra.mxu0 %v1113
    %v1500 = vpop.f32.mrf.mxu0
    %v1501 = vadd.f32 0.0, %v1500
    %1502 = vdwg.mxu0
    %1503 = vmatpush.bf16.msra.mxu0 0
    %1504 = vmatpush.bf16.msra.mxu0 0
    %1505 = vmatpush.bf16.msra.mxu0 0
    %1506 = vmatpush.bf16.msra.mxu0 0
    %1507 = vmatpush.bf16.msra.mxu0 0
    %1508 = vmatpush.bf16.msra.mxu0 0
    %1509 = vmatpush.bf16.msra.mxu0 0
    %1510 = vmatpush.bf16.msra.mxu0 %v1169
    %1511 = vmatmul.f32.gmra.mxu0 %v1113
    %v1512 = vpop.f32.mrf.mxu0
    %v1513 = vadd.f32 0.0, %v1512
    %1514 = vdwg.mxu0
    %1515 = vmatpush.bf16.msra.mxu0 0
    %1516 = vmatpush.bf16.msra.mxu0 0
    %1517 = vmatpush.bf16.msra.mxu0 0
    %1518 = vmatpush.bf16.msra.mxu0 0
    %1519 = vmatpush.bf16.msra.mxu0 0
    %1520 = vmatpush.bf16.msra.mxu0 0
    %1521 = vmatpush.bf16.msra.mxu0 0
    %1522 = vmatpush.bf16.msra.mxu0 %v1171
    %1523 = vmatmul.f32.gmra.mxu0 %v1113
    %v1524 = vpop.f32.mrf.mxu0
    %v1525 = vadd.f32 0.0, %v1524
    %1526 = vdwg.mxu0
    %1527 = vmatpush.bf16.msra.mxu0 0
    %1528 = vmatpush.bf16.msra.mxu0 0
    %1529 = vmatpush.bf16.msra.mxu0 0
    %1530 = vmatpush.bf16.msra.mxu0 0
    %1531 = vmatpush.bf16.msra.mxu0 0
    %1532 = vmatpush.bf16.msra.mxu0 0
    %1533 = vmatpush.bf16.msra.mxu0 0
    %1534 = vmatpush.bf16.msra.mxu0 %v1173
    %1535 = vmatmul.f32.gmra.mxu0 %v1113
    %v1536 = vpop.f32.mrf.mxu0
    %v1537 = vadd.f32 0.0, %v1536
    %1538 = vdwg.mxu0
    %1539 = vmatpush.bf16.msra.mxu0 0
    %1540 = vmatpush.bf16.msra.mxu0 0
    %1541 = vmatpush.bf16.msra.mxu0 0
    %1542 = vmatpush.bf16.msra.mxu0 0
    %1543 = vmatpush.bf16.msra.mxu0 0
    %1544 = vmatpush.bf16.msra.mxu0 0
    %1545 = vmatpush.bf16.msra.mxu0 0
    %1546 = vmatpush.bf16.msra.mxu0 %v1175
    %1547 = vmatmul.f32.gmra.mxu0 %v1113
    %v1548 = vpop.f32.mrf.mxu0
    %v1549 = vadd.f32 0.0, %v1548
    %1550 = vdwg.mxu0
    %1551 = vmatpush.bf16.msra.mxu0 0
    %1552 = vmatpush.bf16.msra.mxu0 0
    %1553 = vmatpush.bf16.msra.mxu0 0
    %1554 = vmatpush.bf16.msra.mxu0 0
    %1555 = vmatpush.bf16.msra.mxu0 0
    %1556 = vmatpush.bf16.msra.mxu0 0
    %1557 = vmatpush.bf16.msra.mxu0 0
    %1558 = vmatpush.bf16.msra.mxu0 %v1177
    %1559 = vmatmul.f32.gmra.mxu0 %v1113
    %v1560 = vpop.f32.mrf.mxu0
    %v1561 = vadd.f32 0.0, %v1560
    %1562 = vdwg.mxu0
    %v1565 = vperm.slane %v283, %v550
    %v1566 = vperm.slane %v288, %v550
    %v1567 = vsel %vm553, %v1566, %v1565
    %1569 = vst [vmem:[#allocation1] ss:$4 sm:$0xff] %v435
    %s1571 = scalar_lea.vmem [#allocation1], 32
    %1572 = vst [vmem:[%s1571] ss:$4 sm:$0xff] %v436
    %v1573 = vld.sshfl [vmem:[#allocation1] sm:$0xff pattern:$0x73625140]
    %v1574 = vld.sshfl [vmem:[#allocation1 + $0x8] sm:$0xff pattern:$0x73625140]
    %v1575 = vld.sshfl [vmem:[#allocation1 + $0x10] sm:$0xff pattern:$0x73625140]
    %v1576 = vld.sshfl [vmem:[#allocation1 + $0x18] sm:$0xff pattern:$0x73625140]
    %v1577 = vld.sshfl [vmem:[#allocation1 + $0x20] sm:$0xff pattern:$0x73625140]
    %v1578 = vld.sshfl [vmem:[#allocation1 + $0x28] sm:$0xff pattern:$0x73625140]
    %v1579 = vld.sshfl [vmem:[#allocation1 + $0x30] sm:$0xff pattern:$0x73625140]
    %v1580 = vld.sshfl [vmem:[#allocation1 + $0x38] sm:$0xff pattern:$0x73625140]
    %1582 = vst [vmem:[#allocation1] ss:$4 sm:$0xff] %v437
    %1584 = vst [vmem:[%s1571] ss:$4 sm:$0xff] %v438
    %v1585 = vld.sshfl [vmem:[#allocation1] sm:$0xff pattern:$0x73625140]
    %v1586 = vld.sshfl [vmem:[#allocation1 + $0x8] sm:$0xff pattern:$0x73625140]
    %v1587 = vld.sshfl [vmem:[#allocation1 + $0x10] sm:$0xff pattern:$0x73625140]
    %v1588 = vld.sshfl [vmem:[#allocation1 + $0x18] sm:$0xff pattern:$0x73625140]
    %v1589 = vld.sshfl [vmem:[#allocation1 + $0x20] sm:$0xff pattern:$0x73625140]
    %v1590 = vld.sshfl [vmem:[#allocation1 + $0x28] sm:$0xff pattern:$0x73625140]
    %v1591 = vld.sshfl [vmem:[#allocation1 + $0x30] sm:$0xff pattern:$0x73625140]
    %v1592 = vld.sshfl [vmem:[#allocation1 + $0x38] sm:$0xff pattern:$0x73625140]
    %1594 = vst [vmem:[#allocation1] ss:$4 sm:$0xff] %v439
    %1596 = vst [vmem:[%s1571] ss:$4 sm:$0xff] %v440
    %v1597 = vld.sshfl [vmem:[#allocation1] sm:$0xff pattern:$0x73625140]
    %v1598 = vld.sshfl [vmem:[#allocation1 + $0x8] sm:$0xff pattern:$0x73625140]
    %v1599 = vld.sshfl [vmem:[#allocation1 + $0x10] sm:$0xff pattern:$0x73625140]
    %v1600 = vld.sshfl [vmem:[#allocation1 + $0x18] sm:$0xff pattern:$0x73625140]
    %v1601 = vld.sshfl [vmem:[#allocation1 + $0x20] sm:$0xff pattern:$0x73625140]
    %v1602 = vld.sshfl [vmem:[#allocation1 + $0x28] sm:$0xff pattern:$0x73625140]
    %v1603 = vld.sshfl [vmem:[#allocation1 + $0x30] sm:$0xff pattern:$0x73625140]
    %v1604 = vld.sshfl [vmem:[#allocation1 + $0x38] sm:$0xff pattern:$0x73625140]
    %1606 = vst [vmem:[#allocation1] ss:$4 sm:$0xff] %v441
    %1608 = vst [vmem:[%s1571] ss:$4 sm:$0xff] %v442
    %v1609 = vld.sshfl [vmem:[#allocation1] sm:$0xff pattern:$0x73625140]
    %v1610 = vld.sshfl [vmem:[#allocation1 + $0x8] sm:$0xff pattern:$0x73625140]
    %v1611 = vld.sshfl [vmem:[#allocation1 + $0x10] sm:$0xff pattern:$0x73625140]
    %v1612 = vld.sshfl [vmem:[#allocation1 + $0x18] sm:$0xff pattern:$0x73625140]
    %v1613 = vld.sshfl [vmem:[#allocation1 + $0x20] sm:$0xff pattern:$0x73625140]
    %v1614 = vld.sshfl [vmem:[#allocation1 + $0x28] sm:$0xff pattern:$0x73625140]
    %v1615 = vld.sshfl [vmem:[#allocation1 + $0x30] sm:$0xff pattern:$0x73625140]
    %v1616 = vld.sshfl [vmem:[#allocation1 + $0x38] sm:$0xff pattern:$0x73625140]
    %v1617 = vsel %vm604, %v1567, 0
    %v1619 = vand.u32 %v1573, %v610
    %v1621 = vand.u32 %v1574, %v610
    %v1623 = vand.u32 %v1575, %v610
    %v1625 = vand.u32 %v1576, %v610
    %v1627 = vand.u32 %v1577, %v610
    %v1629 = vand.u32 %v1578, %v610
    %v1631 = vand.u32 %v1579, %v610
    %v1633 = vand.u32 %v1580, %v610
    %v1635 = vand.u32 %v1585, %v610
    %v1637 = vand.u32 %v1586, %v610
    %v1639 = vand.u32 %v1587, %v610
    %v1641 = vand.u32 %v1588, %v610
    %v1643 = vand.u32 %v1589, %v610
    %v1645 = vand.u32 %v1590, %v610
    %v1647 = vand.u32 %v1591, %v610
    %v1649 = vand.u32 %v1592, %v610
    %v1651 = vand.u32 %v1597, %v610
    %v1653 = vand.u32 %v1598, %v610
    %v1655 = vand.u32 %v1599, %v610
    %v1657 = vand.u32 %v1600, %v610
    %v1659 = vand.u32 %v1601, %v610
    %v1661 = vand.u32 %v1602, %v610
    %v1663 = vand.u32 %v1603, %v610
    %v1665 = vand.u32 %v1604, %v610
    %v1667 = vand.u32 %v1609, %v610
    %v1669 = vand.u32 %v1610, %v610
    %v1671 = vand.u32 %v1611, %v610
    %v1673 = vand.u32 %v1612, %v610
    %v1675 = vand.u32 %v1613, %v610
    %v1677 = vand.u32 %v1614, %v610
    %v1679 = vand.u32 %v1615, %v610
    %v1681 = vand.u32 %v1616, %v610
    %1683 = vmatpush.bf16.msra.mxu0 0
    %1684 = vmatpush.bf16.msra.mxu0 0
    %1685 = vmatpush.bf16.msra.mxu0 0
    %1686 = vmatpush.bf16.msra.mxu0 0
    %1687 = vmatpush.bf16.msra.mxu0 0
    %1688 = vmatpush.bf16.msra.mxu0 0
    %1689 = vmatpush.bf16.msra.mxu0 0
    %1690 = vmatpush.bf16.msra.mxu0 %v1619
    %1691 = vmatmul.f32.gmra.mxu0 %v1617
    %v1692 = vpop.f32.mrf.mxu0
    %v1693 = vadd.f32 0.0, %v1692
    %1694 = vdwg.mxu0
    %1695 = vmatpush.bf16.msra.mxu0 0
    %1696 = vmatpush.bf16.msra.mxu0 0
    %1697 = vmatpush.bf16.msra.mxu0 0
    %1698 = vmatpush.bf16.msra.mxu0 0
    %1699 = vmatpush.bf16.msra.mxu0 0
    %1700 = vmatpush.bf16.msra.mxu0 0
    %1701 = vmatpush.bf16.msra.mxu0 0
    %1702 = vmatpush.bf16.msra.mxu0 %v1621
    %1703 = vmatmul.f32.gmra.mxu0 %v1617
    %v1704 = vpop.f32.mrf.mxu0
    %v1705 = vadd.f32 0.0, %v1704
    %1706 = vdwg.mxu0
    %1707 = vmatpush.bf16.msra.mxu0 0
    %1708 = vmatpush.bf16.msra.mxu0 0
    %1709 = vmatpush.bf16.msra.mxu0 0
    %1710 = vmatpush.bf16.msra.mxu0 0
    %1711 = vmatpush.bf16.msra.mxu0 0
    %1712 = vmatpush.bf16.msra.mxu0 0
    %1713 = vmatpush.bf16.msra.mxu0 0
    %1714 = vmatpush.bf16.msra.mxu0 %v1623
    %1715 = vmatmul.f32.gmra.mxu0 %v1617
    %v1716 = vpop.f32.mrf.mxu0
    %v1717 = vadd.f32 0.0, %v1716
    %1718 = vdwg.mxu0
    %1719 = vmatpush.bf16.msra.mxu0 0
    %1720 = vmatpush.bf16.msra.mxu0 0
    %1721 = vmatpush.bf16.msra.mxu0 0
    %1722 = vmatpush.bf16.msra.mxu0 0
    %1723 = vmatpush.bf16.msra.mxu0 0
    %1724 = vmatpush.bf16.msra.mxu0 0
    %1725 = vmatpush.bf16.msra.mxu0 0
    %1726 = vmatpush.bf16.msra.mxu0 %v1625
    %1727 = vmatmul.f32.gmra.mxu0 %v1617
    %v1728 = vpop.f32.mrf.mxu0
    %v1729 = vadd.f32 0.0, %v1728
    %1730 = vdwg.mxu0
    %1731 = vmatpush.bf16.msra.mxu0 0
    %1732 = vmatpush.bf16.msra.mxu0 0
    %1733 = vmatpush.bf16.msra.mxu0 0
    %1734 = vmatpush.bf16.msra.mxu0 0
    %1735 = vmatpush.bf16.msra.mxu0 0
    %1736 = vmatpush.bf16.msra.mxu0 0
    %1737 = vmatpush.bf16.msra.mxu0 0
    %1738 = vmatpush.bf16.msra.mxu0 %v1627
    %1739 = vmatmul.f32.gmra.mxu0 %v1617
    %v1740 = vpop.f32.mrf.mxu0
    %v1741 = vadd.f32 0.0, %v1740
    %1742 = vdwg.mxu0
    %1743 = vmatpush.bf16.msra.mxu0 0
    %1744 = vmatpush.bf16.msra.mxu0 0
    %1745 = vmatpush.bf16.msra.mxu0 0
    %1746 = vmatpush.bf16.msra.mxu0 0
    %1747 = vmatpush.bf16.msra.mxu0 0
    %1748 = vmatpush.bf16.msra.mxu0 0
    %1749 = vmatpush.bf16.msra.mxu0 0
    %1750 = vmatpush.bf16.msra.mxu0 %v1629
    %1751 = vmatmul.f32.gmra.mxu0 %v1617
    %v1752 = vpop.f32.mrf.mxu0
    %v1753 = vadd.f32 0.0, %v1752
    %1754 = vdwg.mxu0
    %1755 = vmatpush.bf16.msra.mxu0 0
    %1756 = vmatpush.bf16.msra.mxu0 0
    %1757 = vmatpush.bf16.msra.mxu0 0
    %1758 = vmatpush.bf16.msra.mxu0 0
    %1759 = vmatpush.bf16.msra.mxu0 0
    %1760 = vmatpush.bf16.msra.mxu0 0
    %1761 = vmatpush.bf16.msra.mxu0 0
    %1762 = vmatpush.bf16.msra.mxu0 %v1631
    %1763 = vmatmul.f32.gmra.mxu0 %v1617
    %v1764 = vpop.f32.mrf.mxu0
    %v1765 = vadd.f32 0.0, %v1764
    %1766 = vdwg.mxu0
    %1767 = vmatpush.bf16.msra.mxu0 0
    %1768 = vmatpush.bf16.msra.mxu0 0
    %1769 = vmatpush.bf16.msra.mxu0 0
    %1770 = vmatpush.bf16.msra.mxu0 0
    %1771 = vmatpush.bf16.msra.mxu0 0
    %1772 = vmatpush.bf16.msra.mxu0 0
    %1773 = vmatpush.bf16.msra.mxu0 0
    %1774 = vmatpush.bf16.msra.mxu0 %v1633
    %1775 = vmatmul.f32.gmra.mxu0 %v1617
    %v1776 = vpop.f32.mrf.mxu0
    %v1777 = vadd.f32 0.0, %v1776
    %1778 = vdwg.mxu0
    %1779 = vmatpush.bf16.msra.mxu0 0
    %1780 = vmatpush.bf16.msra.mxu0 0
    %1781 = vmatpush.bf16.msra.mxu0 0
    %1782 = vmatpush.bf16.msra.mxu0 0
    %1783 = vmatpush.bf16.msra.mxu0 0
    %1784 = vmatpush.bf16.msra.mxu0 0
    %1785 = vmatpush.bf16.msra.mxu0 0
    %1786 = vmatpush.bf16.msra.mxu0 %v1635
    %1787 = vmatmul.f32.gmra.mxu0 %v1617
    %v1788 = vpop.f32.mrf.mxu0
    %v1789 = vadd.f32 0.0, %v1788
    %1790 = vdwg.mxu0
    %1791 = vmatpush.bf16.msra.mxu0 0
    %1792 = vmatpush.bf16.msra.mxu0 0
    %1793 = vmatpush.bf16.msra.mxu0 0
    %1794 = vmatpush.bf16.msra.mxu0 0
    %1795 = vmatpush.bf16.msra.mxu0 0
    %1796 = vmatpush.bf16.msra.mxu0 0
    %1797 = vmatpush.bf16.msra.mxu0 0
    %1798 = vmatpush.bf16.msra.mxu0 %v1637
    %1799 = vmatmul.f32.gmra.mxu0 %v1617
    %v1800 = vpop.f32.mrf.mxu0
    %v1801 = vadd.f32 0.0, %v1800
    %1802 = vdwg.mxu0
    %1803 = vmatpush.bf16.msra.mxu0 0
    %1804 = vmatpush.bf16.msra.mxu0 0
    %1805 = vmatpush.bf16.msra.mxu0 0
    %1806 = vmatpush.bf16.msra.mxu0 0
    %1807 = vmatpush.bf16.msra.mxu0 0
    %1808 = vmatpush.bf16.msra.mxu0 0
    %1809 = vmatpush.bf16.msra.mxu0 0
    %1810 = vmatpush.bf16.msra.mxu0 %v1639
    %1811 = vmatmul.f32.gmra.mxu0 %v1617
    %v1812 = vpop.f32.mrf.mxu0
    %v1813 = vadd.f32 0.0, %v1812
    %1814 = vdwg.mxu0
    %1815 = vmatpush.bf16.msra.mxu0 0
    %1816 = vmatpush.bf16.msra.mxu0 0
    %1817 = vmatpush.bf16.msra.mxu0 0
    %1818 = vmatpush.bf16.msra.mxu0 0
    %1819 = vmatpush.bf16.msra.mxu0 0
    %1820 = vmatpush.bf16.msra.mxu0 0
    %1821 = vmatpush.bf16.msra.mxu0 0
    %1822 = vmatpush.bf16.msra.mxu0 %v1641
    %1823 = vmatmul.f32.gmra.mxu0 %v1617
    %v1824 = vpop.f32.mrf.mxu0
    %v1825 = vadd.f32 0.0, %v1824
    %1826 = vdwg.mxu0
    %1827 = vmatpush.bf16.msra.mxu0 0
    %1828 = vmatpush.bf16.msra.mxu0 0
    %1829 = vmatpush.bf16.msra.mxu0 0
    %1830 = vmatpush.bf16.msra.mxu0 0
    %1831 = vmatpush.bf16.msra.mxu0 0
    %1832 = vmatpush.bf16.msra.mxu0 0
    %1833 = vmatpush.bf16.msra.mxu0 0
    %1834 = vmatpush.bf16.msra.mxu0 %v1643
    %1835 = vmatmul.f32.gmra.mxu0 %v1617
    %v1836 = vpop.f32.mrf.mxu0
    %v1837 = vadd.f32 0.0, %v1836
    %1838 = vdwg.mxu0
    %1839 = vmatpush.bf16.msra.mxu0 0
    %1840 = vmatpush.bf16.msra.mxu0 0
    %1841 = vmatpush.bf16.msra.mxu0 0
    %1842 = vmatpush.bf16.msra.mxu0 0
    %1843 = vmatpush.bf16.msra.mxu0 0
    %1844 = vmatpush.bf16.msra.mxu0 0
    %1845 = vmatpush.bf16.msra.mxu0 0
    %1846 = vmatpush.bf16.msra.mxu0 %v1645
    %1847 = vmatmul.f32.gmra.mxu0 %v1617
    %v1848 = vpop.f32.mrf.mxu0
    %v1849 = vadd.f32 0.0, %v1848
    %1850 = vdwg.mxu0
    %1851 = vmatpush.bf16.msra.mxu0 0
    %1852 = vmatpush.bf16.msra.mxu0 0
    %1853 = vmatpush.bf16.msra.mxu0 0
    %1854 = vmatpush.bf16.msra.mxu0 0
    %1855 = vmatpush.bf16.msra.mxu0 0
    %1856 = vmatpush.bf16.msra.mxu0 0
    %1857 = vmatpush.bf16.msra.mxu0 0
    %1858 = vmatpush.bf16.msra.mxu0 %v1647
    %1859 = vmatmul.f32.gmra.mxu0 %v1617
    %v1860 = vpop.f32.mrf.mxu0
    %v1861 = vadd.f32 0.0, %v1860
    %1862 = vdwg.mxu0
    %1863 = vmatpush.bf16.msra.mxu0 0
    %1864 = vmatpush.bf16.msra.mxu0 0
    %1865 = vmatpush.bf16.msra.mxu0 0
    %1866 = vmatpush.bf16.msra.mxu0 0
    %1867 = vmatpush.bf16.msra.mxu0 0
    %1868 = vmatpush.bf16.msra.mxu0 0
    %1869 = vmatpush.bf16.msra.mxu0 0
    %1870 = vmatpush.bf16.msra.mxu0 %v1649
    %1871 = vmatmul.f32.gmra.mxu0 %v1617
    %v1872 = vpop.f32.mrf.mxu0
    %v1873 = vadd.f32 0.0, %v1872
    %1874 = vdwg.mxu0
    %1875 = vmatpush.bf16.msra.mxu0 0
    %1876 = vmatpush.bf16.msra.mxu0 0
    %1877 = vmatpush.bf16.msra.mxu0 0
    %1878 = vmatpush.bf16.msra.mxu0 0
    %1879 = vmatpush.bf16.msra.mxu0 0
    %1880 = vmatpush.bf16.msra.mxu0 0
    %1881 = vmatpush.bf16.msra.mxu0 0
    %1882 = vmatpush.bf16.msra.mxu0 %v1651
    %1883 = vmatmul.f32.gmra.mxu0 %v1617
    %v1884 = vpop.f32.mrf.mxu0
    %v1885 = vadd.f32 0.0, %v1884
    %1886 = vdwg.mxu0
    %1887 = vmatpush.bf16.msra.mxu0 0
    %1888 = vmatpush.bf16.msra.mxu0 0
    %1889 = vmatpush.bf16.msra.mxu0 0
    %1890 = vmatpush.bf16.msra.mxu0 0
    %1891 = vmatpush.bf16.msra.mxu0 0
    %1892 = vmatpush.bf16.msra.mxu0 0
    %1893 = vmatpush.bf16.msra.mxu0 0
    %1894 = vmatpush.bf16.msra.mxu0 %v1653
    %1895 = vmatmul.f32.gmra.mxu0 %v1617
    %v1896 = vpop.f32.mrf.mxu0
    %v1897 = vadd.f32 0.0, %v1896
    %1898 = vdwg.mxu0
    %1899 = vmatpush.bf16.msra.mxu0 0
    %1900 = vmatpush.bf16.msra.mxu0 0
    %1901 = vmatpush.bf16.msra.mxu0 0
    %1902 = vmatpush.bf16.msra.mxu0 0
    %1903 = vmatpush.bf16.msra.mxu0 0
    %1904 = vmatpush.bf16.msra.mxu0 0
    %1905 = vmatpush.bf16.msra.mxu0 0
    %1906 = vmatpush.bf16.msra.mxu0 %v1655
    %1907 = vmatmul.f32.gmra.mxu0 %v1617
    %v1908 = vpop.f32.mrf.mxu0
    %v1909 = vadd.f32 0.0, %v1908
    %1910 = vdwg.mxu0
    %1911 = vmatpush.bf16.msra.mxu0 0
    %1912 = vmatpush.bf16.msra.mxu0 0
    %1913 = vmatpush.bf16.msra.mxu0 0
    %1914 = vmatpush.bf16.msra.mxu0 0
    %1915 = vmatpush.bf16.msra.mxu0 0
    %1916 = vmatpush.bf16.msra.mxu0 0
    %1917 = vmatpush.bf16.msra.mxu0 0
    %1918 = vmatpush.bf16.msra.mxu0 %v1657
    %1919 = vmatmul.f32.gmra.mxu0 %v1617
    %v1920 = vpop.f32.mrf.mxu0
    %v1921 = vadd.f32 0.0, %v1920
    %1922 = vdwg.mxu0
    %1923 = vmatpush.bf16.msra.mxu0 0
    %1924 = vmatpush.bf16.msra.mxu0 0
    %1925 = vmatpush.bf16.msra.mxu0 0
    %1926 = vmatpush.bf16.msra.mxu0 0
    %1927 = vmatpush.bf16.msra.mxu0 0
    %1928 = vmatpush.bf16.msra.mxu0 0
    %1929 = vmatpush.bf16.msra.mxu0 0
    %1930 = vmatpush.bf16.msra.mxu0 %v1659
    %1931 = vmatmul.f32.gmra.mxu0 %v1617
    %v1932 = vpop.f32.mrf.mxu0
    %v1933 = vadd.f32 0.0, %v1932
    %1934 = vdwg.mxu0
    %1935 = vmatpush.bf16.msra.mxu0 0
    %1936 = vmatpush.bf16.msra.mxu0 0
    %1937 = vmatpush.bf16.msra.mxu0 0
    %1938 = vmatpush.bf16.msra.mxu0 0
    %1939 = vmatpush.bf16.msra.mxu0 0
    %1940 = vmatpush.bf16.msra.mxu0 0
    %1941 = vmatpush.bf16.msra.mxu0 0
    %1942 = vmatpush.bf16.msra.mxu0 %v1661
    %1943 = vmatmul.f32.gmra.mxu0 %v1617
    %v1944 = vpop.f32.mrf.mxu0
    %v1945 = vadd.f32 0.0, %v1944
    %1946 = vdwg.mxu0
    %1947 = vmatpush.bf16.msra.mxu0 0
    %1948 = vmatpush.bf16.msra.mxu0 0
    %1949 = vmatpush.bf16.msra.mxu0 0
    %1950 = vmatpush.bf16.msra.mxu0 0
    %1951 = vmatpush.bf16.msra.mxu0 0
    %1952 = vmatpush.bf16.msra.mxu0 0
    %1953 = vmatpush.bf16.msra.mxu0 0
    %1954 = vmatpush.bf16.msra.mxu0 %v1663
    %1955 = vmatmul.f32.gmra.mxu0 %v1617
    %v1956 = vpop.f32.mrf.mxu0
    %v1957 = vadd.f32 0.0, %v1956
    %1958 = vdwg.mxu0
    %1959 = vmatpush.bf16.msra.mxu0 0
    %1960 = vmatpush.bf16.msra.mxu0 0
    %1961 = vmatpush.bf16.msra.mxu0 0
    %1962 = vmatpush.bf16.msra.mxu0 0
    %1963 = vmatpush.bf16.msra.mxu0 0
    %1964 = vmatpush.bf16.msra.mxu0 0
    %1965 = vmatpush.bf16.msra.mxu0 0
    %1966 = vmatpush.bf16.msra.mxu0 %v1665
    %1967 = vmatmul.f32.gmra.mxu0 %v1617
    %v1968 = vpop.f32.mrf.mxu0
    %v1969 = vadd.f32 0.0, %v1968
    %1970 = vdwg.mxu0
    %1971 = vmatpush.bf16.msra.mxu0 0
    %1972 = vmatpush.bf16.msra.mxu0 0
    %1973 = vmatpush.bf16.msra.mxu0 0
    %1974 = vmatpush.bf16.msra.mxu0 0
    %1975 = vmatpush.bf16.msra.mxu0 0
    %1976 = vmatpush.bf16.msra.mxu0 0
    %1977 = vmatpush.bf16.msra.mxu0 0
    %1978 = vmatpush.bf16.msra.mxu0 %v1667
    %1979 = vmatmul.f32.gmra.mxu0 %v1617
    %v1980 = vpop.f32.mrf.mxu0
    %v1981 = vadd.f32 0.0, %v1980
    %1982 = vdwg.mxu0
    %1983 = vmatpush.bf16.msra.mxu0 0
    %1984 = vmatpush.bf16.msra.mxu0 0
    %1985 = vmatpush.bf16.msra.mxu0 0
    %1986 = vmatpush.bf16.msra.mxu0 0
    %1987 = vmatpush.bf16.msra.mxu0 0
    %1988 = vmatpush.bf16.msra.mxu0 0
    %1989 = vmatpush.bf16.msra.mxu0 0
    %1990 = vmatpush.bf16.msra.mxu0 %v1669
    %1991 = vmatmul.f32.gmra.mxu0 %v1617
    %v1992 = vpop.f32.mrf.mxu0
    %v1993 = vadd.f32 0.0, %v1992
    %1994 = vdwg.mxu0
    %1995 = vmatpush.bf16.msra.mxu0 0
    %1996 = vmatpush.bf16.msra.mxu0 0
    %1997 = vmatpush.bf16.msra.mxu0 0
    %1998 = vmatpush.bf16.msra.mxu0 0
    %1999 = vmatpush.bf16.msra.mxu0 0
    %2000 = vmatpush.bf16.msra.mxu0 0
    %2001 = vmatpush.bf16.msra.mxu0 0
    %2002 = vmatpush.bf16.msra.mxu0 %v1671
    %2003 = vmatmul.f32.gmra.mxu0 %v1617
    %v2004 = vpop.f32.mrf.mxu0
    %v2005 = vadd.f32 0.0, %v2004
    %2006 = vdwg.mxu0
    %2007 = vmatpush.bf16.msra.mxu0 0
    %2008 = vmatpush.bf16.msra.mxu0 0
    %2009 = vmatpush.bf16.msra.mxu0 0
    %2010 = vmatpush.bf16.msra.mxu0 0
    %2011 = vmatpush.bf16.msra.mxu0 0
    %2012 = vmatpush.bf16.msra.mxu0 0
    %2013 = vmatpush.bf16.msra.mxu0 0
    %2014 = vmatpush.bf16.msra.mxu0 %v1673
    %2015 = vmatmul.f32.gmra.mxu0 %v1617
    %v2016 = vpop.f32.mrf.mxu0
    %v2017 = vadd.f32 0.0, %v2016
    %2018 = vdwg.mxu0
    %2019 = vmatpush.bf16.msra.mxu0 0
    %2020 = vmatpush.bf16.msra.mxu0 0
    %2021 = vmatpush.bf16.msra.mxu0 0
    %2022 = vmatpush.bf16.msra.mxu0 0
    %2023 = vmatpush.bf16.msra.mxu0 0
    %2024 = vmatpush.bf16.msra.mxu0 0
    %2025 = vmatpush.bf16.msra.mxu0 0
    %2026 = vmatpush.bf16.msra.mxu0 %v1675
    %2027 = vmatmul.f32.gmra.mxu0 %v1617
    %v2028 = vpop.f32.mrf.mxu0
    %v2029 = vadd.f32 0.0, %v2028
    %2030 = vdwg.mxu0
    %2031 = vmatpush.bf16.msra.mxu0 0
    %2032 = vmatpush.bf16.msra.mxu0 0
    %2033 = vmatpush.bf16.msra.mxu0 0
    %2034 = vmatpush.bf16.msra.mxu0 0
    %2035 = vmatpush.bf16.msra.mxu0 0
    %2036 = vmatpush.bf16.msra.mxu0 0
    %2037 = vmatpush.bf16.msra.mxu0 0
    %2038 = vmatpush.bf16.msra.mxu0 %v1677
    %2039 = vmatmul.f32.gmra.mxu0 %v1617
    %v2040 = vpop.f32.mrf.mxu0
    %v2041 = vadd.f32 0.0, %v2040
    %2042 = vdwg.mxu0
    %2043 = vmatpush.bf16.msra.mxu0 0
    %2044 = vmatpush.bf16.msra.mxu0 0
    %2045 = vmatpush.bf16.msra.mxu0 0
    %2046 = vmatpush.bf16.msra.mxu0 0
    %2047 = vmatpush.bf16.msra.mxu0 0
    %2048 = vmatpush.bf16.msra.mxu0 0
    %2049 = vmatpush.bf16.msra.mxu0 0
    %2050 = vmatpush.bf16.msra.mxu0 %v1679
    %2051 = vmatmul.f32.gmra.mxu0 %v1617
    %v2052 = vpop.f32.mrf.mxu0
    %v2053 = vadd.f32 0.0, %v2052
    %2054 = vdwg.mxu0
    %2055 = vmatpush.bf16.msra.mxu0 0
    %2056 = vmatpush.bf16.msra.mxu0 0
    %2057 = vmatpush.bf16.msra.mxu0 0
    %2058 = vmatpush.bf16.msra.mxu0 0
    %2059 = vmatpush.bf16.msra.mxu0 0
    %2060 = vmatpush.bf16.msra.mxu0 0
    %2061 = vmatpush.bf16.msra.mxu0 0
    %2062 = vmatpush.bf16.msra.mxu0 %v1681
    %2063 = vmatmul.f32.gmra.mxu0 %v1617
    %v2064 = vpop.f32.mrf.mxu0
    %v2065 = vadd.f32 0.0, %v2064
    %2066 = vdwg.mxu0
    %v2069 = vperm.slane %v293, %v550
    %v2070 = vperm.slane %v298, %v550
    %v2071 = vsel %vm553, %v2070, %v2069
    %2073 = vst [vmem:[#allocation1] ss:$4 sm:$0xff] %v443
    %s2075 = scalar_lea.vmem [#allocation1], 32
    %2076 = vst [vmem:[%s2075] ss:$4 sm:$0xff] %v444
    %v2077 = vld.sshfl [vmem:[#allocation1] sm:$0xff pattern:$0x73625140]
    %v2078 = vld.sshfl [vmem:[#allocation1 + $0x8] sm:$0xff pattern:$0x73625140]
    %v2079 = vld.sshfl [vmem:[#allocation1 + $0x10] sm:$0xff pattern:$0x73625140]
    %v2080 = vld.sshfl [vmem:[#allocation1 + $0x18] sm:$0xff pattern:$0x73625140]
    %v2081 = vld.sshfl [vmem:[#allocation1 + $0x20] sm:$0xff pattern:$0x73625140]
    %v2082 = vld.sshfl [vmem:[#allocation1 + $0x28] sm:$0xff pattern:$0x73625140]
    %v2083 = vld.sshfl [vmem:[#allocation1 + $0x30] sm:$0xff pattern:$0x73625140]
    %v2084 = vld.sshfl [vmem:[#allocation1 + $0x38] sm:$0xff pattern:$0x73625140]
    %2086 = vst [vmem:[#allocation1] ss:$4 sm:$0xff] %v445
    %2088 = vst [vmem:[%s2075] ss:$4 sm:$0xff] %v446
    %v2089 = vld.sshfl [vmem:[#allocation1] sm:$0xff pattern:$0x73625140]
    %v2090 = vld.sshfl [vmem:[#allocation1 + $0x8] sm:$0xff pattern:$0x73625140]
    %v2091 = vld.sshfl [vmem:[#allocation1 + $0x10] sm:$0xff pattern:$0x73625140]
    %v2092 = vld.sshfl [vmem:[#allocation1 + $0x18] sm:$0xff pattern:$0x73625140]
    %v2093 = vld.sshfl [vmem:[#allocation1 + $0x20] sm:$0xff pattern:$0x73625140]
    %v2094 = vld.sshfl [vmem:[#allocation1 + $0x28] sm:$0xff pattern:$0x73625140]
    %v2095 = vld.sshfl [vmem:[#allocation1 + $0x30] sm:$0xff pattern:$0x73625140]
    %v2096 = vld.sshfl [vmem:[#allocation1 + $0x38] sm:$0xff pattern:$0x73625140]
    %2098 = vst [vmem:[#allocation1] ss:$4 sm:$0xff] %v447
    %2100 = vst [vmem:[%s2075] ss:$4 sm:$0xff] %v448
    %v2101 = vld.sshfl [vmem:[#allocation1] sm:$0xff pattern:$0x73625140]
    %v2102 = vld.sshfl [vmem:[#allocation1 + $0x8] sm:$0xff pattern:$0x73625140]
    %v2103 = vld.sshfl [vmem:[#allocation1 + $0x10] sm:$0xff pattern:$0x73625140]
    %v2104 = vld.sshfl [vmem:[#allocation1 + $0x18] sm:$0xff pattern:$0x73625140]
    %v2105 = vld.sshfl [vmem:[#allocation1 + $0x20] sm:$0xff pattern:$0x73625140]
    %v2106 = vld.sshfl [vmem:[#allocation1 + $0x28] sm:$0xff pattern:$0x73625140]
    %v2107 = vld.sshfl [vmem:[#allocation1 + $0x30] sm:$0xff pattern:$0x73625140]
    %v2108 = vld.sshfl [vmem:[#allocation1 + $0x38] sm:$0xff pattern:$0x73625140]
    %2110 = vst [vmem:[#allocation1] ss:$4 sm:$0xff] %v449
    %2112 = vst [vmem:[%s2075] ss:$4 sm:$0xff] %v450
    %v2113 = vld.sshfl [vmem:[#allocation1] sm:$0xff pattern:$0x73625140]
    %v2114 = vld.sshfl [vmem:[#allocation1 + $0x8] sm:$0xff pattern:$0x73625140]
    %v2115 = vld.sshfl [vmem:[#allocation1 + $0x10] sm:$0xff pattern:$0x73625140]
    %v2116 = vld.sshfl [vmem:[#allocation1 + $0x18] sm:$0xff pattern:$0x73625140]
    %v2117 = vld.sshfl [vmem:[#allocation1 + $0x20] sm:$0xff pattern:$0x73625140]
    %v2118 = vld.sshfl [vmem:[#allocation1 + $0x28] sm:$0xff pattern:$0x73625140]
    %v2119 = vld.sshfl [vmem:[#allocation1 + $0x30] sm:$0xff pattern:$0x73625140]
    %v2120 = vld.sshfl [vmem:[#allocation1 + $0x38] sm:$0xff pattern:$0x73625140]
    %v2121 = vsel %vm604, %v2071, 0
    %v2123 = vand.u32 %v2077, %v610
    %v2125 = vand.u32 %v2078, %v610
    %v2127 = vand.u32 %v2079, %v610
    %v2129 = vand.u32 %v2080, %v610
    %v2131 = vand.u32 %v2081, %v610
    %v2133 = vand.u32 %v2082, %v610
    %v2135 = vand.u32 %v2083, %v610
    %v2137 = vand.u32 %v2084, %v610
    %v2139 = vand.u32 %v2089, %v610
    %v2141 = vand.u32 %v2090, %v610
    %v2143 = vand.u32 %v2091, %v610
    %v2145 = vand.u32 %v2092, %v610
    %v2147 = vand.u32 %v2093, %v610
    %v2149 = vand.u32 %v2094, %v610
    %v2151 = vand.u32 %v2095, %v610
    %v2153 = vand.u32 %v2096, %v610
    %v2155 = vand.u32 %v2101, %v610
    %v2157 = vand.u32 %v2102, %v610
    %v2159 = vand.u32 %v2103, %v610
    %v2161 = vand.u32 %v2104, %v610
    %v2163 = vand.u32 %v2105, %v610
    %v2165 = vand.u32 %v2106, %v610
    %v2167 = vand.u32 %v2107, %v610
    %v2169 = vand.u32 %v2108, %v610
    %v2171 = vand.u32 %v2113, %v610
    %v2173 = vand.u32 %v2114, %v610
    %v2175 = vand.u32 %v2115, %v610
    %v2177 = vand.u32 %v2116, %v610
    %v2179 = vand.u32 %v2117, %v610
    %v2181 = vand.u32 %v2118, %v610
    %v2183 = vand.u32 %v2119, %v610
    %v2185 = vand.u32 %v2120, %v610
    %2187 = vmatpush.bf16.msra.mxu0 0
    %2188 = vmatpush.bf16.msra.mxu0 0
    %2189 = vmatpush.bf16.msra.mxu0 0
    %2190 = vmatpush.bf16.msra.mxu0 0
    %2191 = vmatpush.bf16.msra.mxu0 0
    %2192 = vmatpush.bf16.msra.mxu0 0
    %2193 = vmatpush.bf16.msra.mxu0 0
    %2194 = vmatpush.bf16.msra.mxu0 %v2123
    %2195 = vmatmul.f32.gmra.mxu0 %v2121
    %v2196 = vpop.f32.mrf.mxu0
    %v2197 = vadd.f32 0.0, %v2196
    %2198 = vdwg.mxu0
    %2199 = vmatpush.bf16.msra.mxu0 0
    %2200 = vmatpush.bf16.msra.mxu0 0
    %2201 = vmatpush.bf16.msra.mxu0 0
    %2202 = vmatpush.bf16.msra.mxu0 0
    %2203 = vmatpush.bf16.msra.mxu0 0
    %2204 = vmatpush.bf16.msra.mxu0 0
    %2205 = vmatpush.bf16.msra.mxu0 0
    %2206 = vmatpush.bf16.msra.mxu0 %v2125
    %2207 = vmatmul.f32.gmra.mxu0 %v2121
    %v2208 = vpop.f32.mrf.mxu0
    %v2209 = vadd.f32 0.0, %v2208
    %2210 = vdwg.mxu0
    %2211 = vmatpush.bf16.msra.mxu0 0
    %2212 = vmatpush.bf16.msra.mxu0 0
    %2213 = vmatpush.bf16.msra.mxu0 0
    %2214 = vmatpush.bf16.msra.mxu0 0
    %2215 = vmatpush.bf16.msra.mxu0 0
    %2216 = vmatpush.bf16.msra.mxu0 0
    %2217 = vmatpush.bf16.msra.mxu0 0
    %2218 = vmatpush.bf16.msra.mxu0 %v2127
    %2219 = vmatmul.f32.gmra.mxu0 %v2121
    %v2220 = vpop.f32.mrf.mxu0
    %v2221 = vadd.f32 0.0, %v2220
    %2222 = vdwg.mxu0
    %2223 = vmatpush.bf16.msra.mxu0 0
    %2224 = vmatpush.bf16.msra.mxu0 0
    %2225 = vmatpush.bf16.msra.mxu0 0
    %2226 = vmatpush.bf16.msra.mxu0 0
    %2227 = vmatpush.bf16.msra.mxu0 0
    %2228 = vmatpush.bf16.msra.mxu0 0
    %2229 = vmatpush.bf16.msra.mxu0 0
    %2230 = vmatpush.bf16.msra.mxu0 %v2129
    %2231 = vmatmul.f32.gmra.mxu0 %v2121
    %v2232 = vpop.f32.mrf.mxu0
    %v2233 = vadd.f32 0.0, %v2232
    %2234 = vdwg.mxu0
    %2235 = vmatpush.bf16.msra.mxu0 0
    %2236 = vmatpush.bf16.msra.mxu0 0
    %2237 = vmatpush.bf16.msra.mxu0 0
    %2238 = vmatpush.bf16.msra.mxu0 0
    %2239 = vmatpush.bf16.msra.mxu0 0
    %2240 = vmatpush.bf16.msra.mxu0 0
    %2241 = vmatpush.bf16.msra.mxu0 0
    %2242 = vmatpush.bf16.msra.mxu0 %v2131
    %2243 = vmatmul.f32.gmra.mxu0 %v2121
    %v2244 = vpop.f32.mrf.mxu0
    %v2245 = vadd.f32 0.0, %v2244
    %2246 = vdwg.mxu0
    %2247 = vmatpush.bf16.msra.mxu0 0
    %2248 = vmatpush.bf16.msra.mxu0 0
    %2249 = vmatpush.bf16.msra.mxu0 0
    %2250 = vmatpush.bf16.msra.mxu0 0
    %2251 = vmatpush.bf16.msra.mxu0 0
    %2252 = vmatpush.bf16.msra.mxu0 0
    %2253 = vmatpush.bf16.msra.mxu0 0
    %2254 = vmatpush.bf16.msra.mxu0 %v2133
    %2255 = vmatmul.f32.gmra.mxu0 %v2121
    %v2256 = vpop.f32.mrf.mxu0
    %v2257 = vadd.f32 0.0, %v2256
    %2258 = vdwg.mxu0
    %2259 = vmatpush.bf16.msra.mxu0 0
    %2260 = vmatpush.bf16.msra.mxu0 0
    %2261 = vmatpush.bf16.msra.mxu0 0
    %2262 = vmatpush.bf16.msra.mxu0 0
    %2263 = vmatpush.bf16.msra.mxu0 0
    %2264 = vmatpush.bf16.msra.mxu0 0
    %2265 = vmatpush.bf16.msra.mxu0 0
    %2266 = vmatpush.bf16.msra.mxu0 %v2135
    %2267 = vmatmul.f32.gmra.mxu0 %v2121
    %v2268 = vpop.f32.mrf.mxu0
    %v2269 = vadd.f32 0.0, %v2268
    %2270 = vdwg.mxu0
    %2271 = vmatpush.bf16.msra.mxu0 0
    %2272 = vmatpush.bf16.msra.mxu0 0
    %2273 = vmatpush.bf16.msra.mxu0 0
    %2274 = vmatpush.bf16.msra.mxu0 0
    %2275 = vmatpush.bf16.msra.mxu0 0
    %2276 = vmatpush.bf16.msra.mxu0 0
    %2277 = vmatpush.bf16.msra.mxu0 0
    %2278 = vmatpush.bf16.msra.mxu0 %v2137
    %2279 = vmatmul.f32.gmra.mxu0 %v2121
    %v2280 = vpop.f32.mrf.mxu0
    %v2281 = vadd.f32 0.0, %v2280
    %2282 = vdwg.mxu0
    %2283 = vmatpush.bf16.msra.mxu0 0
    %2284 = vmatpush.bf16.msra.mxu0 0
    %2285 = vmatpush.bf16.msra.mxu0 0
    %2286 = vmatpush.bf16.msra.mxu0 0
    %2287 = vmatpush.bf16.msra.mxu0 0
    %2288 = vmatpush.bf16.msra.mxu0 0
    %2289 = vmatpush.bf16.msra.mxu0 0
    %2290 = vmatpush.bf16.msra.mxu0 %v2139
    %2291 = vmatmul.f32.gmra.mxu0 %v2121
    %v2292 = vpop.f32.mrf.mxu0
    %v2293 = vadd.f32 0.0, %v2292
    %2294 = vdwg.mxu0
    %2295 = vmatpush.bf16.msra.mxu0 0
    %2296 = vmatpush.bf16.msra.mxu0 0
    %2297 = vmatpush.bf16.msra.mxu0 0
    %2298 = vmatpush.bf16.msra.mxu0 0
    %2299 = vmatpush.bf16.msra.mxu0 0
    %2300 = vmatpush.bf16.msra.mxu0 0
    %2301 = vmatpush.bf16.msra.mxu0 0
    %2302 = vmatpush.bf16.msra.mxu0 %v2141
    %2303 = vmatmul.f32.gmra.mxu0 %v2121
    %v2304 = vpop.f32.mrf.mxu0
    %v2305 = vadd.f32 0.0, %v2304
    %2306 = vdwg.mxu0
    %2307 = vmatpush.bf16.msra.mxu0 0
    %2308 = vmatpush.bf16.msra.mxu0 0
    %2309 = vmatpush.bf16.msra.mxu0 0
    %2310 = vmatpush.bf16.msra.mxu0 0
    %2311 = vmatpush.bf16.msra.mxu0 0
    %2312 = vmatpush.bf16.msra.mxu0 0
    %2313 = vmatpush.bf16.msra.mxu0 0
    %2314 = vmatpush.bf16.msra.mxu0 %v2143
    %2315 = vmatmul.f32.gmra.mxu0 %v2121
    %v2316 = vpop.f32.mrf.mxu0
    %v2317 = vadd.f32 0.0, %v2316
    %2318 = vdwg.mxu0
    %2319 = vmatpush.bf16.msra.mxu0 0
    %2320 = vmatpush.bf16.msra.mxu0 0
    %2321 = vmatpush.bf16.msra.mxu0 0
    %2322 = vmatpush.bf16.msra.mxu0 0
    %2323 = vmatpush.bf16.msra.mxu0 0
    %2324 = vmatpush.bf16.msra.mxu0 0
    %2325 = vmatpush.bf16.msra.mxu0 0
    %2326 = vmatpush.bf16.msra.mxu0 %v2145
    %2327 = vmatmul.f32.gmra.mxu0 %v2121
    %v2328 = vpop.f32.mrf.mxu0
    %v2329 = vadd.f32 0.0, %v2328
    %2330 = vdwg.mxu0
    %2331 = vmatpush.bf16.msra.mxu0 0
    %2332 = vmatpush.bf16.msra.mxu0 0
    %2333 = vmatpush.bf16.msra.mxu0 0
    %2334 = vmatpush.bf16.msra.mxu0 0
    %2335 = vmatpush.bf16.msra.mxu0 0
    %2336 = vmatpush.bf16.msra.mxu0 0
    %2337 = vmatpush.bf16.msra.mxu0 0
    %2338 = vmatpush.bf16.msra.mxu0 %v2147
    %2339 = vmatmul.f32.gmra.mxu0 %v2121
    %v2340 = vpop.f32.mrf.mxu0
    %v2341 = vadd.f32 0.0, %v2340
    %2342 = vdwg.mxu0
    %2343 = vmatpush.bf16.msra.mxu0 0
    %2344 = vmatpush.bf16.msra.mxu0 0
    %2345 = vmatpush.bf16.msra.mxu0 0
    %2346 = vmatpush.bf16.msra.mxu0 0
    %2347 = vmatpush.bf16.msra.mxu0 0
    %2348 = vmatpush.bf16.msra.mxu0 0
    %2349 = vmatpush.bf16.msra.mxu0 0
    %2350 = vmatpush.bf16.msra.mxu0 %v2149
    %2351 = vmatmul.f32.gmra.mxu0 %v2121
    %v2352 = vpop.f32.mrf.mxu0
    %v2353 = vadd.f32 0.0, %v2352
    %2354 = vdwg.mxu0
    %2355 = vmatpush.bf16.msra.mxu0 0
    %2356 = vmatpush.bf16.msra.mxu0 0
    %2357 = vmatpush.bf16.msra.mxu0 0
    %2358 = vmatpush.bf16.msra.mxu0 0
    %2359 = vmatpush.bf16.msra.mxu0 0
    %2360 = vmatpush.bf16.msra.mxu0 0
    %2361 = vmatpush.bf16.msra.mxu0 0
    %2362 = vmatpush.bf16.msra.mxu0 %v2151
    %2363 = vmatmul.f32.gmra.mxu0 %v2121
    %v2364 = vpop.f32.mrf.mxu0
    %v2365 = vadd.f32 0.0, %v2364
    %2366 = vdwg.mxu0
    %2367 = vmatpush.bf16.msra.mxu0 0
    %2368 = vmatpush.bf16.msra.mxu0 0
    %2369 = vmatpush.bf16.msra.mxu0 0
    %2370 = vmatpush.bf16.msra.mxu0 0
    %2371 = vmatpush.bf16.msra.mxu0 0
    %2372 = vmatpush.bf16.msra.mxu0 0
    %2373 = vmatpush.bf16.msra.mxu0 0
    %2374 = vmatpush.bf16.msra.mxu0 %v2153
    %2375 = vmatmul.f32.gmra.mxu0 %v2121
    %v2376 = vpop.f32.mrf.mxu0
    %v2377 = vadd.f32 0.0, %v2376
    %2378 = vdwg.mxu0
    %2379 = vmatpush.bf16.msra.mxu0 0
    %2380 = vmatpush.bf16.msra.mxu0 0
    %2381 = vmatpush.bf16.msra.mxu0 0
    %2382 = vmatpush.bf16.msra.mxu0 0
    %2383 = vmatpush.bf16.msra.mxu0 0
    %2384 = vmatpush.bf16.msra.mxu0 0
    %2385 = vmatpush.bf16.msra.mxu0 0
    %2386 = vmatpush.bf16.msra.mxu0 %v2155
    %2387 = vmatmul.f32.gmra.mxu0 %v2121
    %v2388 = vpop.f32.mrf.mxu0
    %v2389 = vadd.f32 0.0, %v2388
    %2390 = vdwg.mxu0
    %2391 = vmatpush.bf16.msra.mxu0 0
    %2392 = vmatpush.bf16.msra.mxu0 0
    %2393 = vmatpush.bf16.msra.mxu0 0
    %2394 = vmatpush.bf16.msra.mxu0 0
    %2395 = vmatpush.bf16.msra.mxu0 0
    %2396 = vmatpush.bf16.msra.mxu0 0
    %2397 = vmatpush.bf16.msra.mxu0 0
    %2398 = vmatpush.bf16.msra.mxu0 %v2157
    %2399 = vmatmul.f32.gmra.mxu0 %v2121
    %v2400 = vpop.f32.mrf.mxu0
    %v2401 = vadd.f32 0.0, %v2400
    %2402 = vdwg.mxu0
    %2403 = vmatpush.bf16.msra.mxu0 0
    %2404 = vmatpush.bf16.msra.mxu0 0
    %2405 = vmatpush.bf16.msra.mxu0 0
    %2406 = vmatpush.bf16.msra.mxu0 0
    %2407 = vmatpush.bf16.msra.mxu0 0
    %2408 = vmatpush.bf16.msra.mxu0 0
    %2409 = vmatpush.bf16.msra.mxu0 0
    %2410 = vmatpush.bf16.msra.mxu0 %v2159
    %2411 = vmatmul.f32.gmra.mxu0 %v2121
    %v2412 = vpop.f32.mrf.mxu0
    %v2413 = vadd.f32 0.0, %v2412
    %2414 = vdwg.mxu0
    %2415 = vmatpush.bf16.msra.mxu0 0
    %2416 = vmatpush.bf16.msra.mxu0 0
    %2417 = vmatpush.bf16.msra.mxu0 0
    %2418 = vmatpush.bf16.msra.mxu0 0
    %2419 = vmatpush.bf16.msra.mxu0 0
    %2420 = vmatpush.bf16.msra.mxu0 0
    %2421 = vmatpush.bf16.msra.mxu0 0
    %2422 = vmatpush.bf16.msra.mxu0 %v2161
    %2423 = vmatmul.f32.gmra.mxu0 %v2121
    %v2424 = vpop.f32.mrf.mxu0
    %v2425 = vadd.f32 0.0, %v2424
    %2426 = vdwg.mxu0
    %2427 = vmatpush.bf16.msra.mxu0 0
    %2428 = vmatpush.bf16.msra.mxu0 0
    %2429 = vmatpush.bf16.msra.mxu0 0
    %2430 = vmatpush.bf16.msra.mxu0 0
    %2431 = vmatpush.bf16.msra.mxu0 0
    %2432 = vmatpush.bf16.msra.mxu0 0
    %2433 = vmatpush.bf16.msra.mxu0 0
    %2434 = vmatpush.bf16.msra.mxu0 %v2163
    %2435 = vmatmul.f32.gmra.mxu0 %v2121
    %v2436 = vpop.f32.mrf.mxu0
    %v2437 = vadd.f32 0.0, %v2436
    %2438 = vdwg.mxu0
    %2439 = vmatpush.bf16.msra.mxu0 0
    %2440 = vmatpush.bf16.msra.mxu0 0
    %2441 = vmatpush.bf16.msra.mxu0 0
    %2442 = vmatpush.bf16.msra.mxu0 0
    %2443 = vmatpush.bf16.msra.mxu0 0
    %2444 = vmatpush.bf16.msra.mxu0 0
    %2445 = vmatpush.bf16.msra.mxu0 0
    %2446 = vmatpush.bf16.msra.mxu0 %v2165
    %2447 = vmatmul.f32.gmra.mxu0 %v2121
    %v2448 = vpop.f32.mrf.mxu0
    %v2449 = vadd.f32 0.0, %v2448
    %2450 = vdwg.mxu0
    %2451 = vmatpush.bf16.msra.mxu0 0
    %2452 = vmatpush.bf16.msra.mxu0 0
    %2453 = vmatpush.bf16.msra.mxu0 0
    %2454 = vmatpush.bf16.msra.mxu0 0
    %2455 = vmatpush.bf16.msra.mxu0 0
    %2456 = vmatpush.bf16.msra.mxu0 0
    %2457 = vmatpush.bf16.msra.mxu0 0
    %2458 = vmatpush.bf16.msra.mxu0 %v2167
    %2459 = vmatmul.f32.gmra.mxu0 %v2121
    %v2460 = vpop.f32.mrf.mxu0
    %v2461 = vadd.f32 0.0, %v2460
    %2462 = vdwg.mxu0
    %2463 = vmatpush.bf16.msra.mxu0 0
    %2464 = vmatpush.bf16.msra.mxu0 0
    %2465 = vmatpush.bf16.msra.mxu0 0
    %2466 = vmatpush.bf16.msra.mxu0 0
    %2467 = vmatpush.bf16.msra.mxu0 0
    %2468 = vmatpush.bf16.msra.mxu0 0
    %2469 = vmatpush.bf16.msra.mxu0 0
    %2470 = vmatpush.bf16.msra.mxu0 %v2169
    %2471 = vmatmul.f32.gmra.mxu0 %v2121
    %v2472 = vpop.f32.mrf.mxu0
    %v2473 = vadd.f32 0.0, %v2472
    %2474 = vdwg.mxu0
    %2475 = vmatpush.bf16.msra.mxu0 0
    %2476 = vmatpush.bf16.msra.mxu0 0
    %2477 = vmatpush.bf16.msra.mxu0 0
    %2478 = vmatpush.bf16.msra.mxu0 0
    %2479 = vmatpush.bf16.msra.mxu0 0
    %2480 = vmatpush.bf16.msra.mxu0 0
    %2481 = vmatpush.bf16.msra.mxu0 0
    %2482 = vmatpush.bf16.msra.mxu0 %v2171
    %2483 = vmatmul.f32.gmra.mxu0 %v2121
    %v2484 = vpop.f32.mrf.mxu0
    %v2485 = vadd.f32 0.0, %v2484
    %2486 = vdwg.mxu0
    %2487 = vmatpush.bf16.msra.mxu0 0
    %2488 = vmatpush.bf16.msra.mxu0 0
    %2489 = vmatpush.bf16.msra.mxu0 0
    %2490 = vmatpush.bf16.msra.mxu0 0
    %2491 = vmatpush.bf16.msra.mxu0 0
    %2492 = vmatpush.bf16.msra.mxu0 0
    %2493 = vmatpush.bf16.msra.mxu0 0
    %2494 = vmatpush.bf16.msra.mxu0 %v2173
    %2495 = vmatmul.f32.gmra.mxu0 %v2121
    %v2496 = vpop.f32.mrf.mxu0
    %v2497 = vadd.f32 0.0, %v2496
    %2498 = vdwg.mxu0
    %2499 = vmatpush.bf16.msra.mxu0 0
    %2500 = vmatpush.bf16.msra.mxu0 0
    %2501 = vmatpush.bf16.msra.mxu0 0
    %2502 = vmatpush.bf16.msra.mxu0 0
    %2503 = vmatpush.bf16.msra.mxu0 0
    %2504 = vmatpush.bf16.msra.mxu0 0
    %2505 = vmatpush.bf16.msra.mxu0 0
    %2506 = vmatpush.bf16.msra.mxu0 %v2175
    %2507 = vmatmul.f32.gmra.mxu0 %v2121
    %v2508 = vpop.f32.mrf.mxu0
    %v2509 = vadd.f32 0.0, %v2508
    %2510 = vdwg.mxu0
    %2511 = vmatpush.bf16.msra.mxu0 0
    %2512 = vmatpush.bf16.msra.mxu0 0
    %2513 = vmatpush.bf16.msra.mxu0 0
    %2514 = vmatpush.bf16.msra.mxu0 0
    %2515 = vmatpush.bf16.msra.mxu0 0
    %2516 = vmatpush.bf16.msra.mxu0 0
    %2517 = vmatpush.bf16.msra.mxu0 0
    %2518 = vmatpush.bf16.msra.mxu0 %v2177
    %2519 = vmatmul.f32.gmra.mxu0 %v2121
    %v2520 = vpop.f32.mrf.mxu0
    %v2521 = vadd.f32 0.0, %v2520
    %2522 = vdwg.mxu0
    %2523 = vmatpush.bf16.msra.mxu0 0
    %2524 = vmatpush.bf16.msra.mxu0 0
    %2525 = vmatpush.bf16.msra.mxu0 0
    %2526 = vmatpush.bf16.msra.mxu0 0
    %2527 = vmatpush.bf16.msra.mxu0 0
    %2528 = vmatpush.bf16.msra.mxu0 0
    %2529 = vmatpush.bf16.msra.mxu0 0
    %2530 = vmatpush.bf16.msra.mxu0 %v2179
    %2531 = vmatmul.f32.gmra.mxu0 %v2121
    %v2532 = vpop.f32.mrf.mxu0
    %v2533 = vadd.f32 0.0, %v2532
    %2534 = vdwg.mxu0
    %2535 = vmatpush.bf16.msra.mxu0 0
    %2536 = vmatpush.bf16.msra.mxu0 0
    %2537 = vmatpush.bf16.msra.mxu0 0
    %2538 = vmatpush.bf16.msra.mxu0 0
    %2539 = vmatpush.bf16.msra.mxu0 0
    %2540 = vmatpush.bf16.msra.mxu0 0
    %2541 = vmatpush.bf16.msra.mxu0 0
    %2542 = vmatpush.bf16.msra.mxu0 %v2181
    %2543 = vmatmul.f32.gmra.mxu0 %v2121
    %v2544 = vpop.f32.mrf.mxu0
    %v2545 = vadd.f32 0.0, %v2544
    %2546 = vdwg.mxu0
    %2547 = vmatpush.bf16.msra.mxu0 0
    %2548 = vmatpush.bf16.msra.mxu0 0
    %2549 = vmatpush.bf16.msra.mxu0 0
    %2550 = vmatpush.bf16.msra.mxu0 0
    %2551 = vmatpush.bf16.msra.mxu0 0
    %2552 = vmatpush.bf16.msra.mxu0 0
    %2553 = vmatpush.bf16.msra.mxu0 0
    %2554 = vmatpush.bf16.msra.mxu0 %v2183
    %2555 = vmatmul.f32.gmra.mxu0 %v2121
    %v2556 = vpop.f32.mrf.mxu0
    %v2557 = vadd.f32 0.0, %v2556
    %2558 = vdwg.mxu0
    %2559 = vmatpush.bf16.msra.mxu0 0
    %2560 = vmatpush.bf16.msra.mxu0 0
    %2561 = vmatpush.bf16.msra.mxu0 0
    %2562 = vmatpush.bf16.msra.mxu0 0
    %2563 = vmatpush.bf16.msra.mxu0 0
    %2564 = vmatpush.bf16.msra.mxu0 0
    %2565 = vmatpush.bf16.msra.mxu0 0
    %2566 = vmatpush.bf16.msra.mxu0 %v2185
    %2567 = vmatmul.f32.gmra.mxu0 %v2121
    %v2568 = vpop.f32.mrf.mxu0
    %v2569 = vadd.f32 0.0, %v2568
    %2570 = vdwg.mxu0
    %v2573 = vperm.slane %v303, %v550
    %v2574 = vperm.slane %v308, %v550
    %v2575 = vsel %vm553, %v2574, %v2573
    %2577 = vst [vmem:[#allocation1] ss:$4 sm:$0xff] %v451
    %s2579 = scalar_lea.vmem [#allocation1], 32
    %2580 = vst [vmem:[%s2579] ss:$4 sm:$0xff] %v452
    %v2581 = vld.sshfl [vmem:[#allocation1] sm:$0xff pattern:$0x73625140]
    %v2582 = vld.sshfl [vmem:[#allocation1 + $0x8] sm:$0xff pattern:$0x73625140]
    %v2583 = vld.sshfl [vmem:[#allocation1 + $0x10] sm:$0xff pattern:$0x73625140]
    %v2584 = vld.sshfl [vmem:[#allocation1 + $0x18] sm:$0xff pattern:$0x73625140]
    %v2585 = vld.sshfl [vmem:[#allocation1 + $0x20] sm:$0xff pattern:$0x73625140]
    %v2586 = vld.sshfl [vmem:[#allocation1 + $0x28] sm:$0xff pattern:$0x73625140]
    %v2587 = vld.sshfl [vmem:[#allocation1 + $0x30] sm:$0xff pattern:$0x73625140]
    %v2588 = vld.sshfl [vmem:[#allocation1 + $0x38] sm:$0xff pattern:$0x73625140]
    %2590 = vst [vmem:[#allocation1] ss:$4 sm:$0xff] %v453
    %2592 = vst [vmem:[%s2579] ss:$4 sm:$0xff] %v454
    %v2593 = vld.sshfl [vmem:[#allocation1] sm:$0xff pattern:$0x73625140]
    %v2594 = vld.sshfl [vmem:[#allocation1 + $0x8] sm:$0xff pattern:$0x73625140]
    %v2595 = vld.sshfl [vmem:[#allocation1 + $0x10] sm:$0xff pattern:$0x73625140]
    %v2596 = vld.sshfl [vmem:[#allocation1 + $0x18] sm:$0xff pattern:$0x73625140]
    %v2597 = vld.sshfl [vmem:[#allocation1 + $0x20] sm:$0xff pattern:$0x73625140]
    %v2598 = vld.sshfl [vmem:[#allocation1 + $0x28] sm:$0xff pattern:$0x73625140]
    %v2599 = vld.sshfl [vmem:[#allocation1 + $0x30] sm:$0xff pattern:$0x73625140]
    %v2600 = vld.sshfl [vmem:[#allocation1 + $0x38] sm:$0xff pattern:$0x73625140]
    %2602 = vst [vmem:[#allocation1] ss:$4 sm:$0xff] %v455
    %2604 = vst [vmem:[%s2579] ss:$4 sm:$0xff] %v456
    %v2605 = vld.sshfl [vmem:[#allocation1] sm:$0xff pattern:$0x73625140]
    %v2606 = vld.sshfl [vmem:[#allocation1 + $0x8] sm:$0xff pattern:$0x73625140]
    %v2607 = vld.sshfl [vmem:[#allocation1 + $0x10] sm:$0xff pattern:$0x73625140]
    %v2608 = vld.sshfl [vmem:[#allocation1 + $0x18] sm:$0xff pattern:$0x73625140]
    %v2609 = vld.sshfl [vmem:[#allocation1 + $0x20] sm:$0xff pattern:$0x73625140]
    %v2610 = vld.sshfl [vmem:[#allocation1 + $0x28] sm:$0xff pattern:$0x73625140]
    %v2611 = vld.sshfl [vmem:[#allocation1 + $0x30] sm:$0xff pattern:$0x73625140]
    %v2612 = vld.sshfl [vmem:[#allocation1 + $0x38] sm:$0xff pattern:$0x73625140]
    %2614 = vst [vmem:[#allocation1] ss:$4 sm:$0xff] %v457
    %2616 = vst [vmem:[%s2579] ss:$4 sm:$0xff] %v458
    %v2617 = vld.sshfl [vmem:[#allocation1] sm:$0xff pattern:$0x73625140]
    %v2618 = vld.sshfl [vmem:[#allocation1 + $0x8] sm:$0xff pattern:$0x73625140]
    %v2619 = vld.sshfl [vmem:[#allocation1 + $0x10] sm:$0xff pattern:$0x73625140]
    %v2620 = vld.sshfl [vmem:[#allocation1 + $0x18] sm:$0xff pattern:$0x73625140]
    %v2621 = vld.sshfl [vmem:[#allocation1 + $0x20] sm:$0xff pattern:$0x73625140]
    %v2622 = vld.sshfl [vmem:[#allocation1 + $0x28] sm:$0xff pattern:$0x73625140]
    %v2623 = vld.sshfl [vmem:[#allocation1 + $0x30] sm:$0xff pattern:$0x73625140]
    %v2624 = vld.sshfl [vmem:[#allocation1 + $0x38] sm:$0xff pattern:$0x73625140]
    %v2625 = vsel %vm604, %v2575, 0
    %v2627 = vand.u32 %v2581, %v610
    %v2629 = vand.u32 %v2582, %v610
    %v2631 = vand.u32 %v2583, %v610
    %v2633 = vand.u32 %v2584, %v610
    %v2635 = vand.u32 %v2585, %v610
    %v2637 = vand.u32 %v2586, %v610
    %v2639 = vand.u32 %v2587, %v610
    %v2641 = vand.u32 %v2588, %v610
    %v2643 = vand.u32 %v2593, %v610
    %v2645 = vand.u32 %v2594, %v610
    %v2647 = vand.u32 %v2595, %v610
    %v2649 = vand.u32 %v2596, %v610
    %v2651 = vand.u32 %v2597, %v610
    %v2653 = vand.u32 %v2598, %v610
    %v2655 = vand.u32 %v2599, %v610
    %v2657 = vand.u32 %v2600, %v610
    %v2659 = vand.u32 %v2605, %v610
    %v2661 = vand.u32 %v2606, %v610
    %v2663 = vand.u32 %v2607, %v610
    %v2665 = vand.u32 %v2608, %v610
    %v2667 = vand.u32 %v2609, %v610
    %v2669 = vand.u32 %v2610, %v610
    %v2671 = vand.u32 %v2611, %v610
    %v2673 = vand.u32 %v2612, %v610
    %v2675 = vand.u32 %v2617, %v610
    %v2677 = vand.u32 %v2618, %v610
    %v2679 = vand.u32 %v2619, %v610
    %v2681 = vand.u32 %v2620, %v610
    %v2683 = vand.u32 %v2621, %v610
    %v2685 = vand.u32 %v2622, %v610
    %v2687 = vand.u32 %v2623, %v610
    %v2689 = vand.u32 %v2624, %v610
    %2691 = vmatpush.bf16.msra.mxu0 0
    %2692 = vmatpush.bf16.msra.mxu0 0
    %2693 = vmatpush.bf16.msra.mxu0 0
    %2694 = vmatpush.bf16.msra.mxu0 0
    %2695 = vmatpush.bf16.msra.mxu0 0
    %2696 = vmatpush.bf16.msra.mxu0 0
    %2697 = vmatpush.bf16.msra.mxu0 0
    %2698 = vmatpush.bf16.msra.mxu0 %v2627
    %2699 = vmatmul.f32.gmra.mxu0 %v2625
    %v2700 = vpop.f32.mrf.mxu0
    %v2701 = vadd.f32 0.0, %v2700
    %2702 = vdwg.mxu0
    %2703 = vmatpush.bf16.msra.mxu0 0
    %2704 = vmatpush.bf16.msra.mxu0 0
    %2705 = vmatpush.bf16.msra.mxu0 0
    %2706 = vmatpush.bf16.msra.mxu0 0
    %2707 = vmatpush.bf16.msra.mxu0 0
    %2708 = vmatpush.bf16.msra.mxu0 0
    %2709 = vmatpush.bf16.msra.mxu0 0
    %2710 = vmatpush.bf16.msra.mxu0 %v2629
    %2711 = vmatmul.f32.gmra.mxu0 %v2625
    %v2712 = vpop.f32.mrf.mxu0
    %v2713 = vadd.f32 0.0, %v2712
    %2714 = vdwg.mxu0
    %2715 = vmatpush.bf16.msra.mxu0 0
    %2716 = vmatpush.bf16.msra.mxu0 0
    %2717 = vmatpush.bf16.msra.mxu0 0
    %2718 = vmatpush.bf16.msra.mxu0 0
    %2719 = vmatpush.bf16.msra.mxu0 0
    %2720 = vmatpush.bf16.msra.mxu0 0
    %2721 = vmatpush.bf16.msra.mxu0 0
    %2722 = vmatpush.bf16.msra.mxu0 %v2631
    %2723 = vmatmul.f32.gmra.mxu0 %v2625
    %v2724 = vpop.f32.mrf.mxu0
    %v2725 = vadd.f32 0.0, %v2724
    %2726 = vdwg.mxu0
    %2727 = vmatpush.bf16.msra.mxu0 0
    %2728 = vmatpush.bf16.msra.mxu0 0
    %2729 = vmatpush.bf16.msra.mxu0 0
    %2730 = vmatpush.bf16.msra.mxu0 0
    %2731 = vmatpush.bf16.msra.mxu0 0
    %2732 = vmatpush.bf16.msra.mxu0 0
    %2733 = vmatpush.bf16.msra.mxu0 0
    %2734 = vmatpush.bf16.msra.mxu0 %v2633
    %2735 = vmatmul.f32.gmra.mxu0 %v2625
    %v2736 = vpop.f32.mrf.mxu0
    %v2737 = vadd.f32 0.0, %v2736
    %2738 = vdwg.mxu0
    %2739 = vmatpush.bf16.msra.mxu0 0
    %2740 = vmatpush.bf16.msra.mxu0 0
    %2741 = vmatpush.bf16.msra.mxu0 0
    %2742 = vmatpush.bf16.msra.mxu0 0
    %2743 = vmatpush.bf16.msra.mxu0 0
    %2744 = vmatpush.bf16.msra.mxu0 0
    %2745 = vmatpush.bf16.msra.mxu0 0
    %2746 = vmatpush.bf16.msra.mxu0 %v2635
    %2747 = vmatmul.f32.gmra.mxu0 %v2625
    %v2748 = vpop.f32.mrf.mxu0
    %v2749 = vadd.f32 0.0, %v2748
    %2750 = vdwg.mxu0
    %2751 = vmatpush.bf16.msra.mxu0 0
    %2752 = vmatpush.bf16.msra.mxu0 0
    %2753 = vmatpush.bf16.msra.mxu0 0
    %2754 = vmatpush.bf16.msra.mxu0 0
    %2755 = vmatpush.bf16.msra.mxu0 0
    %2756 = vmatpush.bf16.msra.mxu0 0
    %2757 = vmatpush.bf16.msra.mxu0 0
    %2758 = vmatpush.bf16.msra.mxu0 %v2637
    %2759 = vmatmul.f32.gmra.mxu0 %v2625
    %v2760 = vpop.f32.mrf.mxu0
    %v2761 = vadd.f32 0.0, %v2760
    %2762 = vdwg.mxu0
    %2763 = vmatpush.bf16.msra.mxu0 0
    %2764 = vmatpush.bf16.msra.mxu0 0
    %2765 = vmatpush.bf16.msra.mxu0 0
    %2766 = vmatpush.bf16.msra.mxu0 0
    %2767 = vmatpush.bf16.msra.mxu0 0
    %2768 = vmatpush.bf16.msra.mxu0 0
    %2769 = vmatpush.bf16.msra.mxu0 0
    %2770 = vmatpush.bf16.msra.mxu0 %v2639
    %2771 = vmatmul.f32.gmra.mxu0 %v2625
    %v2772 = vpop.f32.mrf.mxu0
    %v2773 = vadd.f32 0.0, %v2772
    %2774 = vdwg.mxu0
    %2775 = vmatpush.bf16.msra.mxu0 0
    %2776 = vmatpush.bf16.msra.mxu0 0
    %2777 = vmatpush.bf16.msra.mxu0 0
    %2778 = vmatpush.bf16.msra.mxu0 0
    %2779 = vmatpush.bf16.msra.mxu0 0
    %2780 = vmatpush.bf16.msra.mxu0 0
    %2781 = vmatpush.bf16.msra.mxu0 0
    %2782 = vmatpush.bf16.msra.mxu0 %v2641
    %2783 = vmatmul.f32.gmra.mxu0 %v2625
    %v2784 = vpop.f32.mrf.mxu0
    %v2785 = vadd.f32 0.0, %v2784
    %2786 = vdwg.mxu0
    %2787 = vmatpush.bf16.msra.mxu0 0
    %2788 = vmatpush.bf16.msra.mxu0 0
    %2789 = vmatpush.bf16.msra.mxu0 0
    %2790 = vmatpush.bf16.msra.mxu0 0
    %2791 = vmatpush.bf16.msra.mxu0 0
    %2792 = vmatpush.bf16.msra.mxu0 0
    %2793 = vmatpush.bf16.msra.mxu0 0
    %2794 = vmatpush.bf16.msra.mxu0 %v2643
    %2795 = vmatmul.f32.gmra.mxu0 %v2625
    %v2796 = vpop.f32.mrf.mxu0
    %v2797 = vadd.f32 0.0, %v2796
    %2798 = vdwg.mxu0
    %2799 = vmatpush.bf16.msra.mxu0 0
    %2800 = vmatpush.bf16.msra.mxu0 0
    %2801 = vmatpush.bf16.msra.mxu0 0
    %2802 = vmatpush.bf16.msra.mxu0 0
    %2803 = vmatpush.bf16.msra.mxu0 0
    %2804 = vmatpush.bf16.msra.mxu0 0
    %2805 = vmatpush.bf16.msra.mxu0 0
    %2806 = vmatpush.bf16.msra.mxu0 %v2645
    %2807 = vmatmul.f32.gmra.mxu0 %v2625
    %v2808 = vpop.f32.mrf.mxu0
    %v2809 = vadd.f32 0.0, %v2808
    %2810 = vdwg.mxu0
    %2811 = vmatpush.bf16.msra.mxu0 0
    %2812 = vmatpush.bf16.msra.mxu0 0
    %2813 = vmatpush.bf16.msra.mxu0 0
    %2814 = vmatpush.bf16.msra.mxu0 0
    %2815 = vmatpush.bf16.msra.mxu0 0
    %2816 = vmatpush.bf16.msra.mxu0 0
    %2817 = vmatpush.bf16.msra.mxu0 0
    %2818 = vmatpush.bf16.msra.mxu0 %v2647
    %2819 = vmatmul.f32.gmra.mxu0 %v2625
    %v2820 = vpop.f32.mrf.mxu0
    %v2821 = vadd.f32 0.0, %v2820
    %2822 = vdwg.mxu0
    %2823 = vmatpush.bf16.msra.mxu0 0
    %2824 = vmatpush.bf16.msra.mxu0 0
    %2825 = vmatpush.bf16.msra.mxu0 0
    %2826 = vmatpush.bf16.msra.mxu0 0
    %2827 = vmatpush.bf16.msra.mxu0 0
    %2828 = vmatpush.bf16.msra.mxu0 0
    %2829 = vmatpush.bf16.msra.mxu0 0
    %2830 = vmatpush.bf16.msra.mxu0 %v2649
    %2831 = vmatmul.f32.gmra.mxu0 %v2625
    %v2832 = vpop.f32.mrf.mxu0
    %v2833 = vadd.f32 0.0, %v2832
    %2834 = vdwg.mxu0
    %2835 = vmatpush.bf16.msra.mxu0 0
    %2836 = vmatpush.bf16.msra.mxu0 0
    %2837 = vmatpush.bf16.msra.mxu0 0
    %2838 = vmatpush.bf16.msra.mxu0 0
    %2839 = vmatpush.bf16.msra.mxu0 0
    %2840 = vmatpush.bf16.msra.mxu0 0
    %2841 = vmatpush.bf16.msra.mxu0 0
    %2842 = vmatpush.bf16.msra.mxu0 %v2651
    %2843 = vmatmul.f32.gmra.mxu0 %v2625
    %v2844 = vpop.f32.mrf.mxu0
    %v2845 = vadd.f32 0.0, %v2844
    %2846 = vdwg.mxu0
    %2847 = vmatpush.bf16.msra.mxu0 0
    %2848 = vmatpush.bf16.msra.mxu0 0
    %2849 = vmatpush.bf16.msra.mxu0 0
    %2850 = vmatpush.bf16.msra.mxu0 0
    %2851 = vmatpush.bf16.msra.mxu0 0
    %2852 = vmatpush.bf16.msra.mxu0 0
    %2853 = vmatpush.bf16.msra.mxu0 0
    %2854 = vmatpush.bf16.msra.mxu0 %v2653
    %2855 = vmatmul.f32.gmra.mxu0 %v2625
    %v2856 = vpop.f32.mrf.mxu0
    %v2857 = vadd.f32 0.0, %v2856
    %2858 = vdwg.mxu0
    %2859 = vmatpush.bf16.msra.mxu0 0
    %2860 = vmatpush.bf16.msra.mxu0 0
    %2861 = vmatpush.bf16.msra.mxu0 0
    %2862 = vmatpush.bf16.msra.mxu0 0
    %2863 = vmatpush.bf16.msra.mxu0 0
    %2864 = vmatpush.bf16.msra.mxu0 0
    %2865 = vmatpush.bf16.msra.mxu0 0
    %2866 = vmatpush.bf16.msra.mxu0 %v2655
    %2867 = vmatmul.f32.gmra.mxu0 %v2625
    %v2868 = vpop.f32.mrf.mxu0
    %v2869 = vadd.f32 0.0, %v2868
    %2870 = vdwg.mxu0
    %2871 = vmatpush.bf16.msra.mxu0 0
    %2872 = vmatpush.bf16.msra.mxu0 0
    %2873 = vmatpush.bf16.msra.mxu0 0
    %2874 = vmatpush.bf16.msra.mxu0 0
    %2875 = vmatpush.bf16.msra.mxu0 0
    %2876 = vmatpush.bf16.msra.mxu0 0
    %2877 = vmatpush.bf16.msra.mxu0 0
    %2878 = vmatpush.bf16.msra.mxu0 %v2657
    %2879 = vmatmul.f32.gmra.mxu0 %v2625
    %v2880 = vpop.f32.mrf.mxu0
    %v2881 = vadd.f32 0.0, %v2880
    %2882 = vdwg.mxu0
    %2883 = vmatpush.bf16.msra.mxu0 0
    %2884 = vmatpush.bf16.msra.mxu0 0
    %2885 = vmatpush.bf16.msra.mxu0 0
    %2886 = vmatpush.bf16.msra.mxu0 0
    %2887 = vmatpush.bf16.msra.mxu0 0
    %2888 = vmatpush.bf16.msra.mxu0 0
    %2889 = vmatpush.bf16.msra.mxu0 0
    %2890 = vmatpush.bf16.msra.mxu0 %v2659
    %2891 = vmatmul.f32.gmra.mxu0 %v2625
    %v2892 = vpop.f32.mrf.mxu0
    %v2893 = vadd.f32 0.0, %v2892
    %2894 = vdwg.mxu0
    %2895 = vmatpush.bf16.msra.mxu0 0
    %2896 = vmatpush.bf16.msra.mxu0 0
    %2897 = vmatpush.bf16.msra.mxu0 0
    %2898 = vmatpush.bf16.msra.mxu0 0
    %2899 = vmatpush.bf16.msra.mxu0 0
    %2900 = vmatpush.bf16.msra.mxu0 0
    %2901 = vmatpush.bf16.msra.mxu0 0
    %2902 = vmatpush.bf16.msra.mxu0 %v2661
    %2903 = vmatmul.f32.gmra.mxu0 %v2625
    %v2904 = vpop.f32.mrf.mxu0
    %v2905 = vadd.f32 0.0, %v2904
    %2906 = vdwg.mxu0
    %2907 = vmatpush.bf16.msra.mxu0 0
    %2908 = vmatpush.bf16.msra.mxu0 0
    %2909 = vmatpush.bf16.msra.mxu0 0
    %2910 = vmatpush.bf16.msra.mxu0 0
    %2911 = vmatpush.bf16.msra.mxu0 0
    %2912 = vmatpush.bf16.msra.mxu0 0
    %2913 = vmatpush.bf16.msra.mxu0 0
    %2914 = vmatpush.bf16.msra.mxu0 %v2663
    %2915 = vmatmul.f32.gmra.mxu0 %v2625
    %v2916 = vpop.f32.mrf.mxu0
    %v2917 = vadd.f32 0.0, %v2916
    %2918 = vdwg.mxu0
    %2919 = vmatpush.bf16.msra.mxu0 0
    %2920 = vmatpush.bf16.msra.mxu0 0
    %2921 = vmatpush.bf16.msra.mxu0 0
    %2922 = vmatpush.bf16.msra.mxu0 0
    %2923 = vmatpush.bf16.msra.mxu0 0
    %2924 = vmatpush.bf16.msra.mxu0 0
    %2925 = vmatpush.bf16.msra.mxu0 0
    %2926 = vmatpush.bf16.msra.mxu0 %v2665
    %2927 = vmatmul.f32.gmra.mxu0 %v2625
    %v2928 = vpop.f32.mrf.mxu0
    %v2929 = vadd.f32 0.0, %v2928
    %2930 = vdwg.mxu0
    %2931 = vmatpush.bf16.msra.mxu0 0
    %2932 = vmatpush.bf16.msra.mxu0 0
    %2933 = vmatpush.bf16.msra.mxu0 0
    %2934 = vmatpush.bf16.msra.mxu0 0
    %2935 = vmatpush.bf16.msra.mxu0 0
    %2936 = vmatpush.bf16.msra.mxu0 0
    %2937 = vmatpush.bf16.msra.mxu0 0
    %2938 = vmatpush.bf16.msra.mxu0 %v2667
    %2939 = vmatmul.f32.gmra.mxu0 %v2625
    %v2940 = vpop.f32.mrf.mxu0
    %v2941 = vadd.f32 0.0, %v2940
    %2942 = vdwg.mxu0
    %2943 = vmatpush.bf16.msra.mxu0 0
    %2944 = vmatpush.bf16.msra.mxu0 0
    %2945 = vmatpush.bf16.msra.mxu0 0
    %2946 = vmatpush.bf16.msra.mxu0 0
    %2947 = vmatpush.bf16.msra.mxu0 0
    %2948 = vmatpush.bf16.msra.mxu0 0
    %2949 = vmatpush.bf16.msra.mxu0 0
    %2950 = vmatpush.bf16.msra.mxu0 %v2669
    %2951 = vmatmul.f32.gmra.mxu0 %v2625
    %v2952 = vpop.f32.mrf.mxu0
    %v2953 = vadd.f32 0.0, %v2952
    %2954 = vdwg.mxu0
    %2955 = vmatpush.bf16.msra.mxu0 0
    %2956 = vmatpush.bf16.msra.mxu0 0
    %2957 = vmatpush.bf16.msra.mxu0 0
    %2958 = vmatpush.bf16.msra.mxu0 0
    %2959 = vmatpush.bf16.msra.mxu0 0
    %2960 = vmatpush.bf16.msra.mxu0 0
    %2961 = vmatpush.bf16.msra.mxu0 0
    %2962 = vmatpush.bf16.msra.mxu0 %v2671
    %2963 = vmatmul.f32.gmra.mxu0 %v2625
    %v2964 = vpop.f32.mrf.mxu0
    %v2965 = vadd.f32 0.0, %v2964
    %2966 = vdwg.mxu0
    %2967 = vmatpush.bf16.msra.mxu0 0
    %2968 = vmatpush.bf16.msra.mxu0 0
    %2969 = vmatpush.bf16.msra.mxu0 0
    %2970 = vmatpush.bf16.msra.mxu0 0
    %2971 = vmatpush.bf16.msra.mxu0 0
    %2972 = vmatpush.bf16.msra.mxu0 0
    %2973 = vmatpush.bf16.msra.mxu0 0
    %2974 = vmatpush.bf16.msra.mxu0 %v2673
    %2975 = vmatmul.f32.gmra.mxu0 %v2625
    %v2976 = vpop.f32.mrf.mxu0
    %v2977 = vadd.f32 0.0, %v2976
    %2978 = vdwg.mxu0
    %2979 = vmatpush.bf16.msra.mxu0 0
    %2980 = vmatpush.bf16.msra.mxu0 0
    %2981 = vmatpush.bf16.msra.mxu0 0
    %2982 = vmatpush.bf16.msra.mxu0 0
    %2983 = vmatpush.bf16.msra.mxu0 0
    %2984 = vmatpush.bf16.msra.mxu0 0
    %2985 = vmatpush.bf16.msra.mxu0 0
    %2986 = vmatpush.bf16.msra.mxu0 %v2675
    %2987 = vmatmul.f32.gmra.mxu0 %v2625
    %v2988 = vpop.f32.mrf.mxu0
    %v2989 = vadd.f32 0.0, %v2988
    %2990 = vdwg.mxu0
    %2991 = vmatpush.bf16.msra.mxu0 0
    %2992 = vmatpush.bf16.msra.mxu0 0
    %2993 = vmatpush.bf16.msra.mxu0 0
    %2994 = vmatpush.bf16.msra.mxu0 0
    %2995 = vmatpush.bf16.msra.mxu0 0
    %2996 = vmatpush.bf16.msra.mxu0 0
    %2997 = vmatpush.bf16.msra.mxu0 0
    %2998 = vmatpush.bf16.msra.mxu0 %v2677
    %2999 = vmatmul.f32.gmra.mxu0 %v2625
    %v3000 = vpop.f32.mrf.mxu0
    %v3001 = vadd.f32 0.0, %v3000
    %3002 = vdwg.mxu0
    %3003 = vmatpush.bf16.msra.mxu0 0
    %3004 = vmatpush.bf16.msra.mxu0 0
    %3005 = vmatpush.bf16.msra.mxu0 0
    %3006 = vmatpush.bf16.msra.mxu0 0
    %3007 = vmatpush.bf16.msra.mxu0 0
    %3008 = vmatpush.bf16.msra.mxu0 0
    %3009 = vmatpush.bf16.msra.mxu0 0
    %3010 = vmatpush.bf16.msra.mxu0 %v2679
    %3011 = vmatmul.f32.gmra.mxu0 %v2625
    %v3012 = vpop.f32.mrf.mxu0
    %v3013 = vadd.f32 0.0, %v3012
    %3014 = vdwg.mxu0
    %3015 = vmatpush.bf16.msra.mxu0 0
    %3016 = vmatpush.bf16.msra.mxu0 0
    %3017 = vmatpush.bf16.msra.mxu0 0
    %3018 = vmatpush.bf16.msra.mxu0 0
    %3019 = vmatpush.bf16.msra.mxu0 0
    %3020 = vmatpush.bf16.msra.mxu0 0
    %3021 = vmatpush.bf16.msra.mxu0 0
    %3022 = vmatpush.bf16.msra.mxu0 %v2681
    %3023 = vmatmul.f32.gmra.mxu0 %v2625
    %v3024 = vpop.f32.mrf.mxu0
    %v3025 = vadd.f32 0.0, %v3024
    %3026 = vdwg.mxu0
    %3027 = vmatpush.bf16.msra.mxu0 0
    %3028 = vmatpush.bf16.msra.mxu0 0
    %3029 = vmatpush.bf16.msra.mxu0 0
    %3030 = vmatpush.bf16.msra.mxu0 0
    %3031 = vmatpush.bf16.msra.mxu0 0
    %3032 = vmatpush.bf16.msra.mxu0 0
    %3033 = vmatpush.bf16.msra.mxu0 0
    %3034 = vmatpush.bf16.msra.mxu0 %v2683
    %3035 = vmatmul.f32.gmra.mxu0 %v2625
    %v3036 = vpop.f32.mrf.mxu0
    %v3037 = vadd.f32 0.0, %v3036
    %3038 = vdwg.mxu0
    %3039 = vmatpush.bf16.msra.mxu0 0
    %3040 = vmatpush.bf16.msra.mxu0 0
    %3041 = vmatpush.bf16.msra.mxu0 0
    %3042 = vmatpush.bf16.msra.mxu0 0
    %3043 = vmatpush.bf16.msra.mxu0 0
    %3044 = vmatpush.bf16.msra.mxu0 0
    %3045 = vmatpush.bf16.msra.mxu0 0
    %3046 = vmatpush.bf16.msra.mxu0 %v2685
    %3047 = vmatmul.f32.gmra.mxu0 %v2625
    %v3048 = vpop.f32.mrf.mxu0
    %v3049 = vadd.f32 0.0, %v3048
    %3050 = vdwg.mxu0
    %3051 = vmatpush.bf16.msra.mxu0 0
    %3052 = vmatpush.bf16.msra.mxu0 0
    %3053 = vmatpush.bf16.msra.mxu0 0
    %3054 = vmatpush.bf16.msra.mxu0 0
    %3055 = vmatpush.bf16.msra.mxu0 0
    %3056 = vmatpush.bf16.msra.mxu0 0
    %3057 = vmatpush.bf16.msra.mxu0 0
    %3058 = vmatpush.bf16.msra.mxu0 %v2687
    %3059 = vmatmul.f32.gmra.mxu0 %v2625
    %v3060 = vpop.f32.mrf.mxu0
    %v3061 = vadd.f32 0.0, %v3060
    %3062 = vdwg.mxu0
    %3063 = vmatpush.bf16.msra.mxu0 0
    %3064 = vmatpush.bf16.msra.mxu0 0
    %3065 = vmatpush.bf16.msra.mxu0 0
    %3066 = vmatpush.bf16.msra.mxu0 0
    %3067 = vmatpush.bf16.msra.mxu0 0
    %3068 = vmatpush.bf16.msra.mxu0 0
    %3069 = vmatpush.bf16.msra.mxu0 0
    %3070 = vmatpush.bf16.msra.mxu0 %v2689
    %3071 = vmatmul.f32.gmra.mxu0 %v2625
    %v3072 = vpop.f32.mrf.mxu0
    %v3073 = vadd.f32 0.0, %v3072
    %3074 = vdwg.mxu0
    %v3077 = vperm.slane %v313, %v550
    %v3078 = vperm.slane %v318, %v550
    %v3079 = vsel %vm553, %v3078, %v3077
    %3081 = vst [vmem:[#allocation1] ss:$4 sm:$0xff] %v459
    %s3083 = scalar_lea.vmem [#allocation1], 32
    %3084 = vst [vmem:[%s3083] ss:$4 sm:$0xff] %v460
    %v3085 = vld.sshfl [vmem:[#allocation1] sm:$0xff pattern:$0x73625140]
    %v3086 = vld.sshfl [vmem:[#allocation1 + $0x8] sm:$0xff pattern:$0x73625140]
    %v3087 = vld.sshfl [vmem:[#allocation1 + $0x10] sm:$0xff pattern:$0x73625140]
    %v3088 = vld.sshfl [vmem:[#allocation1 + $0x18] sm:$0xff pattern:$0x73625140]
    %v3089 = vld.sshfl [vmem:[#allocation1 + $0x20] sm:$0xff pattern:$0x73625140]
    %v3090 = vld.sshfl [vmem:[#allocation1 + $0x28] sm:$0xff pattern:$0x73625140]
    %v3091 = vld.sshfl [vmem:[#allocation1 + $0x30] sm:$0xff pattern:$0x73625140]
    %v3092 = vld.sshfl [vmem:[#allocation1 + $0x38] sm:$0xff pattern:$0x73625140]
    %3094 = vst [vmem:[#allocation1] ss:$4 sm:$0xff] %v461
    %3096 = vst [vmem:[%s3083] ss:$4 sm:$0xff] %v462
    %v3097 = vld.sshfl [vmem:[#allocation1] sm:$0xff pattern:$0x73625140]
    %v3098 = vld.sshfl [vmem:[#allocation1 + $0x8] sm:$0xff pattern:$0x73625140]
    %v3099 = vld.sshfl [vmem:[#allocation1 + $0x10] sm:$0xff pattern:$0x73625140]
    %v3100 = vld.sshfl [vmem:[#allocation1 + $0x18] sm:$0xff pattern:$0x73625140]
    %v3101 = vld.sshfl [vmem:[#allocation1 + $0x20] sm:$0xff pattern:$0x73625140]
    %v3102 = vld.sshfl [vmem:[#allocation1 + $0x28] sm:$0xff pattern:$0x73625140]
    %v3103 = vld.sshfl [vmem:[#allocation1 + $0x30] sm:$0xff pattern:$0x73625140]
    %v3104 = vld.sshfl [vmem:[#allocation1 + $0x38] sm:$0xff pattern:$0x73625140]
    %3106 = vst [vmem:[#allocation1] ss:$4 sm:$0xff] %v463
    %3108 = vst [vmem:[%s3083] ss:$4 sm:$0xff] %v464
    %v3109 = vld.sshfl [vmem:[#allocation1] sm:$0xff pattern:$0x73625140]
    %v3110 = vld.sshfl [vmem:[#allocation1 + $0x8] sm:$0xff pattern:$0x73625140]
    %v3111 = vld.sshfl [vmem:[#allocation1 + $0x10] sm:$0xff pattern:$0x73625140]
    %v3112 = vld.sshfl [vmem:[#allocation1 + $0x18] sm:$0xff pattern:$0x73625140]
    %v3113 = vld.sshfl [vmem:[#allocation1 + $0x20] sm:$0xff pattern:$0x73625140]
    %v3114 = vld.sshfl [vmem:[#allocation1 + $0x28] sm:$0xff pattern:$0x73625140]
    %v3115 = vld.sshfl [vmem:[#allocation1 + $0x30] sm:$0xff pattern:$0x73625140]
    %v3116 = vld.sshfl [vmem:[#allocation1 + $0x38] sm:$0xff pattern:$0x73625140]
    %3118 = vst [vmem:[#allocation1] ss:$4 sm:$0xff] %v465
    %3120 = vst [vmem:[%s3083] ss:$4 sm:$0xff] %v466
    %v3121 = vld.sshfl [vmem:[#allocation1] sm:$0xff pattern:$0x73625140]
    %v3122 = vld.sshfl [vmem:[#allocation1 + $0x8] sm:$0xff pattern:$0x73625140]
    %v3123 = vld.sshfl [vmem:[#allocation1 + $0x10] sm:$0xff pattern:$0x73625140]
    %v3124 = vld.sshfl [vmem:[#allocation1 + $0x18] sm:$0xff pattern:$0x73625140]
    %v3125 = vld.sshfl [vmem:[#allocation1 + $0x20] sm:$0xff pattern:$0x73625140]
    %v3126 = vld.sshfl [vmem:[#allocation1 + $0x28] sm:$0xff pattern:$0x73625140]
    %v3127 = vld.sshfl [vmem:[#allocation1 + $0x30] sm:$0xff pattern:$0x73625140]
    %v3128 = vld.sshfl [vmem:[#allocation1 + $0x38] sm:$0xff pattern:$0x73625140]
    %v3129 = vsel %vm604, %v3079, 0
    %v3131 = vand.u32 %v3085, %v610
    %v3133 = vand.u32 %v3086, %v610
    %v3135 = vand.u32 %v3087, %v610
    %v3137 = vand.u32 %v3088, %v610
    %v3139 = vand.u32 %v3089, %v610
    %v3141 = vand.u32 %v3090, %v610
    %v3143 = vand.u32 %v3091, %v610
    %v3145 = vand.u32 %v3092, %v610
    %v3147 = vand.u32 %v3097, %v610
    %v3149 = vand.u32 %v3098, %v610
    %v3151 = vand.u32 %v3099, %v610
    %v3153 = vand.u32 %v3100, %v610
    %v3155 = vand.u32 %v3101, %v610
    %v3157 = vand.u32 %v3102, %v610
    %v3159 = vand.u32 %v3103, %v610
    %v3161 = vand.u32 %v3104, %v610
    %v3163 = vand.u32 %v3109, %v610
    %v3165 = vand.u32 %v3110, %v610
    %v3167 = vand.u32 %v3111, %v610
    %v3169 = vand.u32 %v3112, %v610
    %v3171 = vand.u32 %v3113, %v610
    %v3173 = vand.u32 %v3114, %v610
    %v3175 = vand.u32 %v3115, %v610
    %v3177 = vand.u32 %v3116, %v610
    %v3179 = vand.u32 %v3121, %v610
    %v3181 = vand.u32 %v3122, %v610
    %v3183 = vand.u32 %v3123, %v610
    %v3185 = vand.u32 %v3124, %v610
    %v3187 = vand.u32 %v3125, %v610
    %v3189 = vand.u32 %v3126, %v610
    %v3191 = vand.u32 %v3127, %v610
    %v3193 = vand.u32 %v3128, %v610
    %3195 = vmatpush.bf16.msra.mxu0 0
    %3196 = vmatpush.bf16.msra.mxu0 0
    %3197 = vmatpush.bf16.msra.mxu0 0
    %3198 = vmatpush.bf16.msra.mxu0 0
    %3199 = vmatpush.bf16.msra.mxu0 0
    %3200 = vmatpush.bf16.msra.mxu0 0
    %3201 = vmatpush.bf16.msra.mxu0 0
    %3202 = vmatpush.bf16.msra.mxu0 %v3131
    %3203 = vmatmul.f32.gmra.mxu0 %v3129
    %v3204 = vpop.f32.mrf.mxu0
    %v3205 = vadd.f32 0.0, %v3204
    %3206 = vdwg.mxu0
    %3207 = vmatpush.bf16.msra.mxu0 0
    %3208 = vmatpush.bf16.msra.mxu0 0
    %3209 = vmatpush.bf16.msra.mxu0 0
    %3210 = vmatpush.bf16.msra.mxu0 0
    %3211 = vmatpush.bf16.msra.mxu0 0
    %3212 = vmatpush.bf16.msra.mxu0 0
    %3213 = vmatpush.bf16.msra.mxu0 0
    %3214 = vmatpush.bf16.msra.mxu0 %v3133
    %3215 = vmatmul.f32.gmra.mxu0 %v3129
    %v3216 = vpop.f32.mrf.mxu0
    %v3217 = vadd.f32 0.0, %v3216
    %3218 = vdwg.mxu0
    %3219 = vmatpush.bf16.msra.mxu0 0
    %3220 = vmatpush.bf16.msra.mxu0 0
    %3221 = vmatpush.bf16.msra.mxu0 0
    %3222 = vmatpush.bf16.msra.mxu0 0
    %3223 = vmatpush.bf16.msra.mxu0 0
    %3224 = vmatpush.bf16.msra.mxu0 0
    %3225 = vmatpush.bf16.msra.mxu0 0
    %3226 = vmatpush.bf16.msra.mxu0 %v3135
    %3227 = vmatmul.f32.gmra.mxu0 %v3129
    %v3228 = vpop.f32.mrf.mxu0
    %v3229 = vadd.f32 0.0, %v3228
    %3230 = vdwg.mxu0
    %3231 = vmatpush.bf16.msra.mxu0 0
    %3232 = vmatpush.bf16.msra.mxu0 0
    %3233 = vmatpush.bf16.msra.mxu0 0
    %3234 = vmatpush.bf16.msra.mxu0 0
    %3235 = vmatpush.bf16.msra.mxu0 0
    %3236 = vmatpush.bf16.msra.mxu0 0
    %3237 = vmatpush.bf16.msra.mxu0 0
    %3238 = vmatpush.bf16.msra.mxu0 %v3137
    %3239 = vmatmul.f32.gmra.mxu0 %v3129
    %v3240 = vpop.f32.mrf.mxu0
    %v3241 = vadd.f32 0.0, %v3240
    %3242 = vdwg.mxu0
    %3243 = vmatpush.bf16.msra.mxu0 0
    %3244 = vmatpush.bf16.msra.mxu0 0
    %3245 = vmatpush.bf16.msra.mxu0 0
    %3246 = vmatpush.bf16.msra.mxu0 0
    %3247 = vmatpush.bf16.msra.mxu0 0
    %3248 = vmatpush.bf16.msra.mxu0 0
    %3249 = vmatpush.bf16.msra.mxu0 0
    %3250 = vmatpush.bf16.msra.mxu0 %v3139
    %3251 = vmatmul.f32.gmra.mxu0 %v3129
    %v3252 = vpop.f32.mrf.mxu0
    %v3253 = vadd.f32 0.0, %v3252
    %3254 = vdwg.mxu0
    %3255 = vmatpush.bf16.msra.mxu0 0
    %3256 = vmatpush.bf16.msra.mxu0 0
    %3257 = vmatpush.bf16.msra.mxu0 0
    %3258 = vmatpush.bf16.msra.mxu0 0
    %3259 = vmatpush.bf16.msra.mxu0 0
    %3260 = vmatpush.bf16.msra.mxu0 0
    %3261 = vmatpush.bf16.msra.mxu0 0
    %3262 = vmatpush.bf16.msra.mxu0 %v3141
    %3263 = vmatmul.f32.gmra.mxu0 %v3129
    %v3264 = vpop.f32.mrf.mxu0
    %v3265 = vadd.f32 0.0, %v3264
    %3266 = vdwg.mxu0
    %3267 = vmatpush.bf16.msra.mxu0 0
    %3268 = vmatpush.bf16.msra.mxu0 0
    %3269 = vmatpush.bf16.msra.mxu0 0
    %3270 = vmatpush.bf16.msra.mxu0 0
    %3271 = vmatpush.bf16.msra.mxu0 0
    %3272 = vmatpush.bf16.msra.mxu0 0
    %3273 = vmatpush.bf16.msra.mxu0 0
    %3274 = vmatpush.bf16.msra.mxu0 %v3143
    %3275 = vmatmul.f32.gmra.mxu0 %v3129
    %v3276 = vpop.f32.mrf.mxu0
    %v3277 = vadd.f32 0.0, %v3276
    %3278 = vdwg.mxu0
    %3279 = vmatpush.bf16.msra.mxu0 0
    %3280 = vmatpush.bf16.msra.mxu0 0
    %3281 = vmatpush.bf16.msra.mxu0 0
    %3282 = vmatpush.bf16.msra.mxu0 0
    %3283 = vmatpush.bf16.msra.mxu0 0
    %3284 = vmatpush.bf16.msra.mxu0 0
    %3285 = vmatpush.bf16.msra.mxu0 0
    %3286 = vmatpush.bf16.msra.mxu0 %v3145
    %3287 = vmatmul.f32.gmra.mxu0 %v3129
    %v3288 = vpop.f32.mrf.mxu0
    %v3289 = vadd.f32 0.0, %v3288
    %3290 = vdwg.mxu0
    %3291 = vmatpush.bf16.msra.mxu0 0
    %3292 = vmatpush.bf16.msra.mxu0 0
    %3293 = vmatpush.bf16.msra.mxu0 0
    %3294 = vmatpush.bf16.msra.mxu0 0
    %3295 = vmatpush.bf16.msra.mxu0 0
    %3296 = vmatpush.bf16.msra.mxu0 0
    %3297 = vmatpush.bf16.msra.mxu0 0
    %3298 = vmatpush.bf16.msra.mxu0 %v3147
    %3299 = vmatmul.f32.gmra.mxu0 %v3129
    %v3300 = vpop.f32.mrf.mxu0
    %v3301 = vadd.f32 0.0, %v3300
    %3302 = vdwg.mxu0
    %3303 = vmatpush.bf16.msra.mxu0 0
    %3304 = vmatpush.bf16.msra.mxu0 0
    %3305 = vmatpush.bf16.msra.mxu0 0
    %3306 = vmatpush.bf16.msra.mxu0 0
    %3307 = vmatpush.bf16.msra.mxu0 0
    %3308 = vmatpush.bf16.msra.mxu0 0
    %3309 = vmatpush.bf16.msra.mxu0 0
    %3310 = vmatpush.bf16.msra.mxu0 %v3149
    %3311 = vmatmul.f32.gmra.mxu0 %v3129
    %v3312 = vpop.f32.mrf.mxu0
    %v3313 = vadd.f32 0.0, %v3312
    %3314 = vdwg.mxu0
    %3315 = vmatpush.bf16.msra.mxu0 0
    %3316 = vmatpush.bf16.msra.mxu0 0
    %3317 = vmatpush.bf16.msra.mxu0 0
    %3318 = vmatpush.bf16.msra.mxu0 0
    %3319 = vmatpush.bf16.msra.mxu0 0
    %3320 = vmatpush.bf16.msra.mxu0 0
    %3321 = vmatpush.bf16.msra.mxu0 0
    %3322 = vmatpush.bf16.msra.mxu0 %v3151
    %3323 = vmatmul.f32.gmra.mxu0 %v3129
    %v3324 = vpop.f32.mrf.mxu0
    %v3325 = vadd.f32 0.0, %v3324
    %3326 = vdwg.mxu0
    %3327 = vmatpush.bf16.msra.mxu0 0
    %3328 = vmatpush.bf16.msra.mxu0 0
    %3329 = vmatpush.bf16.msra.mxu0 0
    %3330 = vmatpush.bf16.msra.mxu0 0
    %3331 = vmatpush.bf16.msra.mxu0 0
    %3332 = vmatpush.bf16.msra.mxu0 0
    %3333 = vmatpush.bf16.msra.mxu0 0
    %3334 = vmatpush.bf16.msra.mxu0 %v3153
    %3335 = vmatmul.f32.gmra.mxu0 %v3129
    %v3336 = vpop.f32.mrf.mxu0
    %v3337 = vadd.f32 0.0, %v3336
    %3338 = vdwg.mxu0
    %3339 = vmatpush.bf16.msra.mxu0 0
    %3340 = vmatpush.bf16.msra.mxu0 0
    %3341 = vmatpush.bf16.msra.mxu0 0
    %3342 = vmatpush.bf16.msra.mxu0 0
    %3343 = vmatpush.bf16.msra.mxu0 0
    %3344 = vmatpush.bf16.msra.mxu0 0
    %3345 = vmatpush.bf16.msra.mxu0 0
    %3346 = vmatpush.bf16.msra.mxu0 %v3155
    %3347 = vmatmul.f32.gmra.mxu0 %v3129
    %v3348 = vpop.f32.mrf.mxu0
    %v3349 = vadd.f32 0.0, %v3348
    %3350 = vdwg.mxu0
    %3351 = vmatpush.bf16.msra.mxu0 0
    %3352 = vmatpush.bf16.msra.mxu0 0
    %3353 = vmatpush.bf16.msra.mxu0 0
    %3354 = vmatpush.bf16.msra.mxu0 0
    %3355 = vmatpush.bf16.msra.mxu0 0
    %3356 = vmatpush.bf16.msra.mxu0 0
    %3357 = vmatpush.bf16.msra.mxu0 0
    %3358 = vmatpush.bf16.msra.mxu0 %v3157
    %3359 = vmatmul.f32.gmra.mxu0 %v3129
    %v3360 = vpop.f32.mrf.mxu0
    %v3361 = vadd.f32 0.0, %v3360
    %3362 = vdwg.mxu0
    %3363 = vmatpush.bf16.msra.mxu0 0
    %3364 = vmatpush.bf16.msra.mxu0 0
    %3365 = vmatpush.bf16.msra.mxu0 0
    %3366 = vmatpush.bf16.msra.mxu0 0
    %3367 = vmatpush.bf16.msra.mxu0 0
    %3368 = vmatpush.bf16.msra.mxu0 0
    %3369 = vmatpush.bf16.msra.mxu0 0
    %3370 = vmatpush.bf16.msra.mxu0 %v3159
    %3371 = vmatmul.f32.gmra.mxu0 %v3129
    %v3372 = vpop.f32.mrf.mxu0
    %v3373 = vadd.f32 0.0, %v3372
    %3374 = vdwg.mxu0
    %3375 = vmatpush.bf16.msra.mxu0 0
    %3376 = vmatpush.bf16.msra.mxu0 0
    %3377 = vmatpush.bf16.msra.mxu0 0
    %3378 = vmatpush.bf16.msra.mxu0 0
    %3379 = vmatpush.bf16.msra.mxu0 0
    %3380 = vmatpush.bf16.msra.mxu0 0
    %3381 = vmatpush.bf16.msra.mxu0 0
    %3382 = vmatpush.bf16.msra.mxu0 %v3161
    %3383 = vmatmul.f32.gmra.mxu0 %v3129
    %v3384 = vpop.f32.mrf.mxu0
    %v3385 = vadd.f32 0.0, %v3384
    %3386 = vdwg.mxu0
    %3387 = vmatpush.bf16.msra.mxu0 0
    %3388 = vmatpush.bf16.msra.mxu0 0
    %3389 = vmatpush.bf16.msra.mxu0 0
    %3390 = vmatpush.bf16.msra.mxu0 0
    %3391 = vmatpush.bf16.msra.mxu0 0
    %3392 = vmatpush.bf16.msra.mxu0 0
    %3393 = vmatpush.bf16.msra.mxu0 0
    %3394 = vmatpush.bf16.msra.mxu0 %v3163
    %3395 = vmatmul.f32.gmra.mxu0 %v3129
    %v3396 = vpop.f32.mrf.mxu0
    %v3397 = vadd.f32 0.0, %v3396
    %3398 = vdwg.mxu0
    %3399 = vmatpush.bf16.msra.mxu0 0
    %3400 = vmatpush.bf16.msra.mxu0 0
    %3401 = vmatpush.bf16.msra.mxu0 0
    %3402 = vmatpush.bf16.msra.mxu0 0
    %3403 = vmatpush.bf16.msra.mxu0 0
    %3404 = vmatpush.bf16.msra.mxu0 0
    %3405 = vmatpush.bf16.msra.mxu0 0
    %3406 = vmatpush.bf16.msra.mxu0 %v3165
    %3407 = vmatmul.f32.gmra.mxu0 %v3129
    %v3408 = vpop.f32.mrf.mxu0
    %v3409 = vadd.f32 0.0, %v3408
    %3410 = vdwg.mxu0
    %3411 = vmatpush.bf16.msra.mxu0 0
    %3412 = vmatpush.bf16.msra.mxu0 0
    %3413 = vmatpush.bf16.msra.mxu0 0
    %3414 = vmatpush.bf16.msra.mxu0 0
    %3415 = vmatpush.bf16.msra.mxu0 0
    %3416 = vmatpush.bf16.msra.mxu0 0
    %3417 = vmatpush.bf16.msra.mxu0 0
    %3418 = vmatpush.bf16.msra.mxu0 %v3167
    %3419 = vmatmul.f32.gmra.mxu0 %v3129
    %v3420 = vpop.f32.mrf.mxu0
    %v3421 = vadd.f32 0.0, %v3420
    %3422 = vdwg.mxu0
    %3423 = vmatpush.bf16.msra.mxu0 0
    %3424 = vmatpush.bf16.msra.mxu0 0
    %3425 = vmatpush.bf16.msra.mxu0 0
    %3426 = vmatpush.bf16.msra.mxu0 0
    %3427 = vmatpush.bf16.msra.mxu0 0
    %3428 = vmatpush.bf16.msra.mxu0 0
    %3429 = vmatpush.bf16.msra.mxu0 0
    %3430 = vmatpush.bf16.msra.mxu0 %v3169
    %3431 = vmatmul.f32.gmra.mxu0 %v3129
    %v3432 = vpop.f32.mrf.mxu0
    %v3433 = vadd.f32 0.0, %v3432
    %3434 = vdwg.mxu0
    %3435 = vmatpush.bf16.msra.mxu0 0
    %3436 = vmatpush.bf16.msra.mxu0 0
    %3437 = vmatpush.bf16.msra.mxu0 0
    %3438 = vmatpush.bf16.msra.mxu0 0
    %3439 = vmatpush.bf16.msra.mxu0 0
    %3440 = vmatpush.bf16.msra.mxu0 0
    %3441 = vmatpush.bf16.msra.mxu0 0
    %3442 = vmatpush.bf16.msra.mxu0 %v3171
    %3443 = vmatmul.f32.gmra.mxu0 %v3129
    %v3444 = vpop.f32.mrf.mxu0
    %v3445 = vadd.f32 0.0, %v3444
    %3446 = vdwg.mxu0
    %3447 = vmatpush.bf16.msra.mxu0 0
    %3448 = vmatpush.bf16.msra.mxu0 0
    %3449 = vmatpush.bf16.msra.mxu0 0
    %3450 = vmatpush.bf16.msra.mxu0 0
    %3451 = vmatpush.bf16.msra.mxu0 0
    %3452 = vmatpush.bf16.msra.mxu0 0
    %3453 = vmatpush.bf16.msra.mxu0 0
    %3454 = vmatpush.bf16.msra.mxu0 %v3173
    %3455 = vmatmul.f32.gmra.mxu0 %v3129
    %v3456 = vpop.f32.mrf.mxu0
    %v3457 = vadd.f32 0.0, %v3456
    %3458 = vdwg.mxu0
    %3459 = vmatpush.bf16.msra.mxu0 0
    %3460 = vmatpush.bf16.msra.mxu0 0
    %3461 = vmatpush.bf16.msra.mxu0 0
    %3462 = vmatpush.bf16.msra.mxu0 0
    %3463 = vmatpush.bf16.msra.mxu0 0
    %3464 = vmatpush.bf16.msra.mxu0 0
    %3465 = vmatpush.bf16.msra.mxu0 0
    %3466 = vmatpush.bf16.msra.mxu0 %v3175
    %3467 = vmatmul.f32.gmra.mxu0 %v3129
    %v3468 = vpop.f32.mrf.mxu0
    %v3469 = vadd.f32 0.0, %v3468
    %3470 = vdwg.mxu0
    %3471 = vmatpush.bf16.msra.mxu0 0
    %3472 = vmatpush.bf16.msra.mxu0 0
    %3473 = vmatpush.bf16.msra.mxu0 0
    %3474 = vmatpush.bf16.msra.mxu0 0
    %3475 = vmatpush.bf16.msra.mxu0 0
    %3476 = vmatpush.bf16.msra.mxu0 0
    %3477 = vmatpush.bf16.msra.mxu0 0
    %3478 = vmatpush.bf16.msra.mxu0 %v3177
    %3479 = vmatmul.f32.gmra.mxu0 %v3129
    %v3480 = vpop.f32.mrf.mxu0
    %v3481 = vadd.f32 0.0, %v3480
    %3482 = vdwg.mxu0
    %3483 = vmatpush.bf16.msra.mxu0 0
    %3484 = vmatpush.bf16.msra.mxu0 0
    %3485 = vmatpush.bf16.msra.mxu0 0
    %3486 = vmatpush.bf16.msra.mxu0 0
    %3487 = vmatpush.bf16.msra.mxu0 0
    %3488 = vmatpush.bf16.msra.mxu0 0
    %3489 = vmatpush.bf16.msra.mxu0 0
    %3490 = vmatpush.bf16.msra.mxu0 %v3179
    %3491 = vmatmul.f32.gmra.mxu0 %v3129
    %v3492 = vpop.f32.mrf.mxu0
    %v3493 = vadd.f32 0.0, %v3492
    %3494 = vdwg.mxu0
    %3495 = vmatpush.bf16.msra.mxu0 0
    %3496 = vmatpush.bf16.msra.mxu0 0
    %3497 = vmatpush.bf16.msra.mxu0 0
    %3498 = vmatpush.bf16.msra.mxu0 0
    %3499 = vmatpush.bf16.msra.mxu0 0
    %3500 = vmatpush.bf16.msra.mxu0 0
    %3501 = vmatpush.bf16.msra.mxu0 0
    %3502 = vmatpush.bf16.msra.mxu0 %v3181
    %3503 = vmatmul.f32.gmra.mxu0 %v3129
    %v3504 = vpop.f32.mrf.mxu0
    %v3505 = vadd.f32 0.0, %v3504
    %3506 = vdwg.mxu0
    %3507 = vmatpush.bf16.msra.mxu0 0
    %3508 = vmatpush.bf16.msra.mxu0 0
    %3509 = vmatpush.bf16.msra.mxu0 0
    %3510 = vmatpush.bf16.msra.mxu0 0
    %3511 = vmatpush.bf16.msra.mxu0 0
    %3512 = vmatpush.bf16.msra.mxu0 0
    %3513 = vmatpush.bf16.msra.mxu0 0
    %3514 = vmatpush.bf16.msra.mxu0 %v3183
    %3515 = vmatmul.f32.gmra.mxu0 %v3129
    %v3516 = vpop.f32.mrf.mxu0
    %v3517 = vadd.f32 0.0, %v3516
    %3518 = vdwg.mxu0
    %3519 = vmatpush.bf16.msra.mxu0 0
    %3520 = vmatpush.bf16.msra.mxu0 0
    %3521 = vmatpush.bf16.msra.mxu0 0
    %3522 = vmatpush.bf16.msra.mxu0 0
    %3523 = vmatpush.bf16.msra.mxu0 0
    %3524 = vmatpush.bf16.msra.mxu0 0
    %3525 = vmatpush.bf16.msra.mxu0 0
    %3526 = vmatpush.bf16.msra.mxu0 %v3185
    %3527 = vmatmul.f32.gmra.mxu0 %v3129
    %v3528 = vpop.f32.mrf.mxu0
    %v3529 = vadd.f32 0.0, %v3528
    %3530 = vdwg.mxu0
    %3531 = vmatpush.bf16.msra.mxu0 0
    %3532 = vmatpush.bf16.msra.mxu0 0
    %3533 = vmatpush.bf16.msra.mxu0 0
    %3534 = vmatpush.bf16.msra.mxu0 0
    %3535 = vmatpush.bf16.msra.mxu0 0
    %3536 = vmatpush.bf16.msra.mxu0 0
    %3537 = vmatpush.bf16.msra.mxu0 0
    %3538 = vmatpush.bf16.msra.mxu0 %v3187
    %3539 = vmatmul.f32.gmra.mxu0 %v3129
    %v3540 = vpop.f32.mrf.mxu0
    %v3541 = vadd.f32 0.0, %v3540
    %3542 = vdwg.mxu0
    %3543 = vmatpush.bf16.msra.mxu0 0
    %3544 = vmatpush.bf16.msra.mxu0 0
    %3545 = vmatpush.bf16.msra.mxu0 0
    %3546 = vmatpush.bf16.msra.mxu0 0
    %3547 = vmatpush.bf16.msra.mxu0 0
    %3548 = vmatpush.bf16.msra.mxu0 0
    %3549 = vmatpush.bf16.msra.mxu0 0
    %3550 = vmatpush.bf16.msra.mxu0 %v3189
    %3551 = vmatmul.f32.gmra.mxu0 %v3129
    %v3552 = vpop.f32.mrf.mxu0
    %v3553 = vadd.f32 0.0, %v3552
    %3554 = vdwg.mxu0
    %3555 = vmatpush.bf16.msra.mxu0 0
    %3556 = vmatpush.bf16.msra.mxu0 0
    %3557 = vmatpush.bf16.msra.mxu0 0
    %3558 = vmatpush.bf16.msra.mxu0 0
    %3559 = vmatpush.bf16.msra.mxu0 0
    %3560 = vmatpush.bf16.msra.mxu0 0
    %3561 = vmatpush.bf16.msra.mxu0 0
    %3562 = vmatpush.bf16.msra.mxu0 %v3191
    %3563 = vmatmul.f32.gmra.mxu0 %v3129
    %v3564 = vpop.f32.mrf.mxu0
    %v3565 = vadd.f32 0.0, %v3564
    %3566 = vdwg.mxu0
    %3567 = vmatpush.bf16.msra.mxu0 0
    %3568 = vmatpush.bf16.msra.mxu0 0
    %3569 = vmatpush.bf16.msra.mxu0 0
    %3570 = vmatpush.bf16.msra.mxu0 0
    %3571 = vmatpush.bf16.msra.mxu0 0
    %3572 = vmatpush.bf16.msra.mxu0 0
    %3573 = vmatpush.bf16.msra.mxu0 0
    %3574 = vmatpush.bf16.msra.mxu0 %v3193
    %3575 = vmatmul.f32.gmra.mxu0 %v3129
    %v3576 = vpop.f32.mrf.mxu0
    %v3577 = vadd.f32 0.0, %v3576
    %3578 = vdwg.mxu0
    %v3581 = vperm.slane %v323, %v550
    %v3582 = vperm.slane %v328, %v550
    %v3583 = vsel %vm553, %v3582, %v3581
    %3585 = vst [vmem:[#allocation1] ss:$4 sm:$0xff] %v467
    %s3587 = scalar_lea.vmem [#allocation1], 32
    %3588 = vst [vmem:[%s3587] ss:$4 sm:$0xff] %v468
    %v3589 = vld.sshfl [vmem:[#allocation1] sm:$0xff pattern:$0x73625140]
    %v3590 = vld.sshfl [vmem:[#allocation1 + $0x8] sm:$0xff pattern:$0x73625140]
    %v3591 = vld.sshfl [vmem:[#allocation1 + $0x10] sm:$0xff pattern:$0x73625140]
    %v3592 = vld.sshfl [vmem:[#allocation1 + $0x18] sm:$0xff pattern:$0x73625140]
    %v3593 = vld.sshfl [vmem:[#allocation1 + $0x20] sm:$0xff pattern:$0x73625140]
    %v3594 = vld.sshfl [vmem:[#allocation1 + $0x28] sm:$0xff pattern:$0x73625140]
    %v3595 = vld.sshfl [vmem:[#allocation1 + $0x30] sm:$0xff pattern:$0x73625140]
    %v3596 = vld.sshfl [vmem:[#allocation1 + $0x38] sm:$0xff pattern:$0x73625140]
    %3598 = vst [vmem:[#allocation1] ss:$4 sm:$0xff] %v469
    %3600 = vst [vmem:[%s3587] ss:$4 sm:$0xff] %v470
    %v3601 = vld.sshfl [vmem:[#allocation1] sm:$0xff pattern:$0x73625140]
    %v3602 = vld.sshfl [vmem:[#allocation1 + $0x8] sm:$0xff pattern:$0x73625140]
    %v3603 = vld.sshfl [vmem:[#allocation1 + $0x10] sm:$0xff pattern:$0x73625140]
    %v3604 = vld.sshfl [vmem:[#allocation1 + $0x18] sm:$0xff pattern:$0x73625140]
    %v3605 = vld.sshfl [vmem:[#allocation1 + $0x20] sm:$0xff pattern:$0x73625140]
    %v3606 = vld.sshfl [vmem:[#allocation1 + $0x28] sm:$0xff pattern:$0x73625140]
    %v3607 = vld.sshfl [vmem:[#allocation1 + $0x30] sm:$0xff pattern:$0x73625140]
    %v3608 = vld.sshfl [vmem:[#allocation1 + $0x38] sm:$0xff pattern:$0x73625140]
    %3610 = vst [vmem:[#allocation1] ss:$4 sm:$0xff] %v471
    %3612 = vst [vmem:[%s3587] ss:$4 sm:$0xff] %v472
    %v3613 = vld.sshfl [vmem:[#allocation1] sm:$0xff pattern:$0x73625140]
    %v3614 = vld.sshfl [vmem:[#allocation1 + $0x8] sm:$0xff pattern:$0x73625140]
    %v3615 = vld.sshfl [vmem:[#allocation1 + $0x10] sm:$0xff pattern:$0x73625140]
    %v3616 = vld.sshfl [vmem:[#allocation1 + $0x18] sm:$0xff pattern:$0x73625140]
    %v3617 = vld.sshfl [vmem:[#allocation1 + $0x20] sm:$0xff pattern:$0x73625140]
    %v3618 = vld.sshfl [vmem:[#allocation1 + $0x28] sm:$0xff pattern:$0x73625140]
    %v3619 = vld.sshfl [vmem:[#allocation1 + $0x30] sm:$0xff pattern:$0x73625140]
    %v3620 = vld.sshfl [vmem:[#allocation1 + $0x38] sm:$0xff pattern:$0x73625140]
    %3622 = vst [vmem:[#allocation1] ss:$4 sm:$0xff] %v473
    %3624 = vst [vmem:[%s3587] ss:$4 sm:$0xff] %v474
    %v3625 = vld.sshfl [vmem:[#allocation1] sm:$0xff pattern:$0x73625140]
    %v3626 = vld.sshfl [vmem:[#allocation1 + $0x8] sm:$0xff pattern:$0x73625140]
    %v3627 = vld.sshfl [vmem:[#allocation1 + $0x10] sm:$0xff pattern:$0x73625140]
    %v3628 = vld.sshfl [vmem:[#allocation1 + $0x18] sm:$0xff pattern:$0x73625140]
    %v3629 = vld.sshfl [vmem:[#allocation1 + $0x20] sm:$0xff pattern:$0x73625140]
    %v3630 = vld.sshfl [vmem:[#allocation1 + $0x28] sm:$0xff pattern:$0x73625140]
    %v3631 = vld.sshfl [vmem:[#allocation1 + $0x30] sm:$0xff pattern:$0x73625140]
    %v3632 = vld.sshfl [vmem:[#allocation1 + $0x38] sm:$0xff pattern:$0x73625140]
    %v3633 = vsel %vm604, %v3583, 0
    %v3635 = vand.u32 %v3589, %v610
    %v3637 = vand.u32 %v3590, %v610
    %v3639 = vand.u32 %v3591, %v610
    %v3641 = vand.u32 %v3592, %v610
    %v3643 = vand.u32 %v3593, %v610
    %v3645 = vand.u32 %v3594, %v610
    %v3647 = vand.u32 %v3595, %v610
    %v3649 = vand.u32 %v3596, %v610
    %v3651 = vand.u32 %v3601, %v610
    %v3653 = vand.u32 %v3602, %v610
    %v3655 = vand.u32 %v3603, %v610
    %v3657 = vand.u32 %v3604, %v610
    %v3659 = vand.u32 %v3605, %v610
    %v3661 = vand.u32 %v3606, %v610
    %v3663 = vand.u32 %v3607, %v610
    %v3665 = vand.u32 %v3608, %v610
    %v3667 = vand.u32 %v3613, %v610
    %v3669 = vand.u32 %v3614, %v610
    %v3671 = vand.u32 %v3615, %v610
    %v3673 = vand.u32 %v3616, %v610
    %v3675 = vand.u32 %v3617, %v610
    %v3677 = vand.u32 %v3618, %v610
    %v3679 = vand.u32 %v3619, %v610
    %v3681 = vand.u32 %v3620, %v610
    %v3683 = vand.u32 %v3625, %v610
    %v3685 = vand.u32 %v3626, %v610
    %v3687 = vand.u32 %v3627, %v610
    %v3689 = vand.u32 %v3628, %v610
    %v3691 = vand.u32 %v3629, %v610
    %v3693 = vand.u32 %v3630, %v610
    %v3695 = vand.u32 %v3631, %v610
    %v3697 = vand.u32 %v3632, %v610
    %3699 = vmatpush.bf16.msra.mxu0 0
    %3700 = vmatpush.bf16.msra.mxu0 0
    %3701 = vmatpush.bf16.msra.mxu0 0
    %3702 = vmatpush.bf16.msra.mxu0 0
    %3703 = vmatpush.bf16.msra.mxu0 0
    %3704 = vmatpush.bf16.msra.mxu0 0
    %3705 = vmatpush.bf16.msra.mxu0 0
    %3706 = vmatpush.bf16.msra.mxu0 %v3635
    %3707 = vmatmul.f32.gmra.mxu0 %v3633
    %v3708 = vpop.f32.mrf.mxu0
    %v3709 = vadd.f32 0.0, %v3708
    %3710 = vdwg.mxu0
    %3711 = vmatpush.bf16.msra.mxu0 0
    %3712 = vmatpush.bf16.msra.mxu0 0
    %3713 = vmatpush.bf16.msra.mxu0 0
    %3714 = vmatpush.bf16.msra.mxu0 0
    %3715 = vmatpush.bf16.msra.mxu0 0
    %3716 = vmatpush.bf16.msra.mxu0 0
    %3717 = vmatpush.bf16.msra.mxu0 0
    %3718 = vmatpush.bf16.msra.mxu0 %v3637
    %3719 = vmatmul.f32.gmra.mxu0 %v3633
    %v3720 = vpop.f32.mrf.mxu0
    %v3721 = vadd.f32 0.0, %v3720
    %3722 = vdwg.mxu0
    %3723 = vmatpush.bf16.msra.mxu0 0
    %3724 = vmatpush.bf16.msra.mxu0 0
    %3725 = vmatpush.bf16.msra.mxu0 0
    %3726 = vmatpush.bf16.msra.mxu0 0
    %3727 = vmatpush.bf16.msra.mxu0 0
    %3728 = vmatpush.bf16.msra.mxu0 0
    %3729 = vmatpush.bf16.msra.mxu0 0
    %3730 = vmatpush.bf16.msra.mxu0 %v3639
    %3731 = vmatmul.f32.gmra.mxu0 %v3633
    %v3732 = vpop.f32.mrf.mxu0
    %v3733 = vadd.f32 0.0, %v3732
    %3734 = vdwg.mxu0
    %3735 = vmatpush.bf16.msra.mxu0 0
    %3736 = vmatpush.bf16.msra.mxu0 0
    %3737 = vmatpush.bf16.msra.mxu0 0
    %3738 = vmatpush.bf16.msra.mxu0 0
    %3739 = vmatpush.bf16.msra.mxu0 0
    %3740 = vmatpush.bf16.msra.mxu0 0
    %3741 = vmatpush.bf16.msra.mxu0 0
    %3742 = vmatpush.bf16.msra.mxu0 %v3641
    %3743 = vmatmul.f32.gmra.mxu0 %v3633
    %v3744 = vpop.f32.mrf.mxu0
    %v3745 = vadd.f32 0.0, %v3744
    %3746 = vdwg.mxu0
    %3747 = vmatpush.bf16.msra.mxu0 0
    %3748 = vmatpush.bf16.msra.mxu0 0
    %3749 = vmatpush.bf16.msra.mxu0 0
    %3750 = vmatpush.bf16.msra.mxu0 0
    %3751 = vmatpush.bf16.msra.mxu0 0
    %3752 = vmatpush.bf16.msra.mxu0 0
    %3753 = vmatpush.bf16.msra.mxu0 0
    %3754 = vmatpush.bf16.msra.mxu0 %v3643
    %3755 = vmatmul.f32.gmra.mxu0 %v3633
    %v3756 = vpop.f32.mrf.mxu0
    %v3757 = vadd.f32 0.0, %v3756
    %3758 = vdwg.mxu0
    %3759 = vmatpush.bf16.msra.mxu0 0
    %3760 = vmatpush.bf16.msra.mxu0 0
    %3761 = vmatpush.bf16.msra.mxu0 0
    %3762 = vmatpush.bf16.msra.mxu0 0
    %3763 = vmatpush.bf16.msra.mxu0 0
    %3764 = vmatpush.bf16.msra.mxu0 0
    %3765 = vmatpush.bf16.msra.mxu0 0
    %3766 = vmatpush.bf16.msra.mxu0 %v3645
    %3767 = vmatmul.f32.gmra.mxu0 %v3633
    %v3768 = vpop.f32.mrf.mxu0
    %v3769 = vadd.f32 0.0, %v3768
    %3770 = vdwg.mxu0
    %3771 = vmatpush.bf16.msra.mxu0 0
    %3772 = vmatpush.bf16.msra.mxu0 0
    %3773 = vmatpush.bf16.msra.mxu0 0
    %3774 = vmatpush.bf16.msra.mxu0 0
    %3775 = vmatpush.bf16.msra.mxu0 0
    %3776 = vmatpush.bf16.msra.mxu0 0
    %3777 = vmatpush.bf16.msra.mxu0 0
    %3778 = vmatpush.bf16.msra.mxu0 %v3647
    %3779 = vmatmul.f32.gmra.mxu0 %v3633
    %v3780 = vpop.f32.mrf.mxu0
    %v3781 = vadd.f32 0.0, %v3780
    %3782 = vdwg.mxu0
    %3783 = vmatpush.bf16.msra.mxu0 0
    %3784 = vmatpush.bf16.msra.mxu0 0
    %3785 = vmatpush.bf16.msra.mxu0 0
    %3786 = vmatpush.bf16.msra.mxu0 0
    %3787 = vmatpush.bf16.msra.mxu0 0
    %3788 = vmatpush.bf16.msra.mxu0 0
    %3789 = vmatpush.bf16.msra.mxu0 0
    %3790 = vmatpush.bf16.msra.mxu0 %v3649
    %3791 = vmatmul.f32.gmra.mxu0 %v3633
    %v3792 = vpop.f32.mrf.mxu0
    %v3793 = vadd.f32 0.0, %v3792
    %3794 = vdwg.mxu0
    %3795 = vmatpush.bf16.msra.mxu0 0
    %3796 = vmatpush.bf16.msra.mxu0 0
    %3797 = vmatpush.bf16.msra.mxu0 0
    %3798 = vmatpush.bf16.msra.mxu0 0
    %3799 = vmatpush.bf16.msra.mxu0 0
    %3800 = vmatpush.bf16.msra.mxu0 0
    %3801 = vmatpush.bf16.msra.mxu0 0
    %3802 = vmatpush.bf16.msra.mxu0 %v3651
    %3803 = vmatmul.f32.gmra.mxu0 %v3633
    %v3804 = vpop.f32.mrf.mxu0
    %v3805 = vadd.f32 0.0, %v3804
    %3806 = vdwg.mxu0
    %3807 = vmatpush.bf16.msra.mxu0 0
    %3808 = vmatpush.bf16.msra.mxu0 0
    %3809 = vmatpush.bf16.msra.mxu0 0
    %3810 = vmatpush.bf16.msra.mxu0 0
    %3811 = vmatpush.bf16.msra.mxu0 0
    %3812 = vmatpush.bf16.msra.mxu0 0
    %3813 = vmatpush.bf16.msra.mxu0 0
    %3814 = vmatpush.bf16.msra.mxu0 %v3653
    %3815 = vmatmul.f32.gmra.mxu0 %v3633
    %v3816 = vpop.f32.mrf.mxu0
    %v3817 = vadd.f32 0.0, %v3816
    %3818 = vdwg.mxu0
    %3819 = vmatpush.bf16.msra.mxu0 0
    %3820 = vmatpush.bf16.msra.mxu0 0
    %3821 = vmatpush.bf16.msra.mxu0 0
    %3822 = vmatpush.bf16.msra.mxu0 0
    %3823 = vmatpush.bf16.msra.mxu0 0
    %3824 = vmatpush.bf16.msra.mxu0 0
    %3825 = vmatpush.bf16.msra.mxu0 0
    %3826 = vmatpush.bf16.msra.mxu0 %v3655
    %3827 = vmatmul.f32.gmra.mxu0 %v3633
    %v3828 = vpop.f32.mrf.mxu0
    %v3829 = vadd.f32 0.0, %v3828
    %3830 = vdwg.mxu0
    %3831 = vmatpush.bf16.msra.mxu0 0
    %3832 = vmatpush.bf16.msra.mxu0 0
    %3833 = vmatpush.bf16.msra.mxu0 0
    %3834 = vmatpush.bf16.msra.mxu0 0
    %3835 = vmatpush.bf16.msra.mxu0 0
    %3836 = vmatpush.bf16.msra.mxu0 0
    %3837 = vmatpush.bf16.msra.mxu0 0
    %3838 = vmatpush.bf16.msra.mxu0 %v3657
    %3839 = vmatmul.f32.gmra.mxu0 %v3633
    %v3840 = vpop.f32.mrf.mxu0
    %v3841 = vadd.f32 0.0, %v3840
    %3842 = vdwg.mxu0
    %3843 = vmatpush.bf16.msra.mxu0 0
    %3844 = vmatpush.bf16.msra.mxu0 0
    %3845 = vmatpush.bf16.msra.mxu0 0
    %3846 = vmatpush.bf16.msra.mxu0 0
    %3847 = vmatpush.bf16.msra.mxu0 0
    %3848 = vmatpush.bf16.msra.mxu0 0
    %3849 = vmatpush.bf16.msra.mxu0 0
    %3850 = vmatpush.bf16.msra.mxu0 %v3659
    %3851 = vmatmul.f32.gmra.mxu0 %v3633
    %v3852 = vpop.f32.mrf.mxu0
    %v3853 = vadd.f32 0.0, %v3852
    %3854 = vdwg.mxu0
    %3855 = vmatpush.bf16.msra.mxu0 0
    %3856 = vmatpush.bf16.msra.mxu0 0
    %3857 = vmatpush.bf16.msra.mxu0 0
    %3858 = vmatpush.bf16.msra.mxu0 0
    %3859 = vmatpush.bf16.msra.mxu0 0
    %3860 = vmatpush.bf16.msra.mxu0 0
    %3861 = vmatpush.bf16.msra.mxu0 0
    %3862 = vmatpush.bf16.msra.mxu0 %v3661
    %3863 = vmatmul.f32.gmra.mxu0 %v3633
    %v3864 = vpop.f32.mrf.mxu0
    %v3865 = vadd.f32 0.0, %v3864
    %3866 = vdwg.mxu0
    %3867 = vmatpush.bf16.msra.mxu0 0
    %3868 = vmatpush.bf16.msra.mxu0 0
    %3869 = vmatpush.bf16.msra.mxu0 0
    %3870 = vmatpush.bf16.msra.mxu0 0
    %3871 = vmatpush.bf16.msra.mxu0 0
    %3872 = vmatpush.bf16.msra.mxu0 0
    %3873 = vmatpush.bf16.msra.mxu0 0
    %3874 = vmatpush.bf16.msra.mxu0 %v3663
    %3875 = vmatmul.f32.gmra.mxu0 %v3633
    %v3876 = vpop.f32.mrf.mxu0
    %v3877 = vadd.f32 0.0, %v3876
    %3878 = vdwg.mxu0
    %3879 = vmatpush.bf16.msra.mxu0 0
    %3880 = vmatpush.bf16.msra.mxu0 0
    %3881 = vmatpush.bf16.msra.mxu0 0
    %3882 = vmatpush.bf16.msra.mxu0 0
    %3883 = vmatpush.bf16.msra.mxu0 0
    %3884 = vmatpush.bf16.msra.mxu0 0
    %3885 = vmatpush.bf16.msra.mxu0 0
    %3886 = vmatpush.bf16.msra.mxu0 %v3665
    %3887 = vmatmul.f32.gmra.mxu0 %v3633
    %v3888 = vpop.f32.mrf.mxu0
    %v3889 = vadd.f32 0.0, %v3888
    %3890 = vdwg.mxu0
    %3891 = vmatpush.bf16.msra.mxu0 0
    %3892 = vmatpush.bf16.msra.mxu0 0
    %3893 = vmatpush.bf16.msra.mxu0 0
    %3894 = vmatpush.bf16.msra.mxu0 0
    %3895 = vmatpush.bf16.msra.mxu0 0
    %3896 = vmatpush.bf16.msra.mxu0 0
    %3897 = vmatpush.bf16.msra.mxu0 0
    %3898 = vmatpush.bf16.msra.mxu0 %v3667
    %3899 = vmatmul.f32.gmra.mxu0 %v3633
    %v3900 = vpop.f32.mrf.mxu0
    %v3901 = vadd.f32 0.0, %v3900
    %3902 = vdwg.mxu0
    %3903 = vmatpush.bf16.msra.mxu0 0
    %3904 = vmatpush.bf16.msra.mxu0 0
    %3905 = vmatpush.bf16.msra.mxu0 0
    %3906 = vmatpush.bf16.msra.mxu0 0
    %3907 = vmatpush.bf16.msra.mxu0 0
    %3908 = vmatpush.bf16.msra.mxu0 0
    %3909 = vmatpush.bf16.msra.mxu0 0
    %3910 = vmatpush.bf16.msra.mxu0 %v3669
    %3911 = vmatmul.f32.gmra.mxu0 %v3633
    %v3912 = vpop.f32.mrf.mxu0
    %v3913 = vadd.f32 0.0, %v3912
    %3914 = vdwg.mxu0
    %3915 = vmatpush.bf16.msra.mxu0 0
    %3916 = vmatpush.bf16.msra.mxu0 0
    %3917 = vmatpush.bf16.msra.mxu0 0
    %3918 = vmatpush.bf16.msra.mxu0 0
    %3919 = vmatpush.bf16.msra.mxu0 0
    %3920 = vmatpush.bf16.msra.mxu0 0
    %3921 = vmatpush.bf16.msra.mxu0 0
    %3922 = vmatpush.bf16.msra.mxu0 %v3671
    %3923 = vmatmul.f32.gmra.mxu0 %v3633
    %v3924 = vpop.f32.mrf.mxu0
    %v3925 = vadd.f32 0.0, %v3924
    %3926 = vdwg.mxu0
    %3927 = vmatpush.bf16.msra.mxu0 0
    %3928 = vmatpush.bf16.msra.mxu0 0
    %3929 = vmatpush.bf16.msra.mxu0 0
    %3930 = vmatpush.bf16.msra.mxu0 0
    %3931 = vmatpush.bf16.msra.mxu0 0
    %3932 = vmatpush.bf16.msra.mxu0 0
    %3933 = vmatpush.bf16.msra.mxu0 0
    %3934 = vmatpush.bf16.msra.mxu0 %v3673
    %3935 = vmatmul.f32.gmra.mxu0 %v3633
    %v3936 = vpop.f32.mrf.mxu0
    %v3937 = vadd.f32 0.0, %v3936
    %3938 = vdwg.mxu0
    %3939 = vmatpush.bf16.msra.mxu0 0
    %3940 = vmatpush.bf16.msra.mxu0 0
    %3941 = vmatpush.bf16.msra.mxu0 0
    %3942 = vmatpush.bf16.msra.mxu0 0
    %3943 = vmatpush.bf16.msra.mxu0 0
    %3944 = vmatpush.bf16.msra.mxu0 0
    %3945 = vmatpush.bf16.msra.mxu0 0
    %3946 = vmatpush.bf16.msra.mxu0 %v3675
    %3947 = vmatmul.f32.gmra.mxu0 %v3633
    %v3948 = vpop.f32.mrf.mxu0
    %v3949 = vadd.f32 0.0, %v3948
    %3950 = vdwg.mxu0
    %3951 = vmatpush.bf16.msra.mxu0 0
    %3952 = vmatpush.bf16.msra.mxu0 0
    %3953 = vmatpush.bf16.msra.mxu0 0
    %3954 = vmatpush.bf16.msra.mxu0 0
    %3955 = vmatpush.bf16.msra.mxu0 0
    %3956 = vmatpush.bf16.msra.mxu0 0
    %3957 = vmatpush.bf16.msra.mxu0 0
    %3958 = vmatpush.bf16.msra.mxu0 %v3677
    %3959 = vmatmul.f32.gmra.mxu0 %v3633
    %v3960 = vpop.f32.mrf.mxu0
    %v3961 = vadd.f32 0.0, %v3960
    %3962 = vdwg.mxu0
    %3963 = vmatpush.bf16.msra.mxu0 0
    %3964 = vmatpush.bf16.msra.mxu0 0
    %3965 = vmatpush.bf16.msra.mxu0 0
    %3966 = vmatpush.bf16.msra.mxu0 0
    %3967 = vmatpush.bf16.msra.mxu0 0
    %3968 = vmatpush.bf16.msra.mxu0 0
    %3969 = vmatpush.bf16.msra.mxu0 0
    %3970 = vmatpush.bf16.msra.mxu0 %v3679
    %3971 = vmatmul.f32.gmra.mxu0 %v3633
    %v3972 = vpop.f32.mrf.mxu0
    %v3973 = vadd.f32 0.0, %v3972
    %3974 = vdwg.mxu0
    %3975 = vmatpush.bf16.msra.mxu0 0
    %3976 = vmatpush.bf16.msra.mxu0 0
    %3977 = vmatpush.bf16.msra.mxu0 0
    %3978 = vmatpush.bf16.msra.mxu0 0
    %3979 = vmatpush.bf16.msra.mxu0 0
    %3980 = vmatpush.bf16.msra.mxu0 0
    %3981 = vmatpush.bf16.msra.mxu0 0
    %3982 = vmatpush.bf16.msra.mxu0 %v3681
    %3983 = vmatmul.f32.gmra.mxu0 %v3633
    %v3984 = vpop.f32.mrf.mxu0
    %v3985 = vadd.f32 0.0, %v3984
    %3986 = vdwg.mxu0
    %3987 = vmatpush.bf16.msra.mxu0 0
    %3988 = vmatpush.bf16.msra.mxu0 0
    %3989 = vmatpush.bf16.msra.mxu0 0
    %3990 = vmatpush.bf16.msra.mxu0 0
    %3991 = vmatpush.bf16.msra.mxu0 0
    %3992 = vmatpush.bf16.msra.mxu0 0
    %3993 = vmatpush.bf16.msra.mxu0 0
    %3994 = vmatpush.bf16.msra.mxu0 %v3683
    %3995 = vmatmul.f32.gmra.mxu0 %v3633
    %v3996 = vpop.f32.mrf.mxu0
    %v3997 = vadd.f32 0.0, %v3996
    %3998 = vdwg.mxu0
    %3999 = vmatpush.bf16.msra.mxu0 0
    %4000 = vmatpush.bf16.msra.mxu0 0
    %4001 = vmatpush.bf16.msra.mxu0 0
    %4002 = vmatpush.bf16.msra.mxu0 0
    %4003 = vmatpush.bf16.msra.mxu0 0
    %4004 = vmatpush.bf16.msra.mxu0 0
    %4005 = vmatpush.bf16.msra.mxu0 0
    %4006 = vmatpush.bf16.msra.mxu0 %v3685
    %4007 = vmatmul.f32.gmra.mxu0 %v3633
    %v4008 = vpop.f32.mrf.mxu0
    %v4009 = vadd.f32 0.0, %v4008
    %4010 = vdwg.mxu0
    %4011 = vmatpush.bf16.msra.mxu0 0
    %4012 = vmatpush.bf16.msra.mxu0 0
    %4013 = vmatpush.bf16.msra.mxu0 0
    %4014 = vmatpush.bf16.msra.mxu0 0
    %4015 = vmatpush.bf16.msra.mxu0 0
    %4016 = vmatpush.bf16.msra.mxu0 0
    %4017 = vmatpush.bf16.msra.mxu0 0
    %4018 = vmatpush.bf16.msra.mxu0 %v3687
    %4019 = vmatmul.f32.gmra.mxu0 %v3633
    %v4020 = vpop.f32.mrf.mxu0
    %v4021 = vadd.f32 0.0, %v4020
    %4022 = vdwg.mxu0
    %4023 = vmatpush.bf16.msra.mxu0 0
    %4024 = vmatpush.bf16.msra.mxu0 0
    %4025 = vmatpush.bf16.msra.mxu0 0
    %4026 = vmatpush.bf16.msra.mxu0 0
    %4027 = vmatpush.bf16.msra.mxu0 0
    %4028 = vmatpush.bf16.msra.mxu0 0
    %4029 = vmatpush.bf16.msra.mxu0 0
    %4030 = vmatpush.bf16.msra.mxu0 %v3689
    %4031 = vmatmul.f32.gmra.mxu0 %v3633
    %v4032 = vpop.f32.mrf.mxu0
    %v4033 = vadd.f32 0.0, %v4032
    %4034 = vdwg.mxu0
    %4035 = vmatpush.bf16.msra.mxu0 0
    %4036 = vmatpush.bf16.msra.mxu0 0
    %4037 = vmatpush.bf16.msra.mxu0 0
    %4038 = vmatpush.bf16.msra.mxu0 0
    %4039 = vmatpush.bf16.msra.mxu0 0
    %4040 = vmatpush.bf16.msra.mxu0 0
    %4041 = vmatpush.bf16.msra.mxu0 0
    %4042 = vmatpush.bf16.msra.mxu0 %v3691
    %4043 = vmatmul.f32.gmra.mxu0 %v3633
    %v4044 = vpop.f32.mrf.mxu0
    %v4045 = vadd.f32 0.0, %v4044
    %4046 = vdwg.mxu0
    %4047 = vmatpush.bf16.msra.mxu0 0
    %4048 = vmatpush.bf16.msra.mxu0 0
    %4049 = vmatpush.bf16.msra.mxu0 0
    %4050 = vmatpush.bf16.msra.mxu0 0
    %4051 = vmatpush.bf16.msra.mxu0 0
    %4052 = vmatpush.bf16.msra.mxu0 0
    %4053 = vmatpush.bf16.msra.mxu0 0
    %4054 = vmatpush.bf16.msra.mxu0 %v3693
    %4055 = vmatmul.f32.gmra.mxu0 %v3633
    %v4056 = vpop.f32.mrf.mxu0
    %v4057 = vadd.f32 0.0, %v4056
    %4058 = vdwg.mxu0
    %4059 = vmatpush.bf16.msra.mxu0 0
    %4060 = vmatpush.bf16.msra.mxu0 0
    %4061 = vmatpush.bf16.msra.mxu0 0
    %4062 = vmatpush.bf16.msra.mxu0 0
    %4063 = vmatpush.bf16.msra.mxu0 0
    %4064 = vmatpush.bf16.msra.mxu0 0
    %4065 = vmatpush.bf16.msra.mxu0 0
    %4066 = vmatpush.bf16.msra.mxu0 %v3695
    %4067 = vmatmul.f32.gmra.mxu0 %v3633
    %v4068 = vpop.f32.mrf.mxu0
    %v4069 = vadd.f32 0.0, %v4068
    %4070 = vdwg.mxu0
    %4071 = vmatpush.bf16.msra.mxu0 0
    %4072 = vmatpush.bf16.msra.mxu0 0
    %4073 = vmatpush.bf16.msra.mxu0 0
    %4074 = vmatpush.bf16.msra.mxu0 0
    %4075 = vmatpush.bf16.msra.mxu0 0
    %4076 = vmatpush.bf16.msra.mxu0 0
    %4077 = vmatpush.bf16.msra.mxu0 0
    %4078 = vmatpush.bf16.msra.mxu0 %v3697
    %4079 = vmatmul.f32.gmra.mxu0 %v3633
    %v4080 = vpop.f32.mrf.mxu0
    %v4081 = vadd.f32 0.0, %v4080
    %4082 = vdwg.mxu0
    %v4085 = vperm.slane %v333, %v550
    %v4086 = vperm.slane %v338, %v550
    %v4087 = vsel %vm553, %v4086, %v4085
    %4089 = vst [vmem:[#allocation1] ss:$4 sm:$0xff] %v475
    %s4091 = scalar_lea.vmem [#allocation1], 32
    %4092 = vst [vmem:[%s4091] ss:$4 sm:$0xff] %v476
    %v4093 = vld.sshfl [vmem:[#allocation1] sm:$0xff pattern:$0x73625140]
    %v4094 = vld.sshfl [vmem:[#allocation1 + $0x8] sm:$0xff pattern:$0x73625140]
    %v4095 = vld.sshfl [vmem:[#allocation1 + $0x10] sm:$0xff pattern:$0x73625140]
    %v4096 = vld.sshfl [vmem:[#allocation1 + $0x18] sm:$0xff pattern:$0x73625140]
    %v4097 = vld.sshfl [vmem:[#allocation1 + $0x20] sm:$0xff pattern:$0x73625140]
    %v4098 = vld.sshfl [vmem:[#allocation1 + $0x28] sm:$0xff pattern:$0x73625140]
    %v4099 = vld.sshfl [vmem:[#allocation1 + $0x30] sm:$0xff pattern:$0x73625140]
    %v4100 = vld.sshfl [vmem:[#allocation1 + $0x38] sm:$0xff pattern:$0x73625140]
    %4102 = vst [vmem:[#allocation1] ss:$4 sm:$0xff] %v477
    %4104 = vst [vmem:[%s4091] ss:$4 sm:$0xff] %v478
    %v4105 = vld.sshfl [vmem:[#allocation1] sm:$0xff pattern:$0x73625140]
    %v4106 = vld.sshfl [vmem:[#allocation1 + $0x8] sm:$0xff pattern:$0x73625140]
    %v4107 = vld.sshfl [vmem:[#allocation1 + $0x10] sm:$0xff pattern:$0x73625140]
    %v4108 = vld.sshfl [vmem:[#allocation1 + $0x18] sm:$0xff pattern:$0x73625140]
    %v4109 = vld.sshfl [vmem:[#allocation1 + $0x20] sm:$0xff pattern:$0x73625140]
    %v4110 = vld.sshfl [vmem:[#allocation1 + $0x28] sm:$0xff pattern:$0x73625140]
    %v4111 = vld.sshfl [vmem:[#allocation1 + $0x30] sm:$0xff pattern:$0x73625140]
    %v4112 = vld.sshfl [vmem:[#allocation1 + $0x38] sm:$0xff pattern:$0x73625140]
    %4114 = vst [vmem:[#allocation1] ss:$4 sm:$0xff] %v479
    %4116 = vst [vmem:[%s4091] ss:$4 sm:$0xff] %v480
    %v4117 = vld.sshfl [vmem:[#allocation1] sm:$0xff pattern:$0x73625140]
    %v4118 = vld.sshfl [vmem:[#allocation1 + $0x8] sm:$0xff pattern:$0x73625140]
    %v4119 = vld.sshfl [vmem:[#allocation1 + $0x10] sm:$0xff pattern:$0x73625140]
    %v4120 = vld.sshfl [vmem:[#allocation1 + $0x18] sm:$0xff pattern:$0x73625140]
    %v4121 = vld.sshfl [vmem:[#allocation1 + $0x20] sm:$0xff pattern:$0x73625140]
    %v4122 = vld.sshfl [vmem:[#allocation1 + $0x28] sm:$0xff pattern:$0x73625140]
    %v4123 = vld.sshfl [vmem:[#allocation1 + $0x30] sm:$0xff pattern:$0x73625140]
    %v4124 = vld.sshfl [vmem:[#allocation1 + $0x38] sm:$0xff pattern:$0x73625140]
    %4126 = vst [vmem:[#allocation1] ss:$4 sm:$0xff] %v481
    %4128 = vst [vmem:[%s4091] ss:$4 sm:$0xff] %v482
    %v4129 = vld.sshfl [vmem:[#allocation1] sm:$0xff pattern:$0x73625140]
    %v4130 = vld.sshfl [vmem:[#allocation1 + $0x8] sm:$0xff pattern:$0x73625140]
    %v4131 = vld.sshfl [vmem:[#allocation1 + $0x10] sm:$0xff pattern:$0x73625140]
    %v4132 = vld.sshfl [vmem:[#allocation1 + $0x18] sm:$0xff pattern:$0x73625140]
    %v4133 = vld.sshfl [vmem:[#allocation1 + $0x20] sm:$0xff pattern:$0x73625140]
    %v4134 = vld.sshfl [vmem:[#allocation1 + $0x28] sm:$0xff pattern:$0x73625140]
    %v4135 = vld.sshfl [vmem:[#allocation1 + $0x30] sm:$0xff pattern:$0x73625140]
    %v4136 = vld.sshfl [vmem:[#allocation1 + $0x38] sm:$0xff pattern:$0x73625140]
    %v4137 = vsel %vm604, %v4087, 0
    %v4139 = vand.u32 %v4093, %v610
    %v4141 = vand.u32 %v4094, %v610
    %v4143 = vand.u32 %v4095, %v610
    %v4145 = vand.u32 %v4096, %v610
    %v4147 = vand.u32 %v4097, %v610
    %v4149 = vand.u32 %v4098, %v610
    %v4151 = vand.u32 %v4099, %v610
    %v4153 = vand.u32 %v4100, %v610
    %v4155 = vand.u32 %v4105, %v610
    %v4157 = vand.u32 %v4106, %v610
    %v4159 = vand.u32 %v4107, %v610
    %v4161 = vand.u32 %v4108, %v610
    %v4163 = vand.u32 %v4109, %v610
    %v4165 = vand.u32 %v4110, %v610
    %v4167 = vand.u32 %v4111, %v610
    %v4169 = vand.u32 %v4112, %v610
    %v4171 = vand.u32 %v4117, %v610
    %v4173 = vand.u32 %v4118, %v610
    %v4175 = vand.u32 %v4119, %v610
    %v4177 = vand.u32 %v4120, %v610
    %v4179 = vand.u32 %v4121, %v610
    %v4181 = vand.u32 %v4122, %v610
    %v4183 = vand.u32 %v4123, %v610
    %v4185 = vand.u32 %v4124, %v610
    %v4187 = vand.u32 %v4129, %v610
    %v4189 = vand.u32 %v4130, %v610
    %v4191 = vand.u32 %v4131, %v610
    %v4193 = vand.u32 %v4132, %v610
    %v4195 = vand.u32 %v4133, %v610
    %v4197 = vand.u32 %v4134, %v610
    %v4199 = vand.u32 %v4135, %v610
    %v4201 = vand.u32 %v4136, %v610
    %4203 = vmatpush.bf16.msra.mxu0 0
    %4204 = vmatpush.bf16.msra.mxu0 0
    %4205 = vmatpush.bf16.msra.mxu0 0
    %4206 = vmatpush.bf16.msra.mxu0 0
    %4207 = vmatpush.bf16.msra.mxu0 0
    %4208 = vmatpush.bf16.msra.mxu0 0
    %4209 = vmatpush.bf16.msra.mxu0 0
    %4210 = vmatpush.bf16.msra.mxu0 %v4139
    %4211 = vmatmul.f32.gmra.mxu0 %v4137
    %v4212 = vpop.f32.mrf.mxu0
    %v4213 = vadd.f32 0.0, %v4212
    %4214 = vdwg.mxu0
    %4215 = vmatpush.bf16.msra.mxu0 0
    %4216 = vmatpush.bf16.msra.mxu0 0
    %4217 = vmatpush.bf16.msra.mxu0 0
    %4218 = vmatpush.bf16.msra.mxu0 0
    %4219 = vmatpush.bf16.msra.mxu0 0
    %4220 = vmatpush.bf16.msra.mxu0 0
    %4221 = vmatpush.bf16.msra.mxu0 0
    %4222 = vmatpush.bf16.msra.mxu0 %v4141
    %4223 = vmatmul.f32.gmra.mxu0 %v4137
    %v4224 = vpop.f32.mrf.mxu0
    %v4225 = vadd.f32 0.0, %v4224
    %4226 = vdwg.mxu0
    %4227 = vmatpush.bf16.msra.mxu0 0
    %4228 = vmatpush.bf16.msra.mxu0 0
    %4229 = vmatpush.bf16.msra.mxu0 0
    %4230 = vmatpush.bf16.msra.mxu0 0
    %4231 = vmatpush.bf16.msra.mxu0 0
    %4232 = vmatpush.bf16.msra.mxu0 0
    %4233 = vmatpush.bf16.msra.mxu0 0
    %4234 = vmatpush.bf16.msra.mxu0 %v4143
    %4235 = vmatmul.f32.gmra.mxu0 %v4137
    %v4236 = vpop.f32.mrf.mxu0
    %v4237 = vadd.f32 0.0, %v4236
    %4238 = vdwg.mxu0
    %4239 = vmatpush.bf16.msra.mxu0 0
    %4240 = vmatpush.bf16.msra.mxu0 0
    %4241 = vmatpush.bf16.msra.mxu0 0
    %4242 = vmatpush.bf16.msra.mxu0 0
    %4243 = vmatpush.bf16.msra.mxu0 0
    %4244 = vmatpush.bf16.msra.mxu0 0
    %4245 = vmatpush.bf16.msra.mxu0 0
    %4246 = vmatpush.bf16.msra.mxu0 %v4145
    %4247 = vmatmul.f32.gmra.mxu0 %v4137
    %v4248 = vpop.f32.mrf.mxu0
    %v4249 = vadd.f32 0.0, %v4248
    %4250 = vdwg.mxu0
    %4251 = vmatpush.bf16.msra.mxu0 0
    %4252 = vmatpush.bf16.msra.mxu0 0
    %4253 = vmatpush.bf16.msra.mxu0 0
    %4254 = vmatpush.bf16.msra.mxu0 0
    %4255 = vmatpush.bf16.msra.mxu0 0
    %4256 = vmatpush.bf16.msra.mxu0 0
    %4257 = vmatpush.bf16.msra.mxu0 0
    %4258 = vmatpush.bf16.msra.mxu0 %v4147
    %4259 = vmatmul.f32.gmra.mxu0 %v4137
    %v4260 = vpop.f32.mrf.mxu0
    %v4261 = vadd.f32 0.0, %v4260
    %4262 = vdwg.mxu0
    %4263 = vmatpush.bf16.msra.mxu0 0
    %4264 = vmatpush.bf16.msra.mxu0 0
    %4265 = vmatpush.bf16.msra.mxu0 0
    %4266 = vmatpush.bf16.msra.mxu0 0
    %4267 = vmatpush.bf16.msra.mxu0 0
    %4268 = vmatpush.bf16.msra.mxu0 0
    %4269 = vmatpush.bf16.msra.mxu0 0
    %4270 = vmatpush.bf16.msra.mxu0 %v4149
    %4271 = vmatmul.f32.gmra.mxu0 %v4137
    %v4272 = vpop.f32.mrf.mxu0
    %v4273 = vadd.f32 0.0, %v4272
    %4274 = vdwg.mxu0
    %4275 = vmatpush.bf16.msra.mxu0 0
    %4276 = vmatpush.bf16.msra.mxu0 0
    %4277 = vmatpush.bf16.msra.mxu0 0
    %4278 = vmatpush.bf16.msra.mxu0 0
    %4279 = vmatpush.bf16.msra.mxu0 0
    %4280 = vmatpush.bf16.msra.mxu0 0
    %4281 = vmatpush.bf16.msra.mxu0 0
    %4282 = vmatpush.bf16.msra.mxu0 %v4151
    %4283 = vmatmul.f32.gmra.mxu0 %v4137
    %v4284 = vpop.f32.mrf.mxu0
    %v4285 = vadd.f32 0.0, %v4284
    %4286 = vdwg.mxu0
    %4287 = vmatpush.bf16.msra.mxu0 0
    %4288 = vmatpush.bf16.msra.mxu0 0
    %4289 = vmatpush.bf16.msra.mxu0 0
    %4290 = vmatpush.bf16.msra.mxu0 0
    %4291 = vmatpush.bf16.msra.mxu0 0
    %4292 = vmatpush.bf16.msra.mxu0 0
    %4293 = vmatpush.bf16.msra.mxu0 0
    %4294 = vmatpush.bf16.msra.mxu0 %v4153
    %4295 = vmatmul.f32.gmra.mxu0 %v4137
    %v4296 = vpop.f32.mrf.mxu0
    %v4297 = vadd.f32 0.0, %v4296
    %4298 = vdwg.mxu0
    %4299 = vmatpush.bf16.msra.mxu0 0
    %4300 = vmatpush.bf16.msra.mxu0 0
    %4301 = vmatpush.bf16.msra.mxu0 0
    %4302 = vmatpush.bf16.msra.mxu0 0
    %4303 = vmatpush.bf16.msra.mxu0 0
    %4304 = vmatpush.bf16.msra.mxu0 0
    %4305 = vmatpush.bf16.msra.mxu0 0
    %4306 = vmatpush.bf16.msra.mxu0 %v4155
    %4307 = vmatmul.f32.gmra.mxu0 %v4137
    %v4308 = vpop.f32.mrf.mxu0
    %v4309 = vadd.f32 0.0, %v4308
    %4310 = vdwg.mxu0
    %4311 = vmatpush.bf16.msra.mxu0 0
    %4312 = vmatpush.bf16.msra.mxu0 0
    %4313 = vmatpush.bf16.msra.mxu0 0
    %4314 = vmatpush.bf16.msra.mxu0 0
    %4315 = vmatpush.bf16.msra.mxu0 0
    %4316 = vmatpush.bf16.msra.mxu0 0
    %4317 = vmatpush.bf16.msra.mxu0 0
    %4318 = vmatpush.bf16.msra.mxu0 %v4157
    %4319 = vmatmul.f32.gmra.mxu0 %v4137
    %v4320 = vpop.f32.mrf.mxu0
    %v4321 = vadd.f32 0.0, %v4320
    %4322 = vdwg.mxu0
    %4323 = vmatpush.bf16.msra.mxu0 0
    %4324 = vmatpush.bf16.msra.mxu0 0
    %4325 = vmatpush.bf16.msra.mxu0 0
    %4326 = vmatpush.bf16.msra.mxu0 0
    %4327 = vmatpush.bf16.msra.mxu0 0
    %4328 = vmatpush.bf16.msra.mxu0 0
    %4329 = vmatpush.bf16.msra.mxu0 0
    %4330 = vmatpush.bf16.msra.mxu0 %v4159
    %4331 = vmatmul.f32.gmra.mxu0 %v4137
    %v4332 = vpop.f32.mrf.mxu0
    %v4333 = vadd.f32 0.0, %v4332
    %4334 = vdwg.mxu0
    %4335 = vmatpush.bf16.msra.mxu0 0
    %4336 = vmatpush.bf16.msra.mxu0 0
    %4337 = vmatpush.bf16.msra.mxu0 0
    %4338 = vmatpush.bf16.msra.mxu0 0
    %4339 = vmatpush.bf16.msra.mxu0 0
    %4340 = vmatpush.bf16.msra.mxu0 0
    %4341 = vmatpush.bf16.msra.mxu0 0
    %4342 = vmatpush.bf16.msra.mxu0 %v4161
    %4343 = vmatmul.f32.gmra.mxu0 %v4137
    %v4344 = vpop.f32.mrf.mxu0
    %v4345 = vadd.f32 0.0, %v4344
    %4346 = vdwg.mxu0
    %4347 = vmatpush.bf16.msra.mxu0 0
    %4348 = vmatpush.bf16.msra.mxu0 0
    %4349 = vmatpush.bf16.msra.mxu0 0
    %4350 = vmatpush.bf16.msra.mxu0 0
    %4351 = vmatpush.bf16.msra.mxu0 0
    %4352 = vmatpush.bf16.msra.mxu0 0
    %4353 = vmatpush.bf16.msra.mxu0 0
    %4354 = vmatpush.bf16.msra.mxu0 %v4163
    %4355 = vmatmul.f32.gmra.mxu0 %v4137
    %v4356 = vpop.f32.mrf.mxu0
    %v4357 = vadd.f32 0.0, %v4356
    %4358 = vdwg.mxu0
    %4359 = vmatpush.bf16.msra.mxu0 0
    %4360 = vmatpush.bf16.msra.mxu0 0
    %4361 = vmatpush.bf16.msra.mxu0 0
    %4362 = vmatpush.bf16.msra.mxu0 0
    %4363 = vmatpush.bf16.msra.mxu0 0
    %4364 = vmatpush.bf16.msra.mxu0 0
    %4365 = vmatpush.bf16.msra.mxu0 0
    %4366 = vmatpush.bf16.msra.mxu0 %v4165
    %4367 = vmatmul.f32.gmra.mxu0 %v4137
    %v4368 = vpop.f32.mrf.mxu0
    %v4369 = vadd.f32 0.0, %v4368
    %4370 = vdwg.mxu0
    %4371 = vmatpush.bf16.msra.mxu0 0
    %4372 = vmatpush.bf16.msra.mxu0 0
    %4373 = vmatpush.bf16.msra.mxu0 0
    %4374 = vmatpush.bf16.msra.mxu0 0
    %4375 = vmatpush.bf16.msra.mxu0 0
    %4376 = vmatpush.bf16.msra.mxu0 0
    %4377 = vmatpush.bf16.msra.mxu0 0
    %4378 = vmatpush.bf16.msra.mxu0 %v4167
    %4379 = vmatmul.f32.gmra.mxu0 %v4137
    %v4380 = vpop.f32.mrf.mxu0
    %v4381 = vadd.f32 0.0, %v4380
    %4382 = vdwg.mxu0
    %4383 = vmatpush.bf16.msra.mxu0 0
    %4384 = vmatpush.bf16.msra.mxu0 0
    %4385 = vmatpush.bf16.msra.mxu0 0
    %4386 = vmatpush.bf16.msra.mxu0 0
    %4387 = vmatpush.bf16.msra.mxu0 0
    %4388 = vmatpush.bf16.msra.mxu0 0
    %4389 = vmatpush.bf16.msra.mxu0 0
    %4390 = vmatpush.bf16.msra.mxu0 %v4169
    %4391 = vmatmul.f32.gmra.mxu0 %v4137
    %v4392 = vpop.f32.mrf.mxu0
    %v4393 = vadd.f32 0.0, %v4392
    %4394 = vdwg.mxu0
    %4395 = vmatpush.bf16.msra.mxu0 0
    %4396 = vmatpush.bf16.msra.mxu0 0
    %4397 = vmatpush.bf16.msra.mxu0 0
    %4398 = vmatpush.bf16.msra.mxu0 0
    %4399 = vmatpush.bf16.msra.mxu0 0
    %4400 = vmatpush.bf16.msra.mxu0 0
    %4401 = vmatpush.bf16.msra.mxu0 0
    %4402 = vmatpush.bf16.msra.mxu0 %v4171
    %4403 = vmatmul.f32.gmra.mxu0 %v4137
    %v4404 = vpop.f32.mrf.mxu0
    %v4405 = vadd.f32 0.0, %v4404
    %4406 = vdwg.mxu0
    %4407 = vmatpush.bf16.msra.mxu0 0
    %4408 = vmatpush.bf16.msra.mxu0 0
    %4409 = vmatpush.bf16.msra.mxu0 0
    %4410 = vmatpush.bf16.msra.mxu0 0
    %4411 = vmatpush.bf16.msra.mxu0 0
    %4412 = vmatpush.bf16.msra.mxu0 0
    %4413 = vmatpush.bf16.msra.mxu0 0
    %4414 = vmatpush.bf16.msra.mxu0 %v4173
    %4415 = vmatmul.f32.gmra.mxu0 %v4137
    %v4416 = vpop.f32.mrf.mxu0
    %v4417 = vadd.f32 0.0, %v4416
    %4418 = vdwg.mxu0
    %4419 = vmatpush.bf16.msra.mxu0 0
    %4420 = vmatpush.bf16.msra.mxu0 0
    %4421 = vmatpush.bf16.msra.mxu0 0
    %4422 = vmatpush.bf16.msra.mxu0 0
    %4423 = vmatpush.bf16.msra.mxu0 0
    %4424 = vmatpush.bf16.msra.mxu0 0
    %4425 = vmatpush.bf16.msra.mxu0 0
    %4426 = vmatpush.bf16.msra.mxu0 %v4175
    %4427 = vmatmul.f32.gmra.mxu0 %v4137
    %v4428 = vpop.f32.mrf.mxu0
    %v4429 = vadd.f32 0.0, %v4428
    %4430 = vdwg.mxu0
    %4431 = vmatpush.bf16.msra.mxu0 0
    %4432 = vmatpush.bf16.msra.mxu0 0
    %4433 = vmatpush.bf16.msra.mxu0 0
    %4434 = vmatpush.bf16.msra.mxu0 0
    %4435 = vmatpush.bf16.msra.mxu0 0
    %4436 = vmatpush.bf16.msra.mxu0 0
    %4437 = vmatpush.bf16.msra.mxu0 0
    %4438 = vmatpush.bf16.msra.mxu0 %v4177
    %4439 = vmatmul.f32.gmra.mxu0 %v4137
    %v4440 = vpop.f32.mrf.mxu0
    %v4441 = vadd.f32 0.0, %v4440
    %4442 = vdwg.mxu0
    %4443 = vmatpush.bf16.msra.mxu0 0
    %4444 = vmatpush.bf16.msra.mxu0 0
    %4445 = vmatpush.bf16.msra.mxu0 0
    %4446 = vmatpush.bf16.msra.mxu0 0
    %4447 = vmatpush.bf16.msra.mxu0 0
    %4448 = vmatpush.bf16.msra.mxu0 0
    %4449 = vmatpush.bf16.msra.mxu0 0
    %4450 = vmatpush.bf16.msra.mxu0 %v4179
    %4451 = vmatmul.f32.gmra.mxu0 %v4137
    %v4452 = vpop.f32.mrf.mxu0
    %v4453 = vadd.f32 0.0, %v4452
    %4454 = vdwg.mxu0
    %4455 = vmatpush.bf16.msra.mxu0 0
    %4456 = vmatpush.bf16.msra.mxu0 0
    %4457 = vmatpush.bf16.msra.mxu0 0
    %4458 = vmatpush.bf16.msra.mxu0 0
    %4459 = vmatpush.bf16.msra.mxu0 0
    %4460 = vmatpush.bf16.msra.mxu0 0
    %4461 = vmatpush.bf16.msra.mxu0 0
    %4462 = vmatpush.bf16.msra.mxu0 %v4181
    %4463 = vmatmul.f32.gmra.mxu0 %v4137
    %v4464 = vpop.f32.mrf.mxu0
    %v4465 = vadd.f32 0.0, %v4464
    %4466 = vdwg.mxu0
    %4467 = vmatpush.bf16.msra.mxu0 0
    %4468 = vmatpush.bf16.msra.mxu0 0
    %4469 = vmatpush.bf16.msra.mxu0 0
    %4470 = vmatpush.bf16.msra.mxu0 0
    %4471 = vmatpush.bf16.msra.mxu0 0
    %4472 = vmatpush.bf16.msra.mxu0 0
    %4473 = vmatpush.bf16.msra.mxu0 0
    %4474 = vmatpush.bf16.msra.mxu0 %v4183
    %4475 = vmatmul.f32.gmra.mxu0 %v4137
    %v4476 = vpop.f32.mrf.mxu0
    %v4477 = vadd.f32 0.0, %v4476
    %4478 = vdwg.mxu0
    %4479 = vmatpush.bf16.msra.mxu0 0
    %4480 = vmatpush.bf16.msra.mxu0 0
    %4481 = vmatpush.bf16.msra.mxu0 0
    %4482 = vmatpush.bf16.msra.mxu0 0
    %4483 = vmatpush.bf16.msra.mxu0 0
    %4484 = vmatpush.bf16.msra.mxu0 0
    %4485 = vmatpush.bf16.msra.mxu0 0
    %4486 = vmatpush.bf16.msra.mxu0 %v4185
    %4487 = vmatmul.f32.gmra.mxu0 %v4137
    %v4488 = vpop.f32.mrf.mxu0
    %v4489 = vadd.f32 0.0, %v4488
    %4490 = vdwg.mxu0
    %4491 = vmatpush.bf16.msra.mxu0 0
    %4492 = vmatpush.bf16.msra.mxu0 0
    %4493 = vmatpush.bf16.msra.mxu0 0
    %4494 = vmatpush.bf16.msra.mxu0 0
    %4495 = vmatpush.bf16.msra.mxu0 0
    %4496 = vmatpush.bf16.msra.mxu0 0
    %4497 = vmatpush.bf16.msra.mxu0 0
    %4498 = vmatpush.bf16.msra.mxu0 %v4187
    %4499 = vmatmul.f32.gmra.mxu0 %v4137
    %v4500 = vpop.f32.mrf.mxu0
    %v4501 = vadd.f32 0.0, %v4500
    %4502 = vdwg.mxu0
    %4503 = vmatpush.bf16.msra.mxu0 0
    %4504 = vmatpush.bf16.msra.mxu0 0
    %4505 = vmatpush.bf16.msra.mxu0 0
    %4506 = vmatpush.bf16.msra.mxu0 0
    %4507 = vmatpush.bf16.msra.mxu0 0
    %4508 = vmatpush.bf16.msra.mxu0 0
    %4509 = vmatpush.bf16.msra.mxu0 0
    %4510 = vmatpush.bf16.msra.mxu0 %v4189
    %4511 = vmatmul.f32.gmra.mxu0 %v4137
    %v4512 = vpop.f32.mrf.mxu0
    %v4513 = vadd.f32 0.0, %v4512
    %4514 = vdwg.mxu0
    %4515 = vmatpush.bf16.msra.mxu0 0
    %4516 = vmatpush.bf16.msra.mxu0 0
    %4517 = vmatpush.bf16.msra.mxu0 0
    %4518 = vmatpush.bf16.msra.mxu0 0
    %4519 = vmatpush.bf16.msra.mxu0 0
    %4520 = vmatpush.bf16.msra.mxu0 0
    %4521 = vmatpush.bf16.msra.mxu0 0
    %4522 = vmatpush.bf16.msra.mxu0 %v4191
    %4523 = vmatmul.f32.gmra.mxu0 %v4137
    %v4524 = vpop.f32.mrf.mxu0
    %v4525 = vadd.f32 0.0, %v4524
    %4526 = vdwg.mxu0
    %4527 = vmatpush.bf16.msra.mxu0 0
    %4528 = vmatpush.bf16.msra.mxu0 0
    %4529 = vmatpush.bf16.msra.mxu0 0
    %4530 = vmatpush.bf16.msra.mxu0 0
    %4531 = vmatpush.bf16.msra.mxu0 0
    %4532 = vmatpush.bf16.msra.mxu0 0
    %4533 = vmatpush.bf16.msra.mxu0 0
    %4534 = vmatpush.bf16.msra.mxu0 %v4193
    %4535 = vmatmul.f32.gmra.mxu0 %v4137
    %v4536 = vpop.f32.mrf.mxu0
    %v4537 = vadd.f32 0.0, %v4536
    %4538 = vdwg.mxu0
    %4539 = vmatpush.bf16.msra.mxu0 0
    %4540 = vmatpush.bf16.msra.mxu0 0
    %4541 = vmatpush.bf16.msra.mxu0 0
    %4542 = vmatpush.bf16.msra.mxu0 0
    %4543 = vmatpush.bf16.msra.mxu0 0
    %4544 = vmatpush.bf16.msra.mxu0 0
    %4545 = vmatpush.bf16.msra.mxu0 0
    %4546 = vmatpush.bf16.msra.mxu0 %v4195
    %4547 = vmatmul.f32.gmra.mxu0 %v4137
    %v4548 = vpop.f32.mrf.mxu0
    %v4549 = vadd.f32 0.0, %v4548
    %4550 = vdwg.mxu0
    %4551 = vmatpush.bf16.msra.mxu0 0
    %4552 = vmatpush.bf16.msra.mxu0 0
    %4553 = vmatpush.bf16.msra.mxu0 0
    %4554 = vmatpush.bf16.msra.mxu0 0
    %4555 = vmatpush.bf16.msra.mxu0 0
    %4556 = vmatpush.bf16.msra.mxu0 0
    %4557 = vmatpush.bf16.msra.mxu0 0
    %4558 = vmatpush.bf16.msra.mxu0 %v4197
    %4559 = vmatmul.f32.gmra.mxu0 %v4137
    %v4560 = vpop.f32.mrf.mxu0
    %v4561 = vadd.f32 0.0, %v4560
    %4562 = vdwg.mxu0
    %4563 = vmatpush.bf16.msra.mxu0 0
    %4564 = vmatpush.bf16.msra.mxu0 0
    %4565 = vmatpush.bf16.msra.mxu0 0
    %4566 = vmatpush.bf16.msra.mxu0 0
    %4567 = vmatpush.bf16.msra.mxu0 0
    %4568 = vmatpush.bf16.msra.mxu0 0
    %4569 = vmatpush.bf16.msra.mxu0 0
    %4570 = vmatpush.bf16.msra.mxu0 %v4199
    %4571 = vmatmul.f32.gmra.mxu0 %v4137
    %v4572 = vpop.f32.mrf.mxu0
    %v4573 = vadd.f32 0.0, %v4572
    %4574 = vdwg.mxu0
    %4575 = vmatpush.bf16.msra.mxu0 0
    %4576 = vmatpush.bf16.msra.mxu0 0
    %4577 = vmatpush.bf16.msra.mxu0 0
    %4578 = vmatpush.bf16.msra.mxu0 0
    %4579 = vmatpush.bf16.msra.mxu0 0
    %4580 = vmatpush.bf16.msra.mxu0 0
    %4581 = vmatpush.bf16.msra.mxu0 0
    %4582 = vmatpush.bf16.msra.mxu0 %v4201
    %4583 = vmatmul.f32.gmra.mxu0 %v4137
    %v4584 = vpop.f32.mrf.mxu0
    %v4585 = vadd.f32 0.0, %v4584
    %4586 = vdwg.mxu0
    %v4589 = vperm.slane %v343, %v550
    %v4590 = vperm.slane %v348, %v550
    %v4591 = vsel %vm553, %v4590, %v4589
    %4593 = vst [vmem:[#allocation1] ss:$4 sm:$0xff] %v483
    %s4595 = scalar_lea.vmem [#allocation1], 32
    %4596 = vst [vmem:[%s4595] ss:$4 sm:$0xff] %v484
    %v4597 = vld.sshfl [vmem:[#allocation1] sm:$0xff pattern:$0x73625140]
    %v4598 = vld.sshfl [vmem:[#allocation1 + $0x8] sm:$0xff pattern:$0x73625140]
    %v4599 = vld.sshfl [vmem:[#allocation1 + $0x10] sm:$0xff pattern:$0x73625140]
    %v4600 = vld.sshfl [vmem:[#allocation1 + $0x18] sm:$0xff pattern:$0x73625140]
    %v4601 = vld.sshfl [vmem:[#allocation1 + $0x20] sm:$0xff pattern:$0x73625140]
    %v4602 = vld.sshfl [vmem:[#allocation1 + $0x28] sm:$0xff pattern:$0x73625140]
    %v4603 = vld.sshfl [vmem:[#allocation1 + $0x30] sm:$0xff pattern:$0x73625140]
    %v4604 = vld.sshfl [vmem:[#allocation1 + $0x38] sm:$0xff pattern:$0x73625140]
    %4606 = vst [vmem:[#allocation1] ss:$4 sm:$0xff] %v485
    %4608 = vst [vmem:[%s4595] ss:$4 sm:$0xff] %v486
    %v4609 = vld.sshfl [vmem:[#allocation1] sm:$0xff pattern:$0x73625140]
    %v4610 = vld.sshfl [vmem:[#allocation1 + $0x8] sm:$0xff pattern:$0x73625140]
    %v4611 = vld.sshfl [vmem:[#allocation1 + $0x10] sm:$0xff pattern:$0x73625140]
    %v4612 = vld.sshfl [vmem:[#allocation1 + $0x18] sm:$0xff pattern:$0x73625140]
    %v4613 = vld.sshfl [vmem:[#allocation1 + $0x20] sm:$0xff pattern:$0x73625140]
    %v4614 = vld.sshfl [vmem:[#allocation1 + $0x28] sm:$0xff pattern:$0x73625140]
    %v4615 = vld.sshfl [vmem:[#allocation1 + $0x30] sm:$0xff pattern:$0x73625140]
    %v4616 = vld.sshfl [vmem:[#allocation1 + $0x38] sm:$0xff pattern:$0x73625140]
    %4618 = vst [vmem:[#allocation1] ss:$4 sm:$0xff] %v487
    %4620 = vst [vmem:[%s4595] ss:$4 sm:$0xff] %v488
    %v4621 = vld.sshfl [vmem:[#allocation1] sm:$0xff pattern:$0x73625140]
    %v4622 = vld.sshfl [vmem:[#allocation1 + $0x8] sm:$0xff pattern:$0x73625140]
    %v4623 = vld.sshfl [vmem:[#allocation1 + $0x10] sm:$0xff pattern:$0x73625140]
    %v4624 = vld.sshfl [vmem:[#allocation1 + $0x18] sm:$0xff pattern:$0x73625140]
    %v4625 = vld.sshfl [vmem:[#allocation1 + $0x20] sm:$0xff pattern:$0x73625140]
    %v4626 = vld.sshfl [vmem:[#allocation1 + $0x28] sm:$0xff pattern:$0x73625140]
    %v4627 = vld.sshfl [vmem:[#allocation1 + $0x30] sm:$0xff pattern:$0x73625140]
    %v4628 = vld.sshfl [vmem:[#allocation1 + $0x38] sm:$0xff pattern:$0x73625140]
    %4630 = vst [vmem:[#allocation1] ss:$4 sm:$0xff] %v489
    %4632 = vst [vmem:[%s4595] ss:$4 sm:$0xff] %v490
    %v4633 = vld.sshfl [vmem:[#allocation1] sm:$0xff pattern:$0x73625140]
    %v4634 = vld.sshfl [vmem:[#allocation1 + $0x8] sm:$0xff pattern:$0x73625140]
    %v4635 = vld.sshfl [vmem:[#allocation1 + $0x10] sm:$0xff pattern:$0x73625140]
    %v4636 = vld.sshfl [vmem:[#allocation1 + $0x18] sm:$0xff pattern:$0x73625140]
    %v4637 = vld.sshfl [vmem:[#allocation1 + $0x20] sm:$0xff pattern:$0x73625140]
    %v4638 = vld.sshfl [vmem:[#allocation1 + $0x28] sm:$0xff pattern:$0x73625140]
    %v4639 = vld.sshfl [vmem:[#allocation1 + $0x30] sm:$0xff pattern:$0x73625140]
    %v4640 = vld.sshfl [vmem:[#allocation1 + $0x38] sm:$0xff pattern:$0x73625140]
    %v4641 = vsel %vm604, %v4591, 0
    %v4643 = vand.u32 %v4597, %v610
    %v4645 = vand.u32 %v4598, %v610
    %v4647 = vand.u32 %v4599, %v610
    %v4649 = vand.u32 %v4600, %v610
    %v4651 = vand.u32 %v4601, %v610
    %v4653 = vand.u32 %v4602, %v610
    %v4655 = vand.u32 %v4603, %v610
    %v4657 = vand.u32 %v4604, %v610
    %v4659 = vand.u32 %v4609, %v610
    %v4661 = vand.u32 %v4610, %v610
    %v4663 = vand.u32 %v4611, %v610
    %v4665 = vand.u32 %v4612, %v610
    %v4667 = vand.u32 %v4613, %v610
    %v4669 = vand.u32 %v4614, %v610
    %v4671 = vand.u32 %v4615, %v610
    %v4673 = vand.u32 %v4616, %v610
    %v4675 = vand.u32 %v4621, %v610
    %v4677 = vand.u32 %v4622, %v610
    %v4679 = vand.u32 %v4623, %v610
    %v4681 = vand.u32 %v4624, %v610
    %v4683 = vand.u32 %v4625, %v610
    %v4685 = vand.u32 %v4626, %v610
    %v4687 = vand.u32 %v4627, %v610
    %v4689 = vand.u32 %v4628, %v610
    %v4691 = vand.u32 %v4633, %v610
    %v4693 = vand.u32 %v4634, %v610
    %v4695 = vand.u32 %v4635, %v610
    %v4697 = vand.u32 %v4636, %v610
    %v4699 = vand.u32 %v4637, %v610
    %v4701 = vand.u32 %v4638, %v610
    %v4703 = vand.u32 %v4639, %v610
    %v4705 = vand.u32 %v4640, %v610
    %4707 = vmatpush.bf16.msra.mxu0 0
    %4708 = vmatpush.bf16.msra.mxu0 0
    %4709 = vmatpush.bf16.msra.mxu0 0
    %4710 = vmatpush.bf16.msra.mxu0 0
    %4711 = vmatpush.bf16.msra.mxu0 0
    %4712 = vmatpush.bf16.msra.mxu0 0
    %4713 = vmatpush.bf16.msra.mxu0 0
    %4714 = vmatpush.bf16.msra.mxu0 %v4643
    %4715 = vmatmul.f32.gmra.mxu0 %v4641
    %v4716 = vpop.f32.mrf.mxu0
    %v4717 = vadd.f32 0.0, %v4716
    %4718 = vdwg.mxu0
    %4719 = vmatpush.bf16.msra.mxu0 0
    %4720 = vmatpush.bf16.msra.mxu0 0
    %4721 = vmatpush.bf16.msra.mxu0 0
    %4722 = vmatpush.bf16.msra.mxu0 0
    %4723 = vmatpush.bf16.msra.mxu0 0
    %4724 = vmatpush.bf16.msra.mxu0 0
    %4725 = vmatpush.bf16.msra.mxu0 0
    %4726 = vmatpush.bf16.msra.mxu0 %v4645
    %4727 = vmatmul.f32.gmra.mxu0 %v4641
    %v4728 = vpop.f32.mrf.mxu0
    %v4729 = vadd.f32 0.0, %v4728
    %4730 = vdwg.mxu0
    %4731 = vmatpush.bf16.msra.mxu0 0
    %4732 = vmatpush.bf16.msra.mxu0 0
    %4733 = vmatpush.bf16.msra.mxu0 0
    %4734 = vmatpush.bf16.msra.mxu0 0
    %4735 = vmatpush.bf16.msra.mxu0 0
    %4736 = vmatpush.bf16.msra.mxu0 0
    %4737 = vmatpush.bf16.msra.mxu0 0
    %4738 = vmatpush.bf16.msra.mxu0 %v4647
    %4739 = vmatmul.f32.gmra.mxu0 %v4641
    %v4740 = vpop.f32.mrf.mxu0
    %v4741 = vadd.f32 0.0, %v4740
    %4742 = vdwg.mxu0
    %4743 = vmatpush.bf16.msra.mxu0 0
    %4744 = vmatpush.bf16.msra.mxu0 0
    %4745 = vmatpush.bf16.msra.mxu0 0
    %4746 = vmatpush.bf16.msra.mxu0 0
    %4747 = vmatpush.bf16.msra.mxu0 0
    %4748 = vmatpush.bf16.msra.mxu0 0
    %4749 = vmatpush.bf16.msra.mxu0 0
    %4750 = vmatpush.bf16.msra.mxu0 %v4649
    %4751 = vmatmul.f32.gmra.mxu0 %v4641
    %v4752 = vpop.f32.mrf.mxu0
    %v4753 = vadd.f32 0.0, %v4752
    %4754 = vdwg.mxu0
    %4755 = vmatpush.bf16.msra.mxu0 0
    %4756 = vmatpush.bf16.msra.mxu0 0
    %4757 = vmatpush.bf16.msra.mxu0 0
    %4758 = vmatpush.bf16.msra.mxu0 0
    %4759 = vmatpush.bf16.msra.mxu0 0
    %4760 = vmatpush.bf16.msra.mxu0 0
    %4761 = vmatpush.bf16.msra.mxu0 0
    %4762 = vmatpush.bf16.msra.mxu0 %v4651
    %4763 = vmatmul.f32.gmra.mxu0 %v4641
    %v4764 = vpop.f32.mrf.mxu0
    %v4765 = vadd.f32 0.0, %v4764
    %4766 = vdwg.mxu0
    %4767 = vmatpush.bf16.msra.mxu0 0
    %4768 = vmatpush.bf16.msra.mxu0 0
    %4769 = vmatpush.bf16.msra.mxu0 0
    %4770 = vmatpush.bf16.msra.mxu0 0
    %4771 = vmatpush.bf16.msra.mxu0 0
    %4772 = vmatpush.bf16.msra.mxu0 0
    %4773 = vmatpush.bf16.msra.mxu0 0
    %4774 = vmatpush.bf16.msra.mxu0 %v4653
    %4775 = vmatmul.f32.gmra.mxu0 %v4641
    %v4776 = vpop.f32.mrf.mxu0
    %v4777 = vadd.f32 0.0, %v4776
    %4778 = vdwg.mxu0
    %4779 = vmatpush.bf16.msra.mxu0 0
    %4780 = vmatpush.bf16.msra.mxu0 0
    %4781 = vmatpush.bf16.msra.mxu0 0
    %4782 = vmatpush.bf16.msra.mxu0 0
    %4783 = vmatpush.bf16.msra.mxu0 0
    %4784 = vmatpush.bf16.msra.mxu0 0
    %4785 = vmatpush.bf16.msra.mxu0 0
    %4786 = vmatpush.bf16.msra.mxu0 %v4655
    %4787 = vmatmul.f32.gmra.mxu0 %v4641
    %v4788 = vpop.f32.mrf.mxu0
    %v4789 = vadd.f32 0.0, %v4788
    %4790 = vdwg.mxu0
    %4791 = vmatpush.bf16.msra.mxu0 0
    %4792 = vmatpush.bf16.msra.mxu0 0
    %4793 = vmatpush.bf16.msra.mxu0 0
    %4794 = vmatpush.bf16.msra.mxu0 0
    %4795 = vmatpush.bf16.msra.mxu0 0
    %4796 = vmatpush.bf16.msra.mxu0 0
    %4797 = vmatpush.bf16.msra.mxu0 0
    %4798 = vmatpush.bf16.msra.mxu0 %v4657
    %4799 = vmatmul.f32.gmra.mxu0 %v4641
    %v4800 = vpop.f32.mrf.mxu0
    %v4801 = vadd.f32 0.0, %v4800
    %4802 = vdwg.mxu0
    %4803 = vmatpush.bf16.msra.mxu0 0
    %4804 = vmatpush.bf16.msra.mxu0 0
    %4805 = vmatpush.bf16.msra.mxu0 0
    %4806 = vmatpush.bf16.msra.mxu0 0
    %4807 = vmatpush.bf16.msra.mxu0 0
    %4808 = vmatpush.bf16.msra.mxu0 0
    %4809 = vmatpush.bf16.msra.mxu0 0
    %4810 = vmatpush.bf16.msra.mxu0 %v4659
    %4811 = vmatmul.f32.gmra.mxu0 %v4641
    %v4812 = vpop.f32.mrf.mxu0
    %v4813 = vadd.f32 0.0, %v4812
    %4814 = vdwg.mxu0
    %4815 = vmatpush.bf16.msra.mxu0 0
    %4816 = vmatpush.bf16.msra.mxu0 0
    %4817 = vmatpush.bf16.msra.mxu0 0
    %4818 = vmatpush.bf16.msra.mxu0 0
    %4819 = vmatpush.bf16.msra.mxu0 0
    %4820 = vmatpush.bf16.msra.mxu0 0
    %4821 = vmatpush.bf16.msra.mxu0 0
    %4822 = vmatpush.bf16.msra.mxu0 %v4661
    %4823 = vmatmul.f32.gmra.mxu0 %v4641
    %v4824 = vpop.f32.mrf.mxu0
    %v4825 = vadd.f32 0.0, %v4824
    %4826 = vdwg.mxu0
    %4827 = vmatpush.bf16.msra.mxu0 0
    %4828 = vmatpush.bf16.msra.mxu0 0
    %4829 = vmatpush.bf16.msra.mxu0 0
    %4830 = vmatpush.bf16.msra.mxu0 0
    %4831 = vmatpush.bf16.msra.mxu0 0
    %4832 = vmatpush.bf16.msra.mxu0 0
    %4833 = vmatpush.bf16.msra.mxu0 0
    %4834 = vmatpush.bf16.msra.mxu0 %v4663
    %4835 = vmatmul.f32.gmra.mxu0 %v4641
    %v4836 = vpop.f32.mrf.mxu0
    %v4837 = vadd.f32 0.0, %v4836
    %4838 = vdwg.mxu0
    %4839 = vmatpush.bf16.msra.mxu0 0
    %4840 = vmatpush.bf16.msra.mxu0 0
    %4841 = vmatpush.bf16.msra.mxu0 0
    %4842 = vmatpush.bf16.msra.mxu0 0
    %4843 = vmatpush.bf16.msra.mxu0 0
    %4844 = vmatpush.bf16.msra.mxu0 0
    %4845 = vmatpush.bf16.msra.mxu0 0
    %4846 = vmatpush.bf16.msra.mxu0 %v4665
    %4847 = vmatmul.f32.gmra.mxu0 %v4641
    %v4848 = vpop.f32.mrf.mxu0
    %v4849 = vadd.f32 0.0, %v4848
    %4850 = vdwg.mxu0
    %4851 = vmatpush.bf16.msra.mxu0 0
    %4852 = vmatpush.bf16.msra.mxu0 0
    %4853 = vmatpush.bf16.msra.mxu0 0
    %4854 = vmatpush.bf16.msra.mxu0 0
    %4855 = vmatpush.bf16.msra.mxu0 0
    %4856 = vmatpush.bf16.msra.mxu0 0
    %4857 = vmatpush.bf16.msra.mxu0 0
    %4858 = vmatpush.bf16.msra.mxu0 %v4667
    %4859 = vmatmul.f32.gmra.mxu0 %v4641
    %v4860 = vpop.f32.mrf.mxu0
    %v4861 = vadd.f32 0.0, %v4860
    %4862 = vdwg.mxu0
    %4863 = vmatpush.bf16.msra.mxu0 0
    %4864 = vmatpush.bf16.msra.mxu0 0
    %4865 = vmatpush.bf16.msra.mxu0 0
    %4866 = vmatpush.bf16.msra.mxu0 0
    %4867 = vmatpush.bf16.msra.mxu0 0
    %4868 = vmatpush.bf16.msra.mxu0 0
    %4869 = vmatpush.bf16.msra.mxu0 0
    %4870 = vmatpush.bf16.msra.mxu0 %v4669
    %4871 = vmatmul.f32.gmra.mxu0 %v4641
    %v4872 = vpop.f32.mrf.mxu0
    %v4873 = vadd.f32 0.0, %v4872
    %4874 = vdwg.mxu0
    %4875 = vmatpush.bf16.msra.mxu0 0
    %4876 = vmatpush.bf16.msra.mxu0 0
    %4877 = vmatpush.bf16.msra.mxu0 0
    %4878 = vmatpush.bf16.msra.mxu0 0
    %4879 = vmatpush.bf16.msra.mxu0 0
    %4880 = vmatpush.bf16.msra.mxu0 0
    %4881 = vmatpush.bf16.msra.mxu0 0
    %4882 = vmatpush.bf16.msra.mxu0 %v4671
    %4883 = vmatmul.f32.gmra.mxu0 %v4641
    %v4884 = vpop.f32.mrf.mxu0
    %v4885 = vadd.f32 0.0, %v4884
    %4886 = vdwg.mxu0
    %4887 = vmatpush.bf16.msra.mxu0 0
    %4888 = vmatpush.bf16.msra.mxu0 0
    %4889 = vmatpush.bf16.msra.mxu0 0
    %4890 = vmatpush.bf16.msra.mxu0 0
    %4891 = vmatpush.bf16.msra.mxu0 0
    %4892 = vmatpush.bf16.msra.mxu0 0
    %4893 = vmatpush.bf16.msra.mxu0 0
    %4894 = vmatpush.bf16.msra.mxu0 %v4673
    %4895 = vmatmul.f32.gmra.mxu0 %v4641
    %v4896 = vpop.f32.mrf.mxu0
    %v4897 = vadd.f32 0.0, %v4896
    %4898 = vdwg.mxu0
    %4899 = vmatpush.bf16.msra.mxu0 0
    %4900 = vmatpush.bf16.msra.mxu0 0
    %4901 = vmatpush.bf16.msra.mxu0 0
    %4902 = vmatpush.bf16.msra.mxu0 0
    %4903 = vmatpush.bf16.msra.mxu0 0
    %4904 = vmatpush.bf16.msra.mxu0 0
    %4905 = vmatpush.bf16.msra.mxu0 0
    %4906 = vmatpush.bf16.msra.mxu0 %v4675
    %4907 = vmatmul.f32.gmra.mxu0 %v4641
    %v4908 = vpop.f32.mrf.mxu0
    %v4909 = vadd.f32 0.0, %v4908
    %4910 = vdwg.mxu0
    %4911 = vmatpush.bf16.msra.mxu0 0
    %4912 = vmatpush.bf16.msra.mxu0 0
    %4913 = vmatpush.bf16.msra.mxu0 0
    %4914 = vmatpush.bf16.msra.mxu0 0
    %4915 = vmatpush.bf16.msra.mxu0 0
    %4916 = vmatpush.bf16.msra.mxu0 0
    %4917 = vmatpush.bf16.msra.mxu0 0
    %4918 = vmatpush.bf16.msra.mxu0 %v4677
    %4919 = vmatmul.f32.gmra.mxu0 %v4641
    %v4920 = vpop.f32.mrf.mxu0
    %v4921 = vadd.f32 0.0, %v4920
    %4922 = vdwg.mxu0
    %4923 = vmatpush.bf16.msra.mxu0 0
    %4924 = vmatpush.bf16.msra.mxu0 0
    %4925 = vmatpush.bf16.msra.mxu0 0
    %4926 = vmatpush.bf16.msra.mxu0 0
    %4927 = vmatpush.bf16.msra.mxu0 0
    %4928 = vmatpush.bf16.msra.mxu0 0
    %4929 = vmatpush.bf16.msra.mxu0 0
    %4930 = vmatpush.bf16.msra.mxu0 %v4679
    %4931 = vmatmul.f32.gmra.mxu0 %v4641
    %v4932 = vpop.f32.mrf.mxu0
    %v4933 = vadd.f32 0.0, %v4932
    %4934 = vdwg.mxu0
    %4935 = vmatpush.bf16.msra.mxu0 0
    %4936 = vmatpush.bf16.msra.mxu0 0
    %4937 = vmatpush.bf16.msra.mxu0 0
    %4938 = vmatpush.bf16.msra.mxu0 0
    %4939 = vmatpush.bf16.msra.mxu0 0
    %4940 = vmatpush.bf16.msra.mxu0 0
    %4941 = vmatpush.bf16.msra.mxu0 0
    %4942 = vmatpush.bf16.msra.mxu0 %v4681
    %4943 = vmatmul.f32.gmra.mxu0 %v4641
    %v4944 = vpop.f32.mrf.mxu0
    %v4945 = vadd.f32 0.0, %v4944
    %4946 = vdwg.mxu0
    %4947 = vmatpush.bf16.msra.mxu0 0
    %4948 = vmatpush.bf16.msra.mxu0 0
    %4949 = vmatpush.bf16.msra.mxu0 0
    %4950 = vmatpush.bf16.msra.mxu0 0
    %4951 = vmatpush.bf16.msra.mxu0 0
    %4952 = vmatpush.bf16.msra.mxu0 0
    %4953 = vmatpush.bf16.msra.mxu0 0
    %4954 = vmatpush.bf16.msra.mxu0 %v4683
    %4955 = vmatmul.f32.gmra.mxu0 %v4641
    %v4956 = vpop.f32.mrf.mxu0
    %v4957 = vadd.f32 0.0, %v4956
    %4958 = vdwg.mxu0
    %4959 = vmatpush.bf16.msra.mxu0 0
    %4960 = vmatpush.bf16.msra.mxu0 0
    %4961 = vmatpush.bf16.msra.mxu0 0
    %4962 = vmatpush.bf16.msra.mxu0 0
    %4963 = vmatpush.bf16.msra.mxu0 0
    %4964 = vmatpush.bf16.msra.mxu0 0
    %4965 = vmatpush.bf16.msra.mxu0 0
    %4966 = vmatpush.bf16.msra.mxu0 %v4685
    %4967 = vmatmul.f32.gmra.mxu0 %v4641
    %v4968 = vpop.f32.mrf.mxu0
    %v4969 = vadd.f32 0.0, %v4968
    %4970 = vdwg.mxu0
    %4971 = vmatpush.bf16.msra.mxu0 0
    %4972 = vmatpush.bf16.msra.mxu0 0
    %4973 = vmatpush.bf16.msra.mxu0 0
    %4974 = vmatpush.bf16.msra.mxu0 0
    %4975 = vmatpush.bf16.msra.mxu0 0
    %4976 = vmatpush.bf16.msra.mxu0 0
    %4977 = vmatpush.bf16.msra.mxu0 0
    %4978 = vmatpush.bf16.msra.mxu0 %v4687
    %4979 = vmatmul.f32.gmra.mxu0 %v4641
    %v4980 = vpop.f32.mrf.mxu0
    %v4981 = vadd.f32 0.0, %v4980
    %4982 = vdwg.mxu0
    %4983 = vmatpush.bf16.msra.mxu0 0
    %4984 = vmatpush.bf16.msra.mxu0 0
    %4985 = vmatpush.bf16.msra.mxu0 0
    %4986 = vmatpush.bf16.msra.mxu0 0
    %4987 = vmatpush.bf16.msra.mxu0 0
    %4988 = vmatpush.bf16.msra.mxu0 0
    %4989 = vmatpush.bf16.msra.mxu0 0
    %4990 = vmatpush.bf16.msra.mxu0 %v4689
    %4991 = vmatmul.f32.gmra.mxu0 %v4641
    %v4992 = vpop.f32.mrf.mxu0
    %v4993 = vadd.f32 0.0, %v4992
    %4994 = vdwg.mxu0
    %4995 = vmatpush.bf16.msra.mxu0 0
    %4996 = vmatpush.bf16.msra.mxu0 0
    %4997 = vmatpush.bf16.msra.mxu0 0
    %4998 = vmatpush.bf16.msra.mxu0 0
    %4999 = vmatpush.bf16.msra.mxu0 0
    %5000 = vmatpush.bf16.msra.mxu0 0
    %5001 = vmatpush.bf16.msra.mxu0 0
    %5002 = vmatpush.bf16.msra.mxu0 %v4691
    %5003 = vmatmul.f32.gmra.mxu0 %v4641
    %v5004 = vpop.f32.mrf.mxu0
    %v5005 = vadd.f32 0.0, %v5004
    %5006 = vdwg.mxu0
    %5007 = vmatpush.bf16.msra.mxu0 0
    %5008 = vmatpush.bf16.msra.mxu0 0
    %5009 = vmatpush.bf16.msra.mxu0 0
    %5010 = vmatpush.bf16.msra.mxu0 0
    %5011 = vmatpush.bf16.msra.mxu0 0
    %5012 = vmatpush.bf16.msra.mxu0 0
    %5013 = vmatpush.bf16.msra.mxu0 0
    %5014 = vmatpush.bf16.msra.mxu0 %v4693
    %5015 = vmatmul.f32.gmra.mxu0 %v4641
    %v5016 = vpop.f32.mrf.mxu0
    %v5017 = vadd.f32 0.0, %v5016
    %5018 = vdwg.mxu0
    %5019 = vmatpush.bf16.msra.mxu0 0
    %5020 = vmatpush.bf16.msra.mxu0 0
    %5021 = vmatpush.bf16.msra.mxu0 0
    %5022 = vmatpush.bf16.msra.mxu0 0
    %5023 = vmatpush.bf16.msra.mxu0 0
    %5024 = vmatpush.bf16.msra.mxu0 0
    %5025 = vmatpush.bf16.msra.mxu0 0
    %5026 = vmatpush.bf16.msra.mxu0 %v4695
    %5027 = vmatmul.f32.gmra.mxu0 %v4641
    %v5028 = vpop.f32.mrf.mxu0
    %v5029 = vadd.f32 0.0, %v5028
    %5030 = vdwg.mxu0
    %5031 = vmatpush.bf16.msra.mxu0 0
    %5032 = vmatpush.bf16.msra.mxu0 0
    %5033 = vmatpush.bf16.msra.mxu0 0
    %5034 = vmatpush.bf16.msra.mxu0 0
    %5035 = vmatpush.bf16.msra.mxu0 0
    %5036 = vmatpush.bf16.msra.mxu0 0
    %5037 = vmatpush.bf16.msra.mxu0 0
    %5038 = vmatpush.bf16.msra.mxu0 %v4697
    %5039 = vmatmul.f32.gmra.mxu0 %v4641
    %v5040 = vpop.f32.mrf.mxu0
    %v5041 = vadd.f32 0.0, %v5040
    %5042 = vdwg.mxu0
    %5043 = vmatpush.bf16.msra.mxu0 0
    %5044 = vmatpush.bf16.msra.mxu0 0
    %5045 = vmatpush.bf16.msra.mxu0 0
    %5046 = vmatpush.bf16.msra.mxu0 0
    %5047 = vmatpush.bf16.msra.mxu0 0
    %5048 = vmatpush.bf16.msra.mxu0 0
    %5049 = vmatpush.bf16.msra.mxu0 0
    %5050 = vmatpush.bf16.msra.mxu0 %v4699
    %5051 = vmatmul.f32.gmra.mxu0 %v4641
    %v5052 = vpop.f32.mrf.mxu0
    %v5053 = vadd.f32 0.0, %v5052
    %5054 = vdwg.mxu0
    %5055 = vmatpush.bf16.msra.mxu0 0
    %5056 = vmatpush.bf16.msra.mxu0 0
    %5057 = vmatpush.bf16.msra.mxu0 0
    %5058 = vmatpush.bf16.msra.mxu0 0
    %5059 = vmatpush.bf16.msra.mxu0 0
    %5060 = vmatpush.bf16.msra.mxu0 0
    %5061 = vmatpush.bf16.msra.mxu0 0
    %5062 = vmatpush.bf16.msra.mxu0 %v4701
    %5063 = vmatmul.f32.gmra.mxu0 %v4641
    %v5064 = vpop.f32.mrf.mxu0
    %v5065 = vadd.f32 0.0, %v5064
    %5066 = vdwg.mxu0
    %5067 = vmatpush.bf16.msra.mxu0 0
    %5068 = vmatpush.bf16.msra.mxu0 0
    %5069 = vmatpush.bf16.msra.mxu0 0
    %5070 = vmatpush.bf16.msra.mxu0 0
    %5071 = vmatpush.bf16.msra.mxu0 0
    %5072 = vmatpush.bf16.msra.mxu0 0
    %5073 = vmatpush.bf16.msra.mxu0 0
    %5074 = vmatpush.bf16.msra.mxu0 %v4703
    %5075 = vmatmul.f32.gmra.mxu0 %v4641
    %v5076 = vpop.f32.mrf.mxu0
    %v5077 = vadd.f32 0.0, %v5076
    %5078 = vdwg.mxu0
    %5079 = vmatpush.bf16.msra.mxu0 0
    %5080 = vmatpush.bf16.msra.mxu0 0
    %5081 = vmatpush.bf16.msra.mxu0 0
    %5082 = vmatpush.bf16.msra.mxu0 0
    %5083 = vmatpush.bf16.msra.mxu0 0
    %5084 = vmatpush.bf16.msra.mxu0 0
    %5085 = vmatpush.bf16.msra.mxu0 0
    %5086 = vmatpush.bf16.msra.mxu0 %v4705
    %5087 = vmatmul.f32.gmra.mxu0 %v4641
    %v5088 = vpop.f32.mrf.mxu0
    %v5089 = vadd.f32 0.0, %v5088
    %5090 = vdwg.mxu0
    %v5093 = vperm.slane %v353, %v550
    %v5094 = vperm.slane %v358, %v550
    %v5095 = vsel %vm553, %v5094, %v5093
    %5097 = vst [vmem:[#allocation1] ss:$4 sm:$0xff] %v491
    %s5099 = scalar_lea.vmem [#allocation1], 32
    %5100 = vst [vmem:[%s5099] ss:$4 sm:$0xff] %v492
    %v5101 = vld.sshfl [vmem:[#allocation1] sm:$0xff pattern:$0x73625140]
    %v5102 = vld.sshfl [vmem:[#allocation1 + $0x8] sm:$0xff pattern:$0x73625140]
    %v5103 = vld.sshfl [vmem:[#allocation1 + $0x10] sm:$0xff pattern:$0x73625140]
    %v5104 = vld.sshfl [vmem:[#allocation1 + $0x18] sm:$0xff pattern:$0x73625140]
    %v5105 = vld.sshfl [vmem:[#allocation1 + $0x20] sm:$0xff pattern:$0x73625140]
    %v5106 = vld.sshfl [vmem:[#allocation1 + $0x28] sm:$0xff pattern:$0x73625140]
    %v5107 = vld.sshfl [vmem:[#allocation1 + $0x30] sm:$0xff pattern:$0x73625140]
    %v5108 = vld.sshfl [vmem:[#allocation1 + $0x38] sm:$0xff pattern:$0x73625140]
    %5110 = vst [vmem:[#allocation1] ss:$4 sm:$0xff] %v493
    %5112 = vst [vmem:[%s5099] ss:$4 sm:$0xff] %v494
    %v5113 = vld.sshfl [vmem:[#allocation1] sm:$0xff pattern:$0x73625140]
    %v5114 = vld.sshfl [vmem:[#allocation1 + $0x8] sm:$0xff pattern:$0x73625140]
    %v5115 = vld.sshfl [vmem:[#allocation1 + $0x10] sm:$0xff pattern:$0x73625140]
    %v5116 = vld.sshfl [vmem:[#allocation1 + $0x18] sm:$0xff pattern:$0x73625140]
    %v5117 = vld.sshfl [vmem:[#allocation1 + $0x20] sm:$0xff pattern:$0x73625140]
    %v5118 = vld.sshfl [vmem:[#allocation1 + $0x28] sm:$0xff pattern:$0x73625140]
    %v5119 = vld.sshfl [vmem:[#allocation1 + $0x30] sm:$0xff pattern:$0x73625140]
    %v5120 = vld.sshfl [vmem:[#allocation1 + $0x38] sm:$0xff pattern:$0x73625140]
    %5122 = vst [vmem:[#allocation1] ss:$4 sm:$0xff] %v495
    %5124 = vst [vmem:[%s5099] ss:$4 sm:$0xff] %v496
    %v5125 = vld.sshfl [vmem:[#allocation1] sm:$0xff pattern:$0x73625140]
    %v5126 = vld.sshfl [vmem:[#allocation1 + $0x8] sm:$0xff pattern:$0x73625140]
    %v5127 = vld.sshfl [vmem:[#allocation1 + $0x10] sm:$0xff pattern:$0x73625140]
    %v5128 = vld.sshfl [vmem:[#allocation1 + $0x18] sm:$0xff pattern:$0x73625140]
    %v5129 = vld.sshfl [vmem:[#allocation1 + $0x20] sm:$0xff pattern:$0x73625140]
    %v5130 = vld.sshfl [vmem:[#allocation1 + $0x28] sm:$0xff pattern:$0x73625140]
    %v5131 = vld.sshfl [vmem:[#allocation1 + $0x30] sm:$0xff pattern:$0x73625140]
    %v5132 = vld.sshfl [vmem:[#allocation1 + $0x38] sm:$0xff pattern:$0x73625140]
    %5134 = vst [vmem:[#allocation1] ss:$4 sm:$0xff] %v497
    %5136 = vst [vmem:[%s5099] ss:$4 sm:$0xff] %v498
    %v5137 = vld.sshfl [vmem:[#allocation1] sm:$0xff pattern:$0x73625140]
    %v5138 = vld.sshfl [vmem:[#allocation1 + $0x8] sm:$0xff pattern:$0x73625140]
    %v5139 = vld.sshfl [vmem:[#allocation1 + $0x10] sm:$0xff pattern:$0x73625140]
    %v5140 = vld.sshfl [vmem:[#allocation1 + $0x18] sm:$0xff pattern:$0x73625140]
    %v5141 = vld.sshfl [vmem:[#allocation1 + $0x20] sm:$0xff pattern:$0x73625140]
    %v5142 = vld.sshfl [vmem:[#allocation1 + $0x28] sm:$0xff pattern:$0x73625140]
    %v5143 = vld.sshfl [vmem:[#allocation1 + $0x30] sm:$0xff pattern:$0x73625140]
    %v5144 = vld.sshfl [vmem:[#allocation1 + $0x38] sm:$0xff pattern:$0x73625140]
    %v5145 = vsel %vm604, %v5095, 0
    %v5147 = vand.u32 %v5101, %v610
    %v5149 = vand.u32 %v5102, %v610
    %v5151 = vand.u32 %v5103, %v610
    %v5153 = vand.u32 %v5104, %v610
    %v5155 = vand.u32 %v5105, %v610
    %v5157 = vand.u32 %v5106, %v610
    %v5159 = vand.u32 %v5107, %v610
    %v5161 = vand.u32 %v5108, %v610
    %v5163 = vand.u32 %v5113, %v610
    %v5165 = vand.u32 %v5114, %v610
    %v5167 = vand.u32 %v5115, %v610
    %v5169 = vand.u32 %v5116, %v610
    %v5171 = vand.u32 %v5117, %v610
    %v5173 = vand.u32 %v5118, %v610
    %v5175 = vand.u32 %v5119, %v610
    %v5177 = vand.u32 %v5120, %v610
    %v5179 = vand.u32 %v5125, %v610
    %v5181 = vand.u32 %v5126, %v610
    %v5183 = vand.u32 %v5127, %v610
    %v5185 = vand.u32 %v5128, %v610
    %v5187 = vand.u32 %v5129, %v610
    %v5189 = vand.u32 %v5130, %v610
    %v5191 = vand.u32 %v5131, %v610
    %v5193 = vand.u32 %v5132, %v610
    %v5195 = vand.u32 %v5137, %v610
    %v5197 = vand.u32 %v5138, %v610
    %v5199 = vand.u32 %v5139, %v610
    %v5201 = vand.u32 %v5140, %v610
    %v5203 = vand.u32 %v5141, %v610
    %v5205 = vand.u32 %v5142, %v610
    %v5207 = vand.u32 %v5143, %v610
    %v5209 = vand.u32 %v5144, %v610
    %5211 = vmatpush.bf16.msra.mxu0 0
    %5212 = vmatpush.bf16.msra.mxu0 0
    %5213 = vmatpush.bf16.msra.mxu0 0
    %5214 = vmatpush.bf16.msra.mxu0 0
    %5215 = vmatpush.bf16.msra.mxu0 0
    %5216 = vmatpush.bf16.msra.mxu0 0
    %5217 = vmatpush.bf16.msra.mxu0 0
    %5218 = vmatpush.bf16.msra.mxu0 %v5147
    %5219 = vmatmul.f32.gmra.mxu0 %v5145
    %v5220 = vpop.f32.mrf.mxu0
    %v5221 = vadd.f32 0.0, %v5220
    %5222 = vdwg.mxu0
    %5223 = vmatpush.bf16.msra.mxu0 0
    %5224 = vmatpush.bf16.msra.mxu0 0
    %5225 = vmatpush.bf16.msra.mxu0 0
    %5226 = vmatpush.bf16.msra.mxu0 0
    %5227 = vmatpush.bf16.msra.mxu0 0
    %5228 = vmatpush.bf16.msra.mxu0 0
    %5229 = vmatpush.bf16.msra.mxu0 0
    %5230 = vmatpush.bf16.msra.mxu0 %v5149
    %5231 = vmatmul.f32.gmra.mxu0 %v5145
    %v5232 = vpop.f32.mrf.mxu0
    %v5233 = vadd.f32 0.0, %v5232
    %5234 = vdwg.mxu0
    %5235 = vmatpush.bf16.msra.mxu0 0
    %5236 = vmatpush.bf16.msra.mxu0 0
    %5237 = vmatpush.bf16.msra.mxu0 0
    %5238 = vmatpush.bf16.msra.mxu0 0
    %5239 = vmatpush.bf16.msra.mxu0 0
    %5240 = vmatpush.bf16.msra.mxu0 0
    %5241 = vmatpush.bf16.msra.mxu0 0
    %5242 = vmatpush.bf16.msra.mxu0 %v5151
    %5243 = vmatmul.f32.gmra.mxu0 %v5145
    %v5244 = vpop.f32.mrf.mxu0
    %v5245 = vadd.f32 0.0, %v5244
    %5246 = vdwg.mxu0
    %5247 = vmatpush.bf16.msra.mxu0 0
    %5248 = vmatpush.bf16.msra.mxu0 0
    %5249 = vmatpush.bf16.msra.mxu0 0
    %5250 = vmatpush.bf16.msra.mxu0 0
    %5251 = vmatpush.bf16.msra.mxu0 0
    %5252 = vmatpush.bf16.msra.mxu0 0
    %5253 = vmatpush.bf16.msra.mxu0 0
    %5254 = vmatpush.bf16.msra.mxu0 %v5153
    %5255 = vmatmul.f32.gmra.mxu0 %v5145
    %v5256 = vpop.f32.mrf.mxu0
    %v5257 = vadd.f32 0.0, %v5256
    %5258 = vdwg.mxu0
    %5259 = vmatpush.bf16.msra.mxu0 0
    %5260 = vmatpush.bf16.msra.mxu0 0
    %5261 = vmatpush.bf16.msra.mxu0 0
    %5262 = vmatpush.bf16.msra.mxu0 0
    %5263 = vmatpush.bf16.msra.mxu0 0
    %5264 = vmatpush.bf16.msra.mxu0 0
    %5265 = vmatpush.bf16.msra.mxu0 0
    %5266 = vmatpush.bf16.msra.mxu0 %v5155
    %5267 = vmatmul.f32.gmra.mxu0 %v5145
    %v5268 = vpop.f32.mrf.mxu0
    %v5269 = vadd.f32 0.0, %v5268
    %5270 = vdwg.mxu0
    %5271 = vmatpush.bf16.msra.mxu0 0
    %5272 = vmatpush.bf16.msra.mxu0 0
    %5273 = vmatpush.bf16.msra.mxu0 0
    %5274 = vmatpush.bf16.msra.mxu0 0
    %5275 = vmatpush.bf16.msra.mxu0 0
    %5276 = vmatpush.bf16.msra.mxu0 0
    %5277 = vmatpush.bf16.msra.mxu0 0
    %5278 = vmatpush.bf16.msra.mxu0 %v5157
    %5279 = vmatmul.f32.gmra.mxu0 %v5145
    %v5280 = vpop.f32.mrf.mxu0
    %v5281 = vadd.f32 0.0, %v5280
    %5282 = vdwg.mxu0
    %5283 = vmatpush.bf16.msra.mxu0 0
    %5284 = vmatpush.bf16.msra.mxu0 0
    %5285 = vmatpush.bf16.msra.mxu0 0
    %5286 = vmatpush.bf16.msra.mxu0 0
    %5287 = vmatpush.bf16.msra.mxu0 0
    %5288 = vmatpush.bf16.msra.mxu0 0
    %5289 = vmatpush.bf16.msra.mxu0 0
    %5290 = vmatpush.bf16.msra.mxu0 %v5159
    %5291 = vmatmul.f32.gmra.mxu0 %v5145
    %v5292 = vpop.f32.mrf.mxu0
    %v5293 = vadd.f32 0.0, %v5292
    %5294 = vdwg.mxu0
    %5295 = vmatpush.bf16.msra.mxu0 0
    %5296 = vmatpush.bf16.msra.mxu0 0
    %5297 = vmatpush.bf16.msra.mxu0 0
    %5298 = vmatpush.bf16.msra.mxu0 0
    %5299 = vmatpush.bf16.msra.mxu0 0
    %5300 = vmatpush.bf16.msra.mxu0 0
    %5301 = vmatpush.bf16.msra.mxu0 0
    %5302 = vmatpush.bf16.msra.mxu0 %v5161
    %5303 = vmatmul.f32.gmra.mxu0 %v5145
    %v5304 = vpop.f32.mrf.mxu0
    %v5305 = vadd.f32 0.0, %v5304
    %5306 = vdwg.mxu0
    %5307 = vmatpush.bf16.msra.mxu0 0
    %5308 = vmatpush.bf16.msra.mxu0 0
    %5309 = vmatpush.bf16.msra.mxu0 0
    %5310 = vmatpush.bf16.msra.mxu0 0
    %5311 = vmatpush.bf16.msra.mxu0 0
    %5312 = vmatpush.bf16.msra.mxu0 0
    %5313 = vmatpush.bf16.msra.mxu0 0
    %5314 = vmatpush.bf16.msra.mxu0 %v5163
    %5315 = vmatmul.f32.gmra.mxu0 %v5145
    %v5316 = vpop.f32.mrf.mxu0
    %v5317 = vadd.f32 0.0, %v5316
    %5318 = vdwg.mxu0
    %5319 = vmatpush.bf16.msra.mxu0 0
    %5320 = vmatpush.bf16.msra.mxu0 0
    %5321 = vmatpush.bf16.msra.mxu0 0
    %5322 = vmatpush.bf16.msra.mxu0 0
    %5323 = vmatpush.bf16.msra.mxu0 0
    %5324 = vmatpush.bf16.msra.mxu0 0
    %5325 = vmatpush.bf16.msra.mxu0 0
    %5326 = vmatpush.bf16.msra.mxu0 %v5165
    %5327 = vmatmul.f32.gmra.mxu0 %v5145
    %v5328 = vpop.f32.mrf.mxu0
    %v5329 = vadd.f32 0.0, %v5328
    %5330 = vdwg.mxu0
    %5331 = vmatpush.bf16.msra.mxu0 0
    %5332 = vmatpush.bf16.msra.mxu0 0
    %5333 = vmatpush.bf16.msra.mxu0 0
    %5334 = vmatpush.bf16.msra.mxu0 0
    %5335 = vmatpush.bf16.msra.mxu0 0
    %5336 = vmatpush.bf16.msra.mxu0 0
    %5337 = vmatpush.bf16.msra.mxu0 0
    %5338 = vmatpush.bf16.msra.mxu0 %v5167
    %5339 = vmatmul.f32.gmra.mxu0 %v5145
    %v5340 = vpop.f32.mrf.mxu0
    %v5341 = vadd.f32 0.0, %v5340
    %5342 = vdwg.mxu0
    %5343 = vmatpush.bf16.msra.mxu0 0
    %5344 = vmatpush.bf16.msra.mxu0 0
    %5345 = vmatpush.bf16.msra.mxu0 0
    %5346 = vmatpush.bf16.msra.mxu0 0
    %5347 = vmatpush.bf16.msra.mxu0 0
    %5348 = vmatpush.bf16.msra.mxu0 0
    %5349 = vmatpush.bf16.msra.mxu0 0
    %5350 = vmatpush.bf16.msra.mxu0 %v5169
    %5351 = vmatmul.f32.gmra.mxu0 %v5145
    %v5352 = vpop.f32.mrf.mxu0
    %v5353 = vadd.f32 0.0, %v5352
    %5354 = vdwg.mxu0
    %5355 = vmatpush.bf16.msra.mxu0 0
    %5356 = vmatpush.bf16.msra.mxu0 0
    %5357 = vmatpush.bf16.msra.mxu0 0
    %5358 = vmatpush.bf16.msra.mxu0 0
    %5359 = vmatpush.bf16.msra.mxu0 0
    %5360 = vmatpush.bf16.msra.mxu0 0
    %5361 = vmatpush.bf16.msra.mxu0 0
    %5362 = vmatpush.bf16.msra.mxu0 %v5171
    %5363 = vmatmul.f32.gmra.mxu0 %v5145
    %v5364 = vpop.f32.mrf.mxu0
    %v5365 = vadd.f32 0.0, %v5364
    %5366 = vdwg.mxu0
    %5367 = vmatpush.bf16.msra.mxu0 0
    %5368 = vmatpush.bf16.msra.mxu0 0
    %5369 = vmatpush.bf16.msra.mxu0 0
    %5370 = vmatpush.bf16.msra.mxu0 0
    %5371 = vmatpush.bf16.msra.mxu0 0
    %5372 = vmatpush.bf16.msra.mxu0 0
    %5373 = vmatpush.bf16.msra.mxu0 0
    %5374 = vmatpush.bf16.msra.mxu0 %v5173
    %5375 = vmatmul.f32.gmra.mxu0 %v5145
    %v5376 = vpop.f32.mrf.mxu0
    %v5377 = vadd.f32 0.0, %v5376
    %5378 = vdwg.mxu0
    %5379 = vmatpush.bf16.msra.mxu0 0
    %5380 = vmatpush.bf16.msra.mxu0 0
    %5381 = vmatpush.bf16.msra.mxu0 0
    %5382 = vmatpush.bf16.msra.mxu0 0
    %5383 = vmatpush.bf16.msra.mxu0 0
    %5384 = vmatpush.bf16.msra.mxu0 0
    %5385 = vmatpush.bf16.msra.mxu0 0
    %5386 = vmatpush.bf16.msra.mxu0 %v5175
    %5387 = vmatmul.f32.gmra.mxu0 %v5145
    %v5388 = vpop.f32.mrf.mxu0
    %v5389 = vadd.f32 0.0, %v5388
    %5390 = vdwg.mxu0
    %5391 = vmatpush.bf16.msra.mxu0 0
    %5392 = vmatpush.bf16.msra.mxu0 0
    %5393 = vmatpush.bf16.msra.mxu0 0
    %5394 = vmatpush.bf16.msra.mxu0 0
    %5395 = vmatpush.bf16.msra.mxu0 0
    %5396 = vmatpush.bf16.msra.mxu0 0
    %5397 = vmatpush.bf16.msra.mxu0 0
    %5398 = vmatpush.bf16.msra.mxu0 %v5177
    %5399 = vmatmul.f32.gmra.mxu0 %v5145
    %v5400 = vpop.f32.mrf.mxu0
    %v5401 = vadd.f32 0.0, %v5400
    %5402 = vdwg.mxu0
    %5403 = vmatpush.bf16.msra.mxu0 0
    %5404 = vmatpush.bf16.msra.mxu0 0
    %5405 = vmatpush.bf16.msra.mxu0 0
    %5406 = vmatpush.bf16.msra.mxu0 0
    %5407 = vmatpush.bf16.msra.mxu0 0
    %5408 = vmatpush.bf16.msra.mxu0 0
    %5409 = vmatpush.bf16.msra.mxu0 0
    %5410 = vmatpush.bf16.msra.mxu0 %v5179
    %5411 = vmatmul.f32.gmra.mxu0 %v5145
    %v5412 = vpop.f32.mrf.mxu0
    %v5413 = vadd.f32 0.0, %v5412
    %5414 = vdwg.mxu0
    %5415 = vmatpush.bf16.msra.mxu0 0
    %5416 = vmatpush.bf16.msra.mxu0 0
    %5417 = vmatpush.bf16.msra.mxu0 0
    %5418 = vmatpush.bf16.msra.mxu0 0
    %5419 = vmatpush.bf16.msra.mxu0 0
    %5420 = vmatpush.bf16.msra.mxu0 0
    %5421 = vmatpush.bf16.msra.mxu0 0
    %5422 = vmatpush.bf16.msra.mxu0 %v5181
    %5423 = vmatmul.f32.gmra.mxu0 %v5145
    %v5424 = vpop.f32.mrf.mxu0
    %v5425 = vadd.f32 0.0, %v5424
    %5426 = vdwg.mxu0
    %5427 = vmatpush.bf16.msra.mxu0 0
    %5428 = vmatpush.bf16.msra.mxu0 0
    %5429 = vmatpush.bf16.msra.mxu0 0
    %5430 = vmatpush.bf16.msra.mxu0 0
    %5431 = vmatpush.bf16.msra.mxu0 0
    %5432 = vmatpush.bf16.msra.mxu0 0
    %5433 = vmatpush.bf16.msra.mxu0 0
    %5434 = vmatpush.bf16.msra.mxu0 %v5183
    %5435 = vmatmul.f32.gmra.mxu0 %v5145
    %v5436 = vpop.f32.mrf.mxu0
    %v5437 = vadd.f32 0.0, %v5436
    %5438 = vdwg.mxu0
    %5439 = vmatpush.bf16.msra.mxu0 0
    %5440 = vmatpush.bf16.msra.mxu0 0
    %5441 = vmatpush.bf16.msra.mxu0 0
    %5442 = vmatpush.bf16.msra.mxu0 0
    %5443 = vmatpush.bf16.msra.mxu0 0
    %5444 = vmatpush.bf16.msra.mxu0 0
    %5445 = vmatpush.bf16.msra.mxu0 0
    %5446 = vmatpush.bf16.msra.mxu0 %v5185
    %5447 = vmatmul.f32.gmra.mxu0 %v5145
    %v5448 = vpop.f32.mrf.mxu0
    %v5449 = vadd.f32 0.0, %v5448
    %5450 = vdwg.mxu0
    %5451 = vmatpush.bf16.msra.mxu0 0
    %5452 = vmatpush.bf16.msra.mxu0 0
    %5453 = vmatpush.bf16.msra.mxu0 0
    %5454 = vmatpush.bf16.msra.mxu0 0
    %5455 = vmatpush.bf16.msra.mxu0 0
    %5456 = vmatpush.bf16.msra.mxu0 0
    %5457 = vmatpush.bf16.msra.mxu0 0
    %5458 = vmatpush.bf16.msra.mxu0 %v5187
    %5459 = vmatmul.f32.gmra.mxu0 %v5145
    %v5460 = vpop.f32.mrf.mxu0
    %v5461 = vadd.f32 0.0, %v5460
    %5462 = vdwg.mxu0
    %5463 = vmatpush.bf16.msra.mxu0 0
    %5464 = vmatpush.bf16.msra.mxu0 0
    %5465 = vmatpush.bf16.msra.mxu0 0
    %5466 = vmatpush.bf16.msra.mxu0 0
    %5467 = vmatpush.bf16.msra.mxu0 0
    %5468 = vmatpush.bf16.msra.mxu0 0
    %5469 = vmatpush.bf16.msra.mxu0 0
    %5470 = vmatpush.bf16.msra.mxu0 %v5189
    %5471 = vmatmul.f32.gmra.mxu0 %v5145
    %v5472 = vpop.f32.mrf.mxu0
    %v5473 = vadd.f32 0.0, %v5472
    %5474 = vdwg.mxu0
    %5475 = vmatpush.bf16.msra.mxu0 0
    %5476 = vmatpush.bf16.msra.mxu0 0
    %5477 = vmatpush.bf16.msra.mxu0 0
    %5478 = vmatpush.bf16.msra.mxu0 0
    %5479 = vmatpush.bf16.msra.mxu0 0
    %5480 = vmatpush.bf16.msra.mxu0 0
    %5481 = vmatpush.bf16.msra.mxu0 0
    %5482 = vmatpush.bf16.msra.mxu0 %v5191
    %5483 = vmatmul.f32.gmra.mxu0 %v5145
    %v5484 = vpop.f32.mrf.mxu0
    %v5485 = vadd.f32 0.0, %v5484
    %5486 = vdwg.mxu0
    %5487 = vmatpush.bf16.msra.mxu0 0
    %5488 = vmatpush.bf16.msra.mxu0 0
    %5489 = vmatpush.bf16.msra.mxu0 0
    %5490 = vmatpush.bf16.msra.mxu0 0
    %5491 = vmatpush.bf16.msra.mxu0 0
    %5492 = vmatpush.bf16.msra.mxu0 0
    %5493 = vmatpush.bf16.msra.mxu0 0
    %5494 = vmatpush.bf16.msra.mxu0 %v5193
    %5495 = vmatmul.f32.gmra.mxu0 %v5145
    %v5496 = vpop.f32.mrf.mxu0
    %v5497 = vadd.f32 0.0, %v5496
    %5498 = vdwg.mxu0
    %5499 = vmatpush.bf16.msra.mxu0 0
    %5500 = vmatpush.bf16.msra.mxu0 0
    %5501 = vmatpush.bf16.msra.mxu0 0
    %5502 = vmatpush.bf16.msra.mxu0 0
    %5503 = vmatpush.bf16.msra.mxu0 0
    %5504 = vmatpush.bf16.msra.mxu0 0
    %5505 = vmatpush.bf16.msra.mxu0 0
    %5506 = vmatpush.bf16.msra.mxu0 %v5195
    %5507 = vmatmul.f32.gmra.mxu0 %v5145
    %v5508 = vpop.f32.mrf.mxu0
    %v5509 = vadd.f32 0.0, %v5508
    %5510 = vdwg.mxu0
    %5511 = vmatpush.bf16.msra.mxu0 0
    %5512 = vmatpush.bf16.msra.mxu0 0
    %5513 = vmatpush.bf16.msra.mxu0 0
    %5514 = vmatpush.bf16.msra.mxu0 0
    %5515 = vmatpush.bf16.msra.mxu0 0
    %5516 = vmatpush.bf16.msra.mxu0 0
    %5517 = vmatpush.bf16.msra.mxu0 0
    %5518 = vmatpush.bf16.msra.mxu0 %v5197
    %5519 = vmatmul.f32.gmra.mxu0 %v5145
    %v5520 = vpop.f32.mrf.mxu0
    %v5521 = vadd.f32 0.0, %v5520
    %5522 = vdwg.mxu0
    %5523 = vmatpush.bf16.msra.mxu0 0
    %5524 = vmatpush.bf16.msra.mxu0 0
    %5525 = vmatpush.bf16.msra.mxu0 0
    %5526 = vmatpush.bf16.msra.mxu0 0
    %5527 = vmatpush.bf16.msra.mxu0 0
    %5528 = vmatpush.bf16.msra.mxu0 0
    %5529 = vmatpush.bf16.msra.mxu0 0
    %5530 = vmatpush.bf16.msra.mxu0 %v5199
    %5531 = vmatmul.f32.gmra.mxu0 %v5145
    %v5532 = vpop.f32.mrf.mxu0
    %v5533 = vadd.f32 0.0, %v5532
    %5534 = vdwg.mxu0
    %5535 = vmatpush.bf16.msra.mxu0 0
    %5536 = vmatpush.bf16.msra.mxu0 0
    %5537 = vmatpush.bf16.msra.mxu0 0
    %5538 = vmatpush.bf16.msra.mxu0 0
    %5539 = vmatpush.bf16.msra.mxu0 0
    %5540 = vmatpush.bf16.msra.mxu0 0
    %5541 = vmatpush.bf16.msra.mxu0 0
    %5542 = vmatpush.bf16.msra.mxu0 %v5201
    %5543 = vmatmul.f32.gmra.mxu0 %v5145
    %v5544 = vpop.f32.mrf.mxu0
    %v5545 = vadd.f32 0.0, %v5544
    %5546 = vdwg.mxu0
    %5547 = vmatpush.bf16.msra.mxu0 0
    %5548 = vmatpush.bf16.msra.mxu0 0
    %5549 = vmatpush.bf16.msra.mxu0 0
    %5550 = vmatpush.bf16.msra.mxu0 0
    %5551 = vmatpush.bf16.msra.mxu0 0
    %5552 = vmatpush.bf16.msra.mxu0 0
    %5553 = vmatpush.bf16.msra.mxu0 0
    %5554 = vmatpush.bf16.msra.mxu0 %v5203
    %5555 = vmatmul.f32.gmra.mxu0 %v5145
    %v5556 = vpop.f32.mrf.mxu0
    %v5557 = vadd.f32 0.0, %v5556
    %5558 = vdwg.mxu0
    %5559 = vmatpush.bf16.msra.mxu0 0
    %5560 = vmatpush.bf16.msra.mxu0 0
    %5561 = vmatpush.bf16.msra.mxu0 0
    %5562 = vmatpush.bf16.msra.mxu0 0
    %5563 = vmatpush.bf16.msra.mxu0 0
    %5564 = vmatpush.bf16.msra.mxu0 0
    %5565 = vmatpush.bf16.msra.mxu0 0
    %5566 = vmatpush.bf16.msra.mxu0 %v5205
    %5567 = vmatmul.f32.gmra.mxu0 %v5145
    %v5568 = vpop.f32.mrf.mxu0
    %v5569 = vadd.f32 0.0, %v5568
    %5570 = vdwg.mxu0
    %5571 = vmatpush.bf16.msra.mxu0 0
    %5572 = vmatpush.bf16.msra.mxu0 0
    %5573 = vmatpush.bf16.msra.mxu0 0
    %5574 = vmatpush.bf16.msra.mxu0 0
    %5575 = vmatpush.bf16.msra.mxu0 0
    %5576 = vmatpush.bf16.msra.mxu0 0
    %5577 = vmatpush.bf16.msra.mxu0 0
    %5578 = vmatpush.bf16.msra.mxu0 %v5207
    %5579 = vmatmul.f32.gmra.mxu0 %v5145
    %v5580 = vpop.f32.mrf.mxu0
    %v5581 = vadd.f32 0.0, %v5580
    %5582 = vdwg.mxu0
    %5583 = vmatpush.bf16.msra.mxu0 0
    %5584 = vmatpush.bf16.msra.mxu0 0
    %5585 = vmatpush.bf16.msra.mxu0 0
    %5586 = vmatpush.bf16.msra.mxu0 0
    %5587 = vmatpush.bf16.msra.mxu0 0
    %5588 = vmatpush.bf16.msra.mxu0 0
    %5589 = vmatpush.bf16.msra.mxu0 0
    %5590 = vmatpush.bf16.msra.mxu0 %v5209
    %5591 = vmatmul.f32.gmra.mxu0 %v5145
    %v5592 = vpop.f32.mrf.mxu0
    %v5593 = vadd.f32 0.0, %v5592
    %5594 = vdwg.mxu0
    %v5597 = vperm.slane %v363, %v550
    %v5598 = vperm.slane %v368, %v550
    %v5599 = vsel %vm553, %v5598, %v5597
    %5601 = vst [vmem:[#allocation1] ss:$4 sm:$0xff] %v499
    %s5603 = scalar_lea.vmem [#allocation1], 32
    %5604 = vst [vmem:[%s5603] ss:$4 sm:$0xff] %v500
    %v5605 = vld.sshfl [vmem:[#allocation1] sm:$0xff pattern:$0x73625140]
    %v5606 = vld.sshfl [vmem:[#allocation1 + $0x8] sm:$0xff pattern:$0x73625140]
    %v5607 = vld.sshfl [vmem:[#allocation1 + $0x10] sm:$0xff pattern:$0x73625140]
    %v5608 = vld.sshfl [vmem:[#allocation1 + $0x18] sm:$0xff pattern:$0x73625140]
    %v5609 = vld.sshfl [vmem:[#allocation1 + $0x20] sm:$0xff pattern:$0x73625140]
    %v5610 = vld.sshfl [vmem:[#allocation1 + $0x28] sm:$0xff pattern:$0x73625140]
    %v5611 = vld.sshfl [vmem:[#allocation1 + $0x30] sm:$0xff pattern:$0x73625140]
    %v5612 = vld.sshfl [vmem:[#allocation1 + $0x38] sm:$0xff pattern:$0x73625140]
    %5614 = vst [vmem:[#allocation1] ss:$4 sm:$0xff] %v501
    %5616 = vst [vmem:[%s5603] ss:$4 sm:$0xff] %v502
    %v5617 = vld.sshfl [vmem:[#allocation1] sm:$0xff pattern:$0x73625140]
    %v5618 = vld.sshfl [vmem:[#allocation1 + $0x8] sm:$0xff pattern:$0x73625140]
    %v5619 = vld.sshfl [vmem:[#allocation1 + $0x10] sm:$0xff pattern:$0x73625140]
    %v5620 = vld.sshfl [vmem:[#allocation1 + $0x18] sm:$0xff pattern:$0x73625140]
    %v5621 = vld.sshfl [vmem:[#allocation1 + $0x20] sm:$0xff pattern:$0x73625140]
    %v5622 = vld.sshfl [vmem:[#allocation1 + $0x28] sm:$0xff pattern:$0x73625140]
    %v5623 = vld.sshfl [vmem:[#allocation1 + $0x30] sm:$0xff pattern:$0x73625140]
    %v5624 = vld.sshfl [vmem:[#allocation1 + $0x38] sm:$0xff pattern:$0x73625140]
    %5626 = vst [vmem:[#allocation1] ss:$4 sm:$0xff] %v503
    %5628 = vst [vmem:[%s5603] ss:$4 sm:$0xff] %v504
    %v5629 = vld.sshfl [vmem:[#allocation1] sm:$0xff pattern:$0x73625140]
    %v5630 = vld.sshfl [vmem:[#allocation1 + $0x8] sm:$0xff pattern:$0x73625140]
    %v5631 = vld.sshfl [vmem:[#allocation1 + $0x10] sm:$0xff pattern:$0x73625140]
    %v5632 = vld.sshfl [vmem:[#allocation1 + $0x18] sm:$0xff pattern:$0x73625140]
    %v5633 = vld.sshfl [vmem:[#allocation1 + $0x20] sm:$0xff pattern:$0x73625140]
    %v5634 = vld.sshfl [vmem:[#allocation1 + $0x28] sm:$0xff pattern:$0x73625140]
    %v5635 = vld.sshfl [vmem:[#allocation1 + $0x30] sm:$0xff pattern:$0x73625140]
    %v5636 = vld.sshfl [vmem:[#allocation1 + $0x38] sm:$0xff pattern:$0x73625140]
    %5638 = vst [vmem:[#allocation1] ss:$4 sm:$0xff] %v505
    %5640 = vst [vmem:[%s5603] ss:$4 sm:$0xff] %v506
    %v5641 = vld.sshfl [vmem:[#allocation1] sm:$0xff pattern:$0x73625140]
    %v5642 = vld.sshfl [vmem:[#allocation1 + $0x8] sm:$0xff pattern:$0x73625140]
    %v5643 = vld.sshfl [vmem:[#allocation1 + $0x10] sm:$0xff pattern:$0x73625140]
    %v5644 = vld.sshfl [vmem:[#allocation1 + $0x18] sm:$0xff pattern:$0x73625140]
    %v5645 = vld.sshfl [vmem:[#allocation1 + $0x20] sm:$0xff pattern:$0x73625140]
    %v5646 = vld.sshfl [vmem:[#allocation1 + $0x28] sm:$0xff pattern:$0x73625140]
    %v5647 = vld.sshfl [vmem:[#allocation1 + $0x30] sm:$0xff pattern:$0x73625140]
    %v5648 = vld.sshfl [vmem:[#allocation1 + $0x38] sm:$0xff pattern:$0x73625140]
    %v5649 = vsel %vm604, %v5599, 0
    %v5651 = vand.u32 %v5605, %v610
    %v5653 = vand.u32 %v5606, %v610
    %v5655 = vand.u32 %v5607, %v610
    %v5657 = vand.u32 %v5608, %v610
    %v5659 = vand.u32 %v5609, %v610
    %v5661 = vand.u32 %v5610, %v610
    %v5663 = vand.u32 %v5611, %v610
    %v5665 = vand.u32 %v5612, %v610
    %v5667 = vand.u32 %v5617, %v610
    %v5669 = vand.u32 %v5618, %v610
    %v5671 = vand.u32 %v5619, %v610
    %v5673 = vand.u32 %v5620, %v610
    %v5675 = vand.u32 %v5621, %v610
    %v5677 = vand.u32 %v5622, %v610
    %v5679 = vand.u32 %v5623, %v610
    %v5681 = vand.u32 %v5624, %v610
    %v5683 = vand.u32 %v5629, %v610
    %v5685 = vand.u32 %v5630, %v610
    %v5687 = vand.u32 %v5631, %v610
    %v5689 = vand.u32 %v5632, %v610
    %v5691 = vand.u32 %v5633, %v610
    %v5693 = vand.u32 %v5634, %v610
    %v5695 = vand.u32 %v5635, %v610
    %v5697 = vand.u32 %v5636, %v610
    %v5699 = vand.u32 %v5641, %v610
    %v5701 = vand.u32 %v5642, %v610
    %v5703 = vand.u32 %v5643, %v610
    %v5705 = vand.u32 %v5644, %v610
    %v5707 = vand.u32 %v5645, %v610
    %v5709 = vand.u32 %v5646, %v610
    %v5711 = vand.u32 %v5647, %v610
    %v5713 = vand.u32 %v5648, %v610
    %5715 = vmatpush.bf16.msra.mxu0 0
    %5716 = vmatpush.bf16.msra.mxu0 0
    %5717 = vmatpush.bf16.msra.mxu0 0
    %5718 = vmatpush.bf16.msra.mxu0 0
    %5719 = vmatpush.bf16.msra.mxu0 0
    %5720 = vmatpush.bf16.msra.mxu0 0
    %5721 = vmatpush.bf16.msra.mxu0 0
    %5722 = vmatpush.bf16.msra.mxu0 %v5651
    %5723 = vmatmul.f32.gmra.mxu0 %v5649
    %v5724 = vpop.f32.mrf.mxu0
    %v5725 = vadd.f32 0.0, %v5724
    %5726 = vdwg.mxu0
    %5727 = vmatpush.bf16.msra.mxu0 0
    %5728 = vmatpush.bf16.msra.mxu0 0
    %5729 = vmatpush.bf16.msra.mxu0 0
    %5730 = vmatpush.bf16.msra.mxu0 0
    %5731 = vmatpush.bf16.msra.mxu0 0
    %5732 = vmatpush.bf16.msra.mxu0 0
    %5733 = vmatpush.bf16.msra.mxu0 0
    %5734 = vmatpush.bf16.msra.mxu0 %v5653
    %5735 = vmatmul.f32.gmra.mxu0 %v5649
    %v5736 = vpop.f32.mrf.mxu0
    %v5737 = vadd.f32 0.0, %v5736
    %5738 = vdwg.mxu0
    %5739 = vmatpush.bf16.msra.mxu0 0
    %5740 = vmatpush.bf16.msra.mxu0 0
    %5741 = vmatpush.bf16.msra.mxu0 0
    %5742 = vmatpush.bf16.msra.mxu0 0
    %5743 = vmatpush.bf16.msra.mxu0 0
    %5744 = vmatpush.bf16.msra.mxu0 0
    %5745 = vmatpush.bf16.msra.mxu0 0
    %5746 = vmatpush.bf16.msra.mxu0 %v5655
    %5747 = vmatmul.f32.gmra.mxu0 %v5649
    %v5748 = vpop.f32.mrf.mxu0
    %v5749 = vadd.f32 0.0, %v5748
    %5750 = vdwg.mxu0
    %5751 = vmatpush.bf16.msra.mxu0 0
    %5752 = vmatpush.bf16.msra.mxu0 0
    %5753 = vmatpush.bf16.msra.mxu0 0
    %5754 = vmatpush.bf16.msra.mxu0 0
    %5755 = vmatpush.bf16.msra.mxu0 0
    %5756 = vmatpush.bf16.msra.mxu0 0
    %5757 = vmatpush.bf16.msra.mxu0 0
    %5758 = vmatpush.bf16.msra.mxu0 %v5657
    %5759 = vmatmul.f32.gmra.mxu0 %v5649
    %v5760 = vpop.f32.mrf.mxu0
    %v5761 = vadd.f32 0.0, %v5760
    %5762 = vdwg.mxu0
    %5763 = vmatpush.bf16.msra.mxu0 0
    %5764 = vmatpush.bf16.msra.mxu0 0
    %5765 = vmatpush.bf16.msra.mxu0 0
    %5766 = vmatpush.bf16.msra.mxu0 0
    %5767 = vmatpush.bf16.msra.mxu0 0
    %5768 = vmatpush.bf16.msra.mxu0 0
    %5769 = vmatpush.bf16.msra.mxu0 0
    %5770 = vmatpush.bf16.msra.mxu0 %v5659
    %5771 = vmatmul.f32.gmra.mxu0 %v5649
    %v5772 = vpop.f32.mrf.mxu0
    %v5773 = vadd.f32 0.0, %v5772
    %5774 = vdwg.mxu0
    %5775 = vmatpush.bf16.msra.mxu0 0
    %5776 = vmatpush.bf16.msra.mxu0 0
    %5777 = vmatpush.bf16.msra.mxu0 0
    %5778 = vmatpush.bf16.msra.mxu0 0
    %5779 = vmatpush.bf16.msra.mxu0 0
    %5780 = vmatpush.bf16.msra.mxu0 0
    %5781 = vmatpush.bf16.msra.mxu0 0
    %5782 = vmatpush.bf16.msra.mxu0 %v5661
    %5783 = vmatmul.f32.gmra.mxu0 %v5649
    %v5784 = vpop.f32.mrf.mxu0
    %v5785 = vadd.f32 0.0, %v5784
    %5786 = vdwg.mxu0
    %5787 = vmatpush.bf16.msra.mxu0 0
    %5788 = vmatpush.bf16.msra.mxu0 0
    %5789 = vmatpush.bf16.msra.mxu0 0
    %5790 = vmatpush.bf16.msra.mxu0 0
    %5791 = vmatpush.bf16.msra.mxu0 0
    %5792 = vmatpush.bf16.msra.mxu0 0
    %5793 = vmatpush.bf16.msra.mxu0 0
    %5794 = vmatpush.bf16.msra.mxu0 %v5663
    %5795 = vmatmul.f32.gmra.mxu0 %v5649
    %v5796 = vpop.f32.mrf.mxu0
    %v5797 = vadd.f32 0.0, %v5796
    %5798 = vdwg.mxu0
    %5799 = vmatpush.bf16.msra.mxu0 0
    %5800 = vmatpush.bf16.msra.mxu0 0
    %5801 = vmatpush.bf16.msra.mxu0 0
    %5802 = vmatpush.bf16.msra.mxu0 0
    %5803 = vmatpush.bf16.msra.mxu0 0
    %5804 = vmatpush.bf16.msra.mxu0 0
    %5805 = vmatpush.bf16.msra.mxu0 0
    %5806 = vmatpush.bf16.msra.mxu0 %v5665
    %5807 = vmatmul.f32.gmra.mxu0 %v5649
    %v5808 = vpop.f32.mrf.mxu0
    %v5809 = vadd.f32 0.0, %v5808
    %5810 = vdwg.mxu0
    %5811 = vmatpush.bf16.msra.mxu0 0
    %5812 = vmatpush.bf16.msra.mxu0 0
    %5813 = vmatpush.bf16.msra.mxu0 0
    %5814 = vmatpush.bf16.msra.mxu0 0
    %5815 = vmatpush.bf16.msra.mxu0 0
    %5816 = vmatpush.bf16.msra.mxu0 0
    %5817 = vmatpush.bf16.msra.mxu0 0
    %5818 = vmatpush.bf16.msra.mxu0 %v5667
    %5819 = vmatmul.f32.gmra.mxu0 %v5649
    %v5820 = vpop.f32.mrf.mxu0
    %v5821 = vadd.f32 0.0, %v5820
    %5822 = vdwg.mxu0
    %5823 = vmatpush.bf16.msra.mxu0 0
    %5824 = vmatpush.bf16.msra.mxu0 0
    %5825 = vmatpush.bf16.msra.mxu0 0
    %5826 = vmatpush.bf16.msra.mxu0 0
    %5827 = vmatpush.bf16.msra.mxu0 0
    %5828 = vmatpush.bf16.msra.mxu0 0
    %5829 = vmatpush.bf16.msra.mxu0 0
    %5830 = vmatpush.bf16.msra.mxu0 %v5669
    %5831 = vmatmul.f32.gmra.mxu0 %v5649
    %v5832 = vpop.f32.mrf.mxu0
    %v5833 = vadd.f32 0.0, %v5832
    %5834 = vdwg.mxu0
    %5835 = vmatpush.bf16.msra.mxu0 0
    %5836 = vmatpush.bf16.msra.mxu0 0
    %5837 = vmatpush.bf16.msra.mxu0 0
    %5838 = vmatpush.bf16.msra.mxu0 0
    %5839 = vmatpush.bf16.msra.mxu0 0
    %5840 = vmatpush.bf16.msra.mxu0 0
    %5841 = vmatpush.bf16.msra.mxu0 0
    %5842 = vmatpush.bf16.msra.mxu0 %v5671
    %5843 = vmatmul.f32.gmra.mxu0 %v5649
    %v5844 = vpop.f32.mrf.mxu0
    %v5845 = vadd.f32 0.0, %v5844
    %5846 = vdwg.mxu0
    %5847 = vmatpush.bf16.msra.mxu0 0
    %5848 = vmatpush.bf16.msra.mxu0 0
    %5849 = vmatpush.bf16.msra.mxu0 0
    %5850 = vmatpush.bf16.msra.mxu0 0
    %5851 = vmatpush.bf16.msra.mxu0 0
    %5852 = vmatpush.bf16.msra.mxu0 0
    %5853 = vmatpush.bf16.msra.mxu0 0
    %5854 = vmatpush.bf16.msra.mxu0 %v5673
    %5855 = vmatmul.f32.gmra.mxu0 %v5649
    %v5856 = vpop.f32.mrf.mxu0
    %v5857 = vadd.f32 0.0, %v5856
    %5858 = vdwg.mxu0
    %5859 = vmatpush.bf16.msra.mxu0 0
    %5860 = vmatpush.bf16.msra.mxu0 0
    %5861 = vmatpush.bf16.msra.mxu0 0
    %5862 = vmatpush.bf16.msra.mxu0 0
    %5863 = vmatpush.bf16.msra.mxu0 0
    %5864 = vmatpush.bf16.msra.mxu0 0
    %5865 = vmatpush.bf16.msra.mxu0 0
    %5866 = vmatpush.bf16.msra.mxu0 %v5675
    %5867 = vmatmul.f32.gmra.mxu0 %v5649
    %v5868 = vpop.f32.mrf.mxu0
    %v5869 = vadd.f32 0.0, %v5868
    %5870 = vdwg.mxu0
    %5871 = vmatpush.bf16.msra.mxu0 0
    %5872 = vmatpush.bf16.msra.mxu0 0
    %5873 = vmatpush.bf16.msra.mxu0 0
    %5874 = vmatpush.bf16.msra.mxu0 0
    %5875 = vmatpush.bf16.msra.mxu0 0
    %5876 = vmatpush.bf16.msra.mxu0 0
    %5877 = vmatpush.bf16.msra.mxu0 0
    %5878 = vmatpush.bf16.msra.mxu0 %v5677
    %5879 = vmatmul.f32.gmra.mxu0 %v5649
    %v5880 = vpop.f32.mrf.mxu0
    %v5881 = vadd.f32 0.0, %v5880
    %5882 = vdwg.mxu0
    %5883 = vmatpush.bf16.msra.mxu0 0
    %5884 = vmatpush.bf16.msra.mxu0 0
    %5885 = vmatpush.bf16.msra.mxu0 0
    %5886 = vmatpush.bf16.msra.mxu0 0
    %5887 = vmatpush.bf16.msra.mxu0 0
    %5888 = vmatpush.bf16.msra.mxu0 0
    %5889 = vmatpush.bf16.msra.mxu0 0
    %5890 = vmatpush.bf16.msra.mxu0 %v5679
    %5891 = vmatmul.f32.gmra.mxu0 %v5649
    %v5892 = vpop.f32.mrf.mxu0
    %v5893 = vadd.f32 0.0, %v5892
    %5894 = vdwg.mxu0
    %5895 = vmatpush.bf16.msra.mxu0 0
    %5896 = vmatpush.bf16.msra.mxu0 0
    %5897 = vmatpush.bf16.msra.mxu0 0
    %5898 = vmatpush.bf16.msra.mxu0 0
    %5899 = vmatpush.bf16.msra.mxu0 0
    %5900 = vmatpush.bf16.msra.mxu0 0
    %5901 = vmatpush.bf16.msra.mxu0 0
    %5902 = vmatpush.bf16.msra.mxu0 %v5681
    %5903 = vmatmul.f32.gmra.mxu0 %v5649
    %v5904 = vpop.f32.mrf.mxu0
    %v5905 = vadd.f32 0.0, %v5904
    %5906 = vdwg.mxu0
    %5907 = vmatpush.bf16.msra.mxu0 0
    %5908 = vmatpush.bf16.msra.mxu0 0
    %5909 = vmatpush.bf16.msra.mxu0 0
    %5910 = vmatpush.bf16.msra.mxu0 0
    %5911 = vmatpush.bf16.msra.mxu0 0
    %5912 = vmatpush.bf16.msra.mxu0 0
    %5913 = vmatpush.bf16.msra.mxu0 0
    %5914 = vmatpush.bf16.msra.mxu0 %v5683
    %5915 = vmatmul.f32.gmra.mxu0 %v5649
    %v5916 = vpop.f32.mrf.mxu0
    %v5917 = vadd.f32 0.0, %v5916
    %5918 = vdwg.mxu0
    %5919 = vmatpush.bf16.msra.mxu0 0
    %5920 = vmatpush.bf16.msra.mxu0 0
    %5921 = vmatpush.bf16.msra.mxu0 0
    %5922 = vmatpush.bf16.msra.mxu0 0
    %5923 = vmatpush.bf16.msra.mxu0 0
    %5924 = vmatpush.bf16.msra.mxu0 0
    %5925 = vmatpush.bf16.msra.mxu0 0
    %5926 = vmatpush.bf16.msra.mxu0 %v5685
    %5927 = vmatmul.f32.gmra.mxu0 %v5649
    %v5928 = vpop.f32.mrf.mxu0
    %v5929 = vadd.f32 0.0, %v5928
    %5930 = vdwg.mxu0
    %5931 = vmatpush.bf16.msra.mxu0 0
    %5932 = vmatpush.bf16.msra.mxu0 0
    %5933 = vmatpush.bf16.msra.mxu0 0
    %5934 = vmatpush.bf16.msra.mxu0 0
    %5935 = vmatpush.bf16.msra.mxu0 0
    %5936 = vmatpush.bf16.msra.mxu0 0
    %5937 = vmatpush.bf16.msra.mxu0 0
    %5938 = vmatpush.bf16.msra.mxu0 %v5687
    %5939 = vmatmul.f32.gmra.mxu0 %v5649
    %v5940 = vpop.f32.mrf.mxu0
    %v5941 = vadd.f32 0.0, %v5940
    %5942 = vdwg.mxu0
    %5943 = vmatpush.bf16.msra.mxu0 0
    %5944 = vmatpush.bf16.msra.mxu0 0
    %5945 = vmatpush.bf16.msra.mxu0 0
    %5946 = vmatpush.bf16.msra.mxu0 0
    %5947 = vmatpush.bf16.msra.mxu0 0
    %5948 = vmatpush.bf16.msra.mxu0 0
    %5949 = vmatpush.bf16.msra.mxu0 0
    %5950 = vmatpush.bf16.msra.mxu0 %v5689
    %5951 = vmatmul.f32.gmra.mxu0 %v5649
    %v5952 = vpop.f32.mrf.mxu0
    %v5953 = vadd.f32 0.0, %v5952
    %5954 = vdwg.mxu0
    %5955 = vmatpush.bf16.msra.mxu0 0
    %5956 = vmatpush.bf16.msra.mxu0 0
    %5957 = vmatpush.bf16.msra.mxu0 0
    %5958 = vmatpush.bf16.msra.mxu0 0
    %5959 = vmatpush.bf16.msra.mxu0 0
    %5960 = vmatpush.bf16.msra.mxu0 0
    %5961 = vmatpush.bf16.msra.mxu0 0
    %5962 = vmatpush.bf16.msra.mxu0 %v5691
    %5963 = vmatmul.f32.gmra.mxu0 %v5649
    %v5964 = vpop.f32.mrf.mxu0
    %v5965 = vadd.f32 0.0, %v5964
    %5966 = vdwg.mxu0
    %5967 = vmatpush.bf16.msra.mxu0 0
    %5968 = vmatpush.bf16.msra.mxu0 0
    %5969 = vmatpush.bf16.msra.mxu0 0
    %5970 = vmatpush.bf16.msra.mxu0 0
    %5971 = vmatpush.bf16.msra.mxu0 0
    %5972 = vmatpush.bf16.msra.mxu0 0
    %5973 = vmatpush.bf16.msra.mxu0 0
    %5974 = vmatpush.bf16.msra.mxu0 %v5693
    %5975 = vmatmul.f32.gmra.mxu0 %v5649
    %v5976 = vpop.f32.mrf.mxu0
    %v5977 = vadd.f32 0.0, %v5976
    %5978 = vdwg.mxu0
    %5979 = vmatpush.bf16.msra.mxu0 0
    %5980 = vmatpush.bf16.msra.mxu0 0
    %5981 = vmatpush.bf16.msra.mxu0 0
    %5982 = vmatpush.bf16.msra.mxu0 0
    %5983 = vmatpush.bf16.msra.mxu0 0
    %5984 = vmatpush.bf16.msra.mxu0 0
    %5985 = vmatpush.bf16.msra.mxu0 0
    %5986 = vmatpush.bf16.msra.mxu0 %v5695
    %5987 = vmatmul.f32.gmra.mxu0 %v5649
    %v5988 = vpop.f32.mrf.mxu0
    %v5989 = vadd.f32 0.0, %v5988
    %5990 = vdwg.mxu0
    %5991 = vmatpush.bf16.msra.mxu0 0
    %5992 = vmatpush.bf16.msra.mxu0 0
    %5993 = vmatpush.bf16.msra.mxu0 0
    %5994 = vmatpush.bf16.msra.mxu0 0
    %5995 = vmatpush.bf16.msra.mxu0 0
    %5996 = vmatpush.bf16.msra.mxu0 0
    %5997 = vmatpush.bf16.msra.mxu0 0
    %5998 = vmatpush.bf16.msra.mxu0 %v5697
    %5999 = vmatmul.f32.gmra.mxu0 %v5649
    %v6000 = vpop.f32.mrf.mxu0
    %v6001 = vadd.f32 0.0, %v6000
    %6002 = vdwg.mxu0
    %6003 = vmatpush.bf16.msra.mxu0 0
    %6004 = vmatpush.bf16.msra.mxu0 0
    %6005 = vmatpush.bf16.msra.mxu0 0
    %6006 = vmatpush.bf16.msra.mxu0 0
    %6007 = vmatpush.bf16.msra.mxu0 0
    %6008 = vmatpush.bf16.msra.mxu0 0
    %6009 = vmatpush.bf16.msra.mxu0 0
    %6010 = vmatpush.bf16.msra.mxu0 %v5699
    %6011 = vmatmul.f32.gmra.mxu0 %v5649
    %v6012 = vpop.f32.mrf.mxu0
    %v6013 = vadd.f32 0.0, %v6012
    %6014 = vdwg.mxu0
    %6015 = vmatpush.bf16.msra.mxu0 0
    %6016 = vmatpush.bf16.msra.mxu0 0
    %6017 = vmatpush.bf16.msra.mxu0 0
    %6018 = vmatpush.bf16.msra.mxu0 0
    %6019 = vmatpush.bf16.msra.mxu0 0
    %6020 = vmatpush.bf16.msra.mxu0 0
    %6021 = vmatpush.bf16.msra.mxu0 0
    %6022 = vmatpush.bf16.msra.mxu0 %v5701
    %6023 = vmatmul.f32.gmra.mxu0 %v5649
    %v6024 = vpop.f32.mrf.mxu0
    %v6025 = vadd.f32 0.0, %v6024
    %6026 = vdwg.mxu0
    %6027 = vmatpush.bf16.msra.mxu0 0
    %6028 = vmatpush.bf16.msra.mxu0 0
    %6029 = vmatpush.bf16.msra.mxu0 0
    %6030 = vmatpush.bf16.msra.mxu0 0
    %6031 = vmatpush.bf16.msra.mxu0 0
    %6032 = vmatpush.bf16.msra.mxu0 0
    %6033 = vmatpush.bf16.msra.mxu0 0
    %6034 = vmatpush.bf16.msra.mxu0 %v5703
    %6035 = vmatmul.f32.gmra.mxu0 %v5649
    %v6036 = vpop.f32.mrf.mxu0
    %v6037 = vadd.f32 0.0, %v6036
    %6038 = vdwg.mxu0
    %6039 = vmatpush.bf16.msra.mxu0 0
    %6040 = vmatpush.bf16.msra.mxu0 0
    %6041 = vmatpush.bf16.msra.mxu0 0
    %6042 = vmatpush.bf16.msra.mxu0 0
    %6043 = vmatpush.bf16.msra.mxu0 0
    %6044 = vmatpush.bf16.msra.mxu0 0
    %6045 = vmatpush.bf16.msra.mxu0 0
    %6046 = vmatpush.bf16.msra.mxu0 %v5705
    %6047 = vmatmul.f32.gmra.mxu0 %v5649
    %v6048 = vpop.f32.mrf.mxu0
    %v6049 = vadd.f32 0.0, %v6048
    %6050 = vdwg.mxu0
    %6051 = vmatpush.bf16.msra.mxu0 0
    %6052 = vmatpush.bf16.msra.mxu0 0
    %6053 = vmatpush.bf16.msra.mxu0 0
    %6054 = vmatpush.bf16.msra.mxu0 0
    %6055 = vmatpush.bf16.msra.mxu0 0
    %6056 = vmatpush.bf16.msra.mxu0 0
    %6057 = vmatpush.bf16.msra.mxu0 0
    %6058 = vmatpush.bf16.msra.mxu0 %v5707
    %6059 = vmatmul.f32.gmra.mxu0 %v5649
    %v6060 = vpop.f32.mrf.mxu0
    %v6061 = vadd.f32 0.0, %v6060
    %6062 = vdwg.mxu0
    %6063 = vmatpush.bf16.msra.mxu0 0
    %6064 = vmatpush.bf16.msra.mxu0 0
    %6065 = vmatpush.bf16.msra.mxu0 0
    %6066 = vmatpush.bf16.msra.mxu0 0
    %6067 = vmatpush.bf16.msra.mxu0 0
    %6068 = vmatpush.bf16.msra.mxu0 0
    %6069 = vmatpush.bf16.msra.mxu0 0
    %6070 = vmatpush.bf16.msra.mxu0 %v5709
    %6071 = vmatmul.f32.gmra.mxu0 %v5649
    %v6072 = vpop.f32.mrf.mxu0
    %v6073 = vadd.f32 0.0, %v6072
    %6074 = vdwg.mxu0
    %6075 = vmatpush.bf16.msra.mxu0 0
    %6076 = vmatpush.bf16.msra.mxu0 0
    %6077 = vmatpush.bf16.msra.mxu0 0
    %6078 = vmatpush.bf16.msra.mxu0 0
    %6079 = vmatpush.bf16.msra.mxu0 0
    %6080 = vmatpush.bf16.msra.mxu0 0
    %6081 = vmatpush.bf16.msra.mxu0 0
    %6082 = vmatpush.bf16.msra.mxu0 %v5711
    %6083 = vmatmul.f32.gmra.mxu0 %v5649
    %v6084 = vpop.f32.mrf.mxu0
    %v6085 = vadd.f32 0.0, %v6084
    %6086 = vdwg.mxu0
    %6087 = vmatpush.bf16.msra.mxu0 0
    %6088 = vmatpush.bf16.msra.mxu0 0
    %6089 = vmatpush.bf16.msra.mxu0 0
    %6090 = vmatpush.bf16.msra.mxu0 0
    %6091 = vmatpush.bf16.msra.mxu0 0
    %6092 = vmatpush.bf16.msra.mxu0 0
    %6093 = vmatpush.bf16.msra.mxu0 0
    %6094 = vmatpush.bf16.msra.mxu0 %v5713
    %6095 = vmatmul.f32.gmra.mxu0 %v5649
    %v6096 = vpop.f32.mrf.mxu0
    %v6097 = vadd.f32 0.0, %v6096
    %6098 = vdwg.mxu0
    %v6101 = vperm.slane %v373, %v550
    %v6102 = vperm.slane %v378, %v550
    %v6103 = vsel %vm553, %v6102, %v6101
    %6105 = vst [vmem:[#allocation1] ss:$4 sm:$0xff] %v507
    %s6107 = scalar_lea.vmem [#allocation1], 32
    %6108 = vst [vmem:[%s6107] ss:$4 sm:$0xff] %v508
    %v6109 = vld.sshfl [vmem:[#allocation1] sm:$0xff pattern:$0x73625140]
    %v6110 = vld.sshfl [vmem:[#allocation1 + $0x8] sm:$0xff pattern:$0x73625140]
    %v6111 = vld.sshfl [vmem:[#allocation1 + $0x10] sm:$0xff pattern:$0x73625140]
    %v6112 = vld.sshfl [vmem:[#allocation1 + $0x18] sm:$0xff pattern:$0x73625140]
    %v6113 = vld.sshfl [vmem:[#allocation1 + $0x20] sm:$0xff pattern:$0x73625140]
    %v6114 = vld.sshfl [vmem:[#allocation1 + $0x28] sm:$0xff pattern:$0x73625140]
    %v6115 = vld.sshfl [vmem:[#allocation1 + $0x30] sm:$0xff pattern:$0x73625140]
    %v6116 = vld.sshfl [vmem:[#allocation1 + $0x38] sm:$0xff pattern:$0x73625140]
    %6118 = vst [vmem:[#allocation1] ss:$4 sm:$0xff] %v509
    %6120 = vst [vmem:[%s6107] ss:$4 sm:$0xff] %v510
    %v6121 = vld.sshfl [vmem:[#allocation1] sm:$0xff pattern:$0x73625140]
    %v6122 = vld.sshfl [vmem:[#allocation1 + $0x8] sm:$0xff pattern:$0x73625140]
    %v6123 = vld.sshfl [vmem:[#allocation1 + $0x10] sm:$0xff pattern:$0x73625140]
    %v6124 = vld.sshfl [vmem:[#allocation1 + $0x18] sm:$0xff pattern:$0x73625140]
    %v6125 = vld.sshfl [vmem:[#allocation1 + $0x20] sm:$0xff pattern:$0x73625140]
    %v6126 = vld.sshfl [vmem:[#allocation1 + $0x28] sm:$0xff pattern:$0x73625140]
    %v6127 = vld.sshfl [vmem:[#allocation1 + $0x30] sm:$0xff pattern:$0x73625140]
    %v6128 = vld.sshfl [vmem:[#allocation1 + $0x38] sm:$0xff pattern:$0x73625140]
    %6130 = vst [vmem:[#allocation1] ss:$4 sm:$0xff] %v511
    %6132 = vst [vmem:[%s6107] ss:$4 sm:$0xff] %v512
    %v6133 = vld.sshfl [vmem:[#allocation1] sm:$0xff pattern:$0x73625140]
    %v6134 = vld.sshfl [vmem:[#allocation1 + $0x8] sm:$0xff pattern:$0x73625140]
    %v6135 = vld.sshfl [vmem:[#allocation1 + $0x10] sm:$0xff pattern:$0x73625140]
    %v6136 = vld.sshfl [vmem:[#allocation1 + $0x18] sm:$0xff pattern:$0x73625140]
    %v6137 = vld.sshfl [vmem:[#allocation1 + $0x20] sm:$0xff pattern:$0x73625140]
    %v6138 = vld.sshfl [vmem:[#allocation1 + $0x28] sm:$0xff pattern:$0x73625140]
    %v6139 = vld.sshfl [vmem:[#allocation1 + $0x30] sm:$0xff pattern:$0x73625140]
    %v6140 = vld.sshfl [vmem:[#allocation1 + $0x38] sm:$0xff pattern:$0x73625140]
    %6142 = vst [vmem:[#allocation1] ss:$4 sm:$0xff] %v513
    %6144 = vst [vmem:[%s6107] ss:$4 sm:$0xff] %v514
    %v6145 = vld.sshfl [vmem:[#allocation1] sm:$0xff pattern:$0x73625140]
    %v6146 = vld.sshfl [vmem:[#allocation1 + $0x8] sm:$0xff pattern:$0x73625140]
    %v6147 = vld.sshfl [vmem:[#allocation1 + $0x10] sm:$0xff pattern:$0x73625140]
    %v6148 = vld.sshfl [vmem:[#allocation1 + $0x18] sm:$0xff pattern:$0x73625140]
    %v6149 = vld.sshfl [vmem:[#allocation1 + $0x20] sm:$0xff pattern:$0x73625140]
    %v6150 = vld.sshfl [vmem:[#allocation1 + $0x28] sm:$0xff pattern:$0x73625140]
    %v6151 = vld.sshfl [vmem:[#allocation1 + $0x30] sm:$0xff pattern:$0x73625140]
    %v6152 = vld.sshfl [vmem:[#allocation1 + $0x38] sm:$0xff pattern:$0x73625140]
    %v6153 = vsel %vm604, %v6103, 0
    %v6155 = vand.u32 %v6109, %v610
    %v6157 = vand.u32 %v6110, %v610
    %v6159 = vand.u32 %v6111, %v610
    %v6161 = vand.u32 %v6112, %v610
    %v6163 = vand.u32 %v6113, %v610
    %v6165 = vand.u32 %v6114, %v610
    %v6167 = vand.u32 %v6115, %v610
    %v6169 = vand.u32 %v6116, %v610
    %v6171 = vand.u32 %v6121, %v610
    %v6173 = vand.u32 %v6122, %v610
    %v6175 = vand.u32 %v6123, %v610
    %v6177 = vand.u32 %v6124, %v610
    %v6179 = vand.u32 %v6125, %v610
    %v6181 = vand.u32 %v6126, %v610
    %v6183 = vand.u32 %v6127, %v610
    %v6185 = vand.u32 %v6128, %v610
    %v6187 = vand.u32 %v6133, %v610
    %v6189 = vand.u32 %v6134, %v610
    %v6191 = vand.u32 %v6135, %v610
    %v6193 = vand.u32 %v6136, %v610
    %v6195 = vand.u32 %v6137, %v610
    %v6197 = vand.u32 %v6138, %v610
    %v6199 = vand.u32 %v6139, %v610
    %v6201 = vand.u32 %v6140, %v610
    %v6203 = vand.u32 %v6145, %v610
    %v6205 = vand.u32 %v6146, %v610
    %v6207 = vand.u32 %v6147, %v610
    %v6209 = vand.u32 %v6148, %v610
    %v6211 = vand.u32 %v6149, %v610
    %v6213 = vand.u32 %v6150, %v610
    %v6215 = vand.u32 %v6151, %v610
    %v6217 = vand.u32 %v6152, %v610
    %6219 = vmatpush.bf16.msra.mxu0 0
    %6220 = vmatpush.bf16.msra.mxu0 0
    %6221 = vmatpush.bf16.msra.mxu0 0
    %6222 = vmatpush.bf16.msra.mxu0 0
    %6223 = vmatpush.bf16.msra.mxu0 0
    %6224 = vmatpush.bf16.msra.mxu0 0
    %6225 = vmatpush.bf16.msra.mxu0 0
    %6226 = vmatpush.bf16.msra.mxu0 %v6155
    %6227 = vmatmul.f32.gmra.mxu0 %v6153
    %v6228 = vpop.f32.mrf.mxu0
    %v6229 = vadd.f32 0.0, %v6228
    %6230 = vdwg.mxu0
    %6231 = vmatpush.bf16.msra.mxu0 0
    %6232 = vmatpush.bf16.msra.mxu0 0
    %6233 = vmatpush.bf16.msra.mxu0 0
    %6234 = vmatpush.bf16.msra.mxu0 0
    %6235 = vmatpush.bf16.msra.mxu0 0
    %6236 = vmatpush.bf16.msra.mxu0 0
    %6237 = vmatpush.bf16.msra.mxu0 0
    %6238 = vmatpush.bf16.msra.mxu0 %v6157
    %6239 = vmatmul.f32.gmra.mxu0 %v6153
    %v6240 = vpop.f32.mrf.mxu0
    %v6241 = vadd.f32 0.0, %v6240
    %6242 = vdwg.mxu0
    %6243 = vmatpush.bf16.msra.mxu0 0
    %6244 = vmatpush.bf16.msra.mxu0 0
    %6245 = vmatpush.bf16.msra.mxu0 0
    %6246 = vmatpush.bf16.msra.mxu0 0
    %6247 = vmatpush.bf16.msra.mxu0 0
    %6248 = vmatpush.bf16.msra.mxu0 0
    %6249 = vmatpush.bf16.msra.mxu0 0
    %6250 = vmatpush.bf16.msra.mxu0 %v6159
    %6251 = vmatmul.f32.gmra.mxu0 %v6153
    %v6252 = vpop.f32.mrf.mxu0
    %v6253 = vadd.f32 0.0, %v6252
    %6254 = vdwg.mxu0
    %6255 = vmatpush.bf16.msra.mxu0 0
    %6256 = vmatpush.bf16.msra.mxu0 0
    %6257 = vmatpush.bf16.msra.mxu0 0
    %6258 = vmatpush.bf16.msra.mxu0 0
    %6259 = vmatpush.bf16.msra.mxu0 0
    %6260 = vmatpush.bf16.msra.mxu0 0
    %6261 = vmatpush.bf16.msra.mxu0 0
    %6262 = vmatpush.bf16.msra.mxu0 %v6161
    %6263 = vmatmul.f32.gmra.mxu0 %v6153
    %v6264 = vpop.f32.mrf.mxu0
    %v6265 = vadd.f32 0.0, %v6264
    %6266 = vdwg.mxu0
    %6267 = vmatpush.bf16.msra.mxu0 0
    %6268 = vmatpush.bf16.msra.mxu0 0
    %6269 = vmatpush.bf16.msra.mxu0 0
    %6270 = vmatpush.bf16.msra.mxu0 0
    %6271 = vmatpush.bf16.msra.mxu0 0
    %6272 = vmatpush.bf16.msra.mxu0 0
    %6273 = vmatpush.bf16.msra.mxu0 0
    %6274 = vmatpush.bf16.msra.mxu0 %v6163
    %6275 = vmatmul.f32.gmra.mxu0 %v6153
    %v6276 = vpop.f32.mrf.mxu0
    %v6277 = vadd.f32 0.0, %v6276
    %6278 = vdwg.mxu0
    %6279 = vmatpush.bf16.msra.mxu0 0
    %6280 = vmatpush.bf16.msra.mxu0 0
    %6281 = vmatpush.bf16.msra.mxu0 0
    %6282 = vmatpush.bf16.msra.mxu0 0
    %6283 = vmatpush.bf16.msra.mxu0 0
    %6284 = vmatpush.bf16.msra.mxu0 0
    %6285 = vmatpush.bf16.msra.mxu0 0
    %6286 = vmatpush.bf16.msra.mxu0 %v6165
    %6287 = vmatmul.f32.gmra.mxu0 %v6153
    %v6288 = vpop.f32.mrf.mxu0
    %v6289 = vadd.f32 0.0, %v6288
    %6290 = vdwg.mxu0
    %6291 = vmatpush.bf16.msra.mxu0 0
    %6292 = vmatpush.bf16.msra.mxu0 0
    %6293 = vmatpush.bf16.msra.mxu0 0
    %6294 = vmatpush.bf16.msra.mxu0 0
    %6295 = vmatpush.bf16.msra.mxu0 0
    %6296 = vmatpush.bf16.msra.mxu0 0
    %6297 = vmatpush.bf16.msra.mxu0 0
    %6298 = vmatpush.bf16.msra.mxu0 %v6167
    %6299 = vmatmul.f32.gmra.mxu0 %v6153
    %v6300 = vpop.f32.mrf.mxu0
    %v6301 = vadd.f32 0.0, %v6300
    %6302 = vdwg.mxu0
    %6303 = vmatpush.bf16.msra.mxu0 0
    %6304 = vmatpush.bf16.msra.mxu0 0
    %6305 = vmatpush.bf16.msra.mxu0 0
    %6306 = vmatpush.bf16.msra.mxu0 0
    %6307 = vmatpush.bf16.msra.mxu0 0
    %6308 = vmatpush.bf16.msra.mxu0 0
    %6309 = vmatpush.bf16.msra.mxu0 0
    %6310 = vmatpush.bf16.msra.mxu0 %v6169
    %6311 = vmatmul.f32.gmra.mxu0 %v6153
    %v6312 = vpop.f32.mrf.mxu0
    %v6313 = vadd.f32 0.0, %v6312
    %6314 = vdwg.mxu0
    %6315 = vmatpush.bf16.msra.mxu0 0
    %6316 = vmatpush.bf16.msra.mxu0 0
    %6317 = vmatpush.bf16.msra.mxu0 0
    %6318 = vmatpush.bf16.msra.mxu0 0
    %6319 = vmatpush.bf16.msra.mxu0 0
    %6320 = vmatpush.bf16.msra.mxu0 0
    %6321 = vmatpush.bf16.msra.mxu0 0
    %6322 = vmatpush.bf16.msra.mxu0 %v6171
    %6323 = vmatmul.f32.gmra.mxu0 %v6153
    %v6324 = vpop.f32.mrf.mxu0
    %v6325 = vadd.f32 0.0, %v6324
    %6326 = vdwg.mxu0
    %6327 = vmatpush.bf16.msra.mxu0 0
    %6328 = vmatpush.bf16.msra.mxu0 0
    %6329 = vmatpush.bf16.msra.mxu0 0
    %6330 = vmatpush.bf16.msra.mxu0 0
    %6331 = vmatpush.bf16.msra.mxu0 0
    %6332 = vmatpush.bf16.msra.mxu0 0
    %6333 = vmatpush.bf16.msra.mxu0 0
    %6334 = vmatpush.bf16.msra.mxu0 %v6173
    %6335 = vmatmul.f32.gmra.mxu0 %v6153
    %v6336 = vpop.f32.mrf.mxu0
    %v6337 = vadd.f32 0.0, %v6336
    %6338 = vdwg.mxu0
    %6339 = vmatpush.bf16.msra.mxu0 0
    %6340 = vmatpush.bf16.msra.mxu0 0
    %6341 = vmatpush.bf16.msra.mxu0 0
    %6342 = vmatpush.bf16.msra.mxu0 0
    %6343 = vmatpush.bf16.msra.mxu0 0
    %6344 = vmatpush.bf16.msra.mxu0 0
    %6345 = vmatpush.bf16.msra.mxu0 0
    %6346 = vmatpush.bf16.msra.mxu0 %v6175
    %6347 = vmatmul.f32.gmra.mxu0 %v6153
    %v6348 = vpop.f32.mrf.mxu0
    %v6349 = vadd.f32 0.0, %v6348
    %6350 = vdwg.mxu0
    %6351 = vmatpush.bf16.msra.mxu0 0
    %6352 = vmatpush.bf16.msra.mxu0 0
    %6353 = vmatpush.bf16.msra.mxu0 0
    %6354 = vmatpush.bf16.msra.mxu0 0
    %6355 = vmatpush.bf16.msra.mxu0 0
    %6356 = vmatpush.bf16.msra.mxu0 0
    %6357 = vmatpush.bf16.msra.mxu0 0
    %6358 = vmatpush.bf16.msra.mxu0 %v6177
    %6359 = vmatmul.f32.gmra.mxu0 %v6153
    %v6360 = vpop.f32.mrf.mxu0
    %v6361 = vadd.f32 0.0, %v6360
    %6362 = vdwg.mxu0
    %6363 = vmatpush.bf16.msra.mxu0 0
    %6364 = vmatpush.bf16.msra.mxu0 0
    %6365 = vmatpush.bf16.msra.mxu0 0
    %6366 = vmatpush.bf16.msra.mxu0 0
    %6367 = vmatpush.bf16.msra.mxu0 0
    %6368 = vmatpush.bf16.msra.mxu0 0
    %6369 = vmatpush.bf16.msra.mxu0 0
    %6370 = vmatpush.bf16.msra.mxu0 %v6179
    %6371 = vmatmul.f32.gmra.mxu0 %v6153
    %v6372 = vpop.f32.mrf.mxu0
    %v6373 = vadd.f32 0.0, %v6372
    %6374 = vdwg.mxu0
    %6375 = vmatpush.bf16.msra.mxu0 0
    %6376 = vmatpush.bf16.msra.mxu0 0
    %6377 = vmatpush.bf16.msra.mxu0 0
    %6378 = vmatpush.bf16.msra.mxu0 0
    %6379 = vmatpush.bf16.msra.mxu0 0
    %6380 = vmatpush.bf16.msra.mxu0 0
    %6381 = vmatpush.bf16.msra.mxu0 0
    %6382 = vmatpush.bf16.msra.mxu0 %v6181
    %6383 = vmatmul.f32.gmra.mxu0 %v6153
    %v6384 = vpop.f32.mrf.mxu0
    %v6385 = vadd.f32 0.0, %v6384
    %6386 = vdwg.mxu0
    %6387 = vmatpush.bf16.msra.mxu0 0
    %6388 = vmatpush.bf16.msra.mxu0 0
    %6389 = vmatpush.bf16.msra.mxu0 0
    %6390 = vmatpush.bf16.msra.mxu0 0
    %6391 = vmatpush.bf16.msra.mxu0 0
    %6392 = vmatpush.bf16.msra.mxu0 0
    %6393 = vmatpush.bf16.msra.mxu0 0
    %6394 = vmatpush.bf16.msra.mxu0 %v6183
    %6395 = vmatmul.f32.gmra.mxu0 %v6153
    %v6396 = vpop.f32.mrf.mxu0
    %v6397 = vadd.f32 0.0, %v6396
    %6398 = vdwg.mxu0
    %6399 = vmatpush.bf16.msra.mxu0 0
    %6400 = vmatpush.bf16.msra.mxu0 0
    %6401 = vmatpush.bf16.msra.mxu0 0
    %6402 = vmatpush.bf16.msra.mxu0 0
    %6403 = vmatpush.bf16.msra.mxu0 0
    %6404 = vmatpush.bf16.msra.mxu0 0
    %6405 = vmatpush.bf16.msra.mxu0 0
    %6406 = vmatpush.bf16.msra.mxu0 %v6185
    %6407 = vmatmul.f32.gmra.mxu0 %v6153
    %v6408 = vpop.f32.mrf.mxu0
    %v6409 = vadd.f32 0.0, %v6408
    %6410 = vdwg.mxu0
    %6411 = vmatpush.bf16.msra.mxu0 0
    %6412 = vmatpush.bf16.msra.mxu0 0
    %6413 = vmatpush.bf16.msra.mxu0 0
    %6414 = vmatpush.bf16.msra.mxu0 0
    %6415 = vmatpush.bf16.msra.mxu0 0
    %6416 = vmatpush.bf16.msra.mxu0 0
    %6417 = vmatpush.bf16.msra.mxu0 0
    %6418 = vmatpush.bf16.msra.mxu0 %v6187
    %6419 = vmatmul.f32.gmra.mxu0 %v6153
    %v6420 = vpop.f32.mrf.mxu0
    %v6421 = vadd.f32 0.0, %v6420
    %6422 = vdwg.mxu0
    %6423 = vmatpush.bf16.msra.mxu0 0
    %6424 = vmatpush.bf16.msra.mxu0 0
    %6425 = vmatpush.bf16.msra.mxu0 0
    %6426 = vmatpush.bf16.msra.mxu0 0
    %6427 = vmatpush.bf16.msra.mxu0 0
    %6428 = vmatpush.bf16.msra.mxu0 0
    %6429 = vmatpush.bf16.msra.mxu0 0
    %6430 = vmatpush.bf16.msra.mxu0 %v6189
    %6431 = vmatmul.f32.gmra.mxu0 %v6153
    %v6432 = vpop.f32.mrf.mxu0
    %v6433 = vadd.f32 0.0, %v6432
    %6434 = vdwg.mxu0
    %6435 = vmatpush.bf16.msra.mxu0 0
    %6436 = vmatpush.bf16.msra.mxu0 0
    %6437 = vmatpush.bf16.msra.mxu0 0
    %6438 = vmatpush.bf16.msra.mxu0 0
    %6439 = vmatpush.bf16.msra.mxu0 0
    %6440 = vmatpush.bf16.msra.mxu0 0
    %6441 = vmatpush.bf16.msra.mxu0 0
    %6442 = vmatpush.bf16.msra.mxu0 %v6191
    %6443 = vmatmul.f32.gmra.mxu0 %v6153
    %v6444 = vpop.f32.mrf.mxu0
    %v6445 = vadd.f32 0.0, %v6444
    %6446 = vdwg.mxu0
    %6447 = vmatpush.bf16.msra.mxu0 0
    %6448 = vmatpush.bf16.msra.mxu0 0
    %6449 = vmatpush.bf16.msra.mxu0 0
    %6450 = vmatpush.bf16.msra.mxu0 0
    %6451 = vmatpush.bf16.msra.mxu0 0
    %6452 = vmatpush.bf16.msra.mxu0 0
    %6453 = vmatpush.bf16.msra.mxu0 0
    %6454 = vmatpush.bf16.msra.mxu0 %v6193
    %6455 = vmatmul.f32.gmra.mxu0 %v6153
    %v6456 = vpop.f32.mrf.mxu0
    %v6457 = vadd.f32 0.0, %v6456
    %6458 = vdwg.mxu0
    %6459 = vmatpush.bf16.msra.mxu0 0
    %6460 = vmatpush.bf16.msra.mxu0 0
    %6461 = vmatpush.bf16.msra.mxu0 0
    %6462 = vmatpush.bf16.msra.mxu0 0
    %6463 = vmatpush.bf16.msra.mxu0 0
    %6464 = vmatpush.bf16.msra.mxu0 0
    %6465 = vmatpush.bf16.msra.mxu0 0
    %6466 = vmatpush.bf16.msra.mxu0 %v6195
    %6467 = vmatmul.f32.gmra.mxu0 %v6153
    %v6468 = vpop.f32.mrf.mxu0
    %v6469 = vadd.f32 0.0, %v6468
    %6470 = vdwg.mxu0
    %6471 = vmatpush.bf16.msra.mxu0 0
    %6472 = vmatpush.bf16.msra.mxu0 0
    %6473 = vmatpush.bf16.msra.mxu0 0
    %6474 = vmatpush.bf16.msra.mxu0 0
    %6475 = vmatpush.bf16.msra.mxu0 0
    %6476 = vmatpush.bf16.msra.mxu0 0
    %6477 = vmatpush.bf16.msra.mxu0 0
    %6478 = vmatpush.bf16.msra.mxu0 %v6197
    %6479 = vmatmul.f32.gmra.mxu0 %v6153
    %v6480 = vpop.f32.mrf.mxu0
    %v6481 = vadd.f32 0.0, %v6480
    %6482 = vdwg.mxu0
    %6483 = vmatpush.bf16.msra.mxu0 0
    %6484 = vmatpush.bf16.msra.mxu0 0
    %6485 = vmatpush.bf16.msra.mxu0 0
    %6486 = vmatpush.bf16.msra.mxu0 0
    %6487 = vmatpush.bf16.msra.mxu0 0
    %6488 = vmatpush.bf16.msra.mxu0 0
    %6489 = vmatpush.bf16.msra.mxu0 0
    %6490 = vmatpush.bf16.msra.mxu0 %v6199
    %6491 = vmatmul.f32.gmra.mxu0 %v6153
    %v6492 = vpop.f32.mrf.mxu0
    %v6493 = vadd.f32 0.0, %v6492
    %6494 = vdwg.mxu0
    %6495 = vmatpush.bf16.msra.mxu0 0
    %6496 = vmatpush.bf16.msra.mxu0 0
    %6497 = vmatpush.bf16.msra.mxu0 0
    %6498 = vmatpush.bf16.msra.mxu0 0
    %6499 = vmatpush.bf16.msra.mxu0 0
    %6500 = vmatpush.bf16.msra.mxu0 0
    %6501 = vmatpush.bf16.msra.mxu0 0
    %6502 = vmatpush.bf16.msra.mxu0 %v6201
    %6503 = vmatmul.f32.gmra.mxu0 %v6153
    %v6504 = vpop.f32.mrf.mxu0
    %v6505 = vadd.f32 0.0, %v6504
    %6506 = vdwg.mxu0
    %6507 = vmatpush.bf16.msra.mxu0 0
    %6508 = vmatpush.bf16.msra.mxu0 0
    %6509 = vmatpush.bf16.msra.mxu0 0
    %6510 = vmatpush.bf16.msra.mxu0 0
    %6511 = vmatpush.bf16.msra.mxu0 0
    %6512 = vmatpush.bf16.msra.mxu0 0
    %6513 = vmatpush.bf16.msra.mxu0 0
    %6514 = vmatpush.bf16.msra.mxu0 %v6203
    %6515 = vmatmul.f32.gmra.mxu0 %v6153
    %v6516 = vpop.f32.mrf.mxu0
    %v6517 = vadd.f32 0.0, %v6516
    %6518 = vdwg.mxu0
    %6519 = vmatpush.bf16.msra.mxu0 0
    %6520 = vmatpush.bf16.msra.mxu0 0
    %6521 = vmatpush.bf16.msra.mxu0 0
    %6522 = vmatpush.bf16.msra.mxu0 0
    %6523 = vmatpush.bf16.msra.mxu0 0
    %6524 = vmatpush.bf16.msra.mxu0 0
    %6525 = vmatpush.bf16.msra.mxu0 0
    %6526 = vmatpush.bf16.msra.mxu0 %v6205
    %6527 = vmatmul.f32.gmra.mxu0 %v6153
    %v6528 = vpop.f32.mrf.mxu0
    %v6529 = vadd.f32 0.0, %v6528
    %6530 = vdwg.mxu0
    %6531 = vmatpush.bf16.msra.mxu0 0
    %6532 = vmatpush.bf16.msra.mxu0 0
    %6533 = vmatpush.bf16.msra.mxu0 0
    %6534 = vmatpush.bf16.msra.mxu0 0
    %6535 = vmatpush.bf16.msra.mxu0 0
    %6536 = vmatpush.bf16.msra.mxu0 0
    %6537 = vmatpush.bf16.msra.mxu0 0
    %6538 = vmatpush.bf16.msra.mxu0 %v6207
    %6539 = vmatmul.f32.gmra.mxu0 %v6153
    %v6540 = vpop.f32.mrf.mxu0
    %v6541 = vadd.f32 0.0, %v6540
    %6542 = vdwg.mxu0
    %6543 = vmatpush.bf16.msra.mxu0 0
    %6544 = vmatpush.bf16.msra.mxu0 0
    %6545 = vmatpush.bf16.msra.mxu0 0
    %6546 = vmatpush.bf16.msra.mxu0 0
    %6547 = vmatpush.bf16.msra.mxu0 0
    %6548 = vmatpush.bf16.msra.mxu0 0
    %6549 = vmatpush.bf16.msra.mxu0 0
    %6550 = vmatpush.bf16.msra.mxu0 %v6209
    %6551 = vmatmul.f32.gmra.mxu0 %v6153
    %v6552 = vpop.f32.mrf.mxu0
    %v6553 = vadd.f32 0.0, %v6552
    %6554 = vdwg.mxu0
    %6555 = vmatpush.bf16.msra.mxu0 0
    %6556 = vmatpush.bf16.msra.mxu0 0
    %6557 = vmatpush.bf16.msra.mxu0 0
    %6558 = vmatpush.bf16.msra.mxu0 0
    %6559 = vmatpush.bf16.msra.mxu0 0
    %6560 = vmatpush.bf16.msra.mxu0 0
    %6561 = vmatpush.bf16.msra.mxu0 0
    %6562 = vmatpush.bf16.msra.mxu0 %v6211
    %6563 = vmatmul.f32.gmra.mxu0 %v6153
    %v6564 = vpop.f32.mrf.mxu0
    %v6565 = vadd.f32 0.0, %v6564
    %6566 = vdwg.mxu0
    %6567 = vmatpush.bf16.msra.mxu0 0
    %6568 = vmatpush.bf16.msra.mxu0 0
    %6569 = vmatpush.bf16.msra.mxu0 0
    %6570 = vmatpush.bf16.msra.mxu0 0
    %6571 = vmatpush.bf16.msra.mxu0 0
    %6572 = vmatpush.bf16.msra.mxu0 0
    %6573 = vmatpush.bf16.msra.mxu0 0
    %6574 = vmatpush.bf16.msra.mxu0 %v6213
    %6575 = vmatmul.f32.gmra.mxu0 %v6153
    %v6576 = vpop.f32.mrf.mxu0
    %v6577 = vadd.f32 0.0, %v6576
    %6578 = vdwg.mxu0
    %6579 = vmatpush.bf16.msra.mxu0 0
    %6580 = vmatpush.bf16.msra.mxu0 0
    %6581 = vmatpush.bf16.msra.mxu0 0
    %6582 = vmatpush.bf16.msra.mxu0 0
    %6583 = vmatpush.bf16.msra.mxu0 0
    %6584 = vmatpush.bf16.msra.mxu0 0
    %6585 = vmatpush.bf16.msra.mxu0 0
    %6586 = vmatpush.bf16.msra.mxu0 %v6215
    %6587 = vmatmul.f32.gmra.mxu0 %v6153
    %v6588 = vpop.f32.mrf.mxu0
    %v6589 = vadd.f32 0.0, %v6588
    %6590 = vdwg.mxu0
    %6591 = vmatpush.bf16.msra.mxu0 0
    %6592 = vmatpush.bf16.msra.mxu0 0
    %6593 = vmatpush.bf16.msra.mxu0 0
    %6594 = vmatpush.bf16.msra.mxu0 0
    %6595 = vmatpush.bf16.msra.mxu0 0
    %6596 = vmatpush.bf16.msra.mxu0 0
    %6597 = vmatpush.bf16.msra.mxu0 0
    %6598 = vmatpush.bf16.msra.mxu0 %v6217
    %6599 = vmatmul.f32.gmra.mxu0 %v6153
    %v6600 = vpop.f32.mrf.mxu0
    %v6601 = vadd.f32 0.0, %v6600
    %6602 = vdwg.mxu0
    %v6605 = vperm.slane %v383, %v550
    %v6606 = vperm.slane %v388, %v550
    %v6607 = vsel %vm553, %v6606, %v6605
    %6609 = vst [vmem:[#allocation1] ss:$4 sm:$0xff] %v515
    %s6611 = scalar_lea.vmem [#allocation1], 32
    %6612 = vst [vmem:[%s6611] ss:$4 sm:$0xff] %v516
    %v6613 = vld.sshfl [vmem:[#allocation1] sm:$0xff pattern:$0x73625140]
    %v6614 = vld.sshfl [vmem:[#allocation1 + $0x8] sm:$0xff pattern:$0x73625140]
    %v6615 = vld.sshfl [vmem:[#allocation1 + $0x10] sm:$0xff pattern:$0x73625140]
    %v6616 = vld.sshfl [vmem:[#allocation1 + $0x18] sm:$0xff pattern:$0x73625140]
    %v6617 = vld.sshfl [vmem:[#allocation1 + $0x20] sm:$0xff pattern:$0x73625140]
    %v6618 = vld.sshfl [vmem:[#allocation1 + $0x28] sm:$0xff pattern:$0x73625140]
    %v6619 = vld.sshfl [vmem:[#allocation1 + $0x30] sm:$0xff pattern:$0x73625140]
    %v6620 = vld.sshfl [vmem:[#allocation1 + $0x38] sm:$0xff pattern:$0x73625140]
    %6622 = vst [vmem:[#allocation1] ss:$4 sm:$0xff] %v517
    %6624 = vst [vmem:[%s6611] ss:$4 sm:$0xff] %v518
    %v6625 = vld.sshfl [vmem:[#allocation1] sm:$0xff pattern:$0x73625140]
    %v6626 = vld.sshfl [vmem:[#allocation1 + $0x8] sm:$0xff pattern:$0x73625140]
    %v6627 = vld.sshfl [vmem:[#allocation1 + $0x10] sm:$0xff pattern:$0x73625140]
    %v6628 = vld.sshfl [vmem:[#allocation1 + $0x18] sm:$0xff pattern:$0x73625140]
    %v6629 = vld.sshfl [vmem:[#allocation1 + $0x20] sm:$0xff pattern:$0x73625140]
    %v6630 = vld.sshfl [vmem:[#allocation1 + $0x28] sm:$0xff pattern:$0x73625140]
    %v6631 = vld.sshfl [vmem:[#allocation1 + $0x30] sm:$0xff pattern:$0x73625140]
    %v6632 = vld.sshfl [vmem:[#allocation1 + $0x38] sm:$0xff pattern:$0x73625140]
    %6634 = vst [vmem:[#allocation1] ss:$4 sm:$0xff] %v519
    %6636 = vst [vmem:[%s6611] ss:$4 sm:$0xff] %v520
    %v6637 = vld.sshfl [vmem:[#allocation1] sm:$0xff pattern:$0x73625140]
    %v6638 = vld.sshfl [vmem:[#allocation1 + $0x8] sm:$0xff pattern:$0x73625140]
    %v6639 = vld.sshfl [vmem:[#allocation1 + $0x10] sm:$0xff pattern:$0x73625140]
    %v6640 = vld.sshfl [vmem:[#allocation1 + $0x18] sm:$0xff pattern:$0x73625140]
    %v6641 = vld.sshfl [vmem:[#allocation1 + $0x20] sm:$0xff pattern:$0x73625140]
    %v6642 = vld.sshfl [vmem:[#allocation1 + $0x28] sm:$0xff pattern:$0x73625140]
    %v6643 = vld.sshfl [vmem:[#allocation1 + $0x30] sm:$0xff pattern:$0x73625140]
    %v6644 = vld.sshfl [vmem:[#allocation1 + $0x38] sm:$0xff pattern:$0x73625140]
    %6646 = vst [vmem:[#allocation1] ss:$4 sm:$0xff] %v521
    %6648 = vst [vmem:[%s6611] ss:$4 sm:$0xff] %v522
    %v6649 = vld.sshfl [vmem:[#allocation1] sm:$0xff pattern:$0x73625140]
    %v6650 = vld.sshfl [vmem:[#allocation1 + $0x8] sm:$0xff pattern:$0x73625140]
    %v6651 = vld.sshfl [vmem:[#allocation1 + $0x10] sm:$0xff pattern:$0x73625140]
    %v6652 = vld.sshfl [vmem:[#allocation1 + $0x18] sm:$0xff pattern:$0x73625140]
    %v6653 = vld.sshfl [vmem:[#allocation1 + $0x20] sm:$0xff pattern:$0x73625140]
    %v6654 = vld.sshfl [vmem:[#allocation1 + $0x28] sm:$0xff pattern:$0x73625140]
    %v6655 = vld.sshfl [vmem:[#allocation1 + $0x30] sm:$0xff pattern:$0x73625140]
    %v6656 = vld.sshfl [vmem:[#allocation1 + $0x38] sm:$0xff pattern:$0x73625140]
    %v6657 = vsel %vm604, %v6607, 0
    %v6659 = vand.u32 %v6613, %v610
    %v6661 = vand.u32 %v6614, %v610
    %v6663 = vand.u32 %v6615, %v610
    %v6665 = vand.u32 %v6616, %v610
    %v6667 = vand.u32 %v6617, %v610
    %v6669 = vand.u32 %v6618, %v610
    %v6671 = vand.u32 %v6619, %v610
    %v6673 = vand.u32 %v6620, %v610
    %v6675 = vand.u32 %v6625, %v610
    %v6677 = vand.u32 %v6626, %v610
    %v6679 = vand.u32 %v6627, %v610
    %v6681 = vand.u32 %v6628, %v610
    %v6683 = vand.u32 %v6629, %v610
    %v6685 = vand.u32 %v6630, %v610
    %v6687 = vand.u32 %v6631, %v610
    %v6689 = vand.u32 %v6632, %v610
    %v6691 = vand.u32 %v6637, %v610
    %v6693 = vand.u32 %v6638, %v610
    %v6695 = vand.u32 %v6639, %v610
    %v6697 = vand.u32 %v6640, %v610
    %v6699 = vand.u32 %v6641, %v610
    %v6701 = vand.u32 %v6642, %v610
    %v6703 = vand.u32 %v6643, %v610
    %v6705 = vand.u32 %v6644, %v610
    %v6707 = vand.u32 %v6649, %v610
    %v6709 = vand.u32 %v6650, %v610
    %v6711 = vand.u32 %v6651, %v610
    %v6713 = vand.u32 %v6652, %v610
    %v6715 = vand.u32 %v6653, %v610
    %v6717 = vand.u32 %v6654, %v610
    %v6719 = vand.u32 %v6655, %v610
    %v6721 = vand.u32 %v6656, %v610
    %6723 = vmatpush.bf16.msra.mxu0 0
    %6724 = vmatpush.bf16.msra.mxu0 0
    %6725 = vmatpush.bf16.msra.mxu0 0
    %6726 = vmatpush.bf16.msra.mxu0 0
    %6727 = vmatpush.bf16.msra.mxu0 0
    %6728 = vmatpush.bf16.msra.mxu0 0
    %6729 = vmatpush.bf16.msra.mxu0 0
    %6730 = vmatpush.bf16.msra.mxu0 %v6659
    %6731 = vmatmul.f32.gmra.mxu0 %v6657
    %v6732 = vpop.f32.mrf.mxu0
    %v6733 = vadd.f32 0.0, %v6732
    %6734 = vdwg.mxu0
    %6735 = vmatpush.bf16.msra.mxu0 0
    %6736 = vmatpush.bf16.msra.mxu0 0
    %6737 = vmatpush.bf16.msra.mxu0 0
    %6738 = vmatpush.bf16.msra.mxu0 0
    %6739 = vmatpush.bf16.msra.mxu0 0
    %6740 = vmatpush.bf16.msra.mxu0 0
    %6741 = vmatpush.bf16.msra.mxu0 0
    %6742 = vmatpush.bf16.msra.mxu0 %v6661
    %6743 = vmatmul.f32.gmra.mxu0 %v6657
    %v6744 = vpop.f32.mrf.mxu0
    %v6745 = vadd.f32 0.0, %v6744
    %6746 = vdwg.mxu0
    %6747 = vmatpush.bf16.msra.mxu0 0
    %6748 = vmatpush.bf16.msra.mxu0 0
    %6749 = vmatpush.bf16.msra.mxu0 0
    %6750 = vmatpush.bf16.msra.mxu0 0
    %6751 = vmatpush.bf16.msra.mxu0 0
    %6752 = vmatpush.bf16.msra.mxu0 0
    %6753 = vmatpush.bf16.msra.mxu0 0
    %6754 = vmatpush.bf16.msra.mxu0 %v6663
    %6755 = vmatmul.f32.gmra.mxu0 %v6657
    %v6756 = vpop.f32.mrf.mxu0
    %v6757 = vadd.f32 0.0, %v6756
    %6758 = vdwg.mxu0
    %6759 = vmatpush.bf16.msra.mxu0 0
    %6760 = vmatpush.bf16.msra.mxu0 0
    %6761 = vmatpush.bf16.msra.mxu0 0
    %6762 = vmatpush.bf16.msra.mxu0 0
    %6763 = vmatpush.bf16.msra.mxu0 0
    %6764 = vmatpush.bf16.msra.mxu0 0
    %6765 = vmatpush.bf16.msra.mxu0 0
    %6766 = vmatpush.bf16.msra.mxu0 %v6665
    %6767 = vmatmul.f32.gmra.mxu0 %v6657
    %v6768 = vpop.f32.mrf.mxu0
    %v6769 = vadd.f32 0.0, %v6768
    %6770 = vdwg.mxu0
    %6771 = vmatpush.bf16.msra.mxu0 0
    %6772 = vmatpush.bf16.msra.mxu0 0
    %6773 = vmatpush.bf16.msra.mxu0 0
    %6774 = vmatpush.bf16.msra.mxu0 0
    %6775 = vmatpush.bf16.msra.mxu0 0
    %6776 = vmatpush.bf16.msra.mxu0 0
    %6777 = vmatpush.bf16.msra.mxu0 0
    %6778 = vmatpush.bf16.msra.mxu0 %v6667
    %6779 = vmatmul.f32.gmra.mxu0 %v6657
    %v6780 = vpop.f32.mrf.mxu0
    %v6781 = vadd.f32 0.0, %v6780
    %6782 = vdwg.mxu0
    %6783 = vmatpush.bf16.msra.mxu0 0
    %6784 = vmatpush.bf16.msra.mxu0 0
    %6785 = vmatpush.bf16.msra.mxu0 0
    %6786 = vmatpush.bf16.msra.mxu0 0
    %6787 = vmatpush.bf16.msra.mxu0 0
    %6788 = vmatpush.bf16.msra.mxu0 0
    %6789 = vmatpush.bf16.msra.mxu0 0
    %6790 = vmatpush.bf16.msra.mxu0 %v6669
    %6791 = vmatmul.f32.gmra.mxu0 %v6657
    %v6792 = vpop.f32.mrf.mxu0
    %v6793 = vadd.f32 0.0, %v6792
    %6794 = vdwg.mxu0
    %6795 = vmatpush.bf16.msra.mxu0 0
    %6796 = vmatpush.bf16.msra.mxu0 0
    %6797 = vmatpush.bf16.msra.mxu0 0
    %6798 = vmatpush.bf16.msra.mxu0 0
    %6799 = vmatpush.bf16.msra.mxu0 0
    %6800 = vmatpush.bf16.msra.mxu0 0
    %6801 = vmatpush.bf16.msra.mxu0 0
    %6802 = vmatpush.bf16.msra.mxu0 %v6671
    %6803 = vmatmul.f32.gmra.mxu0 %v6657
    %v6804 = vpop.f32.mrf.mxu0
    %v6805 = vadd.f32 0.0, %v6804
    %6806 = vdwg.mxu0
    %6807 = vmatpush.bf16.msra.mxu0 0
    %6808 = vmatpush.bf16.msra.mxu0 0
    %6809 = vmatpush.bf16.msra.mxu0 0
    %6810 = vmatpush.bf16.msra.mxu0 0
    %6811 = vmatpush.bf16.msra.mxu0 0
    %6812 = vmatpush.bf16.msra.mxu0 0
    %6813 = vmatpush.bf16.msra.mxu0 0
    %6814 = vmatpush.bf16.msra.mxu0 %v6673
    %6815 = vmatmul.f32.gmra.mxu0 %v6657
    %v6816 = vpop.f32.mrf.mxu0
    %v6817 = vadd.f32 0.0, %v6816
    %6818 = vdwg.mxu0
    %6819 = vmatpush.bf16.msra.mxu0 0
    %6820 = vmatpush.bf16.msra.mxu0 0
    %6821 = vmatpush.bf16.msra.mxu0 0
    %6822 = vmatpush.bf16.msra.mxu0 0
    %6823 = vmatpush.bf16.msra.mxu0 0
    %6824 = vmatpush.bf16.msra.mxu0 0
    %6825 = vmatpush.bf16.msra.mxu0 0
    %6826 = vmatpush.bf16.msra.mxu0 %v6675
    %6827 = vmatmul.f32.gmra.mxu0 %v6657
    %v6828 = vpop.f32.mrf.mxu0
    %v6829 = vadd.f32 0.0, %v6828
    %6830 = vdwg.mxu0
    %6831 = vmatpush.bf16.msra.mxu0 0
    %6832 = vmatpush.bf16.msra.mxu0 0
    %6833 = vmatpush.bf16.msra.mxu0 0
    %6834 = vmatpush.bf16.msra.mxu0 0
    %6835 = vmatpush.bf16.msra.mxu0 0
    %6836 = vmatpush.bf16.msra.mxu0 0
    %6837 = vmatpush.bf16.msra.mxu0 0
    %6838 = vmatpush.bf16.msra.mxu0 %v6677
    %6839 = vmatmul.f32.gmra.mxu0 %v6657
    %v6840 = vpop.f32.mrf.mxu0
    %v6841 = vadd.f32 0.0, %v6840
    %6842 = vdwg.mxu0
    %6843 = vmatpush.bf16.msra.mxu0 0
    %6844 = vmatpush.bf16.msra.mxu0 0
    %6845 = vmatpush.bf16.msra.mxu0 0
    %6846 = vmatpush.bf16.msra.mxu0 0
    %6847 = vmatpush.bf16.msra.mxu0 0
    %6848 = vmatpush.bf16.msra.mxu0 0
    %6849 = vmatpush.bf16.msra.mxu0 0
    %6850 = vmatpush.bf16.msra.mxu0 %v6679
    %6851 = vmatmul.f32.gmra.mxu0 %v6657
    %v6852 = vpop.f32.mrf.mxu0
    %v6853 = vadd.f32 0.0, %v6852
    %6854 = vdwg.mxu0
    %6855 = vmatpush.bf16.msra.mxu0 0
    %6856 = vmatpush.bf16.msra.mxu0 0
    %6857 = vmatpush.bf16.msra.mxu0 0
    %6858 = vmatpush.bf16.msra.mxu0 0
    %6859 = vmatpush.bf16.msra.mxu0 0
    %6860 = vmatpush.bf16.msra.mxu0 0
    %6861 = vmatpush.bf16.msra.mxu0 0
    %6862 = vmatpush.bf16.msra.mxu0 %v6681
    %6863 = vmatmul.f32.gmra.mxu0 %v6657
    %v6864 = vpop.f32.mrf.mxu0
    %v6865 = vadd.f32 0.0, %v6864
    %6866 = vdwg.mxu0
    %6867 = vmatpush.bf16.msra.mxu0 0
    %6868 = vmatpush.bf16.msra.mxu0 0
    %6869 = vmatpush.bf16.msra.mxu0 0
    %6870 = vmatpush.bf16.msra.mxu0 0
    %6871 = vmatpush.bf16.msra.mxu0 0
    %6872 = vmatpush.bf16.msra.mxu0 0
    %6873 = vmatpush.bf16.msra.mxu0 0
    %6874 = vmatpush.bf16.msra.mxu0 %v6683
    %6875 = vmatmul.f32.gmra.mxu0 %v6657
    %v6876 = vpop.f32.mrf.mxu0
    %v6877 = vadd.f32 0.0, %v6876
    %6878 = vdwg.mxu0
    %6879 = vmatpush.bf16.msra.mxu0 0
    %6880 = vmatpush.bf16.msra.mxu0 0
    %6881 = vmatpush.bf16.msra.mxu0 0
    %6882 = vmatpush.bf16.msra.mxu0 0
    %6883 = vmatpush.bf16.msra.mxu0 0
    %6884 = vmatpush.bf16.msra.mxu0 0
    %6885 = vmatpush.bf16.msra.mxu0 0
    %6886 = vmatpush.bf16.msra.mxu0 %v6685
    %6887 = vmatmul.f32.gmra.mxu0 %v6657
    %v6888 = vpop.f32.mrf.mxu0
    %v6889 = vadd.f32 0.0, %v6888
    %6890 = vdwg.mxu0
    %6891 = vmatpush.bf16.msra.mxu0 0
    %6892 = vmatpush.bf16.msra.mxu0 0
    %6893 = vmatpush.bf16.msra.mxu0 0
    %6894 = vmatpush.bf16.msra.mxu0 0
    %6895 = vmatpush.bf16.msra.mxu0 0
    %6896 = vmatpush.bf16.msra.mxu0 0
    %6897 = vmatpush.bf16.msra.mxu0 0
    %6898 = vmatpush.bf16.msra.mxu0 %v6687
    %6899 = vmatmul.f32.gmra.mxu0 %v6657
    %v6900 = vpop.f32.mrf.mxu0
    %v6901 = vadd.f32 0.0, %v6900
    %6902 = vdwg.mxu0
    %6903 = vmatpush.bf16.msra.mxu0 0
    %6904 = vmatpush.bf16.msra.mxu0 0
    %6905 = vmatpush.bf16.msra.mxu0 0
    %6906 = vmatpush.bf16.msra.mxu0 0
    %6907 = vmatpush.bf16.msra.mxu0 0
    %6908 = vmatpush.bf16.msra.mxu0 0
    %6909 = vmatpush.bf16.msra.mxu0 0
    %6910 = vmatpush.bf16.msra.mxu0 %v6689
    %6911 = vmatmul.f32.gmra.mxu0 %v6657
    %v6912 = vpop.f32.mrf.mxu0
    %v6913 = vadd.f32 0.0, %v6912
    %6914 = vdwg.mxu0
    %6915 = vmatpush.bf16.msra.mxu0 0
    %6916 = vmatpush.bf16.msra.mxu0 0
    %6917 = vmatpush.bf16.msra.mxu0 0
    %6918 = vmatpush.bf16.msra.mxu0 0
    %6919 = vmatpush.bf16.msra.mxu0 0
    %6920 = vmatpush.bf16.msra.mxu0 0
    %6921 = vmatpush.bf16.msra.mxu0 0
    %6922 = vmatpush.bf16.msra.mxu0 %v6691
    %6923 = vmatmul.f32.gmra.mxu0 %v6657
    %v6924 = vpop.f32.mrf.mxu0
    %v6925 = vadd.f32 0.0, %v6924
    %6926 = vdwg.mxu0
    %6927 = vmatpush.bf16.msra.mxu0 0
    %6928 = vmatpush.bf16.msra.mxu0 0
    %6929 = vmatpush.bf16.msra.mxu0 0
    %6930 = vmatpush.bf16.msra.mxu0 0
    %6931 = vmatpush.bf16.msra.mxu0 0
    %6932 = vmatpush.bf16.msra.mxu0 0
    %6933 = vmatpush.bf16.msra.mxu0 0
    %6934 = vmatpush.bf16.msra.mxu0 %v6693
    %6935 = vmatmul.f32.gmra.mxu0 %v6657
    %v6936 = vpop.f32.mrf.mxu0
    %v6937 = vadd.f32 0.0, %v6936
    %6938 = vdwg.mxu0
    %6939 = vmatpush.bf16.msra.mxu0 0
    %6940 = vmatpush.bf16.msra.mxu0 0
    %6941 = vmatpush.bf16.msra.mxu0 0
    %6942 = vmatpush.bf16.msra.mxu0 0
    %6943 = vmatpush.bf16.msra.mxu0 0
    %6944 = vmatpush.bf16.msra.mxu0 0
    %6945 = vmatpush.bf16.msra.mxu0 0
    %6946 = vmatpush.bf16.msra.mxu0 %v6695
    %6947 = vmatmul.f32.gmra.mxu0 %v6657
    %v6948 = vpop.f32.mrf.mxu0
    %v6949 = vadd.f32 0.0, %v6948
    %6950 = vdwg.mxu0
    %6951 = vmatpush.bf16.msra.mxu0 0
    %6952 = vmatpush.bf16.msra.mxu0 0
    %6953 = vmatpush.bf16.msra.mxu0 0
    %6954 = vmatpush.bf16.msra.mxu0 0
    %6955 = vmatpush.bf16.msra.mxu0 0
    %6956 = vmatpush.bf16.msra.mxu0 0
    %6957 = vmatpush.bf16.msra.mxu0 0
    %6958 = vmatpush.bf16.msra.mxu0 %v6697
    %6959 = vmatmul.f32.gmra.mxu0 %v6657
    %v6960 = vpop.f32.mrf.mxu0
    %v6961 = vadd.f32 0.0, %v6960
    %6962 = vdwg.mxu0
    %6963 = vmatpush.bf16.msra.mxu0 0
    %6964 = vmatpush.bf16.msra.mxu0 0
    %6965 = vmatpush.bf16.msra.mxu0 0
    %6966 = vmatpush.bf16.msra.mxu0 0
    %6967 = vmatpush.bf16.msra.mxu0 0
    %6968 = vmatpush.bf16.msra.mxu0 0
    %6969 = vmatpush.bf16.msra.mxu0 0
    %6970 = vmatpush.bf16.msra.mxu0 %v6699
    %6971 = vmatmul.f32.gmra.mxu0 %v6657
    %v6972 = vpop.f32.mrf.mxu0
    %v6973 = vadd.f32 0.0, %v6972
    %6974 = vdwg.mxu0
    %6975 = vmatpush.bf16.msra.mxu0 0
    %6976 = vmatpush.bf16.msra.mxu0 0
    %6977 = vmatpush.bf16.msra.mxu0 0
    %6978 = vmatpush.bf16.msra.mxu0 0
    %6979 = vmatpush.bf16.msra.mxu0 0
    %6980 = vmatpush.bf16.msra.mxu0 0
    %6981 = vmatpush.bf16.msra.mxu0 0
    %6982 = vmatpush.bf16.msra.mxu0 %v6701
    %6983 = vmatmul.f32.gmra.mxu0 %v6657
    %v6984 = vpop.f32.mrf.mxu0
    %v6985 = vadd.f32 0.0, %v6984
    %6986 = vdwg.mxu0
    %6987 = vmatpush.bf16.msra.mxu0 0
    %6988 = vmatpush.bf16.msra.mxu0 0
    %6989 = vmatpush.bf16.msra.mxu0 0
    %6990 = vmatpush.bf16.msra.mxu0 0
    %6991 = vmatpush.bf16.msra.mxu0 0
    %6992 = vmatpush.bf16.msra.mxu0 0
    %6993 = vmatpush.bf16.msra.mxu0 0
    %6994 = vmatpush.bf16.msra.mxu0 %v6703
    %6995 = vmatmul.f32.gmra.mxu0 %v6657
    %v6996 = vpop.f32.mrf.mxu0
    %v6997 = vadd.f32 0.0, %v6996
    %6998 = vdwg.mxu0
    %6999 = vmatpush.bf16.msra.mxu0 0
    %7000 = vmatpush.bf16.msra.mxu0 0
    %7001 = vmatpush.bf16.msra.mxu0 0
    %7002 = vmatpush.bf16.msra.mxu0 0
    %7003 = vmatpush.bf16.msra.mxu0 0
    %7004 = vmatpush.bf16.msra.mxu0 0
    %7005 = vmatpush.bf16.msra.mxu0 0
    %7006 = vmatpush.bf16.msra.mxu0 %v6705
    %7007 = vmatmul.f32.gmra.mxu0 %v6657
    %v7008 = vpop.f32.mrf.mxu0
    %v7009 = vadd.f32 0.0, %v7008
    %7010 = vdwg.mxu0
    %7011 = vmatpush.bf16.msra.mxu0 0
    %7012 = vmatpush.bf16.msra.mxu0 0
    %7013 = vmatpush.bf16.msra.mxu0 0
    %7014 = vmatpush.bf16.msra.mxu0 0
    %7015 = vmatpush.bf16.msra.mxu0 0
    %7016 = vmatpush.bf16.msra.mxu0 0
    %7017 = vmatpush.bf16.msra.mxu0 0
    %7018 = vmatpush.bf16.msra.mxu0 %v6707
    %7019 = vmatmul.f32.gmra.mxu0 %v6657
    %v7020 = vpop.f32.mrf.mxu0
    %v7021 = vadd.f32 0.0, %v7020
    %7022 = vdwg.mxu0
    %7023 = vmatpush.bf16.msra.mxu0 0
    %7024 = vmatpush.bf16.msra.mxu0 0
    %7025 = vmatpush.bf16.msra.mxu0 0
    %7026 = vmatpush.bf16.msra.mxu0 0
    %7027 = vmatpush.bf16.msra.mxu0 0
    %7028 = vmatpush.bf16.msra.mxu0 0
    %7029 = vmatpush.bf16.msra.mxu0 0
    %7030 = vmatpush.bf16.msra.mxu0 %v6709
    %7031 = vmatmul.f32.gmra.mxu0 %v6657
    %v7032 = vpop.f32.mrf.mxu0
    %v7033 = vadd.f32 0.0, %v7032
    %7034 = vdwg.mxu0
    %7035 = vmatpush.bf16.msra.mxu0 0
    %7036 = vmatpush.bf16.msra.mxu0 0
    %7037 = vmatpush.bf16.msra.mxu0 0
    %7038 = vmatpush.bf16.msra.mxu0 0
    %7039 = vmatpush.bf16.msra.mxu0 0
    %7040 = vmatpush.bf16.msra.mxu0 0
    %7041 = vmatpush.bf16.msra.mxu0 0
    %7042 = vmatpush.bf16.msra.mxu0 %v6711
    %7043 = vmatmul.f32.gmra.mxu0 %v6657
    %v7044 = vpop.f32.mrf.mxu0
    %v7045 = vadd.f32 0.0, %v7044
    %7046 = vdwg.mxu0
    %7047 = vmatpush.bf16.msra.mxu0 0
    %7048 = vmatpush.bf16.msra.mxu0 0
    %7049 = vmatpush.bf16.msra.mxu0 0
    %7050 = vmatpush.bf16.msra.mxu0 0
    %7051 = vmatpush.bf16.msra.mxu0 0
    %7052 = vmatpush.bf16.msra.mxu0 0
    %7053 = vmatpush.bf16.msra.mxu0 0
    %7054 = vmatpush.bf16.msra.mxu0 %v6713
    %7055 = vmatmul.f32.gmra.mxu0 %v6657
    %v7056 = vpop.f32.mrf.mxu0
    %v7057 = vadd.f32 0.0, %v7056
    %7058 = vdwg.mxu0
    %7059 = vmatpush.bf16.msra.mxu0 0
    %7060 = vmatpush.bf16.msra.mxu0 0
    %7061 = vmatpush.bf16.msra.mxu0 0
    %7062 = vmatpush.bf16.msra.mxu0 0
    %7063 = vmatpush.bf16.msra.mxu0 0
    %7064 = vmatpush.bf16.msra.mxu0 0
    %7065 = vmatpush.bf16.msra.mxu0 0
    %7066 = vmatpush.bf16.msra.mxu0 %v6715
    %7067 = vmatmul.f32.gmra.mxu0 %v6657
    %v7068 = vpop.f32.mrf.mxu0
    %v7069 = vadd.f32 0.0, %v7068
    %7070 = vdwg.mxu0
    %7071 = vmatpush.bf16.msra.mxu0 0
    %7072 = vmatpush.bf16.msra.mxu0 0
    %7073 = vmatpush.bf16.msra.mxu0 0
    %7074 = vmatpush.bf16.msra.mxu0 0
    %7075 = vmatpush.bf16.msra.mxu0 0
    %7076 = vmatpush.bf16.msra.mxu0 0
    %7077 = vmatpush.bf16.msra.mxu0 0
    %7078 = vmatpush.bf16.msra.mxu0 %v6717
    %7079 = vmatmul.f32.gmra.mxu0 %v6657
    %v7080 = vpop.f32.mrf.mxu0
    %v7081 = vadd.f32 0.0, %v7080
    %7082 = vdwg.mxu0
    %7083 = vmatpush.bf16.msra.mxu0 0
    %7084 = vmatpush.bf16.msra.mxu0 0
    %7085 = vmatpush.bf16.msra.mxu0 0
    %7086 = vmatpush.bf16.msra.mxu0 0
    %7087 = vmatpush.bf16.msra.mxu0 0
    %7088 = vmatpush.bf16.msra.mxu0 0
    %7089 = vmatpush.bf16.msra.mxu0 0
    %7090 = vmatpush.bf16.msra.mxu0 %v6719
    %7091 = vmatmul.f32.gmra.mxu0 %v6657
    %v7092 = vpop.f32.mrf.mxu0
    %v7093 = vadd.f32 0.0, %v7092
    %7094 = vdwg.mxu0
    %7095 = vmatpush.bf16.msra.mxu0 0
    %7096 = vmatpush.bf16.msra.mxu0 0
    %7097 = vmatpush.bf16.msra.mxu0 0
    %7098 = vmatpush.bf16.msra.mxu0 0
    %7099 = vmatpush.bf16.msra.mxu0 0
    %7100 = vmatpush.bf16.msra.mxu0 0
    %7101 = vmatpush.bf16.msra.mxu0 0
    %7102 = vmatpush.bf16.msra.mxu0 %v6721
    %7103 = vmatmul.f32.gmra.mxu0 %v6657
    %v7104 = vpop.f32.mrf.mxu0
    %v7105 = vadd.f32 0.0, %v7104
    %7106 = vdwg.mxu0
    %v7109 = vperm.slane %v393, %v550
    %v7110 = vperm.slane %v398, %v550
    %v7111 = vsel %vm553, %v7110, %v7109
    %7113 = vst [vmem:[#allocation1] ss:$4 sm:$0xff] %v523
    %s7115 = scalar_lea.vmem [#allocation1], 32
    %7116 = vst [vmem:[%s7115] ss:$4 sm:$0xff] %v524
    %v7117 = vld.sshfl [vmem:[#allocation1] sm:$0xff pattern:$0x73625140]
    %v7118 = vld.sshfl [vmem:[#allocation1 + $0x8] sm:$0xff pattern:$0x73625140]
    %v7119 = vld.sshfl [vmem:[#allocation1 + $0x10] sm:$0xff pattern:$0x73625140]
    %v7120 = vld.sshfl [vmem:[#allocation1 + $0x18] sm:$0xff pattern:$0x73625140]
    %v7121 = vld.sshfl [vmem:[#allocation1 + $0x20] sm:$0xff pattern:$0x73625140]
    %v7122 = vld.sshfl [vmem:[#allocation1 + $0x28] sm:$0xff pattern:$0x73625140]
    %v7123 = vld.sshfl [vmem:[#allocation1 + $0x30] sm:$0xff pattern:$0x73625140]
    %v7124 = vld.sshfl [vmem:[#allocation1 + $0x38] sm:$0xff pattern:$0x73625140]
    %7126 = vst [vmem:[#allocation1] ss:$4 sm:$0xff] %v525
    %7128 = vst [vmem:[%s7115] ss:$4 sm:$0xff] %v526
    %v7129 = vld.sshfl [vmem:[#allocation1] sm:$0xff pattern:$0x73625140]
    %v7130 = vld.sshfl [vmem:[#allocation1 + $0x8] sm:$0xff pattern:$0x73625140]
    %v7131 = vld.sshfl [vmem:[#allocation1 + $0x10] sm:$0xff pattern:$0x73625140]
    %v7132 = vld.sshfl [vmem:[#allocation1 + $0x18] sm:$0xff pattern:$0x73625140]
    %v7133 = vld.sshfl [vmem:[#allocation1 + $0x20] sm:$0xff pattern:$0x73625140]
    %v7134 = vld.sshfl [vmem:[#allocation1 + $0x28] sm:$0xff pattern:$0x73625140]
    %v7135 = vld.sshfl [vmem:[#allocation1 + $0x30] sm:$0xff pattern:$0x73625140]
    %v7136 = vld.sshfl [vmem:[#allocation1 + $0x38] sm:$0xff pattern:$0x73625140]
    %7138 = vst [vmem:[#allocation1] ss:$4 sm:$0xff] %v527
    %7140 = vst [vmem:[%s7115] ss:$4 sm:$0xff] %v528
    %v7141 = vld.sshfl [vmem:[#allocation1] sm:$0xff pattern:$0x73625140]
    %v7142 = vld.sshfl [vmem:[#allocation1 + $0x8] sm:$0xff pattern:$0x73625140]
    %v7143 = vld.sshfl [vmem:[#allocation1 + $0x10] sm:$0xff pattern:$0x73625140]
    %v7144 = vld.sshfl [vmem:[#allocation1 + $0x18] sm:$0xff pattern:$0x73625140]
    %v7145 = vld.sshfl [vmem:[#allocation1 + $0x20] sm:$0xff pattern:$0x73625140]
    %v7146 = vld.sshfl [vmem:[#allocation1 + $0x28] sm:$0xff pattern:$0x73625140]
    %v7147 = vld.sshfl [vmem:[#allocation1 + $0x30] sm:$0xff pattern:$0x73625140]
    %v7148 = vld.sshfl [vmem:[#allocation1 + $0x38] sm:$0xff pattern:$0x73625140]
    %7150 = vst [vmem:[#allocation1] ss:$4 sm:$0xff] %v529
    %7152 = vst [vmem:[%s7115] ss:$4 sm:$0xff] %v530
    %v7153 = vld.sshfl [vmem:[#allocation1] sm:$0xff pattern:$0x73625140]
    %v7154 = vld.sshfl [vmem:[#allocation1 + $0x8] sm:$0xff pattern:$0x73625140]
    %v7155 = vld.sshfl [vmem:[#allocation1 + $0x10] sm:$0xff pattern:$0x73625140]
    %v7156 = vld.sshfl [vmem:[#allocation1 + $0x18] sm:$0xff pattern:$0x73625140]
    %v7157 = vld.sshfl [vmem:[#allocation1 + $0x20] sm:$0xff pattern:$0x73625140]
    %v7158 = vld.sshfl [vmem:[#allocation1 + $0x28] sm:$0xff pattern:$0x73625140]
    %v7159 = vld.sshfl [vmem:[#allocation1 + $0x30] sm:$0xff pattern:$0x73625140]
    %v7160 = vld.sshfl [vmem:[#allocation1 + $0x38] sm:$0xff pattern:$0x73625140]
    %v7161 = vsel %vm604, %v7111, 0
    %v7163 = vand.u32 %v7117, %v610
    %v7165 = vand.u32 %v7118, %v610
    %v7167 = vand.u32 %v7119, %v610
    %v7169 = vand.u32 %v7120, %v610
    %v7171 = vand.u32 %v7121, %v610
    %v7173 = vand.u32 %v7122, %v610
    %v7175 = vand.u32 %v7123, %v610
    %v7177 = vand.u32 %v7124, %v610
    %v7179 = vand.u32 %v7129, %v610
    %v7181 = vand.u32 %v7130, %v610
    %v7183 = vand.u32 %v7131, %v610
    %v7185 = vand.u32 %v7132, %v610
    %v7187 = vand.u32 %v7133, %v610
    %v7189 = vand.u32 %v7134, %v610
    %v7191 = vand.u32 %v7135, %v610
    %v7193 = vand.u32 %v7136, %v610
    %v7195 = vand.u32 %v7141, %v610
    %v7197 = vand.u32 %v7142, %v610
    %v7199 = vand.u32 %v7143, %v610
    %v7201 = vand.u32 %v7144, %v610
    %v7203 = vand.u32 %v7145, %v610
    %v7205 = vand.u32 %v7146, %v610
    %v7207 = vand.u32 %v7147, %v610
    %v7209 = vand.u32 %v7148, %v610
    %v7211 = vand.u32 %v7153, %v610
    %v7213 = vand.u32 %v7154, %v610
    %v7215 = vand.u32 %v7155, %v610
    %v7217 = vand.u32 %v7156, %v610
    %v7219 = vand.u32 %v7157, %v610
    %v7221 = vand.u32 %v7158, %v610
    %v7223 = vand.u32 %v7159, %v610
    %v7225 = vand.u32 %v7160, %v610
    %7227 = vmatpush.bf16.msra.mxu0 0
    %7228 = vmatpush.bf16.msra.mxu0 0
    %7229 = vmatpush.bf16.msra.mxu0 0
    %7230 = vmatpush.bf16.msra.mxu0 0
    %7231 = vmatpush.bf16.msra.mxu0 0
    %7232 = vmatpush.bf16.msra.mxu0 0
    %7233 = vmatpush.bf16.msra.mxu0 0
    %7234 = vmatpush.bf16.msra.mxu0 %v7163
    %7235 = vmatmul.f32.gmra.mxu0 %v7161
    %v7236 = vpop.f32.mrf.mxu0
    %v7237 = vadd.f32 0.0, %v7236
    %7238 = vdwg.mxu0
    %7239 = vmatpush.bf16.msra.mxu0 0
    %7240 = vmatpush.bf16.msra.mxu0 0
    %7241 = vmatpush.bf16.msra.mxu0 0
    %7242 = vmatpush.bf16.msra.mxu0 0
    %7243 = vmatpush.bf16.msra.mxu0 0
    %7244 = vmatpush.bf16.msra.mxu0 0
    %7245 = vmatpush.bf16.msra.mxu0 0
    %7246 = vmatpush.bf16.msra.mxu0 %v7165
    %7247 = vmatmul.f32.gmra.mxu0 %v7161
    %v7248 = vpop.f32.mrf.mxu0
    %v7249 = vadd.f32 0.0, %v7248
    %7250 = vdwg.mxu0
    %7251 = vmatpush.bf16.msra.mxu0 0
    %7252 = vmatpush.bf16.msra.mxu0 0
    %7253 = vmatpush.bf16.msra.mxu0 0
    %7254 = vmatpush.bf16.msra.mxu0 0
    %7255 = vmatpush.bf16.msra.mxu0 0
    %7256 = vmatpush.bf16.msra.mxu0 0
    %7257 = vmatpush.bf16.msra.mxu0 0
    %7258 = vmatpush.bf16.msra.mxu0 %v7167
    %7259 = vmatmul.f32.gmra.mxu0 %v7161
    %v7260 = vpop.f32.mrf.mxu0
    %v7261 = vadd.f32 0.0, %v7260
    %7262 = vdwg.mxu0
    %7263 = vmatpush.bf16.msra.mxu0 0
    %7264 = vmatpush.bf16.msra.mxu0 0
    %7265 = vmatpush.bf16.msra.mxu0 0
    %7266 = vmatpush.bf16.msra.mxu0 0
    %7267 = vmatpush.bf16.msra.mxu0 0
    %7268 = vmatpush.bf16.msra.mxu0 0
    %7269 = vmatpush.bf16.msra.mxu0 0
    %7270 = vmatpush.bf16.msra.mxu0 %v7169
    %7271 = vmatmul.f32.gmra.mxu0 %v7161
    %v7272 = vpop.f32.mrf.mxu0
    %v7273 = vadd.f32 0.0, %v7272
    %7274 = vdwg.mxu0
    %7275 = vmatpush.bf16.msra.mxu0 0
    %7276 = vmatpush.bf16.msra.mxu0 0
    %7277 = vmatpush.bf16.msra.mxu0 0
    %7278 = vmatpush.bf16.msra.mxu0 0
    %7279 = vmatpush.bf16.msra.mxu0 0
    %7280 = vmatpush.bf16.msra.mxu0 0
    %7281 = vmatpush.bf16.msra.mxu0 0
    %7282 = vmatpush.bf16.msra.mxu0 %v7171
    %7283 = vmatmul.f32.gmra.mxu0 %v7161
    %v7284 = vpop.f32.mrf.mxu0
    %v7285 = vadd.f32 0.0, %v7284
    %7286 = vdwg.mxu0
    %7287 = vmatpush.bf16.msra.mxu0 0
    %7288 = vmatpush.bf16.msra.mxu0 0
    %7289 = vmatpush.bf16.msra.mxu0 0
    %7290 = vmatpush.bf16.msra.mxu0 0
    %7291 = vmatpush.bf16.msra.mxu0 0
    %7292 = vmatpush.bf16.msra.mxu0 0
    %7293 = vmatpush.bf16.msra.mxu0 0
    %7294 = vmatpush.bf16.msra.mxu0 %v7173
    %7295 = vmatmul.f32.gmra.mxu0 %v7161
    %v7296 = vpop.f32.mrf.mxu0
    %v7297 = vadd.f32 0.0, %v7296
    %7298 = vdwg.mxu0
    %7299 = vmatpush.bf16.msra.mxu0 0
    %7300 = vmatpush.bf16.msra.mxu0 0
    %7301 = vmatpush.bf16.msra.mxu0 0
    %7302 = vmatpush.bf16.msra.mxu0 0
    %7303 = vmatpush.bf16.msra.mxu0 0
    %7304 = vmatpush.bf16.msra.mxu0 0
    %7305 = vmatpush.bf16.msra.mxu0 0
    %7306 = vmatpush.bf16.msra.mxu0 %v7175
    %7307 = vmatmul.f32.gmra.mxu0 %v7161
    %v7308 = vpop.f32.mrf.mxu0
    %v7309 = vadd.f32 0.0, %v7308
    %7310 = vdwg.mxu0
    %7311 = vmatpush.bf16.msra.mxu0 0
    %7312 = vmatpush.bf16.msra.mxu0 0
    %7313 = vmatpush.bf16.msra.mxu0 0
    %7314 = vmatpush.bf16.msra.mxu0 0
    %7315 = vmatpush.bf16.msra.mxu0 0
    %7316 = vmatpush.bf16.msra.mxu0 0
    %7317 = vmatpush.bf16.msra.mxu0 0
    %7318 = vmatpush.bf16.msra.mxu0 %v7177
    %7319 = vmatmul.f32.gmra.mxu0 %v7161
    %v7320 = vpop.f32.mrf.mxu0
    %v7321 = vadd.f32 0.0, %v7320
    %7322 = vdwg.mxu0
    %7323 = vmatpush.bf16.msra.mxu0 0
    %7324 = vmatpush.bf16.msra.mxu0 0
    %7325 = vmatpush.bf16.msra.mxu0 0
    %7326 = vmatpush.bf16.msra.mxu0 0
    %7327 = vmatpush.bf16.msra.mxu0 0
    %7328 = vmatpush.bf16.msra.mxu0 0
    %7329 = vmatpush.bf16.msra.mxu0 0
    %7330 = vmatpush.bf16.msra.mxu0 %v7179
    %7331 = vmatmul.f32.gmra.mxu0 %v7161
    %v7332 = vpop.f32.mrf.mxu0
    %v7333 = vadd.f32 0.0, %v7332
    %7334 = vdwg.mxu0
    %7335 = vmatpush.bf16.msra.mxu0 0
    %7336 = vmatpush.bf16.msra.mxu0 0
    %7337 = vmatpush.bf16.msra.mxu0 0
    %7338 = vmatpush.bf16.msra.mxu0 0
    %7339 = vmatpush.bf16.msra.mxu0 0
    %7340 = vmatpush.bf16.msra.mxu0 0
    %7341 = vmatpush.bf16.msra.mxu0 0
    %7342 = vmatpush.bf16.msra.mxu0 %v7181
    %7343 = vmatmul.f32.gmra.mxu0 %v7161
    %v7344 = vpop.f32.mrf.mxu0
    %v7345 = vadd.f32 0.0, %v7344
    %7346 = vdwg.mxu0
    %7347 = vmatpush.bf16.msra.mxu0 0
    %7348 = vmatpush.bf16.msra.mxu0 0
    %7349 = vmatpush.bf16.msra.mxu0 0
    %7350 = vmatpush.bf16.msra.mxu0 0
    %7351 = vmatpush.bf16.msra.mxu0 0
    %7352 = vmatpush.bf16.msra.mxu0 0
    %7353 = vmatpush.bf16.msra.mxu0 0
    %7354 = vmatpush.bf16.msra.mxu0 %v7183
    %7355 = vmatmul.f32.gmra.mxu0 %v7161
    %v7356 = vpop.f32.mrf.mxu0
    %v7357 = vadd.f32 0.0, %v7356
    %7358 = vdwg.mxu0
    %7359 = vmatpush.bf16.msra.mxu0 0
    %7360 = vmatpush.bf16.msra.mxu0 0
    %7361 = vmatpush.bf16.msra.mxu0 0
    %7362 = vmatpush.bf16.msra.mxu0 0
    %7363 = vmatpush.bf16.msra.mxu0 0
    %7364 = vmatpush.bf16.msra.mxu0 0
    %7365 = vmatpush.bf16.msra.mxu0 0
    %7366 = vmatpush.bf16.msra.mxu0 %v7185
    %7367 = vmatmul.f32.gmra.mxu0 %v7161
    %v7368 = vpop.f32.mrf.mxu0
    %v7369 = vadd.f32 0.0, %v7368
    %7370 = vdwg.mxu0
    %7371 = vmatpush.bf16.msra.mxu0 0
    %7372 = vmatpush.bf16.msra.mxu0 0
    %7373 = vmatpush.bf16.msra.mxu0 0
    %7374 = vmatpush.bf16.msra.mxu0 0
    %7375 = vmatpush.bf16.msra.mxu0 0
    %7376 = vmatpush.bf16.msra.mxu0 0
    %7377 = vmatpush.bf16.msra.mxu0 0
    %7378 = vmatpush.bf16.msra.mxu0 %v7187
    %7379 = vmatmul.f32.gmra.mxu0 %v7161
    %v7380 = vpop.f32.mrf.mxu0
    %v7381 = vadd.f32 0.0, %v7380
    %7382 = vdwg.mxu0
    %7383 = vmatpush.bf16.msra.mxu0 0
    %7384 = vmatpush.bf16.msra.mxu0 0
    %7385 = vmatpush.bf16.msra.mxu0 0
    %7386 = vmatpush.bf16.msra.mxu0 0
    %7387 = vmatpush.bf16.msra.mxu0 0
    %7388 = vmatpush.bf16.msra.mxu0 0
    %7389 = vmatpush.bf16.msra.mxu0 0
    %7390 = vmatpush.bf16.msra.mxu0 %v7189
    %7391 = vmatmul.f32.gmra.mxu0 %v7161
    %v7392 = vpop.f32.mrf.mxu0
    %v7393 = vadd.f32 0.0, %v7392
    %7394 = vdwg.mxu0
    %7395 = vmatpush.bf16.msra.mxu0 0
    %7396 = vmatpush.bf16.msra.mxu0 0
    %7397 = vmatpush.bf16.msra.mxu0 0
    %7398 = vmatpush.bf16.msra.mxu0 0
    %7399 = vmatpush.bf16.msra.mxu0 0
    %7400 = vmatpush.bf16.msra.mxu0 0
    %7401 = vmatpush.bf16.msra.mxu0 0
    %7402 = vmatpush.bf16.msra.mxu0 %v7191
    %7403 = vmatmul.f32.gmra.mxu0 %v7161
    %v7404 = vpop.f32.mrf.mxu0
    %v7405 = vadd.f32 0.0, %v7404
    %7406 = vdwg.mxu0
    %7407 = vmatpush.bf16.msra.mxu0 0
    %7408 = vmatpush.bf16.msra.mxu0 0
    %7409 = vmatpush.bf16.msra.mxu0 0
    %7410 = vmatpush.bf16.msra.mxu0 0
    %7411 = vmatpush.bf16.msra.mxu0 0
    %7412 = vmatpush.bf16.msra.mxu0 0
    %7413 = vmatpush.bf16.msra.mxu0 0
    %7414 = vmatpush.bf16.msra.mxu0 %v7193
    %7415 = vmatmul.f32.gmra.mxu0 %v7161
    %v7416 = vpop.f32.mrf.mxu0
    %v7417 = vadd.f32 0.0, %v7416
    %7418 = vdwg.mxu0
    %7419 = vmatpush.bf16.msra.mxu0 0
    %7420 = vmatpush.bf16.msra.mxu0 0
    %7421 = vmatpush.bf16.msra.mxu0 0
    %7422 = vmatpush.bf16.msra.mxu0 0
    %7423 = vmatpush.bf16.msra.mxu0 0
    %7424 = vmatpush.bf16.msra.mxu0 0
    %7425 = vmatpush.bf16.msra.mxu0 0
    %7426 = vmatpush.bf16.msra.mxu0 %v7195
    %7427 = vmatmul.f32.gmra.mxu0 %v7161
    %v7428 = vpop.f32.mrf.mxu0
    %v7429 = vadd.f32 0.0, %v7428
    %7430 = vdwg.mxu0
    %7431 = vmatpush.bf16.msra.mxu0 0
    %7432 = vmatpush.bf16.msra.mxu0 0
    %7433 = vmatpush.bf16.msra.mxu0 0
    %7434 = vmatpush.bf16.msra.mxu0 0
    %7435 = vmatpush.bf16.msra.mxu0 0
    %7436 = vmatpush.bf16.msra.mxu0 0
    %7437 = vmatpush.bf16.msra.mxu0 0
    %7438 = vmatpush.bf16.msra.mxu0 %v7197
    %7439 = vmatmul.f32.gmra.mxu0 %v7161
    %v7440 = vpop.f32.mrf.mxu0
    %v7441 = vadd.f32 0.0, %v7440
    %7442 = vdwg.mxu0
    %7443 = vmatpush.bf16.msra.mxu0 0
    %7444 = vmatpush.bf16.msra.mxu0 0
    %7445 = vmatpush.bf16.msra.mxu0 0
    %7446 = vmatpush.bf16.msra.mxu0 0
    %7447 = vmatpush.bf16.msra.mxu0 0
    %7448 = vmatpush.bf16.msra.mxu0 0
    %7449 = vmatpush.bf16.msra.mxu0 0
    %7450 = vmatpush.bf16.msra.mxu0 %v7199
    %7451 = vmatmul.f32.gmra.mxu0 %v7161
    %v7452 = vpop.f32.mrf.mxu0
    %v7453 = vadd.f32 0.0, %v7452
    %7454 = vdwg.mxu0
    %7455 = vmatpush.bf16.msra.mxu0 0
    %7456 = vmatpush.bf16.msra.mxu0 0
    %7457 = vmatpush.bf16.msra.mxu0 0
    %7458 = vmatpush.bf16.msra.mxu0 0
    %7459 = vmatpush.bf16.msra.mxu0 0
    %7460 = vmatpush.bf16.msra.mxu0 0
    %7461 = vmatpush.bf16.msra.mxu0 0
    %7462 = vmatpush.bf16.msra.mxu0 %v7201
    %7463 = vmatmul.f32.gmra.mxu0 %v7161
    %v7464 = vpop.f32.mrf.mxu0
    %v7465 = vadd.f32 0.0, %v7464
    %7466 = vdwg.mxu0
    %7467 = vmatpush.bf16.msra.mxu0 0
    %7468 = vmatpush.bf16.msra.mxu0 0
    %7469 = vmatpush.bf16.msra.mxu0 0
    %7470 = vmatpush.bf16.msra.mxu0 0
    %7471 = vmatpush.bf16.msra.mxu0 0
    %7472 = vmatpush.bf16.msra.mxu0 0
    %7473 = vmatpush.bf16.msra.mxu0 0
    %7474 = vmatpush.bf16.msra.mxu0 %v7203
    %7475 = vmatmul.f32.gmra.mxu0 %v7161
    %v7476 = vpop.f32.mrf.mxu0
    %v7477 = vadd.f32 0.0, %v7476
    %7478 = vdwg.mxu0
    %7479 = vmatpush.bf16.msra.mxu0 0
    %7480 = vmatpush.bf16.msra.mxu0 0
    %7481 = vmatpush.bf16.msra.mxu0 0
    %7482 = vmatpush.bf16.msra.mxu0 0
    %7483 = vmatpush.bf16.msra.mxu0 0
    %7484 = vmatpush.bf16.msra.mxu0 0
    %7485 = vmatpush.bf16.msra.mxu0 0
    %7486 = vmatpush.bf16.msra.mxu0 %v7205
    %7487 = vmatmul.f32.gmra.mxu0 %v7161
    %v7488 = vpop.f32.mrf.mxu0
    %v7489 = vadd.f32 0.0, %v7488
    %7490 = vdwg.mxu0
    %7491 = vmatpush.bf16.msra.mxu0 0
    %7492 = vmatpush.bf16.msra.mxu0 0
    %7493 = vmatpush.bf16.msra.mxu0 0
    %7494 = vmatpush.bf16.msra.mxu0 0
    %7495 = vmatpush.bf16.msra.mxu0 0
    %7496 = vmatpush.bf16.msra.mxu0 0
    %7497 = vmatpush.bf16.msra.mxu0 0
    %7498 = vmatpush.bf16.msra.mxu0 %v7207
    %7499 = vmatmul.f32.gmra.mxu0 %v7161
    %v7500 = vpop.f32.mrf.mxu0
    %v7501 = vadd.f32 0.0, %v7500
    %7502 = vdwg.mxu0
    %7503 = vmatpush.bf16.msra.mxu0 0
    %7504 = vmatpush.bf16.msra.mxu0 0
    %7505 = vmatpush.bf16.msra.mxu0 0
    %7506 = vmatpush.bf16.msra.mxu0 0
    %7507 = vmatpush.bf16.msra.mxu0 0
    %7508 = vmatpush.bf16.msra.mxu0 0
    %7509 = vmatpush.bf16.msra.mxu0 0
    %7510 = vmatpush.bf16.msra.mxu0 %v7209
    %7511 = vmatmul.f32.gmra.mxu0 %v7161
    %v7512 = vpop.f32.mrf.mxu0
    %v7513 = vadd.f32 0.0, %v7512
    %7514 = vdwg.mxu0
    %7515 = vmatpush.bf16.msra.mxu0 0
    %7516 = vmatpush.bf16.msra.mxu0 0
    %7517 = vmatpush.bf16.msra.mxu0 0
    %7518 = vmatpush.bf16.msra.mxu0 0
    %7519 = vmatpush.bf16.msra.mxu0 0
    %7520 = vmatpush.bf16.msra.mxu0 0
    %7521 = vmatpush.bf16.msra.mxu0 0
    %7522 = vmatpush.bf16.msra.mxu0 %v7211
    %7523 = vmatmul.f32.gmra.mxu0 %v7161
    %v7524 = vpop.f32.mrf.mxu0
    %v7525 = vadd.f32 0.0, %v7524
    %7526 = vdwg.mxu0
    %7527 = vmatpush.bf16.msra.mxu0 0
    %7528 = vmatpush.bf16.msra.mxu0 0
    %7529 = vmatpush.bf16.msra.mxu0 0
    %7530 = vmatpush.bf16.msra.mxu0 0
    %7531 = vmatpush.bf16.msra.mxu0 0
    %7532 = vmatpush.bf16.msra.mxu0 0
    %7533 = vmatpush.bf16.msra.mxu0 0
    %7534 = vmatpush.bf16.msra.mxu0 %v7213
    %7535 = vmatmul.f32.gmra.mxu0 %v7161
    %v7536 = vpop.f32.mrf.mxu0
    %v7537 = vadd.f32 0.0, %v7536
    %7538 = vdwg.mxu0
    %7539 = vmatpush.bf16.msra.mxu0 0
    %7540 = vmatpush.bf16.msra.mxu0 0
    %7541 = vmatpush.bf16.msra.mxu0 0
    %7542 = vmatpush.bf16.msra.mxu0 0
    %7543 = vmatpush.bf16.msra.mxu0 0
    %7544 = vmatpush.bf16.msra.mxu0 0
    %7545 = vmatpush.bf16.msra.mxu0 0
    %7546 = vmatpush.bf16.msra.mxu0 %v7215
    %7547 = vmatmul.f32.gmra.mxu0 %v7161
    %v7548 = vpop.f32.mrf.mxu0
    %v7549 = vadd.f32 0.0, %v7548
    %7550 = vdwg.mxu0
    %7551 = vmatpush.bf16.msra.mxu0 0
    %7552 = vmatpush.bf16.msra.mxu0 0
    %7553 = vmatpush.bf16.msra.mxu0 0
    %7554 = vmatpush.bf16.msra.mxu0 0
    %7555 = vmatpush.bf16.msra.mxu0 0
    %7556 = vmatpush.bf16.msra.mxu0 0
    %7557 = vmatpush.bf16.msra.mxu0 0
    %7558 = vmatpush.bf16.msra.mxu0 %v7217
    %7559 = vmatmul.f32.gmra.mxu0 %v7161
    %v7560 = vpop.f32.mrf.mxu0
    %v7561 = vadd.f32 0.0, %v7560
    %7562 = vdwg.mxu0
    %7563 = vmatpush.bf16.msra.mxu0 0
    %7564 = vmatpush.bf16.msra.mxu0 0
    %7565 = vmatpush.bf16.msra.mxu0 0
    %7566 = vmatpush.bf16.msra.mxu0 0
    %7567 = vmatpush.bf16.msra.mxu0 0
    %7568 = vmatpush.bf16.msra.mxu0 0
    %7569 = vmatpush.bf16.msra.mxu0 0
    %7570 = vmatpush.bf16.msra.mxu0 %v7219
    %7571 = vmatmul.f32.gmra.mxu0 %v7161
    %v7572 = vpop.f32.mrf.mxu0
    %v7573 = vadd.f32 0.0, %v7572
    %7574 = vdwg.mxu0
    %7575 = vmatpush.bf16.msra.mxu0 0
    %7576 = vmatpush.bf16.msra.mxu0 0
    %7577 = vmatpush.bf16.msra.mxu0 0
    %7578 = vmatpush.bf16.msra.mxu0 0
    %7579 = vmatpush.bf16.msra.mxu0 0
    %7580 = vmatpush.bf16.msra.mxu0 0
    %7581 = vmatpush.bf16.msra.mxu0 0
    %7582 = vmatpush.bf16.msra.mxu0 %v7221
    %7583 = vmatmul.f32.gmra.mxu0 %v7161
    %v7584 = vpop.f32.mrf.mxu0
    %v7585 = vadd.f32 0.0, %v7584
    %7586 = vdwg.mxu0
    %7587 = vmatpush.bf16.msra.mxu0 0
    %7588 = vmatpush.bf16.msra.mxu0 0
    %7589 = vmatpush.bf16.msra.mxu0 0
    %7590 = vmatpush.bf16.msra.mxu0 0
    %7591 = vmatpush.bf16.msra.mxu0 0
    %7592 = vmatpush.bf16.msra.mxu0 0
    %7593 = vmatpush.bf16.msra.mxu0 0
    %7594 = vmatpush.bf16.msra.mxu0 %v7223
    %7595 = vmatmul.f32.gmra.mxu0 %v7161
    %v7596 = vpop.f32.mrf.mxu0
    %v7597 = vadd.f32 0.0, %v7596
    %7598 = vdwg.mxu0
    %7599 = vmatpush.bf16.msra.mxu0 0
    %7600 = vmatpush.bf16.msra.mxu0 0
    %7601 = vmatpush.bf16.msra.mxu0 0
    %7602 = vmatpush.bf16.msra.mxu0 0
    %7603 = vmatpush.bf16.msra.mxu0 0
    %7604 = vmatpush.bf16.msra.mxu0 0
    %7605 = vmatpush.bf16.msra.mxu0 0
    %7606 = vmatpush.bf16.msra.mxu0 %v7225
    %7607 = vmatmul.f32.gmra.mxu0 %v7161
    %v7608 = vpop.f32.mrf.mxu0
    %v7609 = vadd.f32 0.0, %v7608
    %7610 = vdwg.mxu0
    %v7613 = vperm.slane %v403, %v550
    %v7614 = vperm.slane %v408, %v550
    %v7615 = vsel %vm553, %v7614, %v7613
    %7617 = vst [vmem:[#allocation1] ss:$4 sm:$0xff] %v531
    %s7619 = scalar_lea.vmem [#allocation1], 32
    %7620 = vst [vmem:[%s7619] ss:$4 sm:$0xff] %v532
    %v7621 = vld.sshfl [vmem:[#allocation1] sm:$0xff pattern:$0x73625140]
    %v7622 = vld.sshfl [vmem:[#allocation1 + $0x8] sm:$0xff pattern:$0x73625140]
    %v7623 = vld.sshfl [vmem:[#allocation1 + $0x10] sm:$0xff pattern:$0x73625140]
    %v7624 = vld.sshfl [vmem:[#allocation1 + $0x18] sm:$0xff pattern:$0x73625140]
    %v7625 = vld.sshfl [vmem:[#allocation1 + $0x20] sm:$0xff pattern:$0x73625140]
    %v7626 = vld.sshfl [vmem:[#allocation1 + $0x28] sm:$0xff pattern:$0x73625140]
    %v7627 = vld.sshfl [vmem:[#allocation1 + $0x30] sm:$0xff pattern:$0x73625140]
    %v7628 = vld.sshfl [vmem:[#allocation1 + $0x38] sm:$0xff pattern:$0x73625140]
    %7630 = vst [vmem:[#allocation1] ss:$4 sm:$0xff] %v533
    %7632 = vst [vmem:[%s7619] ss:$4 sm:$0xff] %v534
    %v7633 = vld.sshfl [vmem:[#allocation1] sm:$0xff pattern:$0x73625140]
    %v7634 = vld.sshfl [vmem:[#allocation1 + $0x8] sm:$0xff pattern:$0x73625140]
    %v7635 = vld.sshfl [vmem:[#allocation1 + $0x10] sm:$0xff pattern:$0x73625140]
    %v7636 = vld.sshfl [vmem:[#allocation1 + $0x18] sm:$0xff pattern:$0x73625140]
    %v7637 = vld.sshfl [vmem:[#allocation1 + $0x20] sm:$0xff pattern:$0x73625140]
    %v7638 = vld.sshfl [vmem:[#allocation1 + $0x28] sm:$0xff pattern:$0x73625140]
    %v7639 = vld.sshfl [vmem:[#allocation1 + $0x30] sm:$0xff pattern:$0x73625140]
    %v7640 = vld.sshfl [vmem:[#allocation1 + $0x38] sm:$0xff pattern:$0x73625140]
    %7642 = vst [vmem:[#allocation1] ss:$4 sm:$0xff] %v535
    %7644 = vst [vmem:[%s7619] ss:$4 sm:$0xff] %v536
    %v7645 = vld.sshfl [vmem:[#allocation1] sm:$0xff pattern:$0x73625140]
    %v7646 = vld.sshfl [vmem:[#allocation1 + $0x8] sm:$0xff pattern:$0x73625140]
    %v7647 = vld.sshfl [vmem:[#allocation1 + $0x10] sm:$0xff pattern:$0x73625140]
    %v7648 = vld.sshfl [vmem:[#allocation1 + $0x18] sm:$0xff pattern:$0x73625140]
    %v7649 = vld.sshfl [vmem:[#allocation1 + $0x20] sm:$0xff pattern:$0x73625140]
    %v7650 = vld.sshfl [vmem:[#allocation1 + $0x28] sm:$0xff pattern:$0x73625140]
    %v7651 = vld.sshfl [vmem:[#allocation1 + $0x30] sm:$0xff pattern:$0x73625140]
    %v7652 = vld.sshfl [vmem:[#allocation1 + $0x38] sm:$0xff pattern:$0x73625140]
    %7654 = vst [vmem:[#allocation1] ss:$4 sm:$0xff] %v537
    %7656 = vst [vmem:[%s7619] ss:$4 sm:$0xff] %v538
    %v7657 = vld.sshfl [vmem:[#allocation1] sm:$0xff pattern:$0x73625140]
    %v7658 = vld.sshfl [vmem:[#allocation1 + $0x8] sm:$0xff pattern:$0x73625140]
    %v7659 = vld.sshfl [vmem:[#allocation1 + $0x10] sm:$0xff pattern:$0x73625140]
    %v7660 = vld.sshfl [vmem:[#allocation1 + $0x18] sm:$0xff pattern:$0x73625140]
    %v7661 = vld.sshfl [vmem:[#allocation1 + $0x20] sm:$0xff pattern:$0x73625140]
    %v7662 = vld.sshfl [vmem:[#allocation1 + $0x28] sm:$0xff pattern:$0x73625140]
    %v7663 = vld.sshfl [vmem:[#allocation1 + $0x30] sm:$0xff pattern:$0x73625140]
    %v7664 = vld.sshfl [vmem:[#allocation1 + $0x38] sm:$0xff pattern:$0x73625140]
    %v7665 = vsel %vm604, %v7615, 0
    %v7667 = vand.u32 %v7621, %v610
    %v7669 = vand.u32 %v7622, %v610
    %v7671 = vand.u32 %v7623, %v610
    %v7673 = vand.u32 %v7624, %v610
    %v7675 = vand.u32 %v7625, %v610
    %v7677 = vand.u32 %v7626, %v610
    %v7679 = vand.u32 %v7627, %v610
    %v7681 = vand.u32 %v7628, %v610
    %v7683 = vand.u32 %v7633, %v610
    %v7685 = vand.u32 %v7634, %v610
    %v7687 = vand.u32 %v7635, %v610
    %v7689 = vand.u32 %v7636, %v610
    %v7691 = vand.u32 %v7637, %v610
    %v7693 = vand.u32 %v7638, %v610
    %v7695 = vand.u32 %v7639, %v610
    %v7697 = vand.u32 %v7640, %v610
    %v7699 = vand.u32 %v7645, %v610
    %v7701 = vand.u32 %v7646, %v610
    %v7703 = vand.u32 %v7647, %v610
    %v7705 = vand.u32 %v7648, %v610
    %v7707 = vand.u32 %v7649, %v610
    %v7709 = vand.u32 %v7650, %v610
    %v7711 = vand.u32 %v7651, %v610
    %v7713 = vand.u32 %v7652, %v610
    %v7715 = vand.u32 %v7657, %v610
    %v7717 = vand.u32 %v7658, %v610
    %v7719 = vand.u32 %v7659, %v610
    %v7721 = vand.u32 %v7660, %v610
    %v7723 = vand.u32 %v7661, %v610
    %v7725 = vand.u32 %v7662, %v610
    %v7727 = vand.u32 %v7663, %v610
    %v7729 = vand.u32 %v7664, %v610
    %7731 = vmatpush.bf16.msra.mxu0 0
    %7732 = vmatpush.bf16.msra.mxu0 0
    %7733 = vmatpush.bf16.msra.mxu0 0
    %7734 = vmatpush.bf16.msra.mxu0 0
    %7735 = vmatpush.bf16.msra.mxu0 0
    %7736 = vmatpush.bf16.msra.mxu0 0
    %7737 = vmatpush.bf16.msra.mxu0 0
    %7738 = vmatpush.bf16.msra.mxu0 %v7667
    %7739 = vmatmul.f32.gmra.mxu0 %v7665
    %v7740 = vpop.f32.mrf.mxu0
    %v7741 = vadd.f32 0.0, %v7740
    %7742 = vdwg.mxu0
    %7743 = vmatpush.bf16.msra.mxu0 0
    %7744 = vmatpush.bf16.msra.mxu0 0
    %7745 = vmatpush.bf16.msra.mxu0 0
    %7746 = vmatpush.bf16.msra.mxu0 0
    %7747 = vmatpush.bf16.msra.mxu0 0
    %7748 = vmatpush.bf16.msra.mxu0 0
    %7749 = vmatpush.bf16.msra.mxu0 0
    %7750 = vmatpush.bf16.msra.mxu0 %v7669
    %7751 = vmatmul.f32.gmra.mxu0 %v7665
    %v7752 = vpop.f32.mrf.mxu0
    %v7753 = vadd.f32 0.0, %v7752
    %7754 = vdwg.mxu0
    %7755 = vmatpush.bf16.msra.mxu0 0
    %7756 = vmatpush.bf16.msra.mxu0 0
    %7757 = vmatpush.bf16.msra.mxu0 0
    %7758 = vmatpush.bf16.msra.mxu0 0
    %7759 = vmatpush.bf16.msra.mxu0 0
    %7760 = vmatpush.bf16.msra.mxu0 0
    %7761 = vmatpush.bf16.msra.mxu0 0
    %7762 = vmatpush.bf16.msra.mxu0 %v7671
    %7763 = vmatmul.f32.gmra.mxu0 %v7665
    %v7764 = vpop.f32.mrf.mxu0
    %v7765 = vadd.f32 0.0, %v7764
    %7766 = vdwg.mxu0
    %7767 = vmatpush.bf16.msra.mxu0 0
    %7768 = vmatpush.bf16.msra.mxu0 0
    %7769 = vmatpush.bf16.msra.mxu0 0
    %7770 = vmatpush.bf16.msra.mxu0 0
    %7771 = vmatpush.bf16.msra.mxu0 0
    %7772 = vmatpush.bf16.msra.mxu0 0
    %7773 = vmatpush.bf16.msra.mxu0 0
    %7774 = vmatpush.bf16.msra.mxu0 %v7673
    %7775 = vmatmul.f32.gmra.mxu0 %v7665
    %v7776 = vpop.f32.mrf.mxu0
    %v7777 = vadd.f32 0.0, %v7776
    %7778 = vdwg.mxu0
    %7779 = vmatpush.bf16.msra.mxu0 0
    %7780 = vmatpush.bf16.msra.mxu0 0
    %7781 = vmatpush.bf16.msra.mxu0 0
    %7782 = vmatpush.bf16.msra.mxu0 0
    %7783 = vmatpush.bf16.msra.mxu0 0
    %7784 = vmatpush.bf16.msra.mxu0 0
    %7785 = vmatpush.bf16.msra.mxu0 0
    %7786 = vmatpush.bf16.msra.mxu0 %v7675
    %7787 = vmatmul.f32.gmra.mxu0 %v7665
    %v7788 = vpop.f32.mrf.mxu0
    %v7789 = vadd.f32 0.0, %v7788
    %7790 = vdwg.mxu0
    %7791 = vmatpush.bf16.msra.mxu0 0
    %7792 = vmatpush.bf16.msra.mxu0 0
    %7793 = vmatpush.bf16.msra.mxu0 0
    %7794 = vmatpush.bf16.msra.mxu0 0
    %7795 = vmatpush.bf16.msra.mxu0 0
    %7796 = vmatpush.bf16.msra.mxu0 0
    %7797 = vmatpush.bf16.msra.mxu0 0
    %7798 = vmatpush.bf16.msra.mxu0 %v7677
    %7799 = vmatmul.f32.gmra.mxu0 %v7665
    %v7800 = vpop.f32.mrf.mxu0
    %v7801 = vadd.f32 0.0, %v7800
    %7802 = vdwg.mxu0
    %7803 = vmatpush.bf16.msra.mxu0 0
    %7804 = vmatpush.bf16.msra.mxu0 0
    %7805 = vmatpush.bf16.msra.mxu0 0
    %7806 = vmatpush.bf16.msra.mxu0 0
    %7807 = vmatpush.bf16.msra.mxu0 0
    %7808 = vmatpush.bf16.msra.mxu0 0
    %7809 = vmatpush.bf16.msra.mxu0 0
    %7810 = vmatpush.bf16.msra.mxu0 %v7679
    %7811 = vmatmul.f32.gmra.mxu0 %v7665
    %v7812 = vpop.f32.mrf.mxu0
    %v7813 = vadd.f32 0.0, %v7812
    %7814 = vdwg.mxu0
    %7815 = vmatpush.bf16.msra.mxu0 0
    %7816 = vmatpush.bf16.msra.mxu0 0
    %7817 = vmatpush.bf16.msra.mxu0 0
    %7818 = vmatpush.bf16.msra.mxu0 0
    %7819 = vmatpush.bf16.msra.mxu0 0
    %7820 = vmatpush.bf16.msra.mxu0 0
    %7821 = vmatpush.bf16.msra.mxu0 0
    %7822 = vmatpush.bf16.msra.mxu0 %v7681
    %7823 = vmatmul.f32.gmra.mxu0 %v7665
    %v7824 = vpop.f32.mrf.mxu0
    %v7825 = vadd.f32 0.0, %v7824
    %7826 = vdwg.mxu0
    %7827 = vmatpush.bf16.msra.mxu0 0
    %7828 = vmatpush.bf16.msra.mxu0 0
    %7829 = vmatpush.bf16.msra.mxu0 0
    %7830 = vmatpush.bf16.msra.mxu0 0
    %7831 = vmatpush.bf16.msra.mxu0 0
    %7832 = vmatpush.bf16.msra.mxu0 0
    %7833 = vmatpush.bf16.msra.mxu0 0
    %7834 = vmatpush.bf16.msra.mxu0 %v7683
    %7835 = vmatmul.f32.gmra.mxu0 %v7665
    %v7836 = vpop.f32.mrf.mxu0
    %v7837 = vadd.f32 0.0, %v7836
    %7838 = vdwg.mxu0
    %7839 = vmatpush.bf16.msra.mxu0 0
    %7840 = vmatpush.bf16.msra.mxu0 0
    %7841 = vmatpush.bf16.msra.mxu0 0
    %7842 = vmatpush.bf16.msra.mxu0 0
    %7843 = vmatpush.bf16.msra.mxu0 0
    %7844 = vmatpush.bf16.msra.mxu0 0
    %7845 = vmatpush.bf16.msra.mxu0 0
    %7846 = vmatpush.bf16.msra.mxu0 %v7685
    %7847 = vmatmul.f32.gmra.mxu0 %v7665
    %v7848 = vpop.f32.mrf.mxu0
    %v7849 = vadd.f32 0.0, %v7848
    %7850 = vdwg.mxu0
    %7851 = vmatpush.bf16.msra.mxu0 0
    %7852 = vmatpush.bf16.msra.mxu0 0
    %7853 = vmatpush.bf16.msra.mxu0 0
    %7854 = vmatpush.bf16.msra.mxu0 0
    %7855 = vmatpush.bf16.msra.mxu0 0
    %7856 = vmatpush.bf16.msra.mxu0 0
    %7857 = vmatpush.bf16.msra.mxu0 0
    %7858 = vmatpush.bf16.msra.mxu0 %v7687
    %7859 = vmatmul.f32.gmra.mxu0 %v7665
    %v7860 = vpop.f32.mrf.mxu0
    %v7861 = vadd.f32 0.0, %v7860
    %7862 = vdwg.mxu0
    %7863 = vmatpush.bf16.msra.mxu0 0
    %7864 = vmatpush.bf16.msra.mxu0 0
    %7865 = vmatpush.bf16.msra.mxu0 0
    %7866 = vmatpush.bf16.msra.mxu0 0
    %7867 = vmatpush.bf16.msra.mxu0 0
    %7868 = vmatpush.bf16.msra.mxu0 0
    %7869 = vmatpush.bf16.msra.mxu0 0
    %7870 = vmatpush.bf16.msra.mxu0 %v7689
    %7871 = vmatmul.f32.gmra.mxu0 %v7665
    %v7872 = vpop.f32.mrf.mxu0
    %v7873 = vadd.f32 0.0, %v7872
    %7874 = vdwg.mxu0
    %7875 = vmatpush.bf16.msra.mxu0 0
    %7876 = vmatpush.bf16.msra.mxu0 0
    %7877 = vmatpush.bf16.msra.mxu0 0
    %7878 = vmatpush.bf16.msra.mxu0 0
    %7879 = vmatpush.bf16.msra.mxu0 0
    %7880 = vmatpush.bf16.msra.mxu0 0
    %7881 = vmatpush.bf16.msra.mxu0 0
    %7882 = vmatpush.bf16.msra.mxu0 %v7691
    %7883 = vmatmul.f32.gmra.mxu0 %v7665
    %v7884 = vpop.f32.mrf.mxu0
    %v7885 = vadd.f32 0.0, %v7884
    %7886 = vdwg.mxu0
    %7887 = vmatpush.bf16.msra.mxu0 0
    %7888 = vmatpush.bf16.msra.mxu0 0
    %7889 = vmatpush.bf16.msra.mxu0 0
    %7890 = vmatpush.bf16.msra.mxu0 0
    %7891 = vmatpush.bf16.msra.mxu0 0
    %7892 = vmatpush.bf16.msra.mxu0 0
    %7893 = vmatpush.bf16.msra.mxu0 0
    %7894 = vmatpush.bf16.msra.mxu0 %v7693
    %7895 = vmatmul.f32.gmra.mxu0 %v7665
    %v7896 = vpop.f32.mrf.mxu0
    %v7897 = vadd.f32 0.0, %v7896
    %7898 = vdwg.mxu0
    %7899 = vmatpush.bf16.msra.mxu0 0
    %7900 = vmatpush.bf16.msra.mxu0 0
    %7901 = vmatpush.bf16.msra.mxu0 0
    %7902 = vmatpush.bf16.msra.mxu0 0
    %7903 = vmatpush.bf16.msra.mxu0 0
    %7904 = vmatpush.bf16.msra.mxu0 0
    %7905 = vmatpush.bf16.msra.mxu0 0
    %7906 = vmatpush.bf16.msra.mxu0 %v7695
    %7907 = vmatmul.f32.gmra.mxu0 %v7665
    %v7908 = vpop.f32.mrf.mxu0
    %v7909 = vadd.f32 0.0, %v7908
    %7910 = vdwg.mxu0
    %7911 = vmatpush.bf16.msra.mxu0 0
    %7912 = vmatpush.bf16.msra.mxu0 0
    %7913 = vmatpush.bf16.msra.mxu0 0
    %7914 = vmatpush.bf16.msra.mxu0 0
    %7915 = vmatpush.bf16.msra.mxu0 0
    %7916 = vmatpush.bf16.msra.mxu0 0
    %7917 = vmatpush.bf16.msra.mxu0 0
    %7918 = vmatpush.bf16.msra.mxu0 %v7697
    %7919 = vmatmul.f32.gmra.mxu0 %v7665
    %v7920 = vpop.f32.mrf.mxu0
    %v7921 = vadd.f32 0.0, %v7920
    %7922 = vdwg.mxu0
    %7923 = vmatpush.bf16.msra.mxu0 0
    %7924 = vmatpush.bf16.msra.mxu0 0
    %7925 = vmatpush.bf16.msra.mxu0 0
    %7926 = vmatpush.bf16.msra.mxu0 0
    %7927 = vmatpush.bf16.msra.mxu0 0
    %7928 = vmatpush.bf16.msra.mxu0 0
    %7929 = vmatpush.bf16.msra.mxu0 0
    %7930 = vmatpush.bf16.msra.mxu0 %v7699
    %7931 = vmatmul.f32.gmra.mxu0 %v7665
    %v7932 = vpop.f32.mrf.mxu0
    %v7933 = vadd.f32 0.0, %v7932
    %7934 = vdwg.mxu0
    %7935 = vmatpush.bf16.msra.mxu0 0
    %7936 = vmatpush.bf16.msra.mxu0 0
    %7937 = vmatpush.bf16.msra.mxu0 0
    %7938 = vmatpush.bf16.msra.mxu0 0
    %7939 = vmatpush.bf16.msra.mxu0 0
    %7940 = vmatpush.bf16.msra.mxu0 0
    %7941 = vmatpush.bf16.msra.mxu0 0
    %7942 = vmatpush.bf16.msra.mxu0 %v7701
    %7943 = vmatmul.f32.gmra.mxu0 %v7665
    %v7944 = vpop.f32.mrf.mxu0
    %v7945 = vadd.f32 0.0, %v7944
    %7946 = vdwg.mxu0
    %7947 = vmatpush.bf16.msra.mxu0 0
    %7948 = vmatpush.bf16.msra.mxu0 0
    %7949 = vmatpush.bf16.msra.mxu0 0
    %7950 = vmatpush.bf16.msra.mxu0 0
    %7951 = vmatpush.bf16.msra.mxu0 0
    %7952 = vmatpush.bf16.msra.mxu0 0
    %7953 = vmatpush.bf16.msra.mxu0 0
    %7954 = vmatpush.bf16.msra.mxu0 %v7703
    %7955 = vmatmul.f32.gmra.mxu0 %v7665
    %v7956 = vpop.f32.mrf.mxu0
    %v7957 = vadd.f32 0.0, %v7956
    %7958 = vdwg.mxu0
    %7959 = vmatpush.bf16.msra.mxu0 0
    %7960 = vmatpush.bf16.msra.mxu0 0
    %7961 = vmatpush.bf16.msra.mxu0 0
    %7962 = vmatpush.bf16.msra.mxu0 0
    %7963 = vmatpush.bf16.msra.mxu0 0
    %7964 = vmatpush.bf16.msra.mxu0 0
    %7965 = vmatpush.bf16.msra.mxu0 0
    %7966 = vmatpush.bf16.msra.mxu0 %v7705
    %7967 = vmatmul.f32.gmra.mxu0 %v7665
    %v7968 = vpop.f32.mrf.mxu0
    %v7969 = vadd.f32 0.0, %v7968
    %7970 = vdwg.mxu0
    %7971 = vmatpush.bf16.msra.mxu0 0
    %7972 = vmatpush.bf16.msra.mxu0 0
    %7973 = vmatpush.bf16.msra.mxu0 0
    %7974 = vmatpush.bf16.msra.mxu0 0
    %7975 = vmatpush.bf16.msra.mxu0 0
    %7976 = vmatpush.bf16.msra.mxu0 0
    %7977 = vmatpush.bf16.msra.mxu0 0
    %7978 = vmatpush.bf16.msra.mxu0 %v7707
    %7979 = vmatmul.f32.gmra.mxu0 %v7665
    %v7980 = vpop.f32.mrf.mxu0
    %v7981 = vadd.f32 0.0, %v7980
    %7982 = vdwg.mxu0
    %7983 = vmatpush.bf16.msra.mxu0 0
    %7984 = vmatpush.bf16.msra.mxu0 0
    %7985 = vmatpush.bf16.msra.mxu0 0
    %7986 = vmatpush.bf16.msra.mxu0 0
    %7987 = vmatpush.bf16.msra.mxu0 0
    %7988 = vmatpush.bf16.msra.mxu0 0
    %7989 = vmatpush.bf16.msra.mxu0 0
    %7990 = vmatpush.bf16.msra.mxu0 %v7709
    %7991 = vmatmul.f32.gmra.mxu0 %v7665
    %v7992 = vpop.f32.mrf.mxu0
    %v7993 = vadd.f32 0.0, %v7992
    %7994 = vdwg.mxu0
    %7995 = vmatpush.bf16.msra.mxu0 0
    %7996 = vmatpush.bf16.msra.mxu0 0
    %7997 = vmatpush.bf16.msra.mxu0 0
    %7998 = vmatpush.bf16.msra.mxu0 0
    %7999 = vmatpush.bf16.msra.mxu0 0
    %8000 = vmatpush.bf16.msra.mxu0 0
    %8001 = vmatpush.bf16.msra.mxu0 0
    %8002 = vmatpush.bf16.msra.mxu0 %v7711
    %8003 = vmatmul.f32.gmra.mxu0 %v7665
    %v8004 = vpop.f32.mrf.mxu0
    %v8005 = vadd.f32 0.0, %v8004
    %8006 = vdwg.mxu0
    %8007 = vmatpush.bf16.msra.mxu0 0
    %8008 = vmatpush.bf16.msra.mxu0 0
    %8009 = vmatpush.bf16.msra.mxu0 0
    %8010 = vmatpush.bf16.msra.mxu0 0
    %8011 = vmatpush.bf16.msra.mxu0 0
    %8012 = vmatpush.bf16.msra.mxu0 0
    %8013 = vmatpush.bf16.msra.mxu0 0
    %8014 = vmatpush.bf16.msra.mxu0 %v7713
    %8015 = vmatmul.f32.gmra.mxu0 %v7665
    %v8016 = vpop.f32.mrf.mxu0
    %v8017 = vadd.f32 0.0, %v8016
    %8018 = vdwg.mxu0
    %8019 = vmatpush.bf16.msra.mxu0 0
    %8020 = vmatpush.bf16.msra.mxu0 0
    %8021 = vmatpush.bf16.msra.mxu0 0
    %8022 = vmatpush.bf16.msra.mxu0 0
    %8023 = vmatpush.bf16.msra.mxu0 0
    %8024 = vmatpush.bf16.msra.mxu0 0
    %8025 = vmatpush.bf16.msra.mxu0 0
    %8026 = vmatpush.bf16.msra.mxu0 %v7715
    %8027 = vmatmul.f32.gmra.mxu0 %v7665
    %v8028 = vpop.f32.mrf.mxu0
    %v8029 = vadd.f32 0.0, %v8028
    %8030 = vdwg.mxu0
    %8031 = vmatpush.bf16.msra.mxu0 0
    %8032 = vmatpush.bf16.msra.mxu0 0
    %8033 = vmatpush.bf16.msra.mxu0 0
    %8034 = vmatpush.bf16.msra.mxu0 0
    %8035 = vmatpush.bf16.msra.mxu0 0
    %8036 = vmatpush.bf16.msra.mxu0 0
    %8037 = vmatpush.bf16.msra.mxu0 0
    %8038 = vmatpush.bf16.msra.mxu0 %v7717
    %8039 = vmatmul.f32.gmra.mxu0 %v7665
    %v8040 = vpop.f32.mrf.mxu0
    %v8041 = vadd.f32 0.0, %v8040
    %8042 = vdwg.mxu0
    %8043 = vmatpush.bf16.msra.mxu0 0
    %8044 = vmatpush.bf16.msra.mxu0 0
    %8045 = vmatpush.bf16.msra.mxu0 0
    %8046 = vmatpush.bf16.msra.mxu0 0
    %8047 = vmatpush.bf16.msra.mxu0 0
    %8048 = vmatpush.bf16.msra.mxu0 0
    %8049 = vmatpush.bf16.msra.mxu0 0
    %8050 = vmatpush.bf16.msra.mxu0 %v7719
    %8051 = vmatmul.f32.gmra.mxu0 %v7665
    %v8052 = vpop.f32.mrf.mxu0
    %v8053 = vadd.f32 0.0, %v8052
    %8054 = vdwg.mxu0
    %8055 = vmatpush.bf16.msra.mxu0 0
    %8056 = vmatpush.bf16.msra.mxu0 0
    %8057 = vmatpush.bf16.msra.mxu0 0
    %8058 = vmatpush.bf16.msra.mxu0 0
    %8059 = vmatpush.bf16.msra.mxu0 0
    %8060 = vmatpush.bf16.msra.mxu0 0
    %8061 = vmatpush.bf16.msra.mxu0 0
    %8062 = vmatpush.bf16.msra.mxu0 %v7721
    %8063 = vmatmul.f32.gmra.mxu0 %v7665
    %v8064 = vpop.f32.mrf.mxu0
    %v8065 = vadd.f32 0.0, %v8064
    %8066 = vdwg.mxu0
    %8067 = vmatpush.bf16.msra.mxu0 0
    %8068 = vmatpush.bf16.msra.mxu0 0
    %8069 = vmatpush.bf16.msra.mxu0 0
    %8070 = vmatpush.bf16.msra.mxu0 0
    %8071 = vmatpush.bf16.msra.mxu0 0
    %8072 = vmatpush.bf16.msra.mxu0 0
    %8073 = vmatpush.bf16.msra.mxu0 0
    %8074 = vmatpush.bf16.msra.mxu0 %v7723
    %8075 = vmatmul.f32.gmra.mxu0 %v7665
    %v8076 = vpop.f32.mrf.mxu0
    %v8077 = vadd.f32 0.0, %v8076
    %8078 = vdwg.mxu0
    %8079 = vmatpush.bf16.msra.mxu0 0
    %8080 = vmatpush.bf16.msra.mxu0 0
    %8081 = vmatpush.bf16.msra.mxu0 0
    %8082 = vmatpush.bf16.msra.mxu0 0
    %8083 = vmatpush.bf16.msra.mxu0 0
    %8084 = vmatpush.bf16.msra.mxu0 0
    %8085 = vmatpush.bf16.msra.mxu0 0
    %8086 = vmatpush.bf16.msra.mxu0 %v7725
    %8087 = vmatmul.f32.gmra.mxu0 %v7665
    %v8088 = vpop.f32.mrf.mxu0
    %v8089 = vadd.f32 0.0, %v8088
    %8090 = vdwg.mxu0
    %8091 = vmatpush.bf16.msra.mxu0 0
    %8092 = vmatpush.bf16.msra.mxu0 0
    %8093 = vmatpush.bf16.msra.mxu0 0
    %8094 = vmatpush.bf16.msra.mxu0 0
    %8095 = vmatpush.bf16.msra.mxu0 0
    %8096 = vmatpush.bf16.msra.mxu0 0
    %8097 = vmatpush.bf16.msra.mxu0 0
    %8098 = vmatpush.bf16.msra.mxu0 %v7727
    %8099 = vmatmul.f32.gmra.mxu0 %v7665
    %v8100 = vpop.f32.mrf.mxu0
    %v8101 = vadd.f32 0.0, %v8100
    %8102 = vdwg.mxu0
    %8103 = vmatpush.bf16.msra.mxu0 0
    %8104 = vmatpush.bf16.msra.mxu0 0
    %8105 = vmatpush.bf16.msra.mxu0 0
    %8106 = vmatpush.bf16.msra.mxu0 0
    %8107 = vmatpush.bf16.msra.mxu0 0
    %8108 = vmatpush.bf16.msra.mxu0 0
    %8109 = vmatpush.bf16.msra.mxu0 0
    %8110 = vmatpush.bf16.msra.mxu0 %v7729
    %8111 = vmatmul.f32.gmra.mxu0 %v7665
    %v8112 = vpop.f32.mrf.mxu0
    %v8113 = vadd.f32 0.0, %v8112
    %8114 = vdwg.mxu0
    %v8117 = vperm.slane %v413, %v550
    %v8118 = vperm.slane %v418, %v550
    %v8119 = vsel %vm553, %v8118, %v8117
    %8121 = vst [vmem:[#allocation1] ss:$4 sm:$0xff] %v539
    %s8123 = scalar_lea.vmem [#allocation1], 32
    %8124 = vst [vmem:[%s8123] ss:$4 sm:$0xff] %v540
    %v8125 = vld.sshfl [vmem:[#allocation1] sm:$0xff pattern:$0x73625140]
    %v8126 = vld.sshfl [vmem:[#allocation1 + $0x8] sm:$0xff pattern:$0x73625140]
    %v8127 = vld.sshfl [vmem:[#allocation1 + $0x10] sm:$0xff pattern:$0x73625140]
    %v8128 = vld.sshfl [vmem:[#allocation1 + $0x18] sm:$0xff pattern:$0x73625140]
    %v8129 = vld.sshfl [vmem:[#allocation1 + $0x20] sm:$0xff pattern:$0x73625140]
    %v8130 = vld.sshfl [vmem:[#allocation1 + $0x28] sm:$0xff pattern:$0x73625140]
    %v8131 = vld.sshfl [vmem:[#allocation1 + $0x30] sm:$0xff pattern:$0x73625140]
    %v8132 = vld.sshfl [vmem:[#allocation1 + $0x38] sm:$0xff pattern:$0x73625140]
    %8134 = vst [vmem:[#allocation1] ss:$4 sm:$0xff] %v541
    %8136 = vst [vmem:[%s8123] ss:$4 sm:$0xff] %v542
    %v8137 = vld.sshfl [vmem:[#allocation1] sm:$0xff pattern:$0x73625140]
    %v8138 = vld.sshfl [vmem:[#allocation1 + $0x8] sm:$0xff pattern:$0x73625140]
    %v8139 = vld.sshfl [vmem:[#allocation1 + $0x10] sm:$0xff pattern:$0x73625140]
    %v8140 = vld.sshfl [vmem:[#allocation1 + $0x18] sm:$0xff pattern:$0x73625140]
    %v8141 = vld.sshfl [vmem:[#allocation1 + $0x20] sm:$0xff pattern:$0x73625140]
    %v8142 = vld.sshfl [vmem:[#allocation1 + $0x28] sm:$0xff pattern:$0x73625140]
    %v8143 = vld.sshfl [vmem:[#allocation1 + $0x30] sm:$0xff pattern:$0x73625140]
    %v8144 = vld.sshfl [vmem:[#allocation1 + $0x38] sm:$0xff pattern:$0x73625140]
    %8146 = vst [vmem:[#allocation1] ss:$4 sm:$0xff] %v543
    %8148 = vst [vmem:[%s8123] ss:$4 sm:$0xff] %v544
    %v8149 = vld.sshfl [vmem:[#allocation1] sm:$0xff pattern:$0x73625140]
    %v8150 = vld.sshfl [vmem:[#allocation1 + $0x8] sm:$0xff pattern:$0x73625140]
    %v8151 = vld.sshfl [vmem:[#allocation1 + $0x10] sm:$0xff pattern:$0x73625140]
    %v8152 = vld.sshfl [vmem:[#allocation1 + $0x18] sm:$0xff pattern:$0x73625140]
    %v8153 = vld.sshfl [vmem:[#allocation1 + $0x20] sm:$0xff pattern:$0x73625140]
    %v8154 = vld.sshfl [vmem:[#allocation1 + $0x28] sm:$0xff pattern:$0x73625140]
    %v8155 = vld.sshfl [vmem:[#allocation1 + $0x30] sm:$0xff pattern:$0x73625140]
    %v8156 = vld.sshfl [vmem:[#allocation1 + $0x38] sm:$0xff pattern:$0x73625140]
    %8158 = vst [vmem:[#allocation1] ss:$4 sm:$0xff] %v545
    %8160 = vst [vmem:[%s8123] ss:$4 sm:$0xff] %v546
    %v8161 = vld.sshfl [vmem:[#allocation1] sm:$0xff pattern:$0x73625140]
    %v8162 = vld.sshfl [vmem:[#allocation1 + $0x8] sm:$0xff pattern:$0x73625140]
    %v8163 = vld.sshfl [vmem:[#allocation1 + $0x10] sm:$0xff pattern:$0x73625140]
    %v8164 = vld.sshfl [vmem:[#allocation1 + $0x18] sm:$0xff pattern:$0x73625140]
    %v8165 = vld.sshfl [vmem:[#allocation1 + $0x20] sm:$0xff pattern:$0x73625140]
    %v8166 = vld.sshfl [vmem:[#allocation1 + $0x28] sm:$0xff pattern:$0x73625140]
    %v8167 = vld.sshfl [vmem:[#allocation1 + $0x30] sm:$0xff pattern:$0x73625140]
    %v8168 = vld.sshfl [vmem:[#allocation1 + $0x38] sm:$0xff pattern:$0x73625140]
    %v8169 = vsel %vm604, %v8119, 0
    %v8171 = vand.u32 %v8125, %v610
    %v8173 = vand.u32 %v8126, %v610
    %v8175 = vand.u32 %v8127, %v610
    %v8177 = vand.u32 %v8128, %v610
    %v8179 = vand.u32 %v8129, %v610
    %v8181 = vand.u32 %v8130, %v610
    %v8183 = vand.u32 %v8131, %v610
    %v8185 = vand.u32 %v8132, %v610
    %v8187 = vand.u32 %v8137, %v610
    %v8189 = vand.u32 %v8138, %v610
    %v8191 = vand.u32 %v8139, %v610
    %v8193 = vand.u32 %v8140, %v610
    %v8195 = vand.u32 %v8141, %v610
    %v8197 = vand.u32 %v8142, %v610
    %v8199 = vand.u32 %v8143, %v610
    %v8201 = vand.u32 %v8144, %v610
    %v8203 = vand.u32 %v8149, %v610
    %v8205 = vand.u32 %v8150, %v610
    %v8207 = vand.u32 %v8151, %v610
    %v8209 = vand.u32 %v8152, %v610
    %v8211 = vand.u32 %v8153, %v610
    %v8213 = vand.u32 %v8154, %v610
    %v8215 = vand.u32 %v8155, %v610
    %v8217 = vand.u32 %v8156, %v610
    %v8219 = vand.u32 %v8161, %v610
    %v8221 = vand.u32 %v8162, %v610
    %v8223 = vand.u32 %v8163, %v610
    %v8225 = vand.u32 %v8164, %v610
    %v8227 = vand.u32 %v8165, %v610
    %v8229 = vand.u32 %v8166, %v610
    %v8231 = vand.u32 %v8167, %v610
    %v8233 = vand.u32 %v8168, %v610
    %8235 = vmatpush.bf16.msra.mxu0 0
    %8236 = vmatpush.bf16.msra.mxu0 0
    %8237 = vmatpush.bf16.msra.mxu0 0
    %8238 = vmatpush.bf16.msra.mxu0 0
    %8239 = vmatpush.bf16.msra.mxu0 0
    %8240 = vmatpush.bf16.msra.mxu0 0
    %8241 = vmatpush.bf16.msra.mxu0 0
    %8242 = vmatpush.bf16.msra.mxu0 %v8171
    %8243 = vmatmul.f32.gmra.mxu0 %v8169
    %v8244 = vpop.f32.mrf.mxu0
    %v8245 = vadd.f32 0.0, %v8244
    %8246 = vdwg.mxu0
    %8247 = vmatpush.bf16.msra.mxu0 0
    %8248 = vmatpush.bf16.msra.mxu0 0
    %8249 = vmatpush.bf16.msra.mxu0 0
    %8250 = vmatpush.bf16.msra.mxu0 0
    %8251 = vmatpush.bf16.msra.mxu0 0
    %8252 = vmatpush.bf16.msra.mxu0 0
    %8253 = vmatpush.bf16.msra.mxu0 0
    %8254 = vmatpush.bf16.msra.mxu0 %v8173
    %8255 = vmatmul.f32.gmra.mxu0 %v8169
    %v8256 = vpop.f32.mrf.mxu0
    %v8257 = vadd.f32 0.0, %v8256
    %8258 = vdwg.mxu0
    %8259 = vmatpush.bf16.msra.mxu0 0
    %8260 = vmatpush.bf16.msra.mxu0 0
    %8261 = vmatpush.bf16.msra.mxu0 0
    %8262 = vmatpush.bf16.msra.mxu0 0
    %8263 = vmatpush.bf16.msra.mxu0 0
    %8264 = vmatpush.bf16.msra.mxu0 0
    %8265 = vmatpush.bf16.msra.mxu0 0
    %8266 = vmatpush.bf16.msra.mxu0 %v8175
    %8267 = vmatmul.f32.gmra.mxu0 %v8169
    %v8268 = vpop.f32.mrf.mxu0
    %v8269 = vadd.f32 0.0, %v8268
    %8270 = vdwg.mxu0
    %8271 = vmatpush.bf16.msra.mxu0 0
    %8272 = vmatpush.bf16.msra.mxu0 0
    %8273 = vmatpush.bf16.msra.mxu0 0
    %8274 = vmatpush.bf16.msra.mxu0 0
    %8275 = vmatpush.bf16.msra.mxu0 0
    %8276 = vmatpush.bf16.msra.mxu0 0
    %8277 = vmatpush.bf16.msra.mxu0 0
    %8278 = vmatpush.bf16.msra.mxu0 %v8177
    %8279 = vmatmul.f32.gmra.mxu0 %v8169
    %v8280 = vpop.f32.mrf.mxu0
    %v8281 = vadd.f32 0.0, %v8280
    %8282 = vdwg.mxu0
    %8283 = vmatpush.bf16.msra.mxu0 0
    %8284 = vmatpush.bf16.msra.mxu0 0
    %8285 = vmatpush.bf16.msra.mxu0 0
    %8286 = vmatpush.bf16.msra.mxu0 0
    %8287 = vmatpush.bf16.msra.mxu0 0
    %8288 = vmatpush.bf16.msra.mxu0 0
    %8289 = vmatpush.bf16.msra.mxu0 0
    %8290 = vmatpush.bf16.msra.mxu0 %v8179
    %8291 = vmatmul.f32.gmra.mxu0 %v8169
    %v8292 = vpop.f32.mrf.mxu0
    %v8293 = vadd.f32 0.0, %v8292
    %8294 = vdwg.mxu0
    %8295 = vmatpush.bf16.msra.mxu0 0
    %8296 = vmatpush.bf16.msra.mxu0 0
    %8297 = vmatpush.bf16.msra.mxu0 0
    %8298 = vmatpush.bf16.msra.mxu0 0
    %8299 = vmatpush.bf16.msra.mxu0 0
    %8300 = vmatpush.bf16.msra.mxu0 0
    %8301 = vmatpush.bf16.msra.mxu0 0
    %8302 = vmatpush.bf16.msra.mxu0 %v8181
    %8303 = vmatmul.f32.gmra.mxu0 %v8169
    %v8304 = vpop.f32.mrf.mxu0
    %v8305 = vadd.f32 0.0, %v8304
    %8306 = vdwg.mxu0
    %8307 = vmatpush.bf16.msra.mxu0 0
    %8308 = vmatpush.bf16.msra.mxu0 0
    %8309 = vmatpush.bf16.msra.mxu0 0
    %8310 = vmatpush.bf16.msra.mxu0 0
    %8311 = vmatpush.bf16.msra.mxu0 0
    %8312 = vmatpush.bf16.msra.mxu0 0
    %8313 = vmatpush.bf16.msra.mxu0 0
    %8314 = vmatpush.bf16.msra.mxu0 %v8183
    %8315 = vmatmul.f32.gmra.mxu0 %v8169
    %v8316 = vpop.f32.mrf.mxu0
    %v8317 = vadd.f32 0.0, %v8316
    %8318 = vdwg.mxu0
    %8319 = vmatpush.bf16.msra.mxu0 0
    %8320 = vmatpush.bf16.msra.mxu0 0
    %8321 = vmatpush.bf16.msra.mxu0 0
    %8322 = vmatpush.bf16.msra.mxu0 0
    %8323 = vmatpush.bf16.msra.mxu0 0
    %8324 = vmatpush.bf16.msra.mxu0 0
    %8325 = vmatpush.bf16.msra.mxu0 0
    %8326 = vmatpush.bf16.msra.mxu0 %v8185
    %8327 = vmatmul.f32.gmra.mxu0 %v8169
    %v8328 = vpop.f32.mrf.mxu0
    %v8329 = vadd.f32 0.0, %v8328
    %8330 = vdwg.mxu0
    %8331 = vmatpush.bf16.msra.mxu0 0
    %8332 = vmatpush.bf16.msra.mxu0 0
    %8333 = vmatpush.bf16.msra.mxu0 0
    %8334 = vmatpush.bf16.msra.mxu0 0
    %8335 = vmatpush.bf16.msra.mxu0 0
    %8336 = vmatpush.bf16.msra.mxu0 0
    %8337 = vmatpush.bf16.msra.mxu0 0
    %8338 = vmatpush.bf16.msra.mxu0 %v8187
    %8339 = vmatmul.f32.gmra.mxu0 %v8169
    %v8340 = vpop.f32.mrf.mxu0
    %v8341 = vadd.f32 0.0, %v8340
    %8342 = vdwg.mxu0
    %8343 = vmatpush.bf16.msra.mxu0 0
    %8344 = vmatpush.bf16.msra.mxu0 0
    %8345 = vmatpush.bf16.msra.mxu0 0
    %8346 = vmatpush.bf16.msra.mxu0 0
    %8347 = vmatpush.bf16.msra.mxu0 0
    %8348 = vmatpush.bf16.msra.mxu0 0
    %8349 = vmatpush.bf16.msra.mxu0 0
    %8350 = vmatpush.bf16.msra.mxu0 %v8189
    %8351 = vmatmul.f32.gmra.mxu0 %v8169
    %v8352 = vpop.f32.mrf.mxu0
    %v8353 = vadd.f32 0.0, %v8352
    %8354 = vdwg.mxu0
    %8355 = vmatpush.bf16.msra.mxu0 0
    %8356 = vmatpush.bf16.msra.mxu0 0
    %8357 = vmatpush.bf16.msra.mxu0 0
    %8358 = vmatpush.bf16.msra.mxu0 0
    %8359 = vmatpush.bf16.msra.mxu0 0
    %8360 = vmatpush.bf16.msra.mxu0 0
    %8361 = vmatpush.bf16.msra.mxu0 0
    %8362 = vmatpush.bf16.msra.mxu0 %v8191
    %8363 = vmatmul.f32.gmra.mxu0 %v8169
    %v8364 = vpop.f32.mrf.mxu0
    %v8365 = vadd.f32 0.0, %v8364
    %8366 = vdwg.mxu0
    %8367 = vmatpush.bf16.msra.mxu0 0
    %8368 = vmatpush.bf16.msra.mxu0 0
    %8369 = vmatpush.bf16.msra.mxu0 0
    %8370 = vmatpush.bf16.msra.mxu0 0
    %8371 = vmatpush.bf16.msra.mxu0 0
    %8372 = vmatpush.bf16.msra.mxu0 0
    %8373 = vmatpush.bf16.msra.mxu0 0
    %8374 = vmatpush.bf16.msra.mxu0 %v8193
    %8375 = vmatmul.f32.gmra.mxu0 %v8169
    %v8376 = vpop.f32.mrf.mxu0
    %v8377 = vadd.f32 0.0, %v8376
    %8378 = vdwg.mxu0
    %8379 = vmatpush.bf16.msra.mxu0 0
    %8380 = vmatpush.bf16.msra.mxu0 0
    %8381 = vmatpush.bf16.msra.mxu0 0
    %8382 = vmatpush.bf16.msra.mxu0 0
    %8383 = vmatpush.bf16.msra.mxu0 0
    %8384 = vmatpush.bf16.msra.mxu0 0
    %8385 = vmatpush.bf16.msra.mxu0 0
    %8386 = vmatpush.bf16.msra.mxu0 %v8195
    %8387 = vmatmul.f32.gmra.mxu0 %v8169
    %v8388 = vpop.f32.mrf.mxu0
    %v8389 = vadd.f32 0.0, %v8388
    %8390 = vdwg.mxu0
    %8391 = vmatpush.bf16.msra.mxu0 0
    %8392 = vmatpush.bf16.msra.mxu0 0
    %8393 = vmatpush.bf16.msra.mxu0 0
    %8394 = vmatpush.bf16.msra.mxu0 0
    %8395 = vmatpush.bf16.msra.mxu0 0
    %8396 = vmatpush.bf16.msra.mxu0 0
    %8397 = vmatpush.bf16.msra.mxu0 0
    %8398 = vmatpush.bf16.msra.mxu0 %v8197
    %8399 = vmatmul.f32.gmra.mxu0 %v8169
    %v8400 = vpop.f32.mrf.mxu0
    %v8401 = vadd.f32 0.0, %v8400
    %8402 = vdwg.mxu0
    %8403 = vmatpush.bf16.msra.mxu0 0
    %8404 = vmatpush.bf16.msra.mxu0 0
    %8405 = vmatpush.bf16.msra.mxu0 0
    %8406 = vmatpush.bf16.msra.mxu0 0
    %8407 = vmatpush.bf16.msra.mxu0 0
    %8408 = vmatpush.bf16.msra.mxu0 0
    %8409 = vmatpush.bf16.msra.mxu0 0
    %8410 = vmatpush.bf16.msra.mxu0 %v8199
    %8411 = vmatmul.f32.gmra.mxu0 %v8169
    %v8412 = vpop.f32.mrf.mxu0
    %v8413 = vadd.f32 0.0, %v8412
    %8414 = vdwg.mxu0
    %8415 = vmatpush.bf16.msra.mxu0 0
    %8416 = vmatpush.bf16.msra.mxu0 0
    %8417 = vmatpush.bf16.msra.mxu0 0
    %8418 = vmatpush.bf16.msra.mxu0 0
    %8419 = vmatpush.bf16.msra.mxu0 0
    %8420 = vmatpush.bf16.msra.mxu0 0
    %8421 = vmatpush.bf16.msra.mxu0 0
    %8422 = vmatpush.bf16.msra.mxu0 %v8201
    %8423 = vmatmul.f32.gmra.mxu0 %v8169
    %v8424 = vpop.f32.mrf.mxu0
    %v8425 = vadd.f32 0.0, %v8424
    %8426 = vdwg.mxu0
    %8427 = vmatpush.bf16.msra.mxu0 0
    %8428 = vmatpush.bf16.msra.mxu0 0
    %8429 = vmatpush.bf16.msra.mxu0 0
    %8430 = vmatpush.bf16.msra.mxu0 0
    %8431 = vmatpush.bf16.msra.mxu0 0
    %8432 = vmatpush.bf16.msra.mxu0 0
    %8433 = vmatpush.bf16.msra.mxu0 0
    %8434 = vmatpush.bf16.msra.mxu0 %v8203
    %8435 = vmatmul.f32.gmra.mxu0 %v8169
    %v8436 = vpop.f32.mrf.mxu0
    %v8437 = vadd.f32 0.0, %v8436
    %8438 = vdwg.mxu0
    %8439 = vmatpush.bf16.msra.mxu0 0
    %8440 = vmatpush.bf16.msra.mxu0 0
    %8441 = vmatpush.bf16.msra.mxu0 0
    %8442 = vmatpush.bf16.msra.mxu0 0
    %8443 = vmatpush.bf16.msra.mxu0 0
    %8444 = vmatpush.bf16.msra.mxu0 0
    %8445 = vmatpush.bf16.msra.mxu0 0
    %8446 = vmatpush.bf16.msra.mxu0 %v8205
    %8447 = vmatmul.f32.gmra.mxu0 %v8169
    %v8448 = vpop.f32.mrf.mxu0
    %v8449 = vadd.f32 0.0, %v8448
    %8450 = vdwg.mxu0
    %8451 = vmatpush.bf16.msra.mxu0 0
    %8452 = vmatpush.bf16.msra.mxu0 0
    %8453 = vmatpush.bf16.msra.mxu0 0
    %8454 = vmatpush.bf16.msra.mxu0 0
    %8455 = vmatpush.bf16.msra.mxu0 0
    %8456 = vmatpush.bf16.msra.mxu0 0
    %8457 = vmatpush.bf16.msra.mxu0 0
    %8458 = vmatpush.bf16.msra.mxu0 %v8207
    %8459 = vmatmul.f32.gmra.mxu0 %v8169
    %v8460 = vpop.f32.mrf.mxu0
    %v8461 = vadd.f32 0.0, %v8460
    %8462 = vdwg.mxu0
    %8463 = vmatpush.bf16.msra.mxu0 0
    %8464 = vmatpush.bf16.msra.mxu0 0
    %8465 = vmatpush.bf16.msra.mxu0 0
    %8466 = vmatpush.bf16.msra.mxu0 0
    %8467 = vmatpush.bf16.msra.mxu0 0
    %8468 = vmatpush.bf16.msra.mxu0 0
    %8469 = vmatpush.bf16.msra.mxu0 0
    %8470 = vmatpush.bf16.msra.mxu0 %v8209
    %8471 = vmatmul.f32.gmra.mxu0 %v8169
    %v8472 = vpop.f32.mrf.mxu0
    %v8473 = vadd.f32 0.0, %v8472
    %8474 = vdwg.mxu0
    %8475 = vmatpush.bf16.msra.mxu0 0
    %8476 = vmatpush.bf16.msra.mxu0 0
    %8477 = vmatpush.bf16.msra.mxu0 0
    %8478 = vmatpush.bf16.msra.mxu0 0
    %8479 = vmatpush.bf16.msra.mxu0 0
    %8480 = vmatpush.bf16.msra.mxu0 0
    %8481 = vmatpush.bf16.msra.mxu0 0
    %8482 = vmatpush.bf16.msra.mxu0 %v8211
    %8483 = vmatmul.f32.gmra.mxu0 %v8169
    %v8484 = vpop.f32.mrf.mxu0
    %v8485 = vadd.f32 0.0, %v8484
    %8486 = vdwg.mxu0
    %8487 = vmatpush.bf16.msra.mxu0 0
    %8488 = vmatpush.bf16.msra.mxu0 0
    %8489 = vmatpush.bf16.msra.mxu0 0
    %8490 = vmatpush.bf16.msra.mxu0 0
    %8491 = vmatpush.bf16.msra.mxu0 0
    %8492 = vmatpush.bf16.msra.mxu0 0
    %8493 = vmatpush.bf16.msra.mxu0 0
    %8494 = vmatpush.bf16.msra.mxu0 %v8213
    %8495 = vmatmul.f32.gmra.mxu0 %v8169
    %v8496 = vpop.f32.mrf.mxu0
    %v8497 = vadd.f32 0.0, %v8496
    %8498 = vdwg.mxu0
    %8499 = vmatpush.bf16.msra.mxu0 0
    %8500 = vmatpush.bf16.msra.mxu0 0
    %8501 = vmatpush.bf16.msra.mxu0 0
    %8502 = vmatpush.bf16.msra.mxu0 0
    %8503 = vmatpush.bf16.msra.mxu0 0
    %8504 = vmatpush.bf16.msra.mxu0 0
    %8505 = vmatpush.bf16.msra.mxu0 0
    %8506 = vmatpush.bf16.msra.mxu0 %v8215
    %8507 = vmatmul.f32.gmra.mxu0 %v8169
    %v8508 = vpop.f32.mrf.mxu0
    %v8509 = vadd.f32 0.0, %v8508
    %8510 = vdwg.mxu0
    %8511 = vmatpush.bf16.msra.mxu0 0
    %8512 = vmatpush.bf16.msra.mxu0 0
    %8513 = vmatpush.bf16.msra.mxu0 0
    %8514 = vmatpush.bf16.msra.mxu0 0
    %8515 = vmatpush.bf16.msra.mxu0 0
    %8516 = vmatpush.bf16.msra.mxu0 0
    %8517 = vmatpush.bf16.msra.mxu0 0
    %8518 = vmatpush.bf16.msra.mxu0 %v8217
    %8519 = vmatmul.f32.gmra.mxu0 %v8169
    %v8520 = vpop.f32.mrf.mxu0
    %v8521 = vadd.f32 0.0, %v8520
    %8522 = vdwg.mxu0
    %8523 = vmatpush.bf16.msra.mxu0 0
    %8524 = vmatpush.bf16.msra.mxu0 0
    %8525 = vmatpush.bf16.msra.mxu0 0
    %8526 = vmatpush.bf16.msra.mxu0 0
    %8527 = vmatpush.bf16.msra.mxu0 0
    %8528 = vmatpush.bf16.msra.mxu0 0
    %8529 = vmatpush.bf16.msra.mxu0 0
    %8530 = vmatpush.bf16.msra.mxu0 %v8219
    %8531 = vmatmul.f32.gmra.mxu0 %v8169
    %v8532 = vpop.f32.mrf.mxu0
    %v8533 = vadd.f32 0.0, %v8532
    %8534 = vdwg.mxu0
    %8535 = vmatpush.bf16.msra.mxu0 0
    %8536 = vmatpush.bf16.msra.mxu0 0
    %8537 = vmatpush.bf16.msra.mxu0 0
    %8538 = vmatpush.bf16.msra.mxu0 0
    %8539 = vmatpush.bf16.msra.mxu0 0
    %8540 = vmatpush.bf16.msra.mxu0 0
    %8541 = vmatpush.bf16.msra.mxu0 0
    %8542 = vmatpush.bf16.msra.mxu0 %v8221
    %8543 = vmatmul.f32.gmra.mxu0 %v8169
    %v8544 = vpop.f32.mrf.mxu0
    %v8545 = vadd.f32 0.0, %v8544
    %8546 = vdwg.mxu0
    %8547 = vmatpush.bf16.msra.mxu0 0
    %8548 = vmatpush.bf16.msra.mxu0 0
    %8549 = vmatpush.bf16.msra.mxu0 0
    %8550 = vmatpush.bf16.msra.mxu0 0
    %8551 = vmatpush.bf16.msra.mxu0 0
    %8552 = vmatpush.bf16.msra.mxu0 0
    %8553 = vmatpush.bf16.msra.mxu0 0
    %8554 = vmatpush.bf16.msra.mxu0 %v8223
    %8555 = vmatmul.f32.gmra.mxu0 %v8169
    %v8556 = vpop.f32.mrf.mxu0
    %v8557 = vadd.f32 0.0, %v8556
    %8558 = vdwg.mxu0
    %8559 = vmatpush.bf16.msra.mxu0 0
    %8560 = vmatpush.bf16.msra.mxu0 0
    %8561 = vmatpush.bf16.msra.mxu0 0
    %8562 = vmatpush.bf16.msra.mxu0 0
    %8563 = vmatpush.bf16.msra.mxu0 0
    %8564 = vmatpush.bf16.msra.mxu0 0
    %8565 = vmatpush.bf16.msra.mxu0 0
    %8566 = vmatpush.bf16.msra.mxu0 %v8225
    %8567 = vmatmul.f32.gmra.mxu0 %v8169
    %v8568 = vpop.f32.mrf.mxu0
    %v8569 = vadd.f32 0.0, %v8568
    %8570 = vdwg.mxu0
    %8571 = vmatpush.bf16.msra.mxu0 0
    %8572 = vmatpush.bf16.msra.mxu0 0
    %8573 = vmatpush.bf16.msra.mxu0 0
    %8574 = vmatpush.bf16.msra.mxu0 0
    %8575 = vmatpush.bf16.msra.mxu0 0
    %8576 = vmatpush.bf16.msra.mxu0 0
    %8577 = vmatpush.bf16.msra.mxu0 0
    %8578 = vmatpush.bf16.msra.mxu0 %v8227
    %8579 = vmatmul.f32.gmra.mxu0 %v8169
    %v8580 = vpop.f32.mrf.mxu0
    %v8581 = vadd.f32 0.0, %v8580
    %8582 = vdwg.mxu0
    %8583 = vmatpush.bf16.msra.mxu0 0
    %8584 = vmatpush.bf16.msra.mxu0 0
    %8585 = vmatpush.bf16.msra.mxu0 0
    %8586 = vmatpush.bf16.msra.mxu0 0
    %8587 = vmatpush.bf16.msra.mxu0 0
    %8588 = vmatpush.bf16.msra.mxu0 0
    %8589 = vmatpush.bf16.msra.mxu0 0
    %8590 = vmatpush.bf16.msra.mxu0 %v8229
    %8591 = vmatmul.f32.gmra.mxu0 %v8169
    %v8592 = vpop.f32.mrf.mxu0
    %v8593 = vadd.f32 0.0, %v8592
    %8594 = vdwg.mxu0
    %8595 = vmatpush.bf16.msra.mxu0 0
    %8596 = vmatpush.bf16.msra.mxu0 0
    %8597 = vmatpush.bf16.msra.mxu0 0
    %8598 = vmatpush.bf16.msra.mxu0 0
    %8599 = vmatpush.bf16.msra.mxu0 0
    %8600 = vmatpush.bf16.msra.mxu0 0
    %8601 = vmatpush.bf16.msra.mxu0 0
    %8602 = vmatpush.bf16.msra.mxu0 %v8231
    %8603 = vmatmul.f32.gmra.mxu0 %v8169
    %v8604 = vpop.f32.mrf.mxu0
    %v8605 = vadd.f32 0.0, %v8604
    %8606 = vdwg.mxu0
    %8607 = vmatpush.bf16.msra.mxu0 0
    %8608 = vmatpush.bf16.msra.mxu0 0
    %8609 = vmatpush.bf16.msra.mxu0 0
    %8610 = vmatpush.bf16.msra.mxu0 0
    %8611 = vmatpush.bf16.msra.mxu0 0
    %8612 = vmatpush.bf16.msra.mxu0 0
    %8613 = vmatpush.bf16.msra.mxu0 0
    %8614 = vmatpush.bf16.msra.mxu0 %v8233
    %8615 = vmatmul.f32.gmra.mxu0 %v8169
    %v8616 = vpop.f32.mrf.mxu0
    %v8617 = vadd.f32 0.0, %v8616
    %8618 = vdwg.mxu0
    %v8619 = vsel %vm608, %v685, 0.0
    %v8620 = vsel %vm608, %v1189, 0.0
    %v8621 = vadd.f32 %v8619, %v8620
    %v8622 = vsel %vm608, %v1693, 0.0
    %v8623 = vadd.f32 %v8621, %v8622
    %v8624 = vsel %vm608, %v2197, 0.0
    %v8625 = vadd.f32 %v8623, %v8624
    %v8626 = vsel %vm608, %v2701, 0.0
    %v8627 = vadd.f32 %v8625, %v8626
    %v8628 = vsel %vm608, %v3205, 0.0
    %v8629 = vadd.f32 %v8627, %v8628
    %v8630 = vsel %vm608, %v3709, 0.0
    %v8631 = vadd.f32 %v8629, %v8630
    %v8632 = vsel %vm608, %v4213, 0.0
    %v8633 = vadd.f32 %v8631, %v8632
    %v8634 = vsel %vm608, %v4717, 0.0
    %v8635 = vadd.f32 %v8633, %v8634
    %v8636 = vsel %vm608, %v5221, 0.0
    %v8637 = vadd.f32 %v8635, %v8636
    %v8638 = vsel %vm608, %v5725, 0.0
    %v8639 = vadd.f32 %v8637, %v8638
    %v8640 = vsel %vm608, %v6229, 0.0
    %v8641 = vadd.f32 %v8639, %v8640
    %v8642 = vsel %vm608, %v6733, 0.0
    %v8643 = vadd.f32 %v8641, %v8642
    %v8644 = vsel %vm608, %v7237, 0.0
    %v8645 = vadd.f32 %v8643, %v8644
    %v8646 = vsel %vm608, %v7741, 0.0
    %v8647 = vadd.f32 %v8645, %v8646
    %v8648 = vsel %vm608, %v8245, 0.0
    %v8649 = vadd.f32 %v8647, %v8648
    %v8650 = vsel %vm608, %v697, 0.0
    %v8651 = vsel %vm608, %v1201, 0.0
    %v8652 = vadd.f32 %v8650, %v8651
    %v8653 = vsel %vm608, %v1705, 0.0
    %v8654 = vadd.f32 %v8652, %v8653
    %v8655 = vsel %vm608, %v2209, 0.0
    %v8656 = vadd.f32 %v8654, %v8655
    %v8657 = vsel %vm608, %v2713, 0.0
    %v8658 = vadd.f32 %v8656, %v8657
    %v8659 = vsel %vm608, %v3217, 0.0
    %v8660 = vadd.f32 %v8658, %v8659
    %v8661 = vsel %vm608, %v3721, 0.0
    %v8662 = vadd.f32 %v8660, %v8661
    %v8663 = vsel %vm608, %v4225, 0.0
    %v8664 = vadd.f32 %v8662, %v8663
    %v8665 = vsel %vm608, %v4729, 0.0
    %v8666 = vadd.f32 %v8664, %v8665
    %v8667 = vsel %vm608, %v5233, 0.0
    %v8668 = vadd.f32 %v8666, %v8667
    %v8669 = vsel %vm608, %v5737, 0.0
    %v8670 = vadd.f32 %v8668, %v8669
    %v8671 = vsel %vm608, %v6241, 0.0
    %v8672 = vadd.f32 %v8670, %v8671
    %v8673 = vsel %vm608, %v6745, 0.0
    %v8674 = vadd.f32 %v8672, %v8673
    %v8675 = vsel %vm608, %v7249, 0.0
    %v8676 = vadd.f32 %v8674, %v8675
    %v8677 = vsel %vm608, %v7753, 0.0
    %v8678 = vadd.f32 %v8676, %v8677
    %v8679 = vsel %vm608, %v8257, 0.0
    %v8680 = vadd.f32 %v8678, %v8679
    %v8681 = vsel %vm608, %v709, 0.0
    %v8682 = vsel %vm608, %v1213, 0.0
    %v8683 = vadd.f32 %v8681, %v8682
    %v8684 = vsel %vm608, %v1717, 0.0
    %v8685 = vadd.f32 %v8683, %v8684
    %v8686 = vsel %vm608, %v2221, 0.0
    %v8687 = vadd.f32 %v8685, %v8686
    %v8688 = vsel %vm608, %v2725, 0.0
    %v8689 = vadd.f32 %v8687, %v8688
    %v8690 = vsel %vm608, %v3229, 0.0
    %v8691 = vadd.f32 %v8689, %v8690
    %v8692 = vsel %vm608, %v3733, 0.0
    %v8693 = vadd.f32 %v8691, %v8692
    %v8694 = vsel %vm608, %v4237, 0.0
    %v8695 = vadd.f32 %v8693, %v8694
    %v8696 = vsel %vm608, %v4741, 0.0
    %v8697 = vadd.f32 %v8695, %v8696
    %v8698 = vsel %vm608, %v5245, 0.0
    %v8699 = vadd.f32 %v8697, %v8698
    %v8700 = vsel %vm608, %v5749, 0.0
    %v8701 = vadd.f32 %v8699, %v8700
    %v8702 = vsel %vm608, %v6253, 0.0
    %v8703 = vadd.f32 %v8701, %v8702
    %v8704 = vsel %vm608, %v6757, 0.0
    %v8705 = vadd.f32 %v8703, %v8704
    %v8706 = vsel %vm608, %v7261, 0.0
    %v8707 = vadd.f32 %v8705, %v8706
    %v8708 = vsel %vm608, %v7765, 0.0
    %v8709 = vadd.f32 %v8707, %v8708
    %v8710 = vsel %vm608, %v8269, 0.0
    %v8711 = vadd.f32 %v8709, %v8710
    %v8712 = vsel %vm608, %v721, 0.0
    %v8713 = vsel %vm608, %v1225, 0.0
    %v8714 = vadd.f32 %v8712, %v8713
    %v8715 = vsel %vm608, %v1729, 0.0
    %v8716 = vadd.f32 %v8714, %v8715
    %v8717 = vsel %vm608, %v2233, 0.0
    %v8718 = vadd.f32 %v8716, %v8717
    %v8719 = vsel %vm608, %v2737, 0.0
    %v8720 = vadd.f32 %v8718, %v8719
    %v8721 = vsel %vm608, %v3241, 0.0
    %v8722 = vadd.f32 %v8720, %v8721
    %v8723 = vsel %vm608, %v3745, 0.0
    %v8724 = vadd.f32 %v8722, %v8723
    %v8725 = vsel %vm608, %v4249, 0.0
    %v8726 = vadd.f32 %v8724, %v8725
    %v8727 = vsel %vm608, %v4753, 0.0
    %v8728 = vadd.f32 %v8726, %v8727
    %v8729 = vsel %vm608, %v5257, 0.0
    %v8730 = vadd.f32 %v8728, %v8729
    %v8731 = vsel %vm608, %v5761, 0.0
    %v8732 = vadd.f32 %v8730, %v8731
    %v8733 = vsel %vm608, %v6265, 0.0
    %v8734 = vadd.f32 %v8732, %v8733
    %v8735 = vsel %vm608, %v6769, 0.0
    %v8736 = vadd.f32 %v8734, %v8735
    %v8737 = vsel %vm608, %v7273, 0.0
    %v8738 = vadd.f32 %v8736, %v8737
    %v8739 = vsel %vm608, %v7777, 0.0
    %v8740 = vadd.f32 %v8738, %v8739
    %v8741 = vsel %vm608, %v8281, 0.0
    %v8742 = vadd.f32 %v8740, %v8741
    %v8743 = vsel %vm608, %v733, 0.0
    %v8744 = vsel %vm608, %v1237, 0.0
    %v8745 = vadd.f32 %v8743, %v8744
    %v8746 = vsel %vm608, %v1741, 0.0
    %v8747 = vadd.f32 %v8745, %v8746
    %v8748 = vsel %vm608, %v2245, 0.0
    %v8749 = vadd.f32 %v8747, %v8748
    %v8750 = vsel %vm608, %v2749, 0.0
    %v8751 = vadd.f32 %v8749, %v8750
    %v8752 = vsel %vm608, %v3253, 0.0
    %v8753 = vadd.f32 %v8751, %v8752
    %v8754 = vsel %vm608, %v3757, 0.0
    %v8755 = vadd.f32 %v8753, %v8754
    %v8756 = vsel %vm608, %v4261, 0.0
    %v8757 = vadd.f32 %v8755, %v8756
    %v8758 = vsel %vm608, %v4765, 0.0
    %v8759 = vadd.f32 %v8757, %v8758
    %v8760 = vsel %vm608, %v5269, 0.0
    %v8761 = vadd.f32 %v8759, %v8760
    %v8762 = vsel %vm608, %v5773, 0.0
    %v8763 = vadd.f32 %v8761, %v8762
    %v8764 = vsel %vm608, %v6277, 0.0
    %v8765 = vadd.f32 %v8763, %v8764
    %v8766 = vsel %vm608, %v6781, 0.0
    %v8767 = vadd.f32 %v8765, %v8766
    %v8768 = vsel %vm608, %v7285, 0.0
    %v8769 = vadd.f32 %v8767, %v8768
    %v8770 = vsel %vm608, %v7789, 0.0
    %v8771 = vadd.f32 %v8769, %v8770
    %v8772 = vsel %vm608, %v8293, 0.0
    %v8773 = vadd.f32 %v8771, %v8772
    %v8774 = vsel %vm608, %v745, 0.0
    %v8775 = vsel %vm608, %v1249, 0.0
    %v8776 = vadd.f32 %v8774, %v8775
    %v8777 = vsel %vm608, %v1753, 0.0
    %v8778 = vadd.f32 %v8776, %v8777
    %v8779 = vsel %vm608, %v2257, 0.0
    %v8780 = vadd.f32 %v8778, %v8779
    %v8781 = vsel %vm608, %v2761, 0.0
    %v8782 = vadd.f32 %v8780, %v8781
    %v8783 = vsel %vm608, %v3265, 0.0
    %v8784 = vadd.f32 %v8782, %v8783
    %v8785 = vsel %vm608, %v3769, 0.0
    %v8786 = vadd.f32 %v8784, %v8785
    %v8787 = vsel %vm608, %v4273, 0.0
    %v8788 = vadd.f32 %v8786, %v8787
    %v8789 = vsel %vm608, %v4777, 0.0
    %v8790 = vadd.f32 %v8788, %v8789
    %v8791 = vsel %vm608, %v5281, 0.0
    %v8792 = vadd.f32 %v8790, %v8791
    %v8793 = vsel %vm608, %v5785, 0.0
    %v8794 = vadd.f32 %v8792, %v8793
    %v8795 = vsel %vm608, %v6289, 0.0
    %v8796 = vadd.f32 %v8794, %v8795
    %v8797 = vsel %vm608, %v6793, 0.0
    %v8798 = vadd.f32 %v8796, %v8797
    %v8799 = vsel %vm608, %v7297, 0.0
    %v8800 = vadd.f32 %v8798, %v8799
    %v8801 = vsel %vm608, %v7801, 0.0
    %v8802 = vadd.f32 %v8800, %v8801
    %v8803 = vsel %vm608, %v8305, 0.0
    %v8804 = vadd.f32 %v8802, %v8803
    %v8805 = vsel %vm608, %v757, 0.0
    %v8806 = vsel %vm608, %v1261, 0.0
    %v8807 = vadd.f32 %v8805, %v8806
    %v8808 = vsel %vm608, %v1765, 0.0
    %v8809 = vadd.f32 %v8807, %v8808
    %v8810 = vsel %vm608, %v2269, 0.0
    %v8811 = vadd.f32 %v8809, %v8810
    %v8812 = vsel %vm608, %v2773, 0.0
    %v8813 = vadd.f32 %v8811, %v8812
    %v8814 = vsel %vm608, %v3277, 0.0
    %v8815 = vadd.f32 %v8813, %v8814
    %v8816 = vsel %vm608, %v3781, 0.0
    %v8817 = vadd.f32 %v8815, %v8816
    %v8818 = vsel %vm608, %v4285, 0.0
    %v8819 = vadd.f32 %v8817, %v8818
    %v8820 = vsel %vm608, %v4789, 0.0
    %v8821 = vadd.f32 %v8819, %v8820
    %v8822 = vsel %vm608, %v5293, 0.0
    %v8823 = vadd.f32 %v8821, %v8822
    %v8824 = vsel %vm608, %v5797, 0.0
    %v8825 = vadd.f32 %v8823, %v8824
    %v8826 = vsel %vm608, %v6301, 0.0
    %v8827 = vadd.f32 %v8825, %v8826
    %v8828 = vsel %vm608, %v6805, 0.0
    %v8829 = vadd.f32 %v8827, %v8828
    %v8830 = vsel %vm608, %v7309, 0.0
    %v8831 = vadd.f32 %v8829, %v8830
    %v8832 = vsel %vm608, %v7813, 0.0
    %v8833 = vadd.f32 %v8831, %v8832
    %v8834 = vsel %vm608, %v8317, 0.0
    %v8835 = vadd.f32 %v8833, %v8834
    %v8836 = vsel %vm608, %v769, 0.0
    %v8837 = vsel %vm608, %v1273, 0.0
    %v8838 = vadd.f32 %v8836, %v8837
    %v8839 = vsel %vm608, %v1777, 0.0
    %v8840 = vadd.f32 %v8838, %v8839
    %v8841 = vsel %vm608, %v2281, 0.0
    %v8842 = vadd.f32 %v8840, %v8841
    %v8843 = vsel %vm608, %v2785, 0.0
    %v8844 = vadd.f32 %v8842, %v8843
    %v8845 = vsel %vm608, %v3289, 0.0
    %v8846 = vadd.f32 %v8844, %v8845
    %v8847 = vsel %vm608, %v3793, 0.0
    %v8848 = vadd.f32 %v8846, %v8847
    %v8849 = vsel %vm608, %v4297, 0.0
    %v8850 = vadd.f32 %v8848, %v8849
    %v8851 = vsel %vm608, %v4801, 0.0
    %v8852 = vadd.f32 %v8850, %v8851
    %v8853 = vsel %vm608, %v5305, 0.0
    %v8854 = vadd.f32 %v8852, %v8853
    %v8855 = vsel %vm608, %v5809, 0.0
    %v8856 = vadd.f32 %v8854, %v8855
    %v8857 = vsel %vm608, %v6313, 0.0
    %v8858 = vadd.f32 %v8856, %v8857
    %v8859 = vsel %vm608, %v6817, 0.0
    %v8860 = vadd.f32 %v8858, %v8859
    %v8861 = vsel %vm608, %v7321, 0.0
    %v8862 = vadd.f32 %v8860, %v8861
    %v8863 = vsel %vm608, %v7825, 0.0
    %v8864 = vadd.f32 %v8862, %v8863
    %v8865 = vsel %vm608, %v8329, 0.0
    %v8866 = vadd.f32 %v8864, %v8865
    %v8867 = vsel %vm608, %v781, 0.0
    %v8868 = vsel %vm608, %v1285, 0.0
    %v8869 = vadd.f32 %v8867, %v8868
    %v8870 = vsel %vm608, %v1789, 0.0
    %v8871 = vadd.f32 %v8869, %v8870
    %v8872 = vsel %vm608, %v2293, 0.0
    %v8873 = vadd.f32 %v8871, %v8872
    %v8874 = vsel %vm608, %v2797, 0.0
    %v8875 = vadd.f32 %v8873, %v8874
    %v8876 = vsel %vm608, %v3301, 0.0
    %v8877 = vadd.f32 %v8875, %v8876
    %v8878 = vsel %vm608, %v3805, 0.0
    %v8879 = vadd.f32 %v8877, %v8878
    %v8880 = vsel %vm608, %v4309, 0.0
    %v8881 = vadd.f32 %v8879, %v8880
    %v8882 = vsel %vm608, %v4813, 0.0
    %v8883 = vadd.f32 %v8881, %v8882
    %v8884 = vsel %vm608, %v5317, 0.0
    %v8885 = vadd.f32 %v8883, %v8884
    %v8886 = vsel %vm608, %v5821, 0.0
    %v8887 = vadd.f32 %v8885, %v8886
    %v8888 = vsel %vm608, %v6325, 0.0
    %v8889 = vadd.f32 %v8887, %v8888
    %v8890 = vsel %vm608, %v6829, 0.0
    %v8891 = vadd.f32 %v8889, %v8890
    %v8892 = vsel %vm608, %v7333, 0.0
    %v8893 = vadd.f32 %v8891, %v8892
    %v8894 = vsel %vm608, %v7837, 0.0
    %v8895 = vadd.f32 %v8893, %v8894
    %v8896 = vsel %vm608, %v8341, 0.0
    %v8897 = vadd.f32 %v8895, %v8896
    %v8898 = vsel %vm608, %v793, 0.0
    %v8899 = vsel %vm608, %v1297, 0.0
    %v8900 = vadd.f32 %v8898, %v8899
    %v8901 = vsel %vm608, %v1801, 0.0
    %v8902 = vadd.f32 %v8900, %v8901
    %v8903 = vsel %vm608, %v2305, 0.0
    %v8904 = vadd.f32 %v8902, %v8903
    %v8905 = vsel %vm608, %v2809, 0.0
    %v8906 = vadd.f32 %v8904, %v8905
    %v8907 = vsel %vm608, %v3313, 0.0
    %v8908 = vadd.f32 %v8906, %v8907
    %v8909 = vsel %vm608, %v3817, 0.0
    %v8910 = vadd.f32 %v8908, %v8909
    %v8911 = vsel %vm608, %v4321, 0.0
    %v8912 = vadd.f32 %v8910, %v8911
    %v8913 = vsel %vm608, %v4825, 0.0
    %v8914 = vadd.f32 %v8912, %v8913
    %v8915 = vsel %vm608, %v5329, 0.0
    %v8916 = vadd.f32 %v8914, %v8915
    %v8917 = vsel %vm608, %v5833, 0.0
    %v8918 = vadd.f32 %v8916, %v8917
    %v8919 = vsel %vm608, %v6337, 0.0
    %v8920 = vadd.f32 %v8918, %v8919
    %v8921 = vsel %vm608, %v6841, 0.0
    %v8922 = vadd.f32 %v8920, %v8921
    %v8923 = vsel %vm608, %v7345, 0.0
    %v8924 = vadd.f32 %v8922, %v8923
    %v8925 = vsel %vm608, %v7849, 0.0
    %v8926 = vadd.f32 %v8924, %v8925
    %v8927 = vsel %vm608, %v8353, 0.0
    %v8928 = vadd.f32 %v8926, %v8927
    %v8929 = vsel %vm608, %v805, 0.0
    %v8930 = vsel %vm608, %v1309, 0.0
    %v8931 = vadd.f32 %v8929, %v8930
    %v8932 = vsel %vm608, %v1813, 0.0
    %v8933 = vadd.f32 %v8931, %v8932
    %v8934 = vsel %vm608, %v2317, 0.0
    %v8935 = vadd.f32 %v8933, %v8934
    %v8936 = vsel %vm608, %v2821, 0.0
    %v8937 = vadd.f32 %v8935, %v8936
    %v8938 = vsel %vm608, %v3325, 0.0
    %v8939 = vadd.f32 %v8937, %v8938
    %v8940 = vsel %vm608, %v3829, 0.0
    %v8941 = vadd.f32 %v8939, %v8940
    %v8942 = vsel %vm608, %v4333, 0.0
    %v8943 = vadd.f32 %v8941, %v8942
    %v8944 = vsel %vm608, %v4837, 0.0
    %v8945 = vadd.f32 %v8943, %v8944
    %v8946 = vsel %vm608, %v5341, 0.0
    %v8947 = vadd.f32 %v8945, %v8946
    %v8948 = vsel %vm608, %v5845, 0.0
    %v8949 = vadd.f32 %v8947, %v8948
    %v8950 = vsel %vm608, %v6349, 0.0
    %v8951 = vadd.f32 %v8949, %v8950
    %v8952 = vsel %vm608, %v6853, 0.0
    %v8953 = vadd.f32 %v8951, %v8952
    %v8954 = vsel %vm608, %v7357, 0.0
    %v8955 = vadd.f32 %v8953, %v8954
    %v8956 = vsel %vm608, %v7861, 0.0
    %v8957 = vadd.f32 %v8955, %v8956
    %v8958 = vsel %vm608, %v8365, 0.0
    %v8959 = vadd.f32 %v8957, %v8958
    %v8960 = vsel %vm608, %v817, 0.0
    %v8961 = vsel %vm608, %v1321, 0.0
    %v8962 = vadd.f32 %v8960, %v8961
    %v8963 = vsel %vm608, %v1825, 0.0
    %v8964 = vadd.f32 %v8962, %v8963
    %v8965 = vsel %vm608, %v2329, 0.0
    %v8966 = vadd.f32 %v8964, %v8965
    %v8967 = vsel %vm608, %v2833, 0.0
    %v8968 = vadd.f32 %v8966, %v8967
    %v8969 = vsel %vm608, %v3337, 0.0
    %v8970 = vadd.f32 %v8968, %v8969
    %v8971 = vsel %vm608, %v3841, 0.0
    %v8972 = vadd.f32 %v8970, %v8971
    %v8973 = vsel %vm608, %v4345, 0.0
    %v8974 = vadd.f32 %v8972, %v8973
    %v8975 = vsel %vm608, %v4849, 0.0
    %v8976 = vadd.f32 %v8974, %v8975
    %v8977 = vsel %vm608, %v5353, 0.0
    %v8978 = vadd.f32 %v8976, %v8977
    %v8979 = vsel %vm608, %v5857, 0.0
    %v8980 = vadd.f32 %v8978, %v8979
    %v8981 = vsel %vm608, %v6361, 0.0
    %v8982 = vadd.f32 %v8980, %v8981
    %v8983 = vsel %vm608, %v6865, 0.0
    %v8984 = vadd.f32 %v8982, %v8983
    %v8985 = vsel %vm608, %v7369, 0.0
    %v8986 = vadd.f32 %v8984, %v8985
    %v8987 = vsel %vm608, %v7873, 0.0
    %v8988 = vadd.f32 %v8986, %v8987
    %v8989 = vsel %vm608, %v8377, 0.0
    %v8990 = vadd.f32 %v8988, %v8989
    %v8991 = vsel %vm608, %v829, 0.0
    %v8992 = vsel %vm608, %v1333, 0.0
    %v8993 = vadd.f32 %v8991, %v8992
    %v8994 = vsel %vm608, %v1837, 0.0
    %v8995 = vadd.f32 %v8993, %v8994
    %v8996 = vsel %vm608, %v2341, 0.0
    %v8997 = vadd.f32 %v8995, %v8996
    %v8998 = vsel %vm608, %v2845, 0.0
    %v8999 = vadd.f32 %v8997, %v8998
    %v9000 = vsel %vm608, %v3349, 0.0
    %v9001 = vadd.f32 %v8999, %v9000
    %v9002 = vsel %vm608, %v3853, 0.0
    %v9003 = vadd.f32 %v9001, %v9002
    %v9004 = vsel %vm608, %v4357, 0.0
    %v9005 = vadd.f32 %v9003, %v9004
    %v9006 = vsel %vm608, %v4861, 0.0
    %v9007 = vadd.f32 %v9005, %v9006
    %v9008 = vsel %vm608, %v5365, 0.0
    %v9009 = vadd.f32 %v9007, %v9008
    %v9010 = vsel %vm608, %v5869, 0.0
    %v9011 = vadd.f32 %v9009, %v9010
    %v9012 = vsel %vm608, %v6373, 0.0
    %v9013 = vadd.f32 %v9011, %v9012
    %v9014 = vsel %vm608, %v6877, 0.0
    %v9015 = vadd.f32 %v9013, %v9014
    %v9016 = vsel %vm608, %v7381, 0.0
    %v9017 = vadd.f32 %v9015, %v9016
    %v9018 = vsel %vm608, %v7885, 0.0
    %v9019 = vadd.f32 %v9017, %v9018
    %v9020 = vsel %vm608, %v8389, 0.0
    %v9021 = vadd.f32 %v9019, %v9020
    %v9022 = vsel %vm608, %v841, 0.0
    %v9023 = vsel %vm608, %v1345, 0.0
    %v9024 = vadd.f32 %v9022, %v9023
    %v9025 = vsel %vm608, %v1849, 0.0
    %v9026 = vadd.f32 %v9024, %v9025
    %v9027 = vsel %vm608, %v2353, 0.0
    %v9028 = vadd.f32 %v9026, %v9027
    %v9029 = vsel %vm608, %v2857, 0.0
    %v9030 = vadd.f32 %v9028, %v9029
    %v9031 = vsel %vm608, %v3361, 0.0
    %v9032 = vadd.f32 %v9030, %v9031
    %v9033 = vsel %vm608, %v3865, 0.0
    %v9034 = vadd.f32 %v9032, %v9033
    %v9035 = vsel %vm608, %v4369, 0.0
    %v9036 = vadd.f32 %v9034, %v9035
    %v9037 = vsel %vm608, %v4873, 0.0
    %v9038 = vadd.f32 %v9036, %v9037
    %v9039 = vsel %vm608, %v5377, 0.0
    %v9040 = vadd.f32 %v9038, %v9039
    %v9041 = vsel %vm608, %v5881, 0.0
    %v9042 = vadd.f32 %v9040, %v9041
    %v9043 = vsel %vm608, %v6385, 0.0
    %v9044 = vadd.f32 %v9042, %v9043
    %v9045 = vsel %vm608, %v6889, 0.0
    %v9046 = vadd.f32 %v9044, %v9045
    %v9047 = vsel %vm608, %v7393, 0.0
    %v9048 = vadd.f32 %v9046, %v9047
    %v9049 = vsel %vm608, %v7897, 0.0
    %v9050 = vadd.f32 %v9048, %v9049
    %v9051 = vsel %vm608, %v8401, 0.0
    %v9052 = vadd.f32 %v9050, %v9051
    %v9053 = vsel %vm608, %v853, 0.0
    %v9054 = vsel %vm608, %v1357, 0.0
    %v9055 = vadd.f32 %v9053, %v9054
    %v9056 = vsel %vm608, %v1861, 0.0
    %v9057 = vadd.f32 %v9055, %v9056
    %v9058 = vsel %vm608, %v2365, 0.0
    %v9059 = vadd.f32 %v9057, %v9058
    %v9060 = vsel %vm608, %v2869, 0.0
    %v9061 = vadd.f32 %v9059, %v9060
    %v9062 = vsel %vm608, %v3373, 0.0
    %v9063 = vadd.f32 %v9061, %v9062
    %v9064 = vsel %vm608, %v3877, 0.0
    %v9065 = vadd.f32 %v9063, %v9064
    %v9066 = vsel %vm608, %v4381, 0.0
    %v9067 = vadd.f32 %v9065, %v9066
    %v9068 = vsel %vm608, %v4885, 0.0
    %v9069 = vadd.f32 %v9067, %v9068
    %v9070 = vsel %vm608, %v5389, 0.0
    %v9071 = vadd.f32 %v9069, %v9070
    %v9072 = vsel %vm608, %v5893, 0.0
    %v9073 = vadd.f32 %v9071, %v9072
    %v9074 = vsel %vm608, %v6397, 0.0
    %v9075 = vadd.f32 %v9073, %v9074
    %v9076 = vsel %vm608, %v6901, 0.0
    %v9077 = vadd.f32 %v9075, %v9076
    %v9078 = vsel %vm608, %v7405, 0.0
    %v9079 = vadd.f32 %v9077, %v9078
    %v9080 = vsel %vm608, %v7909, 0.0
    %v9081 = vadd.f32 %v9079, %v9080
    %v9082 = vsel %vm608, %v8413, 0.0
    %v9083 = vadd.f32 %v9081, %v9082
    %v9084 = vsel %vm608, %v865, 0.0
    %v9085 = vsel %vm608, %v1369, 0.0
    %v9086 = vadd.f32 %v9084, %v9085
    %v9087 = vsel %vm608, %v1873, 0.0
    %v9088 = vadd.f32 %v9086, %v9087
    %v9089 = vsel %vm608, %v2377, 0.0
    %v9090 = vadd.f32 %v9088, %v9089
    %v9091 = vsel %vm608, %v2881, 0.0
    %v9092 = vadd.f32 %v9090, %v9091
    %v9093 = vsel %vm608, %v3385, 0.0
    %v9094 = vadd.f32 %v9092, %v9093
    %v9095 = vsel %vm608, %v3889, 0.0
    %v9096 = vadd.f32 %v9094, %v9095
    %v9097 = vsel %vm608, %v4393, 0.0
    %v9098 = vadd.f32 %v9096, %v9097
    %v9099 = vsel %vm608, %v4897, 0.0
    %v9100 = vadd.f32 %v9098, %v9099
    %v9101 = vsel %vm608, %v5401, 0.0
    %v9102 = vadd.f32 %v9100, %v9101
    %v9103 = vsel %vm608, %v5905, 0.0
    %v9104 = vadd.f32 %v9102, %v9103
    %v9105 = vsel %vm608, %v6409, 0.0
    %v9106 = vadd.f32 %v9104, %v9105
    %v9107 = vsel %vm608, %v6913, 0.0
    %v9108 = vadd.f32 %v9106, %v9107
    %v9109 = vsel %vm608, %v7417, 0.0
    %v9110 = vadd.f32 %v9108, %v9109
    %v9111 = vsel %vm608, %v7921, 0.0
    %v9112 = vadd.f32 %v9110, %v9111
    %v9113 = vsel %vm608, %v8425, 0.0
    %v9114 = vadd.f32 %v9112, %v9113
    %v9115 = vsel %vm608, %v877, 0.0
    %v9116 = vsel %vm608, %v1381, 0.0
    %v9117 = vadd.f32 %v9115, %v9116
    %v9118 = vsel %vm608, %v1885, 0.0
    %v9119 = vadd.f32 %v9117, %v9118
    %v9120 = vsel %vm608, %v2389, 0.0
    %v9121 = vadd.f32 %v9119, %v9120
    %v9122 = vsel %vm608, %v2893, 0.0
    %v9123 = vadd.f32 %v9121, %v9122
    %v9124 = vsel %vm608, %v3397, 0.0
    %v9125 = vadd.f32 %v9123, %v9124
    %v9126 = vsel %vm608, %v3901, 0.0
    %v9127 = vadd.f32 %v9125, %v9126
    %v9128 = vsel %vm608, %v4405, 0.0
    %v9129 = vadd.f32 %v9127, %v9128
    %v9130 = vsel %vm608, %v4909, 0.0
    %v9131 = vadd.f32 %v9129, %v9130
    %v9132 = vsel %vm608, %v5413, 0.0
    %v9133 = vadd.f32 %v9131, %v9132
    %v9134 = vsel %vm608, %v5917, 0.0
    %v9135 = vadd.f32 %v9133, %v9134
    %v9136 = vsel %vm608, %v6421, 0.0
    %v9137 = vadd.f32 %v9135, %v9136
    %v9138 = vsel %vm608, %v6925, 0.0
    %v9139 = vadd.f32 %v9137, %v9138
    %v9140 = vsel %vm608, %v7429, 0.0
    %v9141 = vadd.f32 %v9139, %v9140
    %v9142 = vsel %vm608, %v7933, 0.0
    %v9143 = vadd.f32 %v9141, %v9142
    %v9144 = vsel %vm608, %v8437, 0.0
    %v9145 = vadd.f32 %v9143, %v9144
    %v9146 = vsel %vm608, %v889, 0.0
    %v9147 = vsel %vm608, %v1393, 0.0
    %v9148 = vadd.f32 %v9146, %v9147
    %v9149 = vsel %vm608, %v1897, 0.0
    %v9150 = vadd.f32 %v9148, %v9149
    %v9151 = vsel %vm608, %v2401, 0.0
    %v9152 = vadd.f32 %v9150, %v9151
    %v9153 = vsel %vm608, %v2905, 0.0
    %v9154 = vadd.f32 %v9152, %v9153
    %v9155 = vsel %vm608, %v3409, 0.0
    %v9156 = vadd.f32 %v9154, %v9155
    %v9157 = vsel %vm608, %v3913, 0.0
    %v9158 = vadd.f32 %v9156, %v9157
    %v9159 = vsel %vm608, %v4417, 0.0
    %v9160 = vadd.f32 %v9158, %v9159
    %v9161 = vsel %vm608, %v4921, 0.0
    %v9162 = vadd.f32 %v9160, %v9161
    %v9163 = vsel %vm608, %v5425, 0.0
    %v9164 = vadd.f32 %v9162, %v9163
    %v9165 = vsel %vm608, %v5929, 0.0
    %v9166 = vadd.f32 %v9164, %v9165
    %v9167 = vsel %vm608, %v6433, 0.0
    %v9168 = vadd.f32 %v9166, %v9167
    %v9169 = vsel %vm608, %v6937, 0.0
    %v9170 = vadd.f32 %v9168, %v9169
    %v9171 = vsel %vm608, %v7441, 0.0
    %v9172 = vadd.f32 %v9170, %v9171
    %v9173 = vsel %vm608, %v7945, 0.0
    %v9174 = vadd.f32 %v9172, %v9173
    %v9175 = vsel %vm608, %v8449, 0.0
    %v9176 = vadd.f32 %v9174, %v9175
    %v9177 = vsel %vm608, %v901, 0.0
    %v9178 = vsel %vm608, %v1405, 0.0
    %v9179 = vadd.f32 %v9177, %v9178
    %v9180 = vsel %vm608, %v1909, 0.0
    %v9181 = vadd.f32 %v9179, %v9180
    %v9182 = vsel %vm608, %v2413, 0.0
    %v9183 = vadd.f32 %v9181, %v9182
    %v9184 = vsel %vm608, %v2917, 0.0
    %v9185 = vadd.f32 %v9183, %v9184
    %v9186 = vsel %vm608, %v3421, 0.0
    %v9187 = vadd.f32 %v9185, %v9186
    %v9188 = vsel %vm608, %v3925, 0.0
    %v9189 = vadd.f32 %v9187, %v9188
    %v9190 = vsel %vm608, %v4429, 0.0
    %v9191 = vadd.f32 %v9189, %v9190
    %v9192 = vsel %vm608, %v4933, 0.0
    %v9193 = vadd.f32 %v9191, %v9192
    %v9194 = vsel %vm608, %v5437, 0.0
    %v9195 = vadd.f32 %v9193, %v9194
    %v9196 = vsel %vm608, %v5941, 0.0
    %v9197 = vadd.f32 %v9195, %v9196
    %v9198 = vsel %vm608, %v6445, 0.0
    %v9199 = vadd.f32 %v9197, %v9198
    %v9200 = vsel %vm608, %v6949, 0.0
    %v9201 = vadd.f32 %v9199, %v9200
    %v9202 = vsel %vm608, %v7453, 0.0
    %v9203 = vadd.f32 %v9201, %v9202
    %v9204 = vsel %vm608, %v7957, 0.0
    %v9205 = vadd.f32 %v9203, %v9204
    %v9206 = vsel %vm608, %v8461, 0.0
    %v9207 = vadd.f32 %v9205, %v9206
    %v9208 = vsel %vm608, %v913, 0.0
    %v9209 = vsel %vm608, %v1417, 0.0
    %v9210 = vadd.f32 %v9208, %v9209
    %v9211 = vsel %vm608, %v1921, 0.0
    %v9212 = vadd.f32 %v9210, %v9211
    %v9213 = vsel %vm608, %v2425, 0.0
    %v9214 = vadd.f32 %v9212, %v9213
    %v9215 = vsel %vm608, %v2929, 0.0
    %v9216 = vadd.f32 %v9214, %v9215
    %v9217 = vsel %vm608, %v3433, 0.0
    %v9218 = vadd.f32 %v9216, %v9217
    %v9219 = vsel %vm608, %v3937, 0.0
    %v9220 = vadd.f32 %v9218, %v9219
    %v9221 = vsel %vm608, %v4441, 0.0
    %v9222 = vadd.f32 %v9220, %v9221
    %v9223 = vsel %vm608, %v4945, 0.0
    %v9224 = vadd.f32 %v9222, %v9223
    %v9225 = vsel %vm608, %v5449, 0.0
    %v9226 = vadd.f32 %v9224, %v9225
    %v9227 = vsel %vm608, %v5953, 0.0
    %v9228 = vadd.f32 %v9226, %v9227
    %v9229 = vsel %vm608, %v6457, 0.0
    %v9230 = vadd.f32 %v9228, %v9229
    %v9231 = vsel %vm608, %v6961, 0.0
    %v9232 = vadd.f32 %v9230, %v9231
    %v9233 = vsel %vm608, %v7465, 0.0
    %v9234 = vadd.f32 %v9232, %v9233
    %v9235 = vsel %vm608, %v7969, 0.0
    %v9236 = vadd.f32 %v9234, %v9235
    %v9237 = vsel %vm608, %v8473, 0.0
    %v9238 = vadd.f32 %v9236, %v9237
    %v9239 = vsel %vm608, %v925, 0.0
    %v9240 = vsel %vm608, %v1429, 0.0
    %v9241 = vadd.f32 %v9239, %v9240
    %v9242 = vsel %vm608, %v1933, 0.0
    %v9243 = vadd.f32 %v9241, %v9242
    %v9244 = vsel %vm608, %v2437, 0.0
    %v9245 = vadd.f32 %v9243, %v9244
    %v9246 = vsel %vm608, %v2941, 0.0
    %v9247 = vadd.f32 %v9245, %v9246
    %v9248 = vsel %vm608, %v3445, 0.0
    %v9249 = vadd.f32 %v9247, %v9248
    %v9250 = vsel %vm608, %v3949, 0.0
    %v9251 = vadd.f32 %v9249, %v9250
    %v9252 = vsel %vm608, %v4453, 0.0
    %v9253 = vadd.f32 %v9251, %v9252
    %v9254 = vsel %vm608, %v4957, 0.0
    %v9255 = vadd.f32 %v9253, %v9254
    %v9256 = vsel %vm608, %v5461, 0.0
    %v9257 = vadd.f32 %v9255, %v9256
    %v9258 = vsel %vm608, %v5965, 0.0
    %v9259 = vadd.f32 %v9257, %v9258
    %v9260 = vsel %vm608, %v6469, 0.0
    %v9261 = vadd.f32 %v9259, %v9260
    %v9262 = vsel %vm608, %v6973, 0.0
    %v9263 = vadd.f32 %v9261, %v9262
    %v9264 = vsel %vm608, %v7477, 0.0
    %v9265 = vadd.f32 %v9263, %v9264
    %v9266 = vsel %vm608, %v7981, 0.0
    %v9267 = vadd.f32 %v9265, %v9266
    %v9268 = vsel %vm608, %v8485, 0.0
    %v9269 = vadd.f32 %v9267, %v9268
    %v9270 = vsel %vm608, %v937, 0.0
    %v9271 = vsel %vm608, %v1441, 0.0
    %v9272 = vadd.f32 %v9270, %v9271
    %v9273 = vsel %vm608, %v1945, 0.0
    %v9274 = vadd.f32 %v9272, %v9273
    %v9275 = vsel %vm608, %v2449, 0.0
    %v9276 = vadd.f32 %v9274, %v9275
    %v9277 = vsel %vm608, %v2953, 0.0
    %v9278 = vadd.f32 %v9276, %v9277
    %v9279 = vsel %vm608, %v3457, 0.0
    %v9280 = vadd.f32 %v9278, %v9279
    %v9281 = vsel %vm608, %v3961, 0.0
    %v9282 = vadd.f32 %v9280, %v9281
    %v9283 = vsel %vm608, %v4465, 0.0
    %v9284 = vadd.f32 %v9282, %v9283
    %v9285 = vsel %vm608, %v4969, 0.0
    %v9286 = vadd.f32 %v9284, %v9285
    %v9287 = vsel %vm608, %v5473, 0.0
    %v9288 = vadd.f32 %v9286, %v9287
    %v9289 = vsel %vm608, %v5977, 0.0
    %v9290 = vadd.f32 %v9288, %v9289
    %v9291 = vsel %vm608, %v6481, 0.0
    %v9292 = vadd.f32 %v9290, %v9291
    %v9293 = vsel %vm608, %v6985, 0.0
    %v9294 = vadd.f32 %v9292, %v9293
    %v9295 = vsel %vm608, %v7489, 0.0
    %v9296 = vadd.f32 %v9294, %v9295
    %v9297 = vsel %vm608, %v7993, 0.0
    %v9298 = vadd.f32 %v9296, %v9297
    %v9299 = vsel %vm608, %v8497, 0.0
    %v9300 = vadd.f32 %v9298, %v9299
    %v9301 = vsel %vm608, %v949, 0.0
    %v9302 = vsel %vm608, %v1453, 0.0
    %v9303 = vadd.f32 %v9301, %v9302
    %v9304 = vsel %vm608, %v1957, 0.0
    %v9305 = vadd.f32 %v9303, %v9304
    %v9306 = vsel %vm608, %v2461, 0.0
    %v9307 = vadd.f32 %v9305, %v9306
    %v9308 = vsel %vm608, %v2965, 0.0
    %v9309 = vadd.f32 %v9307, %v9308
    %v9310 = vsel %vm608, %v3469, 0.0
    %v9311 = vadd.f32 %v9309, %v9310
    %v9312 = vsel %vm608, %v3973, 0.0
    %v9313 = vadd.f32 %v9311, %v9312
    %v9314 = vsel %vm608, %v4477, 0.0
    %v9315 = vadd.f32 %v9313, %v9314
    %v9316 = vsel %vm608, %v4981, 0.0
    %v9317 = vadd.f32 %v9315, %v9316
    %v9318 = vsel %vm608, %v5485, 0.0
    %v9319 = vadd.f32 %v9317, %v9318
    %v9320 = vsel %vm608, %v5989, 0.0
    %v9321 = vadd.f32 %v9319, %v9320
    %v9322 = vsel %vm608, %v6493, 0.0
    %v9323 = vadd.f32 %v9321, %v9322
    %v9324 = vsel %vm608, %v6997, 0.0
    %v9325 = vadd.f32 %v9323, %v9324
    %v9326 = vsel %vm608, %v7501, 0.0
    %v9327 = vadd.f32 %v9325, %v9326
    %v9328 = vsel %vm608, %v8005, 0.0
    %v9329 = vadd.f32 %v9327, %v9328
    %v9330 = vsel %vm608, %v8509, 0.0
    %v9331 = vadd.f32 %v9329, %v9330
    %v9332 = vsel %vm608, %v961, 0.0
    %v9333 = vsel %vm608, %v1465, 0.0
    %v9334 = vadd.f32 %v9332, %v9333
    %v9335 = vsel %vm608, %v1969, 0.0
    %v9336 = vadd.f32 %v9334, %v9335
    %v9337 = vsel %vm608, %v2473, 0.0
    %v9338 = vadd.f32 %v9336, %v9337
    %v9339 = vsel %vm608, %v2977, 0.0
    %v9340 = vadd.f32 %v9338, %v9339
    %v9341 = vsel %vm608, %v3481, 0.0
    %v9342 = vadd.f32 %v9340, %v9341
    %v9343 = vsel %vm608, %v3985, 0.0
    %v9344 = vadd.f32 %v9342, %v9343
    %v9345 = vsel %vm608, %v4489, 0.0
    %v9346 = vadd.f32 %v9344, %v9345
    %v9347 = vsel %vm608, %v4993, 0.0
    %v9348 = vadd.f32 %v9346, %v9347
    %v9349 = vsel %vm608, %v5497, 0.0
    %v9350 = vadd.f32 %v9348, %v9349
    %v9351 = vsel %vm608, %v6001, 0.0
    %v9352 = vadd.f32 %v9350, %v9351
    %v9353 = vsel %vm608, %v6505, 0.0
    %v9354 = vadd.f32 %v9352, %v9353
    %v9355 = vsel %vm608, %v7009, 0.0
    %v9356 = vadd.f32 %v9354, %v9355
    %v9357 = vsel %vm608, %v7513, 0.0
    %v9358 = vadd.f32 %v9356, %v9357
    %v9359 = vsel %vm608, %v8017, 0.0
    %v9360 = vadd.f32 %v9358, %v9359
    %v9361 = vsel %vm608, %v8521, 0.0
    %v9362 = vadd.f32 %v9360, %v9361
    %v9363 = vsel %vm608, %v973, 0.0
    %v9364 = vsel %vm608, %v1477, 0.0
    %v9365 = vadd.f32 %v9363, %v9364
    %v9366 = vsel %vm608, %v1981, 0.0
    %v9367 = vadd.f32 %v9365, %v9366
    %v9368 = vsel %vm608, %v2485, 0.0
    %v9369 = vadd.f32 %v9367, %v9368
    %v9370 = vsel %vm608, %v2989, 0.0
    %v9371 = vadd.f32 %v9369, %v9370
    %v9372 = vsel %vm608, %v3493, 0.0
    %v9373 = vadd.f32 %v9371, %v9372
    %v9374 = vsel %vm608, %v3997, 0.0
    %v9375 = vadd.f32 %v9373, %v9374
    %v9376 = vsel %vm608, %v4501, 0.0
    %v9377 = vadd.f32 %v9375, %v9376
    %v9378 = vsel %vm608, %v5005, 0.0
    %v9379 = vadd.f32 %v9377, %v9378
    %v9380 = vsel %vm608, %v5509, 0.0
    %v9381 = vadd.f32 %v9379, %v9380
    %v9382 = vsel %vm608, %v6013, 0.0
    %v9383 = vadd.f32 %v9381, %v9382
    %v9384 = vsel %vm608, %v6517, 0.0
    %v9385 = vadd.f32 %v9383, %v9384
    %v9386 = vsel %vm608, %v7021, 0.0
    %v9387 = vadd.f32 %v9385, %v9386
    %v9388 = vsel %vm608, %v7525, 0.0
    %v9389 = vadd.f32 %v9387, %v9388
    %v9390 = vsel %vm608, %v8029, 0.0
    %v9391 = vadd.f32 %v9389, %v9390
    %v9392 = vsel %vm608, %v8533, 0.0
    %v9393 = vadd.f32 %v9391, %v9392
    %v9394 = vsel %vm608, %v985, 0.0
    %v9395 = vsel %vm608, %v1489, 0.0
    %v9396 = vadd.f32 %v9394, %v9395
    %v9397 = vsel %vm608, %v1993, 0.0
    %v9398 = vadd.f32 %v9396, %v9397
    %v9399 = vsel %vm608, %v2497, 0.0
    %v9400 = vadd.f32 %v9398, %v9399
    %v9401 = vsel %vm608, %v3001, 0.0
    %v9402 = vadd.f32 %v9400, %v9401
    %v9403 = vsel %vm608, %v3505, 0.0
    %v9404 = vadd.f32 %v9402, %v9403
    %v9405 = vsel %vm608, %v4009, 0.0
    %v9406 = vadd.f32 %v9404, %v9405
    %v9407 = vsel %vm608, %v4513, 0.0
    %v9408 = vadd.f32 %v9406, %v9407
    %v9409 = vsel %vm608, %v5017, 0.0
    %v9410 = vadd.f32 %v9408, %v9409
    %v9411 = vsel %vm608, %v5521, 0.0
    %v9412 = vadd.f32 %v9410, %v9411
    %v9413 = vsel %vm608, %v6025, 0.0
    %v9414 = vadd.f32 %v9412, %v9413
    %v9415 = vsel %vm608, %v6529, 0.0
    %v9416 = vadd.f32 %v9414, %v9415
    %v9417 = vsel %vm608, %v7033, 0.0
    %v9418 = vadd.f32 %v9416, %v9417
    %v9419 = vsel %vm608, %v7537, 0.0
    %v9420 = vadd.f32 %v9418, %v9419
    %v9421 = vsel %vm608, %v8041, 0.0
    %v9422 = vadd.f32 %v9420, %v9421
    %v9423 = vsel %vm608, %v8545, 0.0
    %v9424 = vadd.f32 %v9422, %v9423
    %v9425 = vsel %vm608, %v997, 0.0
    %v9426 = vsel %vm608, %v1501, 0.0
    %v9427 = vadd.f32 %v9425, %v9426
    %v9428 = vsel %vm608, %v2005, 0.0
    %v9429 = vadd.f32 %v9427, %v9428
    %v9430 = vsel %vm608, %v2509, 0.0
    %v9431 = vadd.f32 %v9429, %v9430
    %v9432 = vsel %vm608, %v3013, 0.0
    %v9433 = vadd.f32 %v9431, %v9432
    %v9434 = vsel %vm608, %v3517, 0.0
    %v9435 = vadd.f32 %v9433, %v9434
    %v9436 = vsel %vm608, %v4021, 0.0
    %v9437 = vadd.f32 %v9435, %v9436
    %v9438 = vsel %vm608, %v4525, 0.0
    %v9439 = vadd.f32 %v9437, %v9438
    %v9440 = vsel %vm608, %v5029, 0.0
    %v9441 = vadd.f32 %v9439, %v9440
    %v9442 = vsel %vm608, %v5533, 0.0
    %v9443 = vadd.f32 %v9441, %v9442
    %v9444 = vsel %vm608, %v6037, 0.0
    %v9445 = vadd.f32 %v9443, %v9444
    %v9446 = vsel %vm608, %v6541, 0.0
    %v9447 = vadd.f32 %v9445, %v9446
    %v9448 = vsel %vm608, %v7045, 0.0
    %v9449 = vadd.f32 %v9447, %v9448
    %v9450 = vsel %vm608, %v7549, 0.0
    %v9451 = vadd.f32 %v9449, %v9450
    %v9452 = vsel %vm608, %v8053, 0.0
    %v9453 = vadd.f32 %v9451, %v9452
    %v9454 = vsel %vm608, %v8557, 0.0
    %v9455 = vadd.f32 %v9453, %v9454
    %v9456 = vsel %vm608, %v1009, 0.0
    %v9457 = vsel %vm608, %v1513, 0.0
    %v9458 = vadd.f32 %v9456, %v9457
    %v9459 = vsel %vm608, %v2017, 0.0
    %v9460 = vadd.f32 %v9458, %v9459
    %v9461 = vsel %vm608, %v2521, 0.0
    %v9462 = vadd.f32 %v9460, %v9461
    %v9463 = vsel %vm608, %v3025, 0.0
    %v9464 = vadd.f32 %v9462, %v9463
    %v9465 = vsel %vm608, %v3529, 0.0
    %v9466 = vadd.f32 %v9464, %v9465
    %v9467 = vsel %vm608, %v4033, 0.0
    %v9468 = vadd.f32 %v9466, %v9467
    %v9469 = vsel %vm608, %v4537, 0.0
    %v9470 = vadd.f32 %v9468, %v9469
    %v9471 = vsel %vm608, %v5041, 0.0
    %v9472 = vadd.f32 %v9470, %v9471
    %v9473 = vsel %vm608, %v5545, 0.0
    %v9474 = vadd.f32 %v9472, %v9473
    %v9475 = vsel %vm608, %v6049, 0.0
    %v9476 = vadd.f32 %v9474, %v9475
    %v9477 = vsel %vm608, %v6553, 0.0
    %v9478 = vadd.f32 %v9476, %v9477
    %v9479 = vsel %vm608, %v7057, 0.0
    %v9480 = vadd.f32 %v9478, %v9479
    %v9481 = vsel %vm608, %v7561, 0.0
    %v9482 = vadd.f32 %v9480, %v9481
    %v9483 = vsel %vm608, %v8065, 0.0
    %v9484 = vadd.f32 %v9482, %v9483
    %v9485 = vsel %vm608, %v8569, 0.0
    %v9486 = vadd.f32 %v9484, %v9485
    %v9487 = vsel %vm608, %v1021, 0.0
    %v9488 = vsel %vm608, %v1525, 0.0
    %v9489 = vadd.f32 %v9487, %v9488
    %v9490 = vsel %vm608, %v2029, 0.0
    %v9491 = vadd.f32 %v9489, %v9490
    %v9492 = vsel %vm608, %v2533, 0.0
    %v9493 = vadd.f32 %v9491, %v9492
    %v9494 = vsel %vm608, %v3037, 0.0
    %v9495 = vadd.f32 %v9493, %v9494
    %v9496 = vsel %vm608, %v3541, 0.0
    %v9497 = vadd.f32 %v9495, %v9496
    %v9498 = vsel %vm608, %v4045, 0.0
    %v9499 = vadd.f32 %v9497, %v9498
    %v9500 = vsel %vm608, %v4549, 0.0
    %v9501 = vadd.f32 %v9499, %v9500
    %v9502 = vsel %vm608, %v5053, 0.0
    %v9503 = vadd.f32 %v9501, %v9502
    %v9504 = vsel %vm608, %v5557, 0.0
    %v9505 = vadd.f32 %v9503, %v9504
    %v9506 = vsel %vm608, %v6061, 0.0
    %v9507 = vadd.f32 %v9505, %v9506
    %v9508 = vsel %vm608, %v6565, 0.0
    %v9509 = vadd.f32 %v9507, %v9508
    %v9510 = vsel %vm608, %v7069, 0.0
    %v9511 = vadd.f32 %v9509, %v9510
    %v9512 = vsel %vm608, %v7573, 0.0
    %v9513 = vadd.f32 %v9511, %v9512
    %v9514 = vsel %vm608, %v8077, 0.0
    %v9515 = vadd.f32 %v9513, %v9514
    %v9516 = vsel %vm608, %v8581, 0.0
    %v9517 = vadd.f32 %v9515, %v9516
    %v9518 = vsel %vm608, %v1033, 0.0
    %v9519 = vsel %vm608, %v1537, 0.0
    %v9520 = vadd.f32 %v9518, %v9519
    %v9521 = vsel %vm608, %v2041, 0.0
    %v9522 = vadd.f32 %v9520, %v9521
    %v9523 = vsel %vm608, %v2545, 0.0
    %v9524 = vadd.f32 %v9522, %v9523
    %v9525 = vsel %vm608, %v3049, 0.0
    %v9526 = vadd.f32 %v9524, %v9525
    %v9527 = vsel %vm608, %v3553, 0.0
    %v9528 = vadd.f32 %v9526, %v9527
    %v9529 = vsel %vm608, %v4057, 0.0
    %v9530 = vadd.f32 %v9528, %v9529
    %v9531 = vsel %vm608, %v4561, 0.0
    %v9532 = vadd.f32 %v9530, %v9531
    %v9533 = vsel %vm608, %v5065, 0.0
    %v9534 = vadd.f32 %v9532, %v9533
    %v9535 = vsel %vm608, %v5569, 0.0
    %v9536 = vadd.f32 %v9534, %v9535
    %v9537 = vsel %vm608, %v6073, 0.0
    %v9538 = vadd.f32 %v9536, %v9537
    %v9539 = vsel %vm608, %v6577, 0.0
    %v9540 = vadd.f32 %v9538, %v9539
    %v9541 = vsel %vm608, %v7081, 0.0
    %v9542 = vadd.f32 %v9540, %v9541
    %v9543 = vsel %vm608, %v7585, 0.0
    %v9544 = vadd.f32 %v9542, %v9543
    %v9545 = vsel %vm608, %v8089, 0.0
    %v9546 = vadd.f32 %v9544, %v9545
    %v9547 = vsel %vm608, %v8593, 0.0
    %v9548 = vadd.f32 %v9546, %v9547
    %v9549 = vsel %vm608, %v1045, 0.0
    %v9550 = vsel %vm608, %v1549, 0.0
    %v9551 = vadd.f32 %v9549, %v9550
    %v9552 = vsel %vm608, %v2053, 0.0
    %v9553 = vadd.f32 %v9551, %v9552
    %v9554 = vsel %vm608, %v2557, 0.0
    %v9555 = vadd.f32 %v9553, %v9554
    %v9556 = vsel %vm608, %v3061, 0.0
    %v9557 = vadd.f32 %v9555, %v9556
    %v9558 = vsel %vm608, %v3565, 0.0
    %v9559 = vadd.f32 %v9557, %v9558
    %v9560 = vsel %vm608, %v4069, 0.0
    %v9561 = vadd.f32 %v9559, %v9560
    %v9562 = vsel %vm608, %v4573, 0.0
    %v9563 = vadd.f32 %v9561, %v9562
    %v9564 = vsel %vm608, %v5077, 0.0
    %v9565 = vadd.f32 %v9563, %v9564
    %v9566 = vsel %vm608, %v5581, 0.0
    %v9567 = vadd.f32 %v9565, %v9566
    %v9568 = vsel %vm608, %v6085, 0.0
    %v9569 = vadd.f32 %v9567, %v9568
    %v9570 = vsel %vm608, %v6589, 0.0
    %v9571 = vadd.f32 %v9569, %v9570
    %v9572 = vsel %vm608, %v7093, 0.0
    %v9573 = vadd.f32 %v9571, %v9572
    %v9574 = vsel %vm608, %v7597, 0.0
    %v9575 = vadd.f32 %v9573, %v9574
    %v9576 = vsel %vm608, %v8101, 0.0
    %v9577 = vadd.f32 %v9575, %v9576
    %v9578 = vsel %vm608, %v8605, 0.0
    %v9579 = vadd.f32 %v9577, %v9578
    %v9580 = vsel %vm608, %v1057, 0.0
    %v9581 = vsel %vm608, %v1561, 0.0
    %v9582 = vadd.f32 %v9580, %v9581
    %v9583 = vsel %vm608, %v2065, 0.0
    %v9584 = vadd.f32 %v9582, %v9583
    %v9585 = vsel %vm608, %v2569, 0.0
    %v9586 = vadd.f32 %v9584, %v9585
    %v9587 = vsel %vm608, %v3073, 0.0
    %v9588 = vadd.f32 %v9586, %v9587
    %v9589 = vsel %vm608, %v3577, 0.0
    %v9590 = vadd.f32 %v9588, %v9589
    %v9591 = vsel %vm608, %v4081, 0.0
    %v9592 = vadd.f32 %v9590, %v9591
    %v9593 = vsel %vm608, %v4585, 0.0
    %v9594 = vadd.f32 %v9592, %v9593
    %v9595 = vsel %vm608, %v5089, 0.0
    %v9596 = vadd.f32 %v9594, %v9595
    %v9597 = vsel %vm608, %v5593, 0.0
    %v9598 = vadd.f32 %v9596, %v9597
    %v9599 = vsel %vm608, %v6097, 0.0
    %v9600 = vadd.f32 %v9598, %v9599
    %v9601 = vsel %vm608, %v6601, 0.0
    %v9602 = vadd.f32 %v9600, %v9601
    %v9603 = vsel %vm608, %v7105, 0.0
    %v9604 = vadd.f32 %v9602, %v9603
    %v9605 = vsel %vm608, %v7609, 0.0
    %v9606 = vadd.f32 %v9604, %v9605
    %v9607 = vsel %vm608, %v8113, 0.0
    %v9608 = vadd.f32 %v9606, %v9607
    %v9609 = vsel %vm608, %v8617, 0.0
    %v9610 = vadd.f32 %v9608, %v9609
    %v9611 = vld [vmem:[%s2] sm:$0xff]
    %v9612 = vld [vmem:[%s2 + $0x8] sm:$0xff]
    %v9613 = vld [vmem:[%s2 + $0x10] sm:$0xff]
    %v9614 = vld [vmem:[%s2 + $0x18] sm:$0xff]
    %v9619 = vperm.slane %v9611, 0
    %v9620 = vperm.slane %v9611, 1
    %v9621 = vperm.slane %v9611, 2
    %v9622 = vperm.slane %v9611, 3
    %v9623 = vperm.slane %v9611, 4
    %v9624 = vperm.slane %v9611, 5
    %v9625 = vperm.slane %v9611, 6
    %v9626 = vperm.slane %v9611, 7
    %v9627 = vperm.slane %v9612, 0
    %v9628 = vperm.slane %v9612, 1
    %v9629 = vperm.slane %v9612, 2
    %v9630 = vperm.slane %v9612, 3
    %v9631 = vperm.slane %v9612, 4
    %v9632 = vperm.slane %v9612, 5
    %v9633 = vperm.slane %v9612, 6
    %v9634 = vperm.slane %v9612, 7
    %v9635 = vperm.slane %v9613, 0
    %v9636 = vperm.slane %v9613, 1
    %v9637 = vperm.slane %v9613, 2
    %v9638 = vperm.slane %v9613, 3
    %v9639 = vperm.slane %v9613, 4
    %v9640 = vperm.slane %v9613, 5
    %v9641 = vperm.slane %v9613, 6
    %v9642 = vperm.slane %v9613, 7
    %v9643 = vperm.slane %v9614, 0
    %v9644 = vperm.slane %v9614, 1
    %v9645 = vperm.slane %v9614, 2
    %v9646 = vperm.slane %v9614, 3
    %v9647 = vperm.slane %v9614, 4
    %v9648 = vperm.slane %v9614, 5
    %v9649 = vperm.slane %v9614, 6
    %v9650 = vperm.slane %v9614, 7
    %v9683 = vadd.f32 %v8649, %v9619
    %v9684 = vadd.f32 %v8680, %v9620
    %v9685 = vadd.f32 %v8711, %v9621
    %v9686 = vadd.f32 %v8742, %v9622
    %v9687 = vadd.f32 %v8773, %v9623
    %v9688 = vadd.f32 %v8804, %v9624
    %v9689 = vadd.f32 %v8835, %v9625
    %v9690 = vadd.f32 %v8866, %v9626
    %v9691 = vadd.f32 %v8897, %v9627
    %v9692 = vadd.f32 %v8928, %v9628
    %v9693 = vadd.f32 %v8959, %v9629
    %v9694 = vadd.f32 %v8990, %v9630
    %v9695 = vadd.f32 %v9021, %v9631
    %v9696 = vadd.f32 %v9052, %v9632
    %v9697 = vadd.f32 %v9083, %v9633
    %v9698 = vadd.f32 %v9114, %v9634
    %v9699 = vadd.f32 %v9145, %v9635
    %v9700 = vadd.f32 %v9176, %v9636
    %v9701 = vadd.f32 %v9207, %v9637
    %v9702 = vadd.f32 %v9238, %v9638
    %v9703 = vadd.f32 %v9269, %v9639
    %v9704 = vadd.f32 %v9300, %v9640
    %v9705 = vadd.f32 %v9331, %v9641
    %v9706 = vadd.f32 %v9362, %v9642
    %v9707 = vadd.f32 %v9393, %v9643
    %v9708 = vadd.f32 %v9424, %v9644
    %v9709 = vadd.f32 %v9455, %v9645
    %v9710 = vadd.f32 %v9486, %v9646
    %v9711 = vadd.f32 %v9517, %v9647
    %v9712 = vadd.f32 %v9548, %v9648
    %v9713 = vadd.f32 %v9579, %v9649
    %v9714 = vadd.f32 %v9610, %v9650
    %v9715 = vmax.f32 %v9683, 0.0
    %v9716 = vmax.f32 %v9684, 0.0
    %v9717 = vmax.f32 %v9685, 0.0
    %v9718 = vmax.f32 %v9686, 0.0
    %v9719 = vmax.f32 %v9687, 0.0
    %v9720 = vmax.f32 %v9688, 0.0
    %v9721 = vmax.f32 %v9689, 0.0
    %v9722 = vmax.f32 %v9690, 0.0
    %v9723 = vmax.f32 %v9691, 0.0
    %v9724 = vmax.f32 %v9692, 0.0
    %v9725 = vmax.f32 %v9693, 0.0
    %v9726 = vmax.f32 %v9694, 0.0
    %v9727 = vmax.f32 %v9695, 0.0
    %v9728 = vmax.f32 %v9696, 0.0
    %v9729 = vmax.f32 %v9697, 0.0
    %v9730 = vmax.f32 %v9698, 0.0
    %v9731 = vmax.f32 %v9699, 0.0
    %v9732 = vmax.f32 %v9700, 0.0
    %v9733 = vmax.f32 %v9701, 0.0
    %v9734 = vmax.f32 %v9702, 0.0
    %v9735 = vmax.f32 %v9703, 0.0
    %v9736 = vmax.f32 %v9704, 0.0
    %v9737 = vmax.f32 %v9705, 0.0
    %v9738 = vmax.f32 %v9706, 0.0
    %v9739 = vmax.f32 %v9707, 0.0
    %v9740 = vmax.f32 %v9708, 0.0
    %v9741 = vmax.f32 %v9709, 0.0
    %v9742 = vmax.f32 %v9710, 0.0
    %v9743 = vmax.f32 %v9711, 0.0
    %v9744 = vmax.f32 %v9712, 0.0
    %v9745 = vmax.f32 %v9713, 0.0
    %v9746 = vmax.f32 %v9714, 0.0
    %v9747 = vld [vmem:[%s3] sm:$0xf]
    %v9748 = vld [vmem:[%s3 + $0x4] sm:$0xf]
    %v9749 = vld [vmem:[%s3 + $0x8] sm:$0xf]
    %v9750 = vld [vmem:[%s3 + $0xc] sm:$0xf]
    %v9751 = vld [vmem:[%s3 + $0x10] sm:$0xf]
    %v9752 = vld [vmem:[%s3 + $0x14] sm:$0xf]
    %v9753 = vld [vmem:[%s3 + $0x18] sm:$0xf]
    %v9754 = vld [vmem:[%s3 + $0x1c] sm:$0xf]
    %v9755 = vld [vmem:[%s3 + $0x20] sm:$0xf]
    %v9756 = vld [vmem:[%s3 + $0x24] sm:$0xf]
    %v9757 = vld [vmem:[%s3 + $0x28] sm:$0xf]
    %v9758 = vld [vmem:[%s3 + $0x2c] sm:$0xf]
    %v9759 = vld [vmem:[%s3 + $0x30] sm:$0xf]
    %v9760 = vld [vmem:[%s3 + $0x34] sm:$0xf]
    %v9761 = vld [vmem:[%s3 + $0x38] sm:$0xf]
    %v9762 = vld [vmem:[%s3 + $0x3c] sm:$0xf]
    %v9763 = vld [vmem:[%s4] sm:$0x3]
    %v9765 = vperm.slane %v9763, 0
    %v9766 = vperm.slane %v9763, 1
    %9770 = vst [vmem:[#allocation1] ss:$4 sm:$0xff] %v9747
    %v9771 = vld.sshfl [vmem:[#allocation1] sm:$0xff pattern:$0x73625140]
    %v9772 = vld.sshfl [vmem:[#allocation1 + $0x8] sm:$0xff pattern:$0x73625140]
    %v9773 = vand.u32 %v9771, %v610
    %v9775 = vand.u32 %v9772, %v610
    %9777 = vmatpush.bf16.msra.mxu0 0
    %9778 = vmatpush.bf16.msra.mxu0 0
    %9779 = vmatpush.bf16.msra.mxu0 0
    %9780 = vmatpush.bf16.msra.mxu0 0
    %9781 = vmatpush.bf16.msra.mxu0 0
    %9782 = vmatpush.bf16.msra.mxu0 0
    %9783 = vmatpush.bf16.msra.mxu0 0
    %9784 = vmatpush.bf16.msra.mxu0 %v9773
    %9785 = vmatmul.f32.gmra.mxu0 %v605
    %v9786 = vpop.f32.mrf.mxu0
    %v9787 = vadd.f32 %v9765, %v9786
    %9788 = vdwg.mxu0
    %9789 = vmatpush.bf16.msra.mxu0 0
    %9790 = vmatpush.bf16.msra.mxu0 0
    %9791 = vmatpush.bf16.msra.mxu0 0
    %9792 = vmatpush.bf16.msra.mxu0 0
    %9793 = vmatpush.bf16.msra.mxu0 0
    %9794 = vmatpush.bf16.msra.mxu0 0
    %9795 = vmatpush.bf16.msra.mxu0 0
    %9796 = vmatpush.bf16.msra.mxu0 %v9775
    %9797 = vmatmul.f32.gmra.mxu0 %v605
    %v9798 = vpop.f32.mrf.mxu0
    %v9799 = vadd.f32 %v9766, %v9798
    %9800 = vdwg.mxu0
    %9802 = vst [vmem:[#allocation1] ss:$4 sm:$0xff] %v9748
    %v9803 = vld.sshfl [vmem:[#allocation1] sm:$0xff pattern:$0x73625140]
    %v9804 = vld.sshfl [vmem:[#allocation1 + $0x8] sm:$0xff pattern:$0x73625140]
    %v9805 = vand.u32 %v9803, %v610
    %v9807 = vand.u32 %v9804, %v610
    %9809 = vmatpush.bf16.msra.mxu0 0
    %9810 = vmatpush.bf16.msra.mxu0 0
    %9811 = vmatpush.bf16.msra.mxu0 0
    %9812 = vmatpush.bf16.msra.mxu0 0
    %9813 = vmatpush.bf16.msra.mxu0 0
    %9814 = vmatpush.bf16.msra.mxu0 0
    %9815 = vmatpush.bf16.msra.mxu0 0
    %9816 = vmatpush.bf16.msra.mxu0 %v9805
    %9817 = vmatmul.f32.gmra.mxu0 %v1113
    %v9818 = vpop.f32.mrf.mxu0
    %v9819 = vadd.f32 %v9765, %v9818
    %9820 = vdwg.mxu0
    %9821 = vmatpush.bf16.msra.mxu0 0
    %9822 = vmatpush.bf16.msra.mxu0 0
    %9823 = vmatpush.bf16.msra.mxu0 0
    %9824 = vmatpush.bf16.msra.mxu0 0
    %9825 = vmatpush.bf16.msra.mxu0 0
    %9826 = vmatpush.bf16.msra.mxu0 0
    %9827 = vmatpush.bf16.msra.mxu0 0
    %9828 = vmatpush.bf16.msra.mxu0 %v9807
    %9829 = vmatmul.f32.gmra.mxu0 %v1113
    %v9830 = vpop.f32.mrf.mxu0
    %v9831 = vadd.f32 %v9766, %v9830
    %9832 = vdwg.mxu0
    %9834 = vst [vmem:[#allocation1] ss:$4 sm:$0xff] %v9749
    %v9835 = vld.sshfl [vmem:[#allocation1] sm:$0xff pattern:$0x73625140]
    %v9836 = vld.sshfl [vmem:[#allocation1 + $0x8] sm:$0xff pattern:$0x73625140]
    %v9837 = vand.u32 %v9835, %v610
    %v9839 = vand.u32 %v9836, %v610
    %9841 = vmatpush.bf16.msra.mxu0 0
    %9842 = vmatpush.bf16.msra.mxu0 0
    %9843 = vmatpush.bf16.msra.mxu0 0
    %9844 = vmatpush.bf16.msra.mxu0 0
    %9845 = vmatpush.bf16.msra.mxu0 0
    %9846 = vmatpush.bf16.msra.mxu0 0
    %9847 = vmatpush.bf16.msra.mxu0 0
    %9848 = vmatpush.bf16.msra.mxu0 %v9837
    %9849 = vmatmul.f32.gmra.mxu0 %v1617
    %v9850 = vpop.f32.mrf.mxu0
    %v9851 = vadd.f32 %v9765, %v9850
    %9852 = vdwg.mxu0
    %9853 = vmatpush.bf16.msra.mxu0 0
    %9854 = vmatpush.bf16.msra.mxu0 0
    %9855 = vmatpush.bf16.msra.mxu0 0
    %9856 = vmatpush.bf16.msra.mxu0 0
    %9857 = vmatpush.bf16.msra.mxu0 0
    %9858 = vmatpush.bf16.msra.mxu0 0
    %9859 = vmatpush.bf16.msra.mxu0 0
    %9860 = vmatpush.bf16.msra.mxu0 %v9839
    %9861 = vmatmul.f32.gmra.mxu0 %v1617
    %v9862 = vpop.f32.mrf.mxu0
    %v9863 = vadd.f32 %v9766, %v9862
    %9864 = vdwg.mxu0
    %9866 = vst [vmem:[#allocation1] ss:$4 sm:$0xff] %v9750
    %v9867 = vld.sshfl [vmem:[#allocation1] sm:$0xff pattern:$0x73625140]
    %v9868 = vld.sshfl [vmem:[#allocation1 + $0x8] sm:$0xff pattern:$0x73625140]
    %v9869 = vand.u32 %v9867, %v610
    %v9871 = vand.u32 %v9868, %v610
    %9873 = vmatpush.bf16.msra.mxu0 0
    %9874 = vmatpush.bf16.msra.mxu0 0
    %9875 = vmatpush.bf16.msra.mxu0 0
    %9876 = vmatpush.bf16.msra.mxu0 0
    %9877 = vmatpush.bf16.msra.mxu0 0
    %9878 = vmatpush.bf16.msra.mxu0 0
    %9879 = vmatpush.bf16.msra.mxu0 0
    %9880 = vmatpush.bf16.msra.mxu0 %v9869
    %9881 = vmatmul.f32.gmra.mxu0 %v2121
    %v9882 = vpop.f32.mrf.mxu0
    %v9883 = vadd.f32 %v9765, %v9882
    %9884 = vdwg.mxu0
    %9885 = vmatpush.bf16.msra.mxu0 0
    %9886 = vmatpush.bf16.msra.mxu0 0
    %9887 = vmatpush.bf16.msra.mxu0 0
    %9888 = vmatpush.bf16.msra.mxu0 0
    %9889 = vmatpush.bf16.msra.mxu0 0
    %9890 = vmatpush.bf16.msra.mxu0 0
    %9891 = vmatpush.bf16.msra.mxu0 0
    %9892 = vmatpush.bf16.msra.mxu0 %v9871
    %9893 = vmatmul.f32.gmra.mxu0 %v2121
    %v9894 = vpop.f32.mrf.mxu0
    %v9895 = vadd.f32 %v9766, %v9894
    %9896 = vdwg.mxu0
    %9898 = vst [vmem:[#allocation1] ss:$4 sm:$0xff] %v9751
    %v9899 = vld.sshfl [vmem:[#allocation1] sm:$0xff pattern:$0x73625140]
    %v9900 = vld.sshfl [vmem:[#allocation1 + $0x8] sm:$0xff pattern:$0x73625140]
    %v9901 = vand.u32 %v9899, %v610
    %v9903 = vand.u32 %v9900, %v610
    %9905 = vmatpush.bf16.msra.mxu0 0
    %9906 = vmatpush.bf16.msra.mxu0 0
    %9907 = vmatpush.bf16.msra.mxu0 0
    %9908 = vmatpush.bf16.msra.mxu0 0
    %9909 = vmatpush.bf16.msra.mxu0 0
    %9910 = vmatpush.bf16.msra.mxu0 0
    %9911 = vmatpush.bf16.msra.mxu0 0
    %9912 = vmatpush.bf16.msra.mxu0 %v9901
    %9913 = vmatmul.f32.gmra.mxu0 %v2625
    %v9914 = vpop.f32.mrf.mxu0
    %v9915 = vadd.f32 %v9765, %v9914
    %9916 = vdwg.mxu0
    %9917 = vmatpush.bf16.msra.mxu0 0
    %9918 = vmatpush.bf16.msra.mxu0 0
    %9919 = vmatpush.bf16.msra.mxu0 0
    %9920 = vmatpush.bf16.msra.mxu0 0
    %9921 = vmatpush.bf16.msra.mxu0 0
    %9922 = vmatpush.bf16.msra.mxu0 0
    %9923 = vmatpush.bf16.msra.mxu0 0
    %9924 = vmatpush.bf16.msra.mxu0 %v9903
    %9925 = vmatmul.f32.gmra.mxu0 %v2625
    %v9926 = vpop.f32.mrf.mxu0
    %v9927 = vadd.f32 %v9766, %v9926
    %9928 = vdwg.mxu0
    %9930 = vst [vmem:[#allocation1] ss:$4 sm:$0xff] %v9752
    %v9931 = vld.sshfl [vmem:[#allocation1] sm:$0xff pattern:$0x73625140]
    %v9932 = vld.sshfl [vmem:[#allocation1 + $0x8] sm:$0xff pattern:$0x73625140]
    %v9933 = vand.u32 %v9931, %v610
    %v9935 = vand.u32 %v9932, %v610
    %9937 = vmatpush.bf16.msra.mxu0 0
    %9938 = vmatpush.bf16.msra.mxu0 0
    %9939 = vmatpush.bf16.msra.mxu0 0
    %9940 = vmatpush.bf16.msra.mxu0 0
    %9941 = vmatpush.bf16.msra.mxu0 0
    %9942 = vmatpush.bf16.msra.mxu0 0
    %9943 = vmatpush.bf16.msra.mxu0 0
    %9944 = vmatpush.bf16.msra.mxu0 %v9933
    %9945 = vmatmul.f32.gmra.mxu0 %v3129
    %v9946 = vpop.f32.mrf.mxu0
    %v9947 = vadd.f32 %v9765, %v9946
    %9948 = vdwg.mxu0
    %9949 = vmatpush.bf16.msra.mxu0 0
    %9950 = vmatpush.bf16.msra.mxu0 0
    %9951 = vmatpush.bf16.msra.mxu0 0
    %9952 = vmatpush.bf16.msra.mxu0 0
    %9953 = vmatpush.bf16.msra.mxu0 0
    %9954 = vmatpush.bf16.msra.mxu0 0
    %9955 = vmatpush.bf16.msra.mxu0 0
    %9956 = vmatpush.bf16.msra.mxu0 %v9935
    %9957 = vmatmul.f32.gmra.mxu0 %v3129
    %v9958 = vpop.f32.mrf.mxu0
    %v9959 = vadd.f32 %v9766, %v9958
    %9960 = vdwg.mxu0
    %9962 = vst [vmem:[#allocation1] ss:$4 sm:$0xff] %v9753
    %v9963 = vld.sshfl [vmem:[#allocation1] sm:$0xff pattern:$0x73625140]
    %v9964 = vld.sshfl [vmem:[#allocation1 + $0x8] sm:$0xff pattern:$0x73625140]
    %v9965 = vand.u32 %v9963, %v610
    %v9967 = vand.u32 %v9964, %v610
    %9969 = vmatpush.bf16.msra.mxu0 0
    %9970 = vmatpush.bf16.msra.mxu0 0
    %9971 = vmatpush.bf16.msra.mxu0 0
    %9972 = vmatpush.bf16.msra.mxu0 0
    %9973 = vmatpush.bf16.msra.mxu0 0
    %9974 = vmatpush.bf16.msra.mxu0 0
    %9975 = vmatpush.bf16.msra.mxu0 0
    %9976 = vmatpush.bf16.msra.mxu0 %v9965
    %9977 = vmatmul.f32.gmra.mxu0 %v3633
    %v9978 = vpop.f32.mrf.mxu0
    %v9979 = vadd.f32 %v9765, %v9978
    %9980 = vdwg.mxu0
    %9981 = vmatpush.bf16.msra.mxu0 0
    %9982 = vmatpush.bf16.msra.mxu0 0
    %9983 = vmatpush.bf16.msra.mxu0 0
    %9984 = vmatpush.bf16.msra.mxu0 0
    %9985 = vmatpush.bf16.msra.mxu0 0
    %9986 = vmatpush.bf16.msra.mxu0 0
    %9987 = vmatpush.bf16.msra.mxu0 0
    %9988 = vmatpush.bf16.msra.mxu0 %v9967
    %9989 = vmatmul.f32.gmra.mxu0 %v3633
    %v9990 = vpop.f32.mrf.mxu0
    %v9991 = vadd.f32 %v9766, %v9990
    %9992 = vdwg.mxu0
    %9994 = vst [vmem:[#allocation1] ss:$4 sm:$0xff] %v9754
    %v9995 = vld.sshfl [vmem:[#allocation1] sm:$0xff pattern:$0x73625140]
    %v9996 = vld.sshfl [vmem:[#allocation1 + $0x8] sm:$0xff pattern:$0x73625140]
    %v9997 = vand.u32 %v9995, %v610
    %v9999 = vand.u32 %v9996, %v610
    %10001 = vmatpush.bf16.msra.mxu0 0
    %10002 = vmatpush.bf16.msra.mxu0 0
    %10003 = vmatpush.bf16.msra.mxu0 0
    %10004 = vmatpush.bf16.msra.mxu0 0
    %10005 = vmatpush.bf16.msra.mxu0 0
    %10006 = vmatpush.bf16.msra.mxu0 0
    %10007 = vmatpush.bf16.msra.mxu0 0
    %10008 = vmatpush.bf16.msra.mxu0 %v9997
    %10009 = vmatmul.f32.gmra.mxu0 %v4137
    %v10010 = vpop.f32.mrf.mxu0
    %v10011 = vadd.f32 %v9765, %v10010
    %10012 = vdwg.mxu0
    %10013 = vmatpush.bf16.msra.mxu0 0
    %10014 = vmatpush.bf16.msra.mxu0 0
    %10015 = vmatpush.bf16.msra.mxu0 0
    %10016 = vmatpush.bf16.msra.mxu0 0
    %10017 = vmatpush.bf16.msra.mxu0 0
    %10018 = vmatpush.bf16.msra.mxu0 0
    %10019 = vmatpush.bf16.msra.mxu0 0
    %10020 = vmatpush.bf16.msra.mxu0 %v9999
    %10021 = vmatmul.f32.gmra.mxu0 %v4137
    %v10022 = vpop.f32.mrf.mxu0
    %v10023 = vadd.f32 %v9766, %v10022
    %10024 = vdwg.mxu0
    %10026 = vst [vmem:[#allocation1] ss:$4 sm:$0xff] %v9755
    %v10027 = vld.sshfl [vmem:[#allocation1] sm:$0xff pattern:$0x73625140]
    %v10028 = vld.sshfl [vmem:[#allocation1 + $0x8] sm:$0xff pattern:$0x73625140]
    %v10029 = vand.u32 %v10027, %v610
    %v10031 = vand.u32 %v10028, %v610
    %10033 = vmatpush.bf16.msra.mxu0 0
    %10034 = vmatpush.bf16.msra.mxu0 0
    %10035 = vmatpush.bf16.msra.mxu0 0
    %10036 = vmatpush.bf16.msra.mxu0 0
    %10037 = vmatpush.bf16.msra.mxu0 0
    %10038 = vmatpush.bf16.msra.mxu0 0
    %10039 = vmatpush.bf16.msra.mxu0 0
    %10040 = vmatpush.bf16.msra.mxu0 %v10029
    %10041 = vmatmul.f32.gmra.mxu0 %v4641
    %v10042 = vpop.f32.mrf.mxu0
    %v10043 = vadd.f32 %v9765, %v10042
    %10044 = vdwg.mxu0
    %10045 = vmatpush.bf16.msra.mxu0 0
    %10046 = vmatpush.bf16.msra.mxu0 0
    %10047 = vmatpush.bf16.msra.mxu0 0
    %10048 = vmatpush.bf16.msra.mxu0 0
    %10049 = vmatpush.bf16.msra.mxu0 0
    %10050 = vmatpush.bf16.msra.mxu0 0
    %10051 = vmatpush.bf16.msra.mxu0 0
    %10052 = vmatpush.bf16.msra.mxu0 %v10031
    %10053 = vmatmul.f32.gmra.mxu0 %v4641
    %v10054 = vpop.f32.mrf.mxu0
    %v10055 = vadd.f32 %v9766, %v10054
    %10056 = vdwg.mxu0
    %10058 = vst [vmem:[#allocation1] ss:$4 sm:$0xff] %v9756
    %v10059 = vld.sshfl [vmem:[#allocation1] sm:$0xff pattern:$0x73625140]
    %v10060 = vld.sshfl [vmem:[#allocation1 + $0x8] sm:$0xff pattern:$0x73625140]
    %v10061 = vand.u32 %v10059, %v610
    %v10063 = vand.u32 %v10060, %v610
    %10065 = vmatpush.bf16.msra.mxu0 0
    %10066 = vmatpush.bf16.msra.mxu0 0
    %10067 = vmatpush.bf16.msra.mxu0 0
    %10068 = vmatpush.bf16.msra.mxu0 0
    %10069 = vmatpush.bf16.msra.mxu0 0
    %10070 = vmatpush.bf16.msra.mxu0 0
    %10071 = vmatpush.bf16.msra.mxu0 0
    %10072 = vmatpush.bf16.msra.mxu0 %v10061
    %10073 = vmatmul.f32.gmra.mxu0 %v5145
    %v10074 = vpop.f32.mrf.mxu0
    %v10075 = vadd.f32 %v9765, %v10074
    %10076 = vdwg.mxu0
    %10077 = vmatpush.bf16.msra.mxu0 0
    %10078 = vmatpush.bf16.msra.mxu0 0
    %10079 = vmatpush.bf16.msra.mxu0 0
    %10080 = vmatpush.bf16.msra.mxu0 0
    %10081 = vmatpush.bf16.msra.mxu0 0
    %10082 = vmatpush.bf16.msra.mxu0 0
    %10083 = vmatpush.bf16.msra.mxu0 0
    %10084 = vmatpush.bf16.msra.mxu0 %v10063
    %10085 = vmatmul.f32.gmra.mxu0 %v5145
    %v10086 = vpop.f32.mrf.mxu0
    %v10087 = vadd.f32 %v9766, %v10086
    %10088 = vdwg.mxu0
    %10090 = vst [vmem:[#allocation1] ss:$4 sm:$0xff] %v9757
    %v10091 = vld.sshfl [vmem:[#allocation1] sm:$0xff pattern:$0x73625140]
    %v10092 = vld.sshfl [vmem:[#allocation1 + $0x8] sm:$0xff pattern:$0x73625140]
    %v10093 = vand.u32 %v10091, %v610
    %v10095 = vand.u32 %v10092, %v610
    %10097 = vmatpush.bf16.msra.mxu0 0
    %10098 = vmatpush.bf16.msra.mxu0 0
    %10099 = vmatpush.bf16.msra.mxu0 0
    %10100 = vmatpush.bf16.msra.mxu0 0
    %10101 = vmatpush.bf16.msra.mxu0 0
    %10102 = vmatpush.bf16.msra.mxu0 0
    %10103 = vmatpush.bf16.msra.mxu0 0
    %10104 = vmatpush.bf16.msra.mxu0 %v10093
    %10105 = vmatmul.f32.gmra.mxu0 %v5649
    %v10106 = vpop.f32.mrf.mxu0
    %v10107 = vadd.f32 %v9765, %v10106
    %10108 = vdwg.mxu0
    %10109 = vmatpush.bf16.msra.mxu0 0
    %10110 = vmatpush.bf16.msra.mxu0 0
    %10111 = vmatpush.bf16.msra.mxu0 0
    %10112 = vmatpush.bf16.msra.mxu0 0
    %10113 = vmatpush.bf16.msra.mxu0 0
    %10114 = vmatpush.bf16.msra.mxu0 0
    %10115 = vmatpush.bf16.msra.mxu0 0
    %10116 = vmatpush.bf16.msra.mxu0 %v10095
    %10117 = vmatmul.f32.gmra.mxu0 %v5649
    %v10118 = vpop.f32.mrf.mxu0
    %v10119 = vadd.f32 %v9766, %v10118
    %10120 = vdwg.mxu0
    %10122 = vst [vmem:[#allocation1] ss:$4 sm:$0xff] %v9758
    %v10123 = vld.sshfl [vmem:[#allocation1] sm:$0xff pattern:$0x73625140]
    %v10124 = vld.sshfl [vmem:[#allocation1 + $0x8] sm:$0xff pattern:$0x73625140]
    %v10125 = vand.u32 %v10123, %v610
    %v10127 = vand.u32 %v10124, %v610
    %10129 = vmatpush.bf16.msra.mxu0 0
    %10130 = vmatpush.bf16.msra.mxu0 0
    %10131 = vmatpush.bf16.msra.mxu0 0
    %10132 = vmatpush.bf16.msra.mxu0 0
    %10133 = vmatpush.bf16.msra.mxu0 0
    %10134 = vmatpush.bf16.msra.mxu0 0
    %10135 = vmatpush.bf16.msra.mxu0 0
    %10136 = vmatpush.bf16.msra.mxu0 %v10125
    %10137 = vmatmul.f32.gmra.mxu0 %v6153
    %v10138 = vpop.f32.mrf.mxu0
    %v10139 = vadd.f32 %v9765, %v10138
    %10140 = vdwg.mxu0
    %10141 = vmatpush.bf16.msra.mxu0 0
    %10142 = vmatpush.bf16.msra.mxu0 0
    %10143 = vmatpush.bf16.msra.mxu0 0
    %10144 = vmatpush.bf16.msra.mxu0 0
    %10145 = vmatpush.bf16.msra.mxu0 0
    %10146 = vmatpush.bf16.msra.mxu0 0
    %10147 = vmatpush.bf16.msra.mxu0 0
    %10148 = vmatpush.bf16.msra.mxu0 %v10127
    %10149 = vmatmul.f32.gmra.mxu0 %v6153
    %v10150 = vpop.f32.mrf.mxu0
    %v10151 = vadd.f32 %v9766, %v10150
    %10152 = vdwg.mxu0
    %10154 = vst [vmem:[#allocation1] ss:$4 sm:$0xff] %v9759
    %v10155 = vld.sshfl [vmem:[#allocation1] sm:$0xff pattern:$0x73625140]
    %v10156 = vld.sshfl [vmem:[#allocation1 + $0x8] sm:$0xff pattern:$0x73625140]
    %v10157 = vand.u32 %v10155, %v610
    %v10159 = vand.u32 %v10156, %v610
    %10161 = vmatpush.bf16.msra.mxu0 0
    %10162 = vmatpush.bf16.msra.mxu0 0
    %10163 = vmatpush.bf16.msra.mxu0 0
    %10164 = vmatpush.bf16.msra.mxu0 0
    %10165 = vmatpush.bf16.msra.mxu0 0
    %10166 = vmatpush.bf16.msra.mxu0 0
    %10167 = vmatpush.bf16.msra.mxu0 0
    %10168 = vmatpush.bf16.msra.mxu0 %v10157
    %10169 = vmatmul.f32.gmra.mxu0 %v6657
    %v10170 = vpop.f32.mrf.mxu0
    %v10171 = vadd.f32 %v9765, %v10170
    %10172 = vdwg.mxu0
    %10173 = vmatpush.bf16.msra.mxu0 0
    %10174 = vmatpush.bf16.msra.mxu0 0
    %10175 = vmatpush.bf16.msra.mxu0 0
    %10176 = vmatpush.bf16.msra.mxu0 0
    %10177 = vmatpush.bf16.msra.mxu0 0
    %10178 = vmatpush.bf16.msra.mxu0 0
    %10179 = vmatpush.bf16.msra.mxu0 0
    %10180 = vmatpush.bf16.msra.mxu0 %v10159
    %10181 = vmatmul.f32.gmra.mxu0 %v6657
    %v10182 = vpop.f32.mrf.mxu0
    %v10183 = vadd.f32 %v9766, %v10182
    %10184 = vdwg.mxu0
    %10186 = vst [vmem:[#allocation1] ss:$4 sm:$0xff] %v9760
    %v10187 = vld.sshfl [vmem:[#allocation1] sm:$0xff pattern:$0x73625140]
    %v10188 = vld.sshfl [vmem:[#allocation1 + $0x8] sm:$0xff pattern:$0x73625140]
    %v10189 = vand.u32 %v10187, %v610
    %v10191 = vand.u32 %v10188, %v610
    %10193 = vmatpush.bf16.msra.mxu0 0
    %10194 = vmatpush.bf16.msra.mxu0 0
    %10195 = vmatpush.bf16.msra.mxu0 0
    %10196 = vmatpush.bf16.msra.mxu0 0
    %10197 = vmatpush.bf16.msra.mxu0 0
    %10198 = vmatpush.bf16.msra.mxu0 0
    %10199 = vmatpush.bf16.msra.mxu0 0
    %10200 = vmatpush.bf16.msra.mxu0 %v10189
    %10201 = vmatmul.f32.gmra.mxu0 %v7161
    %v10202 = vpop.f32.mrf.mxu0
    %v10203 = vadd.f32 %v9765, %v10202
    %10204 = vdwg.mxu0
    %10205 = vmatpush.bf16.msra.mxu0 0
    %10206 = vmatpush.bf16.msra.mxu0 0
    %10207 = vmatpush.bf16.msra.mxu0 0
    %10208 = vmatpush.bf16.msra.mxu0 0
    %10209 = vmatpush.bf16.msra.mxu0 0
    %10210 = vmatpush.bf16.msra.mxu0 0
    %10211 = vmatpush.bf16.msra.mxu0 0
    %10212 = vmatpush.bf16.msra.mxu0 %v10191
    %10213 = vmatmul.f32.gmra.mxu0 %v7161
    %v10214 = vpop.f32.mrf.mxu0
    %v10215 = vadd.f32 %v9766, %v10214
    %10216 = vdwg.mxu0
    %10218 = vst [vmem:[#allocation1] ss:$4 sm:$0xff] %v9761
    %v10219 = vld.sshfl [vmem:[#allocation1] sm:$0xff pattern:$0x73625140]
    %v10220 = vld.sshfl [vmem:[#allocation1 + $0x8] sm:$0xff pattern:$0x73625140]
    %v10221 = vand.u32 %v10219, %v610
    %v10223 = vand.u32 %v10220, %v610
    %10225 = vmatpush.bf16.msra.mxu0 0
    %10226 = vmatpush.bf16.msra.mxu0 0
    %10227 = vmatpush.bf16.msra.mxu0 0
    %10228 = vmatpush.bf16.msra.mxu0 0
    %10229 = vmatpush.bf16.msra.mxu0 0
    %10230 = vmatpush.bf16.msra.mxu0 0
    %10231 = vmatpush.bf16.msra.mxu0 0
    %10232 = vmatpush.bf16.msra.mxu0 %v10221
    %10233 = vmatmul.f32.gmra.mxu0 %v7665
    %v10234 = vpop.f32.mrf.mxu0
    %v10235 = vadd.f32 %v9765, %v10234
    %10236 = vdwg.mxu0
    %10237 = vmatpush.bf16.msra.mxu0 0
    %10238 = vmatpush.bf16.msra.mxu0 0
    %10239 = vmatpush.bf16.msra.mxu0 0
    %10240 = vmatpush.bf16.msra.mxu0 0
    %10241 = vmatpush.bf16.msra.mxu0 0
    %10242 = vmatpush.bf16.msra.mxu0 0
    %10243 = vmatpush.bf16.msra.mxu0 0
    %10244 = vmatpush.bf16.msra.mxu0 %v10223
    %10245 = vmatmul.f32.gmra.mxu0 %v7665
    %v10246 = vpop.f32.mrf.mxu0
    %v10247 = vadd.f32 %v9766, %v10246
    %10248 = vdwg.mxu0
    %10250 = vst [vmem:[#allocation1] ss:$4 sm:$0xff] %v9762
    %v10251 = vld.sshfl [vmem:[#allocation1] sm:$0xff pattern:$0x73625140]
    %v10252 = vld.sshfl [vmem:[#allocation1 + $0x8] sm:$0xff pattern:$0x73625140]
    %v10253 = vand.u32 %v10251, %v610
    %v10255 = vand.u32 %v10252, %v610
    %10257 = vmatpush.bf16.msra.mxu0 0
    %10258 = vmatpush.bf16.msra.mxu0 0
    %10259 = vmatpush.bf16.msra.mxu0 0
    %10260 = vmatpush.bf16.msra.mxu0 0
    %10261 = vmatpush.bf16.msra.mxu0 0
    %10262 = vmatpush.bf16.msra.mxu0 0
    %10263 = vmatpush.bf16.msra.mxu0 0
    %10264 = vmatpush.bf16.msra.mxu0 %v10253
    %10265 = vmatmul.f32.gmra.mxu0 %v8169
    %v10266 = vpop.f32.mrf.mxu0
    %v10267 = vadd.f32 %v9765, %v10266
    %10268 = vdwg.mxu0
    %10269 = vmatpush.bf16.msra.mxu0 0
    %10270 = vmatpush.bf16.msra.mxu0 0
    %10271 = vmatpush.bf16.msra.mxu0 0
    %10272 = vmatpush.bf16.msra.mxu0 0
    %10273 = vmatpush.bf16.msra.mxu0 0
    %10274 = vmatpush.bf16.msra.mxu0 0
    %10275 = vmatpush.bf16.msra.mxu0 0
    %10276 = vmatpush.bf16.msra.mxu0 %v10255
    %10277 = vmatmul.f32.gmra.mxu0 %v8169
    %v10278 = vpop.f32.mrf.mxu0
    %v10279 = vadd.f32 %v9766, %v10278
    %10280 = vdwg.mxu0
    %v10281 = vtanh.pop %v9787
    %v10282 = vtanh.pop %v9799
    %v10283 = vtanh.pop %v9819
    %v10284 = vtanh.pop %v9831
    %v10285 = vtanh.pop %v9851
    %v10286 = vtanh.pop %v9863
    %v10287 = vtanh.pop %v9883
    %v10288 = vtanh.pop %v9895
    %v10289 = vtanh.pop %v9915
    %v10290 = vtanh.pop %v9927
    %v10291 = vtanh.pop %v9947
    %v10292 = vtanh.pop %v9959
    %v10293 = vtanh.pop %v9979
    %v10294 = vtanh.pop %v9991
    %v10295 = vtanh.pop %v10011
    %v10296 = vtanh.pop %v10023
    %v10297 = vtanh.pop %v10043
    %v10298 = vtanh.pop %v10055
    %v10299 = vtanh.pop %v10075
    %v10300 = vtanh.pop %v10087
    %v10301 = vtanh.pop %v10107
    %v10302 = vtanh.pop %v10119
    %v10303 = vtanh.pop %v10139
    %v10304 = vtanh.pop %v10151
    %v10305 = vtanh.pop %v10171
    %v10306 = vtanh.pop %v10183
    %v10307 = vtanh.pop %v10203
    %v10308 = vtanh.pop %v10215
    %v10309 = vtanh.pop %v10235
    %v10310 = vtanh.pop %v10247
    %v10311 = vtanh.pop %v10267
    %v10312 = vtanh.pop %v10279
    %v10313 = vld [vmem:[%s5] sm:$0xff]
    %v10314 = vld [vmem:[%s5 + $0x8] sm:$0xff]
    %v10315 = vld [vmem:[%s5 + $0x10] sm:$0xff]
    %v10316 = vld [vmem:[%s5 + $0x18] sm:$0xff]
    %v10317 = vld [vmem:[%s5 + $0x20] sm:$0xff]
    %v10318 = vld [vmem:[%s5 + $0x28] sm:$0xff]
    %v10319 = vld [vmem:[%s5 + $0x30] sm:$0xff]
    %v10320 = vld [vmem:[%s5 + $0x38] sm:$0xff]
    %v10321 = vld [vmem:[%s5 + $0x40] sm:$0xff]
    %v10322 = vld [vmem:[%s5 + $0x48] sm:$0xff]
    %v10323 = vld [vmem:[%s5 + $0x50] sm:$0xff]
    %v10324 = vld [vmem:[%s5 + $0x58] sm:$0xff]
    %v10325 = vld [vmem:[%s5 + $0x60] sm:$0xff]
    %v10326 = vld [vmem:[%s5 + $0x68] sm:$0xff]
    %v10327 = vld [vmem:[%s5 + $0x70] sm:$0xff]
    %v10328 = vld [vmem:[%s5 + $0x78] sm:$0xff]
    %v10329 = vld [vmem:[%s6] sm:$0xff]
    %v10330 = vld [vmem:[%s6 + $0x8] sm:$0xff]
    %v10331 = vld [vmem:[%s6 + $0x10] sm:$0xff]
    %v10332 = vld [vmem:[%s6 + $0x18] sm:$0xff]
    %v10333 = vld [vmem:[%s6 + $0x20] sm:$0xff]
    %v10334 = vld [vmem:[%s6 + $0x28] sm:$0xff]
    %v10335 = vld [vmem:[%s6 + $0x30] sm:$0xff]
    %v10336 = vld [vmem:[%s6 + $0x38] sm:$0xff]
    %v10337 = vld [vmem:[%s6 + $0x40] sm:$0xff]
    %v10338 = vld [vmem:[%s6 + $0x48] sm:$0xff]
    %v10339 = vld [vmem:[%s6 + $0x50] sm:$0xff]
    %v10340 = vld [vmem:[%s6 + $0x58] sm:$0xff]
    %v10341 = vld [vmem:[%s6 + $0x60] sm:$0xff]
    %v10342 = vld [vmem:[%s6 + $0x68] sm:$0xff]
    %v10343 = vld [vmem:[%s6 + $0x70] sm:$0xff]
    %v10344 = vld [vmem:[%s6 + $0x78] sm:$0xff]
    %v10346 = vunpack.c.l.b16 %v10329
    %v10347 = vunpack.c.h.b16 %v10329
    %v10348 = vpack.c.b16 %v10346, %v10346
    %v10349 = vpack.c.b16 %v10347, %v10347
    %10352 = vmatpush.bf16.xpose.msra.mxu0 0
    %10353 = vmatpush.bf16.xpose.msra.mxu0 0
    %10354 = vmatpush.bf16.xpose.msra.mxu0 0
    %10355 = vmatpush.bf16.xpose.msra.mxu0 0
    %10356 = vmatpush.bf16.xpose.msra.mxu0 0
    %10357 = vmatpush.bf16.xpose.msra.mxu0 0
    %10358 = vmatpush.bf16.xpose.msra.mxu0 0
    %10359 = vmatpush.bf16.xpose.msra.mxu0 %v10348
    %10360 = vmatmul.f32.gmra.mxu0 %v10281
    %v10361 = vpop.f32.mrf.mxu0
    %v10362 = vadd.f32 0.0, %v10361
    %10363 = vdwg.mxu0
    %10364 = vmatpush.bf16.xpose.msra.mxu0 0
    %10365 = vmatpush.bf16.xpose.msra.mxu0 0
    %10366 = vmatpush.bf16.xpose.msra.mxu0 0
    %10367 = vmatpush.bf16.xpose.msra.mxu0 0
    %10368 = vmatpush.bf16.xpose.msra.mxu0 0
    %10369 = vmatpush.bf16.xpose.msra.mxu0 0
    %10370 = vmatpush.bf16.xpose.msra.mxu0 0
    %10371 = vmatpush.bf16.xpose.msra.mxu0 %v10349
    %10372 = vmatmul.f32.gmra.mxu0 %v10282
    %v10373 = vpop.f32.mrf.mxu0
    %v10374 = vadd.f32 %v10362, %v10373
    %10375 = vdwg.mxu0
    %v10377 = vunpack.c.l.b16 %v10330
    %v10378 = vunpack.c.h.b16 %v10330
    %v10379 = vpack.c.b16 %v10377, %v10377
    %v10380 = vpack.c.b16 %v10378, %v10378
    %10383 = vmatpush.bf16.xpose.msra.mxu0 0
    %10384 = vmatpush.bf16.xpose.msra.mxu0 0
    %10385 = vmatpush.bf16.xpose.msra.mxu0 0
    %10386 = vmatpush.bf16.xpose.msra.mxu0 0
    %10387 = vmatpush.bf16.xpose.msra.mxu0 0
    %10388 = vmatpush.bf16.xpose.msra.mxu0 0
    %10389 = vmatpush.bf16.xpose.msra.mxu0 0
    %10390 = vmatpush.bf16.xpose.msra.mxu0 %v10379
    %10391 = vmatmul.f32.gmra.mxu0 %v10283
    %v10392 = vpop.f32.mrf.mxu0
    %v10393 = vadd.f32 0.0, %v10392
    %10394 = vdwg.mxu0
    %10395 = vmatpush.bf16.xpose.msra.mxu0 0
    %10396 = vmatpush.bf16.xpose.msra.mxu0 0
    %10397 = vmatpush.bf16.xpose.msra.mxu0 0
    %10398 = vmatpush.bf16.xpose.msra.mxu0 0
    %10399 = vmatpush.bf16.xpose.msra.mxu0 0
    %10400 = vmatpush.bf16.xpose.msra.mxu0 0
    %10401 = vmatpush.bf16.xpose.msra.mxu0 0
    %10402 = vmatpush.bf16.xpose.msra.mxu0 %v10380
    %10403 = vmatmul.f32.gmra.mxu0 %v10284
    %v10404 = vpop.f32.mrf.mxu0
    %v10405 = vadd.f32 %v10393, %v10404
    %10406 = vdwg.mxu0
    %v10408 = vunpack.c.l.b16 %v10331
    %v10409 = vunpack.c.h.b16 %v10331
    %v10410 = vpack.c.b16 %v10408, %v10408
    %v10411 = vpack.c.b16 %v10409, %v10409
    %10414 = vmatpush.bf16.xpose.msra.mxu0 0
    %10415 = vmatpush.bf16.xpose.msra.mxu0 0
    %10416 = vmatpush.bf16.xpose.msra.mxu0 0
    %10417 = vmatpush.bf16.xpose.msra.mxu0 0
    %10418 = vmatpush.bf16.xpose.msra.mxu0 0
    %10419 = vmatpush.bf16.xpose.msra.mxu0 0
    %10420 = vmatpush.bf16.xpose.msra.mxu0 0
    %10421 = vmatpush.bf16.xpose.msra.mxu0 %v10410
    %10422 = vmatmul.f32.gmra.mxu0 %v10285
    %v10423 = vpop.f32.mrf.mxu0
    %v10424 = vadd.f32 0.0, %v10423
    %10425 = vdwg.mxu0
    %10426 = vmatpush.bf16.xpose.msra.mxu0 0
    %10427 = vmatpush.bf16.xpose.msra.mxu0 0
    %10428 = vmatpush.bf16.xpose.msra.mxu0 0
    %10429 = vmatpush.bf16.xpose.msra.mxu0 0
    %10430 = vmatpush.bf16.xpose.msra.mxu0 0
    %10431 = vmatpush.bf16.xpose.msra.mxu0 0
    %10432 = vmatpush.bf16.xpose.msra.mxu0 0
    %10433 = vmatpush.bf16.xpose.msra.mxu0 %v10411
    %10434 = vmatmul.f32.gmra.mxu0 %v10286
    %v10435 = vpop.f32.mrf.mxu0
    %v10436 = vadd.f32 %v10424, %v10435
    %10437 = vdwg.mxu0
    %v10439 = vunpack.c.l.b16 %v10332
    %v10440 = vunpack.c.h.b16 %v10332
    %v10441 = vpack.c.b16 %v10439, %v10439
    %v10442 = vpack.c.b16 %v10440, %v10440
    %10445 = vmatpush.bf16.xpose.msra.mxu0 0
    %10446 = vmatpush.bf16.xpose.msra.mxu0 0
    %10447 = vmatpush.bf16.xpose.msra.mxu0 0
    %10448 = vmatpush.bf16.xpose.msra.mxu0 0
    %10449 = vmatpush.bf16.xpose.msra.mxu0 0
    %10450 = vmatpush.bf16.xpose.msra.mxu0 0
    %10451 = vmatpush.bf16.xpose.msra.mxu0 0
    %10452 = vmatpush.bf16.xpose.msra.mxu0 %v10441
    %10453 = vmatmul.f32.gmra.mxu0 %v10287
    %v10454 = vpop.f32.mrf.mxu0
    %v10455 = vadd.f32 0.0, %v10454
    %10456 = vdwg.mxu0
    %10457 = vmatpush.bf16.xpose.msra.mxu0 0
    %10458 = vmatpush.bf16.xpose.msra.mxu0 0
    %10459 = vmatpush.bf16.xpose.msra.mxu0 0
    %10460 = vmatpush.bf16.xpose.msra.mxu0 0
    %10461 = vmatpush.bf16.xpose.msra.mxu0 0
    %10462 = vmatpush.bf16.xpose.msra.mxu0 0
    %10463 = vmatpush.bf16.xpose.msra.mxu0 0
    %10464 = vmatpush.bf16.xpose.msra.mxu0 %v10442
    %10465 = vmatmul.f32.gmra.mxu0 %v10288
    %v10466 = vpop.f32.mrf.mxu0
    %v10467 = vadd.f32 %v10455, %v10466
    %10468 = vdwg.mxu0
    %v10470 = vunpack.c.l.b16 %v10333
    %v10471 = vunpack.c.h.b16 %v10333
    %v10472 = vpack.c.b16 %v10470, %v10470
    %v10473 = vpack.c.b16 %v10471, %v10471
    %10476 = vmatpush.bf16.xpose.msra.mxu0 0
    %10477 = vmatpush.bf16.xpose.msra.mxu0 0
    %10478 = vmatpush.bf16.xpose.msra.mxu0 0
    %10479 = vmatpush.bf16.xpose.msra.mxu0 0
    %10480 = vmatpush.bf16.xpose.msra.mxu0 0
    %10481 = vmatpush.bf16.xpose.msra.mxu0 0
    %10482 = vmatpush.bf16.xpose.msra.mxu0 0
    %10483 = vmatpush.bf16.xpose.msra.mxu0 %v10472
    %10484 = vmatmul.f32.gmra.mxu0 %v10289
    %v10485 = vpop.f32.mrf.mxu0
    %v10486 = vadd.f32 0.0, %v10485
    %10487 = vdwg.mxu0
    %10488 = vmatpush.bf16.xpose.msra.mxu0 0
    %10489 = vmatpush.bf16.xpose.msra.mxu0 0
    %10490 = vmatpush.bf16.xpose.msra.mxu0 0
    %10491 = vmatpush.bf16.xpose.msra.mxu0 0
    %10492 = vmatpush.bf16.xpose.msra.mxu0 0
    %10493 = vmatpush.bf16.xpose.msra.mxu0 0
    %10494 = vmatpush.bf16.xpose.msra.mxu0 0
    %10495 = vmatpush.bf16.xpose.msra.mxu0 %v10473
    %10496 = vmatmul.f32.gmra.mxu0 %v10290
    %v10497 = vpop.f32.mrf.mxu0
    %v10498 = vadd.f32 %v10486, %v10497
    %10499 = vdwg.mxu0
    %v10501 = vunpack.c.l.b16 %v10334
    %v10502 = vunpack.c.h.b16 %v10334
    %v10503 = vpack.c.b16 %v10501, %v10501
    %v10504 = vpack.c.b16 %v10502, %v10502
    %10507 = vmatpush.bf16.xpose.msra.mxu0 0
    %10508 = vmatpush.bf16.xpose.msra.mxu0 0
    %10509 = vmatpush.bf16.xpose.msra.mxu0 0
    %10510 = vmatpush.bf16.xpose.msra.mxu0 0
    %10511 = vmatpush.bf16.xpose.msra.mxu0 0
    %10512 = vmatpush.bf16.xpose.msra.mxu0 0
    %10513 = vmatpush.bf16.xpose.msra.mxu0 0
    %10514 = vmatpush.bf16.xpose.msra.mxu0 %v10503
    %10515 = vmatmul.f32.gmra.mxu0 %v10291
    %v10516 = vpop.f32.mrf.mxu0
    %v10517 = vadd.f32 0.0, %v10516
    %10518 = vdwg.mxu0
    %10519 = vmatpush.bf16.xpose.msra.mxu0 0
    %10520 = vmatpush.bf16.xpose.msra.mxu0 0
    %10521 = vmatpush.bf16.xpose.msra.mxu0 0
    %10522 = vmatpush.bf16.xpose.msra.mxu0 0
    %10523 = vmatpush.bf16.xpose.msra.mxu0 0
    %10524 = vmatpush.bf16.xpose.msra.mxu0 0
    %10525 = vmatpush.bf16.xpose.msra.mxu0 0
    %10526 = vmatpush.bf16.xpose.msra.mxu0 %v10504
    %10527 = vmatmul.f32.gmra.mxu0 %v10292
    %v10528 = vpop.f32.mrf.mxu0
    %v10529 = vadd.f32 %v10517, %v10528
    %10530 = vdwg.mxu0
    %v10532 = vunpack.c.l.b16 %v10335
    %v10533 = vunpack.c.h.b16 %v10335
    %v10534 = vpack.c.b16 %v10532, %v10532
    %v10535 = vpack.c.b16 %v10533, %v10533
    %10538 = vmatpush.bf16.xpose.msra.mxu0 0
    %10539 = vmatpush.bf16.xpose.msra.mxu0 0
    %10540 = vmatpush.bf16.xpose.msra.mxu0 0
    %10541 = vmatpush.bf16.xpose.msra.mxu0 0
    %10542 = vmatpush.bf16.xpose.msra.mxu0 0
    %10543 = vmatpush.bf16.xpose.msra.mxu0 0
    %10544 = vmatpush.bf16.xpose.msra.mxu0 0
    %10545 = vmatpush.bf16.xpose.msra.mxu0 %v10534
    %10546 = vmatmul.f32.gmra.mxu0 %v10293
    %v10547 = vpop.f32.mrf.mxu0
    %v10548 = vadd.f32 0.0, %v10547
    %10549 = vdwg.mxu0
    %10550 = vmatpush.bf16.xpose.msra.mxu0 0
    %10551 = vmatpush.bf16.xpose.msra.mxu0 0
    %10552 = vmatpush.bf16.xpose.msra.mxu0 0
    %10553 = vmatpush.bf16.xpose.msra.mxu0 0
    %10554 = vmatpush.bf16.xpose.msra.mxu0 0
    %10555 = vmatpush.bf16.xpose.msra.mxu0 0
    %10556 = vmatpush.bf16.xpose.msra.mxu0 0
    %10557 = vmatpush.bf16.xpose.msra.mxu0 %v10535
    %10558 = vmatmul.f32.gmra.mxu0 %v10294
    %v10559 = vpop.f32.mrf.mxu0
    %v10560 = vadd.f32 %v10548, %v10559
    %10561 = vdwg.mxu0
    %v10563 = vunpack.c.l.b16 %v10336
    %v10564 = vunpack.c.h.b16 %v10336
    %v10565 = vpack.c.b16 %v10563, %v10563
    %v10566 = vpack.c.b16 %v10564, %v10564
    %10569 = vmatpush.bf16.xpose.msra.mxu0 0
    %10570 = vmatpush.bf16.xpose.msra.mxu0 0
    %10571 = vmatpush.bf16.xpose.msra.mxu0 0
    %10572 = vmatpush.bf16.xpose.msra.mxu0 0
    %10573 = vmatpush.bf16.xpose.msra.mxu0 0
    %10574 = vmatpush.bf16.xpose.msra.mxu0 0
    %10575 = vmatpush.bf16.xpose.msra.mxu0 0
    %10576 = vmatpush.bf16.xpose.msra.mxu0 %v10565
    %10577 = vmatmul.f32.gmra.mxu0 %v10295
    %v10578 = vpop.f32.mrf.mxu0
    %v10579 = vadd.f32 0.0, %v10578
    %10580 = vdwg.mxu0
    %10581 = vmatpush.bf16.xpose.msra.mxu0 0
    %10582 = vmatpush.bf16.xpose.msra.mxu0 0
    %10583 = vmatpush.bf16.xpose.msra.mxu0 0
    %10584 = vmatpush.bf16.xpose.msra.mxu0 0
    %10585 = vmatpush.bf16.xpose.msra.mxu0 0
    %10586 = vmatpush.bf16.xpose.msra.mxu0 0
    %10587 = vmatpush.bf16.xpose.msra.mxu0 0
    %10588 = vmatpush.bf16.xpose.msra.mxu0 %v10566
    %10589 = vmatmul.f32.gmra.mxu0 %v10296
    %v10590 = vpop.f32.mrf.mxu0
    %v10591 = vadd.f32 %v10579, %v10590
    %10592 = vdwg.mxu0
    %v10594 = vunpack.c.l.b16 %v10337
    %v10595 = vunpack.c.h.b16 %v10337
    %v10596 = vpack.c.b16 %v10594, %v10594
    %v10597 = vpack.c.b16 %v10595, %v10595
    %10600 = vmatpush.bf16.xpose.msra.mxu0 0
    %10601 = vmatpush.bf16.xpose.msra.mxu0 0
    %10602 = vmatpush.bf16.xpose.msra.mxu0 0
    %10603 = vmatpush.bf16.xpose.msra.mxu0 0
    %10604 = vmatpush.bf16.xpose.msra.mxu0 0
    %10605 = vmatpush.bf16.xpose.msra.mxu0 0
    %10606 = vmatpush.bf16.xpose.msra.mxu0 0
    %10607 = vmatpush.bf16.xpose.msra.mxu0 %v10596
    %10608 = vmatmul.f32.gmra.mxu0 %v10297
    %v10609 = vpop.f32.mrf.mxu0
    %v10610 = vadd.f32 0.0, %v10609
    %10611 = vdwg.mxu0
    %10612 = vmatpush.bf16.xpose.msra.mxu0 0
    %10613 = vmatpush.bf16.xpose.msra.mxu0 0
    %10614 = vmatpush.bf16.xpose.msra.mxu0 0
    %10615 = vmatpush.bf16.xpose.msra.mxu0 0
    %10616 = vmatpush.bf16.xpose.msra.mxu0 0
    %10617 = vmatpush.bf16.xpose.msra.mxu0 0
    %10618 = vmatpush.bf16.xpose.msra.mxu0 0
    %10619 = vmatpush.bf16.xpose.msra.mxu0 %v10597
    %10620 = vmatmul.f32.gmra.mxu0 %v10298
    %v10621 = vpop.f32.mrf.mxu0
    %v10622 = vadd.f32 %v10610, %v10621
    %10623 = vdwg.mxu0
    %v10625 = vunpack.c.l.b16 %v10338
    %v10626 = vunpack.c.h.b16 %v10338
    %v10627 = vpack.c.b16 %v10625, %v10625
    %v10628 = vpack.c.b16 %v10626, %v10626
    %10631 = vmatpush.bf16.xpose.msra.mxu0 0
    %10632 = vmatpush.bf16.xpose.msra.mxu0 0
    %10633 = vmatpush.bf16.xpose.msra.mxu0 0
    %10634 = vmatpush.bf16.xpose.msra.mxu0 0
    %10635 = vmatpush.bf16.xpose.msra.mxu0 0
    %10636 = vmatpush.bf16.xpose.msra.mxu0 0
    %10637 = vmatpush.bf16.xpose.msra.mxu0 0
    %10638 = vmatpush.bf16.xpose.msra.mxu0 %v10627
    %10639 = vmatmul.f32.gmra.mxu0 %v10299
    %v10640 = vpop.f32.mrf.mxu0
    %v10641 = vadd.f32 0.0, %v10640
    %10642 = vdwg.mxu0
    %10643 = vmatpush.bf16.xpose.msra.mxu0 0
    %10644 = vmatpush.bf16.xpose.msra.mxu0 0
    %10645 = vmatpush.bf16.xpose.msra.mxu0 0
    %10646 = vmatpush.bf16.xpose.msra.mxu0 0
    %10647 = vmatpush.bf16.xpose.msra.mxu0 0
    %10648 = vmatpush.bf16.xpose.msra.mxu0 0
    %10649 = vmatpush.bf16.xpose.msra.mxu0 0
    %10650 = vmatpush.bf16.xpose.msra.mxu0 %v10628
    %10651 = vmatmul.f32.gmra.mxu0 %v10300
    %v10652 = vpop.f32.mrf.mxu0
    %v10653 = vadd.f32 %v10641, %v10652
    %10654 = vdwg.mxu0
    %v10656 = vunpack.c.l.b16 %v10339
    %v10657 = vunpack.c.h.b16 %v10339
    %v10658 = vpack.c.b16 %v10656, %v10656
    %v10659 = vpack.c.b16 %v10657, %v10657
    %10662 = vmatpush.bf16.xpose.msra.mxu0 0
    %10663 = vmatpush.bf16.xpose.msra.mxu0 0
    %10664 = vmatpush.bf16.xpose.msra.mxu0 0
    %10665 = vmatpush.bf16.xpose.msra.mxu0 0
    %10666 = vmatpush.bf16.xpose.msra.mxu0 0
    %10667 = vmatpush.bf16.xpose.msra.mxu0 0
    %10668 = vmatpush.bf16.xpose.msra.mxu0 0
    %10669 = vmatpush.bf16.xpose.msra.mxu0 %v10658
    %10670 = vmatmul.f32.gmra.mxu0 %v10301
    %v10671 = vpop.f32.mrf.mxu0
    %v10672 = vadd.f32 0.0, %v10671
    %10673 = vdwg.mxu0
    %10674 = vmatpush.bf16.xpose.msra.mxu0 0
    %10675 = vmatpush.bf16.xpose.msra.mxu0 0
    %10676 = vmatpush.bf16.xpose.msra.mxu0 0
    %10677 = vmatpush.bf16.xpose.msra.mxu0 0
    %10678 = vmatpush.bf16.xpose.msra.mxu0 0
    %10679 = vmatpush.bf16.xpose.msra.mxu0 0
    %10680 = vmatpush.bf16.xpose.msra.mxu0 0
    %10681 = vmatpush.bf16.xpose.msra.mxu0 %v10659
    %10682 = vmatmul.f32.gmra.mxu0 %v10302
    %v10683 = vpop.f32.mrf.mxu0
    %v10684 = vadd.f32 %v10672, %v10683
    %10685 = vdwg.mxu0
    %v10687 = vunpack.c.l.b16 %v10340
    %v10688 = vunpack.c.h.b16 %v10340
    %v10689 = vpack.c.b16 %v10687, %v10687
    %v10690 = vpack.c.b16 %v10688, %v10688
    %10693 = vmatpush.bf16.xpose.msra.mxu0 0
    %10694 = vmatpush.bf16.xpose.msra.mxu0 0
    %10695 = vmatpush.bf16.xpose.msra.mxu0 0
    %10696 = vmatpush.bf16.xpose.msra.mxu0 0
    %10697 = vmatpush.bf16.xpose.msra.mxu0 0
    %10698 = vmatpush.bf16.xpose.msra.mxu0 0
    %10699 = vmatpush.bf16.xpose.msra.mxu0 0
    %10700 = vmatpush.bf16.xpose.msra.mxu0 %v10689
    %10701 = vmatmul.f32.gmra.mxu0 %v10303
    %v10702 = vpop.f32.mrf.mxu0
    %v10703 = vadd.f32 0.0, %v10702
    %10704 = vdwg.mxu0
    %10705 = vmatpush.bf16.xpose.msra.mxu0 0
    %10706 = vmatpush.bf16.xpose.msra.mxu0 0
    %10707 = vmatpush.bf16.xpose.msra.mxu0 0
    %10708 = vmatpush.bf16.xpose.msra.mxu0 0
    %10709 = vmatpush.bf16.xpose.msra.mxu0 0
    %10710 = vmatpush.bf16.xpose.msra.mxu0 0
    %10711 = vmatpush.bf16.xpose.msra.mxu0 0
    %10712 = vmatpush.bf16.xpose.msra.mxu0 %v10690
    %10713 = vmatmul.f32.gmra.mxu0 %v10304
    %v10714 = vpop.f32.mrf.mxu0
    %v10715 = vadd.f32 %v10703, %v10714
    %10716 = vdwg.mxu0
    %v10718 = vunpack.c.l.b16 %v10341
    %v10719 = vunpack.c.h.b16 %v10341
    %v10720 = vpack.c.b16 %v10718, %v10718
    %v10721 = vpack.c.b16 %v10719, %v10719
    %10724 = vmatpush.bf16.xpose.msra.mxu0 0
    %10725 = vmatpush.bf16.xpose.msra.mxu0 0
    %10726 = vmatpush.bf16.xpose.msra.mxu0 0
    %10727 = vmatpush.bf16.xpose.msra.mxu0 0
    %10728 = vmatpush.bf16.xpose.msra.mxu0 0
    %10729 = vmatpush.bf16.xpose.msra.mxu0 0
    %10730 = vmatpush.bf16.xpose.msra.mxu0 0
    %10731 = vmatpush.bf16.xpose.msra.mxu0 %v10720
    %10732 = vmatmul.f32.gmra.mxu0 %v10305
    %v10733 = vpop.f32.mrf.mxu0
    %v10734 = vadd.f32 0.0, %v10733
    %10735 = vdwg.mxu0
    %10736 = vmatpush.bf16.xpose.msra.mxu0 0
    %10737 = vmatpush.bf16.xpose.msra.mxu0 0
    %10738 = vmatpush.bf16.xpose.msra.mxu0 0
    %10739 = vmatpush.bf16.xpose.msra.mxu0 0
    %10740 = vmatpush.bf16.xpose.msra.mxu0 0
    %10741 = vmatpush.bf16.xpose.msra.mxu0 0
    %10742 = vmatpush.bf16.xpose.msra.mxu0 0
    %10743 = vmatpush.bf16.xpose.msra.mxu0 %v10721
    %10744 = vmatmul.f32.gmra.mxu0 %v10306
    %v10745 = vpop.f32.mrf.mxu0
    %v10746 = vadd.f32 %v10734, %v10745
    %10747 = vdwg.mxu0
    %v10749 = vunpack.c.l.b16 %v10342
    %v10750 = vunpack.c.h.b16 %v10342
    %v10751 = vpack.c.b16 %v10749, %v10749
    %v10752 = vpack.c.b16 %v10750, %v10750
    %10755 = vmatpush.bf16.xpose.msra.mxu0 0
    %10756 = vmatpush.bf16.xpose.msra.mxu0 0
    %10757 = vmatpush.bf16.xpose.msra.mxu0 0
    %10758 = vmatpush.bf16.xpose.msra.mxu0 0
    %10759 = vmatpush.bf16.xpose.msra.mxu0 0
    %10760 = vmatpush.bf16.xpose.msra.mxu0 0
    %10761 = vmatpush.bf16.xpose.msra.mxu0 0
    %10762 = vmatpush.bf16.xpose.msra.mxu0 %v10751
    %10763 = vmatmul.f32.gmra.mxu0 %v10307
    %v10764 = vpop.f32.mrf.mxu0
    %v10765 = vadd.f32 0.0, %v10764
    %10766 = vdwg.mxu0
    %10767 = vmatpush.bf16.xpose.msra.mxu0 0
    %10768 = vmatpush.bf16.xpose.msra.mxu0 0
    %10769 = vmatpush.bf16.xpose.msra.mxu0 0
    %10770 = vmatpush.bf16.xpose.msra.mxu0 0
    %10771 = vmatpush.bf16.xpose.msra.mxu0 0
    %10772 = vmatpush.bf16.xpose.msra.mxu0 0
    %10773 = vmatpush.bf16.xpose.msra.mxu0 0
    %10774 = vmatpush.bf16.xpose.msra.mxu0 %v10752
    %10775 = vmatmul.f32.gmra.mxu0 %v10308
    %v10776 = vpop.f32.mrf.mxu0
    %v10777 = vadd.f32 %v10765, %v10776
    %10778 = vdwg.mxu0
    %v10780 = vunpack.c.l.b16 %v10343
    %v10781 = vunpack.c.h.b16 %v10343
    %v10782 = vpack.c.b16 %v10780, %v10780
    %v10783 = vpack.c.b16 %v10781, %v10781
    %10786 = vmatpush.bf16.xpose.msra.mxu0 0
    %10787 = vmatpush.bf16.xpose.msra.mxu0 0
    %10788 = vmatpush.bf16.xpose.msra.mxu0 0
    %10789 = vmatpush.bf16.xpose.msra.mxu0 0
    %10790 = vmatpush.bf16.xpose.msra.mxu0 0
    %10791 = vmatpush.bf16.xpose.msra.mxu0 0
    %10792 = vmatpush.bf16.xpose.msra.mxu0 0
    %10793 = vmatpush.bf16.xpose.msra.mxu0 %v10782
    %10794 = vmatmul.f32.gmra.mxu0 %v10309
    %v10795 = vpop.f32.mrf.mxu0
    %v10796 = vadd.f32 0.0, %v10795
    %10797 = vdwg.mxu0
    %10798 = vmatpush.bf16.xpose.msra.mxu0 0
    %10799 = vmatpush.bf16.xpose.msra.mxu0 0
    %10800 = vmatpush.bf16.xpose.msra.mxu0 0
    %10801 = vmatpush.bf16.xpose.msra.mxu0 0
    %10802 = vmatpush.bf16.xpose.msra.mxu0 0
    %10803 = vmatpush.bf16.xpose.msra.mxu0 0
    %10804 = vmatpush.bf16.xpose.msra.mxu0 0
    %10805 = vmatpush.bf16.xpose.msra.mxu0 %v10783
    %10806 = vmatmul.f32.gmra.mxu0 %v10310
    %v10807 = vpop.f32.mrf.mxu0
    %v10808 = vadd.f32 %v10796, %v10807
    %10809 = vdwg.mxu0
    %v10811 = vunpack.c.l.b16 %v10344
    %v10812 = vunpack.c.h.b16 %v10344
    %v10813 = vpack.c.b16 %v10811, %v10811
    %v10814 = vpack.c.b16 %v10812, %v10812
    %10817 = vmatpush.bf16.xpose.msra.mxu0 0
    %10818 = vmatpush.bf16.xpose.msra.mxu0 0
    %10819 = vmatpush.bf16.xpose.msra.mxu0 0
    %10820 = vmatpush.bf16.xpose.msra.mxu0 0
    %10821 = vmatpush.bf16.xpose.msra.mxu0 0
    %10822 = vmatpush.bf16.xpose.msra.mxu0 0
    %10823 = vmatpush.bf16.xpose.msra.mxu0 0
    %10824 = vmatpush.bf16.xpose.msra.mxu0 %v10813
    %10825 = vmatmul.f32.gmra.mxu0 %v10311
    %v10826 = vpop.f32.mrf.mxu0
    %v10827 = vadd.f32 0.0, %v10826
    %10828 = vdwg.mxu0
    %10829 = vmatpush.bf16.xpose.msra.mxu0 0
    %10830 = vmatpush.bf16.xpose.msra.mxu0 0
    %10831 = vmatpush.bf16.xpose.msra.mxu0 0
    %10832 = vmatpush.bf16.xpose.msra.mxu0 0
    %10833 = vmatpush.bf16.xpose.msra.mxu0 0
    %10834 = vmatpush.bf16.xpose.msra.mxu0 0
    %10835 = vmatpush.bf16.xpose.msra.mxu0 0
    %10836 = vmatpush.bf16.xpose.msra.mxu0 %v10814
    %10837 = vmatmul.f32.gmra.mxu0 %v10312
    %v10838 = vpop.f32.mrf.mxu0
    %v10839 = vadd.f32 %v10827, %v10838
    %10840 = vdwg.mxu0
    %vm10841 = vcmask 58368
    %v10842 = vsel %vm10841, %v10374, 0.0
    %v10843 = vsel %vm10841, %v10405, 0.0
    %v10844 = vadd.f32 %v10842, %v10843
    %v10845 = vsel %vm10841, %v10436, 0.0
    %v10846 = vadd.f32 %v10844, %v10845
    %v10847 = vsel %vm10841, %v10467, 0.0
    %v10848 = vadd.f32 %v10846, %v10847
    %v10849 = vsel %vm10841, %v10498, 0.0
    %v10850 = vadd.f32 %v10848, %v10849
    %v10851 = vsel %vm10841, %v10529, 0.0
    %v10852 = vadd.f32 %v10850, %v10851
    %v10853 = vsel %vm10841, %v10560, 0.0
    %v10854 = vadd.f32 %v10852, %v10853
    %v10855 = vsel %vm10841, %v10591, 0.0
    %v10856 = vadd.f32 %v10854, %v10855
    %v10857 = vsel %vm10841, %v10622, 0.0
    %v10858 = vadd.f32 %v10856, %v10857
    %v10859 = vsel %vm10841, %v10653, 0.0
    %v10860 = vadd.f32 %v10858, %v10859
    %v10861 = vsel %vm10841, %v10684, 0.0
    %v10862 = vadd.f32 %v10860, %v10861
    %v10863 = vsel %vm10841, %v10715, 0.0
    %v10864 = vadd.f32 %v10862, %v10863
    %v10865 = vsel %vm10841, %v10746, 0.0
    %v10866 = vadd.f32 %v10864, %v10865
    %v10867 = vsel %vm10841, %v10777, 0.0
    %v10868 = vadd.f32 %v10866, %v10867
    %v10869 = vsel %vm10841, %v10808, 0.0
    %v10870 = vadd.f32 %v10868, %v10869
    %v10871 = vsel %vm10841, %v10839, 0.0
    %v10872 = vadd.f32 %v10870, %v10871
    %v10889 = vunpack.c.l.b16 %v10313
    %v10890 = vunpack.c.h.b16 %v10313
    %v10891 = vunpack.c.l.b16 %v10314
    %v10892 = vunpack.c.h.b16 %v10314
    %v10893 = vunpack.c.l.b16 %v10315
    %v10894 = vunpack.c.h.b16 %v10315
    %v10895 = vunpack.c.l.b16 %v10316
    %v10896 = vunpack.c.h.b16 %v10316
    %v10897 = vunpack.c.l.b16 %v10317
    %v10898 = vunpack.c.h.b16 %v10317
    %v10899 = vunpack.c.l.b16 %v10318
    %v10900 = vunpack.c.h.b16 %v10318
    %v10901 = vunpack.c.l.b16 %v10319
    %v10902 = vunpack.c.h.b16 %v10319
    %v10903 = vunpack.c.l.b16 %v10320
    %v10904 = vunpack.c.h.b16 %v10320
    %v10905 = vunpack.c.l.b16 %v10321
    %v10906 = vunpack.c.h.b16 %v10321
    %v10907 = vunpack.c.l.b16 %v10322
    %v10908 = vunpack.c.h.b16 %v10322
    %v10909 = vunpack.c.l.b16 %v10323
    %v10910 = vunpack.c.h.b16 %v10323
    %v10911 = vunpack.c.l.b16 %v10324
    %v10912 = vunpack.c.h.b16 %v10324
    %v10913 = vunpack.c.l.b16 %v10325
    %v10914 = vunpack.c.h.b16 %v10325
    %v10915 = vunpack.c.l.b16 %v10326
    %v10916 = vunpack.c.h.b16 %v10326
    %v10917 = vunpack.c.l.b16 %v10327
    %v10918 = vunpack.c.h.b16 %v10327
    %v10919 = vunpack.c.l.b16 %v10328
    %v10920 = vunpack.c.h.b16 %v10328
    %v10921 = vpack.c.b16 %v10889, %v10889
    %v10922 = vpack.c.b16 %v10890, %v10890
    %v10923 = vpack.c.b16 %v10891, %v10891
    %v10924 = vpack.c.b16 %v10892, %v10892
    %v10925 = vpack.c.b16 %v10893, %v10893
    %v10926 = vpack.c.b16 %v10894, %v10894
    %v10927 = vpack.c.b16 %v10895, %v10895
    %v10928 = vpack.c.b16 %v10896, %v10896
    %v10929 = vpack.c.b16 %v10897, %v10897
    %v10930 = vpack.c.b16 %v10898, %v10898
    %v10931 = vpack.c.b16 %v10899, %v10899
    %v10932 = vpack.c.b16 %v10900, %v10900
    %v10933 = vpack.c.b16 %v10901, %v10901
    %v10934 = vpack.c.b16 %v10902, %v10902
    %v10935 = vpack.c.b16 %v10903, %v10903
    %v10936 = vpack.c.b16 %v10904, %v10904
    %v10937 = vpack.c.b16 %v10905, %v10905
    %v10938 = vpack.c.b16 %v10906, %v10906
    %v10939 = vpack.c.b16 %v10907, %v10907
    %v10940 = vpack.c.b16 %v10908, %v10908
    %v10941 = vpack.c.b16 %v10909, %v10909
    %v10942 = vpack.c.b16 %v10910, %v10910
    %v10943 = vpack.c.b16 %v10911, %v10911
    %v10944 = vpack.c.b16 %v10912, %v10912
    %v10945 = vpack.c.b16 %v10913, %v10913
    %v10946 = vpack.c.b16 %v10914, %v10914
    %v10947 = vpack.c.b16 %v10915, %v10915
    %v10948 = vpack.c.b16 %v10916, %v10916
    %v10949 = vpack.c.b16 %v10917, %v10917
    %v10950 = vpack.c.b16 %v10918, %v10918
    %v10951 = vpack.c.b16 %v10919, %v10919
    %v10952 = vpack.c.b16 %v10920, %v10920
    %10985 = vmatpush.bf16.xpose.msra.mxu0 0
    %10986 = vmatpush.bf16.xpose.msra.mxu0 0
    %10987 = vmatpush.bf16.xpose.msra.mxu0 0
    %10988 = vmatpush.bf16.xpose.msra.mxu0 0
    %10989 = vmatpush.bf16.xpose.msra.mxu0 0
    %10990 = vmatpush.bf16.xpose.msra.mxu0 0
    %10991 = vmatpush.bf16.xpose.msra.mxu0 0
    %10992 = vmatpush.bf16.xpose.msra.mxu0 %v10921
    %10993 = vmatmul.f32.gmra.mxu0 %v9715
    %v10994 = vpop.f32.mrf.mxu0
    %v10995 = vadd.f32 %v10872, %v10994
    %10996 = vdwg.mxu0
    %10997 = vmatpush.bf16.xpose.msra.mxu0 0
    %10998 = vmatpush.bf16.xpose.msra.mxu0 0
    %10999 = vmatpush.bf16.xpose.msra.mxu0 0
    %11000 = vmatpush.bf16.xpose.msra.mxu0 0
    %11001 = vmatpush.bf16.xpose.msra.mxu0 0
    %11002 = vmatpush.bf16.xpose.msra.mxu0 0
    %11003 = vmatpush.bf16.xpose.msra.mxu0 0
    %11004 = vmatpush.bf16.xpose.msra.mxu0 %v10922
    %11005 = vmatmul.f32.gmra.mxu0 %v9716
    %v11006 = vpop.f32.mrf.mxu0
    %v11007 = vadd.f32 %v10995, %v11006
    %11008 = vdwg.mxu0
    %11009 = vmatpush.bf16.xpose.msra.mxu0 0
    %11010 = vmatpush.bf16.xpose.msra.mxu0 0
    %11011 = vmatpush.bf16.xpose.msra.mxu0 0
    %11012 = vmatpush.bf16.xpose.msra.mxu0 0
    %11013 = vmatpush.bf16.xpose.msra.mxu0 0
    %11014 = vmatpush.bf16.xpose.msra.mxu0 0
    %11015 = vmatpush.bf16.xpose.msra.mxu0 0
    %11016 = vmatpush.bf16.xpose.msra.mxu0 %v10923
    %11017 = vmatmul.f32.gmra.mxu0 %v9717
    %v11018 = vpop.f32.mrf.mxu0
    %v11019 = vadd.f32 %v11007, %v11018
    %11020 = vdwg.mxu0
    %11021 = vmatpush.bf16.xpose.msra.mxu0 0
    %11022 = vmatpush.bf16.xpose.msra.mxu0 0
    %11023 = vmatpush.bf16.xpose.msra.mxu0 0
    %11024 = vmatpush.bf16.xpose.msra.mxu0 0
    %11025 = vmatpush.bf16.xpose.msra.mxu0 0
    %11026 = vmatpush.bf16.xpose.msra.mxu0 0
    %11027 = vmatpush.bf16.xpose.msra.mxu0 0
    %11028 = vmatpush.bf16.xpose.msra.mxu0 %v10924
    %11029 = vmatmul.f32.gmra.mxu0 %v9718
    %v11030 = vpop.f32.mrf.mxu0
    %v11031 = vadd.f32 %v11019, %v11030
    %11032 = vdwg.mxu0
    %11033 = vmatpush.bf16.xpose.msra.mxu0 0
    %11034 = vmatpush.bf16.xpose.msra.mxu0 0
    %11035 = vmatpush.bf16.xpose.msra.mxu0 0
    %11036 = vmatpush.bf16.xpose.msra.mxu0 0
    %11037 = vmatpush.bf16.xpose.msra.mxu0 0
    %11038 = vmatpush.bf16.xpose.msra.mxu0 0
    %11039 = vmatpush.bf16.xpose.msra.mxu0 0
    %11040 = vmatpush.bf16.xpose.msra.mxu0 %v10925
    %11041 = vmatmul.f32.gmra.mxu0 %v9719
    %v11042 = vpop.f32.mrf.mxu0
    %v11043 = vadd.f32 %v11031, %v11042
    %11044 = vdwg.mxu0
    %11045 = vmatpush.bf16.xpose.msra.mxu0 0
    %11046 = vmatpush.bf16.xpose.msra.mxu0 0
    %11047 = vmatpush.bf16.xpose.msra.mxu0 0
    %11048 = vmatpush.bf16.xpose.msra.mxu0 0
    %11049 = vmatpush.bf16.xpose.msra.mxu0 0
    %11050 = vmatpush.bf16.xpose.msra.mxu0 0
    %11051 = vmatpush.bf16.xpose.msra.mxu0 0
    %11052 = vmatpush.bf16.xpose.msra.mxu0 %v10926
    %11053 = vmatmul.f32.gmra.mxu0 %v9720
    %v11054 = vpop.f32.mrf.mxu0
    %v11055 = vadd.f32 %v11043, %v11054
    %11056 = vdwg.mxu0
    %11057 = vmatpush.bf16.xpose.msra.mxu0 0
    %11058 = vmatpush.bf16.xpose.msra.mxu0 0
    %11059 = vmatpush.bf16.xpose.msra.mxu0 0
    %11060 = vmatpush.bf16.xpose.msra.mxu0 0
    %11061 = vmatpush.bf16.xpose.msra.mxu0 0
    %11062 = vmatpush.bf16.xpose.msra.mxu0 0
    %11063 = vmatpush.bf16.xpose.msra.mxu0 0
    %11064 = vmatpush.bf16.xpose.msra.mxu0 %v10927
    %11065 = vmatmul.f32.gmra.mxu0 %v9721
    %v11066 = vpop.f32.mrf.mxu0
    %v11067 = vadd.f32 %v11055, %v11066
    %11068 = vdwg.mxu0
    %11069 = vmatpush.bf16.xpose.msra.mxu0 0
    %11070 = vmatpush.bf16.xpose.msra.mxu0 0
    %11071 = vmatpush.bf16.xpose.msra.mxu0 0
    %11072 = vmatpush.bf16.xpose.msra.mxu0 0
    %11073 = vmatpush.bf16.xpose.msra.mxu0 0
    %11074 = vmatpush.bf16.xpose.msra.mxu0 0
    %11075 = vmatpush.bf16.xpose.msra.mxu0 0
    %11076 = vmatpush.bf16.xpose.msra.mxu0 %v10928
    %11077 = vmatmul.f32.gmra.mxu0 %v9722
    %v11078 = vpop.f32.mrf.mxu0
    %v11079 = vadd.f32 %v11067, %v11078
    %11080 = vdwg.mxu0
    %11081 = vmatpush.bf16.xpose.msra.mxu0 0
    %11082 = vmatpush.bf16.xpose.msra.mxu0 0
    %11083 = vmatpush.bf16.xpose.msra.mxu0 0
    %11084 = vmatpush.bf16.xpose.msra.mxu0 0
    %11085 = vmatpush.bf16.xpose.msra.mxu0 0
    %11086 = vmatpush.bf16.xpose.msra.mxu0 0
    %11087 = vmatpush.bf16.xpose.msra.mxu0 0
    %11088 = vmatpush.bf16.xpose.msra.mxu0 %v10929
    %11089 = vmatmul.f32.gmra.mxu0 %v9723
    %v11090 = vpop.f32.mrf.mxu0
    %v11091 = vadd.f32 %v11079, %v11090
    %11092 = vdwg.mxu0
    %11093 = vmatpush.bf16.xpose.msra.mxu0 0
    %11094 = vmatpush.bf16.xpose.msra.mxu0 0
    %11095 = vmatpush.bf16.xpose.msra.mxu0 0
    %11096 = vmatpush.bf16.xpose.msra.mxu0 0
    %11097 = vmatpush.bf16.xpose.msra.mxu0 0
    %11098 = vmatpush.bf16.xpose.msra.mxu0 0
    %11099 = vmatpush.bf16.xpose.msra.mxu0 0
    %11100 = vmatpush.bf16.xpose.msra.mxu0 %v10930
    %11101 = vmatmul.f32.gmra.mxu0 %v9724
    %v11102 = vpop.f32.mrf.mxu0
    %v11103 = vadd.f32 %v11091, %v11102
    %11104 = vdwg.mxu0
    %11105 = vmatpush.bf16.xpose.msra.mxu0 0
    %11106 = vmatpush.bf16.xpose.msra.mxu0 0
    %11107 = vmatpush.bf16.xpose.msra.mxu0 0
    %11108 = vmatpush.bf16.xpose.msra.mxu0 0
    %11109 = vmatpush.bf16.xpose.msra.mxu0 0
    %11110 = vmatpush.bf16.xpose.msra.mxu0 0
    %11111 = vmatpush.bf16.xpose.msra.mxu0 0
    %11112 = vmatpush.bf16.xpose.msra.mxu0 %v10931
    %11113 = vmatmul.f32.gmra.mxu0 %v9725
    %v11114 = vpop.f32.mrf.mxu0
    %v11115 = vadd.f32 %v11103, %v11114
    %11116 = vdwg.mxu0
    %11117 = vmatpush.bf16.xpose.msra.mxu0 0
    %11118 = vmatpush.bf16.xpose.msra.mxu0 0
    %11119 = vmatpush.bf16.xpose.msra.mxu0 0
    %11120 = vmatpush.bf16.xpose.msra.mxu0 0
    %11121 = vmatpush.bf16.xpose.msra.mxu0 0
    %11122 = vmatpush.bf16.xpose.msra.mxu0 0
    %11123 = vmatpush.bf16.xpose.msra.mxu0 0
    %11124 = vmatpush.bf16.xpose.msra.mxu0 %v10932
    %11125 = vmatmul.f32.gmra.mxu0 %v9726
    %v11126 = vpop.f32.mrf.mxu0
    %v11127 = vadd.f32 %v11115, %v11126
    %11128 = vdwg.mxu0
    %11129 = vmatpush.bf16.xpose.msra.mxu0 0
    %11130 = vmatpush.bf16.xpose.msra.mxu0 0
    %11131 = vmatpush.bf16.xpose.msra.mxu0 0
    %11132 = vmatpush.bf16.xpose.msra.mxu0 0
    %11133 = vmatpush.bf16.xpose.msra.mxu0 0
    %11134 = vmatpush.bf16.xpose.msra.mxu0 0
    %11135 = vmatpush.bf16.xpose.msra.mxu0 0
    %11136 = vmatpush.bf16.xpose.msra.mxu0 %v10933
    %11137 = vmatmul.f32.gmra.mxu0 %v9727
    %v11138 = vpop.f32.mrf.mxu0
    %v11139 = vadd.f32 %v11127, %v11138
    %11140 = vdwg.mxu0
    %11141 = vmatpush.bf16.xpose.msra.mxu0 0
    %11142 = vmatpush.bf16.xpose.msra.mxu0 0
    %11143 = vmatpush.bf16.xpose.msra.mxu0 0
    %11144 = vmatpush.bf16.xpose.msra.mxu0 0
    %11145 = vmatpush.bf16.xpose.msra.mxu0 0
    %11146 = vmatpush.bf16.xpose.msra.mxu0 0
    %11147 = vmatpush.bf16.xpose.msra.mxu0 0
    %11148 = vmatpush.bf16.xpose.msra.mxu0 %v10934
    %11149 = vmatmul.f32.gmra.mxu0 %v9728
    %v11150 = vpop.f32.mrf.mxu0
    %v11151 = vadd.f32 %v11139, %v11150
    %11152 = vdwg.mxu0
    %11153 = vmatpush.bf16.xpose.msra.mxu0 0
    %11154 = vmatpush.bf16.xpose.msra.mxu0 0
    %11155 = vmatpush.bf16.xpose.msra.mxu0 0
    %11156 = vmatpush.bf16.xpose.msra.mxu0 0
    %11157 = vmatpush.bf16.xpose.msra.mxu0 0
    %11158 = vmatpush.bf16.xpose.msra.mxu0 0
    %11159 = vmatpush.bf16.xpose.msra.mxu0 0
    %11160 = vmatpush.bf16.xpose.msra.mxu0 %v10935
    %11161 = vmatmul.f32.gmra.mxu0 %v9729
    %v11162 = vpop.f32.mrf.mxu0
    %v11163 = vadd.f32 %v11151, %v11162
    %11164 = vdwg.mxu0
    %11165 = vmatpush.bf16.xpose.msra.mxu0 0
    %11166 = vmatpush.bf16.xpose.msra.mxu0 0
    %11167 = vmatpush.bf16.xpose.msra.mxu0 0
    %11168 = vmatpush.bf16.xpose.msra.mxu0 0
    %11169 = vmatpush.bf16.xpose.msra.mxu0 0
    %11170 = vmatpush.bf16.xpose.msra.mxu0 0
    %11171 = vmatpush.bf16.xpose.msra.mxu0 0
    %11172 = vmatpush.bf16.xpose.msra.mxu0 %v10936
    %11173 = vmatmul.f32.gmra.mxu0 %v9730
    %v11174 = vpop.f32.mrf.mxu0
    %v11175 = vadd.f32 %v11163, %v11174
    %11176 = vdwg.mxu0
    %11177 = vmatpush.bf16.xpose.msra.mxu0 0
    %11178 = vmatpush.bf16.xpose.msra.mxu0 0
    %11179 = vmatpush.bf16.xpose.msra.mxu0 0
    %11180 = vmatpush.bf16.xpose.msra.mxu0 0
    %11181 = vmatpush.bf16.xpose.msra.mxu0 0
    %11182 = vmatpush.bf16.xpose.msra.mxu0 0
    %11183 = vmatpush.bf16.xpose.msra.mxu0 0
    %11184 = vmatpush.bf16.xpose.msra.mxu0 %v10937
    %11185 = vmatmul.f32.gmra.mxu0 %v9731
    %v11186 = vpop.f32.mrf.mxu0
    %v11187 = vadd.f32 %v11175, %v11186
    %11188 = vdwg.mxu0
    %11189 = vmatpush.bf16.xpose.msra.mxu0 0
    %11190 = vmatpush.bf16.xpose.msra.mxu0 0
    %11191 = vmatpush.bf16.xpose.msra.mxu0 0
    %11192 = vmatpush.bf16.xpose.msra.mxu0 0
    %11193 = vmatpush.bf16.xpose.msra.mxu0 0
    %11194 = vmatpush.bf16.xpose.msra.mxu0 0
    %11195 = vmatpush.bf16.xpose.msra.mxu0 0
    %11196 = vmatpush.bf16.xpose.msra.mxu0 %v10938
    %11197 = vmatmul.f32.gmra.mxu0 %v9732
    %v11198 = vpop.f32.mrf.mxu0
    %v11199 = vadd.f32 %v11187, %v11198
    %11200 = vdwg.mxu0
    %11201 = vmatpush.bf16.xpose.msra.mxu0 0
    %11202 = vmatpush.bf16.xpose.msra.mxu0 0
    %11203 = vmatpush.bf16.xpose.msra.mxu0 0
    %11204 = vmatpush.bf16.xpose.msra.mxu0 0
    %11205 = vmatpush.bf16.xpose.msra.mxu0 0
    %11206 = vmatpush.bf16.xpose.msra.mxu0 0
    %11207 = vmatpush.bf16.xpose.msra.mxu0 0
    %11208 = vmatpush.bf16.xpose.msra.mxu0 %v10939
    %11209 = vmatmul.f32.gmra.mxu0 %v9733
    %v11210 = vpop.f32.mrf.mxu0
    %v11211 = vadd.f32 %v11199, %v11210
    %11212 = vdwg.mxu0
    %11213 = vmatpush.bf16.xpose.msra.mxu0 0
    %11214 = vmatpush.bf16.xpose.msra.mxu0 0
    %11215 = vmatpush.bf16.xpose.msra.mxu0 0
    %11216 = vmatpush.bf16.xpose.msra.mxu0 0
    %11217 = vmatpush.bf16.xpose.msra.mxu0 0
    %11218 = vmatpush.bf16.xpose.msra.mxu0 0
    %11219 = vmatpush.bf16.xpose.msra.mxu0 0
    %11220 = vmatpush.bf16.xpose.msra.mxu0 %v10940
    %11221 = vmatmul.f32.gmra.mxu0 %v9734
    %v11222 = vpop.f32.mrf.mxu0
    %v11223 = vadd.f32 %v11211, %v11222
    %11224 = vdwg.mxu0
    %11225 = vmatpush.bf16.xpose.msra.mxu0 0
    %11226 = vmatpush.bf16.xpose.msra.mxu0 0
    %11227 = vmatpush.bf16.xpose.msra.mxu0 0
    %11228 = vmatpush.bf16.xpose.msra.mxu0 0
    %11229 = vmatpush.bf16.xpose.msra.mxu0 0
    %11230 = vmatpush.bf16.xpose.msra.mxu0 0
    %11231 = vmatpush.bf16.xpose.msra.mxu0 0
    %11232 = vmatpush.bf16.xpose.msra.mxu0 %v10941
    %11233 = vmatmul.f32.gmra.mxu0 %v9735
    %v11234 = vpop.f32.mrf.mxu0
    %v11235 = vadd.f32 %v11223, %v11234
    %11236 = vdwg.mxu0
    %11237 = vmatpush.bf16.xpose.msra.mxu0 0
    %11238 = vmatpush.bf16.xpose.msra.mxu0 0
    %11239 = vmatpush.bf16.xpose.msra.mxu0 0
    %11240 = vmatpush.bf16.xpose.msra.mxu0 0
    %11241 = vmatpush.bf16.xpose.msra.mxu0 0
    %11242 = vmatpush.bf16.xpose.msra.mxu0 0
    %11243 = vmatpush.bf16.xpose.msra.mxu0 0
    %11244 = vmatpush.bf16.xpose.msra.mxu0 %v10942
    %11245 = vmatmul.f32.gmra.mxu0 %v9736
    %v11246 = vpop.f32.mrf.mxu0
    %v11247 = vadd.f32 %v11235, %v11246
    %11248 = vdwg.mxu0
    %11249 = vmatpush.bf16.xpose.msra.mxu0 0
    %11250 = vmatpush.bf16.xpose.msra.mxu0 0
    %11251 = vmatpush.bf16.xpose.msra.mxu0 0
    %11252 = vmatpush.bf16.xpose.msra.mxu0 0
    %11253 = vmatpush.bf16.xpose.msra.mxu0 0
    %11254 = vmatpush.bf16.xpose.msra.mxu0 0
    %11255 = vmatpush.bf16.xpose.msra.mxu0 0
    %11256 = vmatpush.bf16.xpose.msra.mxu0 %v10943
    %11257 = vmatmul.f32.gmra.mxu0 %v9737
    %v11258 = vpop.f32.mrf.mxu0
    %v11259 = vadd.f32 %v11247, %v11258
    %11260 = vdwg.mxu0
    %11261 = vmatpush.bf16.xpose.msra.mxu0 0
    %11262 = vmatpush.bf16.xpose.msra.mxu0 0
    %11263 = vmatpush.bf16.xpose.msra.mxu0 0
    %11264 = vmatpush.bf16.xpose.msra.mxu0 0
    %11265 = vmatpush.bf16.xpose.msra.mxu0 0
    %11266 = vmatpush.bf16.xpose.msra.mxu0 0
    %11267 = vmatpush.bf16.xpose.msra.mxu0 0
    %11268 = vmatpush.bf16.xpose.msra.mxu0 %v10944
    %11269 = vmatmul.f32.gmra.mxu0 %v9738
    %v11270 = vpop.f32.mrf.mxu0
    %v11271 = vadd.f32 %v11259, %v11270
    %11272 = vdwg.mxu0
    %11273 = vmatpush.bf16.xpose.msra.mxu0 0
    %11274 = vmatpush.bf16.xpose.msra.mxu0 0
    %11275 = vmatpush.bf16.xpose.msra.mxu0 0
    %11276 = vmatpush.bf16.xpose.msra.mxu0 0
    %11277 = vmatpush.bf16.xpose.msra.mxu0 0
    %11278 = vmatpush.bf16.xpose.msra.mxu0 0
    %11279 = vmatpush.bf16.xpose.msra.mxu0 0
    %11280 = vmatpush.bf16.xpose.msra.mxu0 %v10945
    %11281 = vmatmul.f32.gmra.mxu0 %v9739
    %v11282 = vpop.f32.mrf.mxu0
    %v11283 = vadd.f32 %v11271, %v11282
    %11284 = vdwg.mxu0
    %11285 = vmatpush.bf16.xpose.msra.mxu0 0
    %11286 = vmatpush.bf16.xpose.msra.mxu0 0
    %11287 = vmatpush.bf16.xpose.msra.mxu0 0
    %11288 = vmatpush.bf16.xpose.msra.mxu0 0
    %11289 = vmatpush.bf16.xpose.msra.mxu0 0
    %11290 = vmatpush.bf16.xpose.msra.mxu0 0
    %11291 = vmatpush.bf16.xpose.msra.mxu0 0
    %11292 = vmatpush.bf16.xpose.msra.mxu0 %v10946
    %11293 = vmatmul.f32.gmra.mxu0 %v9740
    %v11294 = vpop.f32.mrf.mxu0
    %v11295 = vadd.f32 %v11283, %v11294
    %11296 = vdwg.mxu0
    %11297 = vmatpush.bf16.xpose.msra.mxu0 0
    %11298 = vmatpush.bf16.xpose.msra.mxu0 0
    %11299 = vmatpush.bf16.xpose.msra.mxu0 0
    %11300 = vmatpush.bf16.xpose.msra.mxu0 0
    %11301 = vmatpush.bf16.xpose.msra.mxu0 0
    %11302 = vmatpush.bf16.xpose.msra.mxu0 0
    %11303 = vmatpush.bf16.xpose.msra.mxu0 0
    %11304 = vmatpush.bf16.xpose.msra.mxu0 %v10947
    %11305 = vmatmul.f32.gmra.mxu0 %v9741
    %v11306 = vpop.f32.mrf.mxu0
    %v11307 = vadd.f32 %v11295, %v11306
    %11308 = vdwg.mxu0
    %11309 = vmatpush.bf16.xpose.msra.mxu0 0
    %11310 = vmatpush.bf16.xpose.msra.mxu0 0
    %11311 = vmatpush.bf16.xpose.msra.mxu0 0
    %11312 = vmatpush.bf16.xpose.msra.mxu0 0
    %11313 = vmatpush.bf16.xpose.msra.mxu0 0
    %11314 = vmatpush.bf16.xpose.msra.mxu0 0
    %11315 = vmatpush.bf16.xpose.msra.mxu0 0
    %11316 = vmatpush.bf16.xpose.msra.mxu0 %v10948
    %11317 = vmatmul.f32.gmra.mxu0 %v9742
    %v11318 = vpop.f32.mrf.mxu0
    %v11319 = vadd.f32 %v11307, %v11318
    %11320 = vdwg.mxu0
    %11321 = vmatpush.bf16.xpose.msra.mxu0 0
    %11322 = vmatpush.bf16.xpose.msra.mxu0 0
    %11323 = vmatpush.bf16.xpose.msra.mxu0 0
    %11324 = vmatpush.bf16.xpose.msra.mxu0 0
    %11325 = vmatpush.bf16.xpose.msra.mxu0 0
    %11326 = vmatpush.bf16.xpose.msra.mxu0 0
    %11327 = vmatpush.bf16.xpose.msra.mxu0 0
    %11328 = vmatpush.bf16.xpose.msra.mxu0 %v10949
    %11329 = vmatmul.f32.gmra.mxu0 %v9743
    %v11330 = vpop.f32.mrf.mxu0
    %v11331 = vadd.f32 %v11319, %v11330
    %11332 = vdwg.mxu0
    %11333 = vmatpush.bf16.xpose.msra.mxu0 0
    %11334 = vmatpush.bf16.xpose.msra.mxu0 0
    %11335 = vmatpush.bf16.xpose.msra.mxu0 0
    %11336 = vmatpush.bf16.xpose.msra.mxu0 0
    %11337 = vmatpush.bf16.xpose.msra.mxu0 0
    %11338 = vmatpush.bf16.xpose.msra.mxu0 0
    %11339 = vmatpush.bf16.xpose.msra.mxu0 0
    %11340 = vmatpush.bf16.xpose.msra.mxu0 %v10950
    %11341 = vmatmul.f32.gmra.mxu0 %v9744
    %v11342 = vpop.f32.mrf.mxu0
    %v11343 = vadd.f32 %v11331, %v11342
    %11344 = vdwg.mxu0
    %11345 = vmatpush.bf16.xpose.msra.mxu0 0
    %11346 = vmatpush.bf16.xpose.msra.mxu0 0
    %11347 = vmatpush.bf16.xpose.msra.mxu0 0
    %11348 = vmatpush.bf16.xpose.msra.mxu0 0
    %11349 = vmatpush.bf16.xpose.msra.mxu0 0
    %11350 = vmatpush.bf16.xpose.msra.mxu0 0
    %11351 = vmatpush.bf16.xpose.msra.mxu0 0
    %11352 = vmatpush.bf16.xpose.msra.mxu0 %v10951
    %11353 = vmatmul.f32.gmra.mxu0 %v9745
    %v11354 = vpop.f32.mrf.mxu0
    %v11355 = vadd.f32 %v11343, %v11354
    %11356 = vdwg.mxu0
    %11357 = vmatpush.bf16.xpose.msra.mxu0 0
    %11358 = vmatpush.bf16.xpose.msra.mxu0 0
    %11359 = vmatpush.bf16.xpose.msra.mxu0 0
    %11360 = vmatpush.bf16.xpose.msra.mxu0 0
    %11361 = vmatpush.bf16.xpose.msra.mxu0 0
    %11362 = vmatpush.bf16.xpose.msra.mxu0 0
    %11363 = vmatpush.bf16.xpose.msra.mxu0 0
    %11364 = vmatpush.bf16.xpose.msra.mxu0 %v10952
    %11365 = vmatmul.f32.gmra.mxu0 %v9746
    %v11366 = vpop.f32.mrf.mxu0
    %v11367 = vadd.f32 %v11355, %v11366
    %11368 = vdwg.mxu0
    %v11369 = vld [vmem:[%s7] sm:$0x1]
    %v11371 = vperm.slane %v11369, 0
    %v11373 = vadd.f32 %v11367, %v11371
    %11374 = vst.msk [vmem:[#allocation2] sm:$0x3] %vm10841, %v11373
    // Predicated region
    $region34: #{tpu_custom_call.1} parent=1 // pred_check
      _
    $region35: #{tpu_custom_call.1} parent=1 // pred_check_branch
      %11376 = sbr.rel (0) target = $region37
    $region36: #{tpu_custom_call.1} parent=1 // pred_region
      %11378 = vsyncadd [#allocation3], 0
      %s11380 = sshll.u32 [#allocation2], 4
      %s11381 = int_to_ptr.vmem [resolvable:$true] %s11380
      %s11382 = sshll.u32 %s8, 4
      %s11383 = int_to_ptr.hbm [resolvable:$true] %s11382
      %11385 = dma.vmem_to_hbm [thread:$0]  %s11381, 32, %s11383, [#allocation3]
    $region37: #{tpu_custom_call.1} parent=1 // pred_fallthru
      _
    // Predicated region
    $region38: #{tpu_custom_call.1} parent=1 // pred_check
      _
    $region39: #{tpu_custom_call.1} parent=1 // pred_check_branch
      %11387 = sbr.rel (0) target = $region41
    $region40: #{tpu_custom_call.1} parent=1 // pred_region
      %11389 = dma.done [#allocation3], 32
    $region41: #{tpu_custom_call.1} parent=1 // pred_fallthru
      _
    %11390 = vsyncpa [#allocation3], 1

</llo_original>
